<compile_context>
chip_gen: v7x
topology: tpu7x:2x2x1
jax: 0.10.0
libtpu: 0.0.40
codegen_flags: <defaults>
</compile_context>

<pallas_src>
import math

import jax
import jax.numpy as jnp
from jax.experimental import pallas as pl
from jax.experimental.pallas import tpu as pltpu

K = 7
PAD = (K - 1) // 2


def _chunks(n, c):
    """Static (start, size) chunk list covering range(n) in steps of c."""
    out = []
    s = 0
    while s < n:
        out.append((s, min(c, n - s)))
        s += c
    return out


def _triplet_kernel(x_ref, ws_ref, wh_ref, ww_ref, o_ref,
                    s3max_ref, s3mean_ref,
                    s1max_ref, s1mean_ref,
                    s2max_ref, s2mean_ref):
    """Fused TripletAttention forward for one (nb, C, H, W) batch block.

    x_ref   : (nb, C, H, W) VMEM input block (native dtype)
    ws_ref  : (2*K*K,) SMEM  SpatialGate   weight  (conv on the (H, W) plane)
    wh_ref  : (2*K*K,) SMEM  ChannelGateH  weight, (kh,kw)-swapped
                                             (lane-dense conv on the (W, C) plane)
    ww_ref  : (2*K*K,) SMEM  ChannelGateW  weight  (lane-dense conv on (H, C))
    o_ref   : (nb, C, H, W) VMEM output block
    s*_ref  : zero-padded f32 VMEM scratch for the pooled maps of each gate
    """
    nb, C, H, W = x_ref.shape
    f32 = jnp.float32

    # ------------- fused max+mean pooling: ONE chunked traversal per axis ---
    # gate3 (SpatialGate): reduce over C -> (nb, H, W)
    g3max = g3sum = None
    for c0, cc in _chunks(C, min(C, 8)):
        xc = x_ref[:, c0:c0 + cc, :, :]                 # native dtype chunk
        m = jnp.max(xc, axis=1)
        s = jnp.sum(xc.astype(f32), axis=1)
        g3max = m if g3max is None else jnp.maximum(g3max, m)
        g3sum = s if g3sum is None else g3sum + s
    g3max = g3max.astype(f32)
    g3mean = g3sum * (1.0 / C)

    # gate1 (ChannelGateH): reduce over H -> (nb, C, W)
    g1max = g1sum = None
    for h0, hc in _chunks(H, min(H, 8)):
        xh = x_ref[:, :, h0:h0 + hc, :]
        m = jnp.max(xh, axis=2)
        s = jnp.sum(xh.astype(f32), axis=2)
        g1max = m if g1max is None else jnp.maximum(g1max, m)
        g1sum = s if g1sum is None else g1sum + s
    g1max = g1max.astype(f32)
    g1mean = g1sum * (1.0 / H)

    # gate2 (ChannelGateW): reduce over W -> (nb, C, H)
    g2max = g2sum = None
    for w0, wc in _chunks(W, min(W, 128)):
        xw = x_ref[:, :, :, w0:w0 + wc]
        m = jnp.max(xw, axis=3)
        s = jnp.sum(xw.astype(f32), axis=3)
        g2max = m if g2max is None else jnp.maximum(g2max, m)
        g2sum = s if g2sum is None else g2sum + s
    g2max = g2max.astype(f32)
    g2mean = g2sum * (1.0 / W)

    # Lane-dense layouts for gates 1/2: put C on the 128-lane axis of the
    # pooled maps (a small-map transpose is far cheaper than 98 lane-masked
    # tap reads per gate).
    g1max_t = jnp.swapaxes(g1max, 1, 2)     # (nb, W, C)
    g1mean_t = jnp.swapaxes(g1mean, 1, 2)
    g2max_t = jnp.swapaxes(g2max, 1, 2)     # (nb, H, C)
    g2mean_t = jnp.swapaxes(g2mean, 1, 2)

    def gate(pmax, pmean, smax_ref, smean_ref, w_ref):
        """zero-pad -> 7x7 'same' conv (2->1 ch, bias=False) -> ReLU -> sigmoid."""
        P, Q = pmax.shape[1], pmax.shape[2]
        # Re-zero only the PAD-wide borders (the interior is fully rewritten
        # every grid step); the zero tensors are built once per gate and
        # shared by the max/mean refs.
        zr = jnp.zeros((nb, PAD, Q + 2 * PAD), f32)
        zc = jnp.zeros((nb, P + 2 * PAD, PAD), f32)
        for ref, interior in ((smax_ref, pmax), (smean_ref, pmean)):
            ref[:, 0:PAD, :] = zr
            ref[:, P + PAD:P + 2 * PAD, :] = zr
            ref[:, :, 0:PAD] = zc
            ref[:, :, Q + PAD:Q + 2 * PAD] = zc
            ref[:, PAD:PAD + P, PAD:PAD + Q] = interior

        # Read the padded maps back ONCE as values; hoist the 7 kw (lane)
        # shifts and reuse them across all kh (sublane) offsets.
        pm = smax_ref[...]
        pe = smean_ref[...]
        acc = jnp.zeros((nb, P, Q), f32)
        # TODO(synk): this kw sweep could be an MXU matmul against a banded
        # (Q+2*PAD, Q) matrix to offload the VPU on v6e/v7x.
        for kw in range(K):
            am = pm[:, :, kw:kw + Q]                 # (nb, P+2*PAD, Q)
            ae = pe[:, :, kw:kw + Q]
            for kh in range(K):
                w0 = w_ref[kh * K + kw]              # channel 0: max map
                w1 = w_ref[K * K + kh * K + kw]      # channel 1: mean map
                acc = acc + w0 * am[:, kh:kh + P, :] + w1 * ae[:, kh:kh + P, :]
        # BasicConv(relu=True, bn=False), then torch.sigmoid_ (per the spec).
        return jax.nn.sigmoid(jnp.maximum(acc, 0.0))

    s3 = gate(g3max, g3mean, s3max_ref, s3mean_ref, ws_ref)         # (nb, H, W)
    s1t = gate(g1max_t, g1mean_t, s1max_ref, s1mean_ref, wh_ref)    # (nb, W, C)
    s2t = gate(g2max_t, g2mean_t, s2max_ref, s2mean_ref, ww_ref)    # (nb, H, C)

    s1 = jnp.swapaxes(s1t, 1, 2)     # (nb, C, W)
    s2 = jnp.swapaxes(s2t, 1, 2)     # (nb, C, H)

    # out = x * (s1 + s2 + s3) / 3, per C-chunk (no block-sized f32 live range)
    for c0, cc in _chunks(C, min(C, 8)):
        scale = (s1[:, c0:c0 + cc, None, :]
                 + s2[:, c0:c0 + cc, :, None]
                 + s3[:, None, :, :]) * (1.0 / 3.0)
        xc = x_ref[:, c0:c0 + cc, :, :].astype(f32)
        o_ref[:, c0:c0 + cc, :, :] = (xc * scale).astype(o_ref.dtype)


def triplet_attention(x, w_h, w_w, w_s, *,
                      max_block_bytes=2 * 1024 * 1024,
                      vmem_limit_bytes=48 * 1024 * 1024):
    """TripletAttention forward.  x: (N, C, H, W);  w_*: (2, 7, 7) conv weights."""
    N, C, H, W = x.shape
    itemsize = jnp.dtype(x.dtype).itemsize
    per_batch = C * H * W * itemsize

    # Batch-block size: target the ~0.5-4 MiB DMA sweet spot, but keep at
    # least 2 grid steps whenever N >= 2 so both v7x TensorCores get work.
    nb = max(1, min(N, max_block_bytes // max(per_batch, 1)))
    if N >= 2:
        nb = min(nb, -(-N // 2))
    grid = (pl.cdiv(N, nb),)   # non-divisible N handled by Pallas block padding
    # TODO(synk): C-tiling fallback when a single image exceeds the block budget.

    # Flattened conv weights live in SMEM (scalar * vector FMAs in the kernel).
    #  - SpatialGate   conv runs on the (H, W) plane           -> w_s as-is
    #  - ChannelGateH  conv runs lane-dense on the (W, C) plane -> w_h (kh,kw)-swapped
    #  - ChannelGateW  conv runs lane-dense on the (H, C) plane -> w_w as-is
    wsf = w_s.reshape(-1).astype(jnp.float32)
    whf = jnp.transpose(w_h, (0, 2, 1)).reshape(-1).astype(jnp.float32)
    wwf = w_w.reshape(-1).astype(jnp.float32)

    blk = pl.BlockSpec((nb, C, H, W), lambda n: (n, 0, 0, 0))
    smem = pl.BlockSpec(memory_space=pltpu.MemorySpace.SMEM)

    f32 = jnp.float32
    scratch = [
        pltpu.VMEM((nb, H + 2 * PAD, W + 2 * PAD), f32),   # gate3 max
        pltpu.VMEM((nb, H + 2 * PAD, W + 2 * PAD), f32),   # gate3 mean
        pltpu.VMEM((nb, W + 2 * PAD, C + 2 * PAD), f32),   # gate1 max  (lane-dense)
        pltpu.VMEM((nb, W + 2 * PAD, C + 2 * PAD), f32),   # gate1 mean (lane-dense)
        pltpu.VMEM((nb, H + 2 * PAD, C + 2 * PAD), f32),   # gate2 max  (lane-dense)
        pltpu.VMEM((nb, H + 2 * PAD, C + 2 * PAD), f32),   # gate2 mean (lane-dense)
    ]

    maps = H * W + C * W + C * H
    cost = pl.CostEstimate(
        flops=int(N * (6 * C * H * W + 4 * K * K * maps + 4 * C * H * W)),
        transcendentals=int(N * maps),
        bytes_accessed=int(2 * N * C * H * W * itemsize),
    )

    return pl.pallas_call(
        _triplet_kernel,
        out_shape=jax.ShapeDtypeStruct((N, C, H, W), x.dtype),
        grid=grid,
        in_specs=[blk, smem, smem, smem],
        out_specs=blk,
        scratch_shapes=scratch,
        compiler_params=pltpu.CompilerParams(
            dimension_semantics=("parallel",),     # batch blocks are independent
            vmem_limit_bytes=vmem_limit_bytes,     # VMEM-safe on v7x (64 MiB/TC)
        ),
        cost_estimate=cost,
    )(x, wsf, whf, wwf)


# ----------------------- pure-JAX reference (for checking) -----------------------
def _spatial_gate_ref(x, w):
    pooled = jnp.stack([jnp.max(x, axis=1), jnp.mean(x, axis=1)], axis=1)  # (N,2,P,Q)
    conv = jax.lax.conv_general_dilated(
        pooled, w[None], window_strides=(1, 1), padding=[(PAD, PAD), (PAD, PAD)],
        dimension_numbers=("NCHW", "OIHW", "NCHW"))
    scale = jax.nn.sigmoid(jnp.maximum(conv, 0.0))
    return x * scale


def _triplet_ref(x, w_h, w_w, w_s):
    x1 = jnp.transpose(x, (0, 2, 1, 3))
    y1 = jnp.transpose(_spatial_gate_ref(x1, w_h), (0, 2, 1, 3))
    x2 = jnp.transpose(x, (0, 3, 2, 1))
    y2 = jnp.transpose(_spatial_gate_ref(x2, w_w), (0, 3, 2, 1))
    y3 = _spatial_gate_ref(x, w_s)
    return (y1 + y2 + y3) / 3.0


if __name__ == "__main__":
    key = jax.random.PRNGKey(0)
    k_x, k_h, k_w, k_s, k_x2 = jax.random.split(key, 5)

    # Conv2d(2, 1, 7, bias=False) weights for each of the three gates,
    # deterministic kaiming-uniform-style init (bound = 1/sqrt(fan_in)).
    bound = 1.0 / math.sqrt(2 * K * K)
    w_h = jax.random.uniform(k_h, (2, K, K), jnp.float32, -bound, bound)
    w_w = jax.random.uniform(k_w, (2, K, K), jnp.float32, -bound, bound)
    w_s = jax.random.uniform(k_s, (2, K, K), jnp.float32, -bound, bound)

    # Case 1: small canonical shape.
    N, C, H, W = 2, 4, 16, 16
    x = jax.random.normal(k_x, (N, C, H, W), dtype=jnp.float32)
    out = jax.block_until_ready(triplet_attention(x, w_h, w_w, w_s))
    ref = _triplet_ref(x, w_h, w_w, w_s)
    assert out.shape == (N, C, H, W)
    assert jnp.allclose(out, ref, rtol=2e-5, atol=2e-5), "mismatch vs reference (case 1)"

    # Case 2: non-divisible batch (cdiv grid + padded tail block) and multi-chunk C.
    N2, C2, H2, W2 = 3, 12, 16, 16
    x2 = jax.random.normal(k_x2, (N2, C2, H2, W2), dtype=jnp.float32)
    out2 = jax.block_until_ready(triplet_attention(x2, w_h, w_w, w_s))
    ref2 = _triplet_ref(x2, w_h, w_w, w_s)
    assert out2.shape == (N2, C2, H2, W2)
    assert jnp.allclose(out2, ref2, rtol=2e-5, atol=2e-5), "mismatch vs reference (case 2)"

    print("KERNEL_OK")
</pallas_src>

<mosaic_0001>
module attributes {stable_mosaic.version = 11 : i64} {
  func.func @_triplet_kernel(%arg0: i32, %arg1: memref<1x4x16x16xf32, #tpu.memory_space<vmem>>, %arg2: memref<98xf32, #tpu.memory_space<smem>>, %arg3: memref<98xf32, #tpu.memory_space<smem>>, %arg4: memref<98xf32, #tpu.memory_space<smem>>, %arg5: memref<1x4x16x16xf32, #tpu.memory_space<vmem>>, %arg6: memref<1x22x22xf32, #tpu.memory_space<vmem>>, %arg7: memref<1x22x22xf32, #tpu.memory_space<vmem>>, %arg8: memref<1x22x10xf32, #tpu.memory_space<vmem>>, %arg9: memref<1x22x10xf32, #tpu.memory_space<vmem>>, %arg10: memref<1x22x10xf32, #tpu.memory_space<vmem>>, %arg11: memref<1x22x10xf32, #tpu.memory_space<vmem>>) attributes {dimension_semantics = [#tpu.dimension_semantics<parallel>], iteration_bounds = array<i64: 2>, scalar_prefetch = 0 : i64, scratch_operands = 6 : i64, tpu.core_type = #tpu.core_type<tc>, window_params = [{transform_indices = @transform_0, window_bounds = array<i64: 1, 4, 16, 16>}, {transform_indices = @transform_1, window_bounds = array<i64: 98>}, {transform_indices = @transform_2, window_bounds = array<i64: 98>}, {transform_indices = @transform_3, window_bounds = array<i64: 98>}, {transform_indices = @transform_4, window_bounds = array<i64: 1, 4, 16, 16>}]} {
    %c0 = arith.constant 0 : index
    %c0_0 = arith.constant 0 : index
    %c0_1 = arith.constant 0 : index
    %c0_2 = arith.constant 0 : index
    %0 = vector.load %arg1[%c0, %c0_0, %c0_1, %c0_2] : memref<1x4x16x16xf32, #tpu.memory_space<vmem>>, vector<1x4x16x16xf32>
    %cst = arith.constant dense<0xFF800000> : vector<1x16x16xf32>
    %1 = vector.multi_reduction <maximumf>, %0, %cst [1] : vector<1x4x16x16xf32> to vector<1x16x16xf32>
    %cst_3 = arith.constant dense<0.000000e+00> : vector<1x16x16xf32>
    %2 = vector.multi_reduction <add>, %0, %cst_3 [1] : vector<1x4x16x16xf32> to vector<1x16x16xf32>
    %cst_4 = arith.constant 2.500000e-01 : f32
    %3 = vector.broadcast %cst_4 : f32 to vector<1x16x16xf32>
    %4 = arith.mulf %2, %3 : vector<1x16x16xf32>
    %c0_5 = arith.constant 0 : index
    %c0_6 = arith.constant 0 : index
    %c0_7 = arith.constant 0 : index
    %c0_8 = arith.constant 0 : index
    %5 = vector.load %arg1[%c0_5, %c0_6, %c0_7, %c0_8] : memref<1x4x16x16xf32, #tpu.memory_space<vmem>>, vector<1x4x8x16xf32>
    %cst_9 = arith.constant dense<0xFF800000> : vector<1x4x16xf32>
    %6 = vector.multi_reduction <maximumf>, %5, %cst_9 [2] : vector<1x4x8x16xf32> to vector<1x4x16xf32>
    %cst_10 = arith.constant dense<0.000000e+00> : vector<1x4x16xf32>
    %7 = vector.multi_reduction <add>, %5, %cst_10 [2] : vector<1x4x8x16xf32> to vector<1x4x16xf32>
    %c0_11 = arith.constant 0 : index
    %c0_12 = arith.constant 0 : index
    %c8 = arith.constant 8 : index
    %c0_13 = arith.constant 0 : index
    %8 = vector.load %arg1[%c0_11, %c0_12, %c8, %c0_13] : memref<1x4x16x16xf32, #tpu.memory_space<vmem>>, vector<1x4x8x16xf32>
    %cst_14 = arith.constant dense<0xFF800000> : vector<1x4x16xf32>
    %9 = vector.multi_reduction <maximumf>, %8, %cst_14 [2] : vector<1x4x8x16xf32> to vector<1x4x16xf32>
    %cst_15 = arith.constant dense<0.000000e+00> : vector<1x4x16xf32>
    %10 = vector.multi_reduction <add>, %8, %cst_15 [2] : vector<1x4x8x16xf32> to vector<1x4x16xf32>
    %11 = arith.maximumf %6, %9 : vector<1x4x16xf32>
    %12 = arith.addf %7, %10 : vector<1x4x16xf32>
    %cst_16 = arith.constant 6.250000e-02 : f32
    %13 = vector.broadcast %cst_16 : f32 to vector<1x4x16xf32>
    %14 = arith.mulf %12, %13 : vector<1x4x16xf32>
    %c0_17 = arith.constant 0 : index
    %c0_18 = arith.constant 0 : index
    %c0_19 = arith.constant 0 : index
    %c0_20 = arith.constant 0 : index
    %15 = vector.load %arg1[%c0_17, %c0_18, %c0_19, %c0_20] : memref<1x4x16x16xf32, #tpu.memory_space<vmem>>, vector<1x4x16x16xf32>
    %cst_21 = arith.constant dense<0xFF800000> : vector<1x4x16xf32>
    %16 = vector.multi_reduction <maximumf>, %15, %cst_21 [3] : vector<1x4x16x16xf32> to vector<1x4x16xf32>
    %cst_22 = arith.constant dense<0.000000e+00> : vector<1x4x16xf32>
    %17 = vector.multi_reduction <add>, %15, %cst_22 [3] : vector<1x4x16x16xf32> to vector<1x4x16xf32>
    %cst_23 = arith.constant 6.250000e-02 : f32
    %18 = vector.broadcast %cst_23 : f32 to vector<1x4x16xf32>
    %19 = arith.mulf %17, %18 : vector<1x4x16xf32>
    %20 = tpu.transpose %11, [0, 2, 1] : vector<1x4x16xf32> -> vector<1x16x4xf32>
    %21 = tpu.transpose %14, [0, 2, 1] : vector<1x4x16xf32> -> vector<1x16x4xf32>
    %22 = tpu.transpose %16, [0, 2, 1] : vector<1x4x16xf32> -> vector<1x16x4xf32>
    %23 = tpu.transpose %19, [0, 2, 1] : vector<1x4x16xf32> -> vector<1x16x4xf32>
    %cst_24 = arith.constant 0.000000e+00 : f32
    %24 = vector.broadcast %cst_24 : f32 to vector<1x3x22xf32>
    %cst_25 = arith.constant 0.000000e+00 : f32
    %25 = vector.broadcast %cst_25 : f32 to vector<1x22x3xf32>
    %c0_26 = arith.constant 0 : index
    %c0_27 = arith.constant 0 : index
    %c0_28 = arith.constant 0 : index
    %26 = vector.load %arg6[%c0_26, %c0_27, %c0_28] : memref<1x22x22xf32, #tpu.memory_space<vmem>>, vector<1x3x22xf32>
    tpu.vector_store %arg6[%c0_26, %c0_27, %c0_28], %24 {strides = array<i32>} : memref<1x22x22xf32, #tpu.memory_space<vmem>>, vector<1x3x22xf32>,
    %c0_29 = arith.constant 0 : index
    %c19 = arith.constant 19 : index
    %c0_30 = arith.constant 0 : index
    %27 = vector.load %arg6[%c0_29, %c19, %c0_30] : memref<1x22x22xf32, #tpu.memory_space<vmem>>, vector<1x3x22xf32>
    tpu.vector_store %arg6[%c0_29, %c19, %c0_30], %24 {strides = array<i32>} : memref<1x22x22xf32, #tpu.memory_space<vmem>>, vector<1x3x22xf32>,
    %c0_31 = arith.constant 0 : index
    %c0_32 = arith.constant 0 : index
    %c0_33 = arith.constant 0 : index
    %28 = vector.load %arg6[%c0_31, %c0_32, %c0_33] : memref<1x22x22xf32, #tpu.memory_space<vmem>>, vector<1x22x3xf32>
    tpu.vector_store %arg6[%c0_31, %c0_32, %c0_33], %25 {strides = array<i32>} : memref<1x22x22xf32, #tpu.memory_space<vmem>>, vector<1x22x3xf32>,
    %c0_34 = arith.constant 0 : index
    %c0_35 = arith.constant 0 : index
    %c19_36 = arith.constant 19 : index
    %29 = vector.load %arg6[%c0_34, %c0_35, %c19_36] : memref<1x22x22xf32, #tpu.memory_space<vmem>>, vector<1x22x3xf32>
    tpu.vector_store %arg6[%c0_34, %c0_35, %c19_36], %25 {strides = array<i32>} : memref<1x22x22xf32, #tpu.memory_space<vmem>>, vector<1x22x3xf32>,
    %c0_37 = arith.constant 0 : index
    %c3 = arith.constant 3 : index
    %c3_38 = arith.constant 3 : index
    %30 = vector.load %arg6[%c0_37, %c3, %c3_38] : memref<1x22x22xf32, #tpu.memory_space<vmem>>, vector<1x16x16xf32>
    tpu.vector_store %arg6[%c0_37, %c3, %c3_38], %1 {strides = array<i32>} : memref<1x22x22xf32, #tpu.memory_space<vmem>>, vector<1x16x16xf32>,
    %c0_39 = arith.constant 0 : index
    %c0_40 = arith.constant 0 : index
    %c0_41 = arith.constant 0 : index
    %31 = vector.load %arg7[%c0_39, %c0_40, %c0_41] : memref<1x22x22xf32, #tpu.memory_space<vmem>>, vector<1x3x22xf32>
    tpu.vector_store %arg7[%c0_39, %c0_40, %c0_41], %24 {strides = array<i32>} : memref<1x22x22xf32, #tpu.memory_space<vmem>>, vector<1x3x22xf32>,
    %c0_42 = arith.constant 0 : index
    %c19_43 = arith.constant 19 : index
    %c0_44 = arith.constant 0 : index
    %32 = vector.load %arg7[%c0_42, %c19_43, %c0_44] : memref<1x22x22xf32, #tpu.memory_space<vmem>>, vector<1x3x22xf32>
    tpu.vector_store %arg7[%c0_42, %c19_43, %c0_44], %24 {strides = array<i32>} : memref<1x22x22xf32, #tpu.memory_space<vmem>>, vector<1x3x22xf32>,
    %c0_45 = arith.constant 0 : index
    %c0_46 = arith.constant 0 : index
    %c0_47 = arith.constant 0 : index
    %33 = vector.load %arg7[%c0_45, %c0_46, %c0_47] : memref<1x22x22xf32, #tpu.memory_space<vmem>>, vector<1x22x3xf32>
    tpu.vector_store %arg7[%c0_45, %c0_46, %c0_47], %25 {strides = array<i32>} : memref<1x22x22xf32, #tpu.memory_space<vmem>>, vector<1x22x3xf32>,
    %c0_48 = arith.constant 0 : index
    %c0_49 = arith.constant 0 : index
    %c19_50 = arith.constant 19 : index
    %34 = vector.load %arg7[%c0_48, %c0_49, %c19_50] : memref<1x22x22xf32, #tpu.memory_space<vmem>>, vector<1x22x3xf32>
    tpu.vector_store %arg7[%c0_48, %c0_49, %c19_50], %25 {strides = array<i32>} : memref<1x22x22xf32, #tpu.memory_space<vmem>>, vector<1x22x3xf32>,
    %c0_51 = arith.constant 0 : index
    %c3_52 = arith.constant 3 : index
    %c3_53 = arith.constant 3 : index
    %35 = vector.load %arg7[%c0_51, %c3_52, %c3_53] : memref<1x22x22xf32, #tpu.memory_space<vmem>>, vector<1x16x16xf32>
    tpu.vector_store %arg7[%c0_51, %c3_52, %c3_53], %4 {strides = array<i32>} : memref<1x22x22xf32, #tpu.memory_space<vmem>>, vector<1x16x16xf32>,
    %c0_54 = arith.constant 0 : index
    %c0_55 = arith.constant 0 : index
    %c0_56 = arith.constant 0 : index
    %36 = vector.load %arg6[%c0_54, %c0_55, %c0_56] : memref<1x22x22xf32, #tpu.memory_space<vmem>>, vector<1x22x22xf32>
    %c0_57 = arith.constant 0 : index
    %c0_58 = arith.constant 0 : index
    %c0_59 = arith.constant 0 : index
    %37 = vector.load %arg7[%c0_57, %c0_58, %c0_59] : memref<1x22x22xf32, #tpu.memory_space<vmem>>, vector<1x22x22xf32>
    %cst_60 = arith.constant 0.000000e+00 : f32
    %38 = vector.broadcast %cst_60 : f32 to vector<1x16x16xf32>
    %39 = vector.extract_strided_slice %36 {offsets = [0, 0, 0], sizes = [1, 22, 16], strides = [1, 1, 1]} : vector<1x22x22xf32> to vector<1x22x16xf32>
    %40 = vector.extract_strided_slice %37 {offsets = [0, 0, 0], sizes = [1, 22, 16], strides = [1, 1, 1]} : vector<1x22x22xf32> to vector<1x22x16xf32>
    %c0_61 = arith.constant 0 : index
    %41 = memref.load %arg2[%c0_61] : memref<98xf32, #tpu.memory_space<smem>>
    %c49 = arith.constant 49 : index
    %42 = memref.load %arg2[%c49] : memref<98xf32, #tpu.memory_space<smem>>
    %43 = vector.extract_strided_slice %39 {offsets = [0, 0, 0], sizes = [1, 16, 16], strides = [1, 1, 1]} : vector<1x22x16xf32> to vector<1x16x16xf32>
    %44 = vector.broadcast %41 : f32 to vector<1x16x16xf32>
    %45 = arith.mulf %44, %43 : vector<1x16x16xf32>
    %46 = arith.addf %38, %45 : vector<1x16x16xf32>
    %47 = vector.extract_strided_slice %40 {offsets = [0, 0, 0], sizes = [1, 16, 16], strides = [1, 1, 1]} : vector<1x22x16xf32> to vector<1x16x16xf32>
    %48 = vector.broadcast %42 : f32 to vector<1x16x16xf32>
    %49 = arith.mulf %48, %47 : vector<1x16x16xf32>
    %50 = arith.addf %46, %49 : vector<1x16x16xf32>
    %c7 = arith.constant 7 : index
    %51 = memref.load %arg2[%c7] : memref<98xf32, #tpu.memory_space<smem>>
    %c56 = arith.constant 56 : index
    %52 = memref.load %arg2[%c56] : memref<98xf32, #tpu.memory_space<smem>>
    %53 = vector.extract_strided_slice %39 {offsets = [0, 1, 0], sizes = [1, 16, 16], strides = [1, 1, 1]} : vector<1x22x16xf32> to vector<1x16x16xf32>
    %54 = vector.broadcast %51 : f32 to vector<1x16x16xf32>
    %55 = arith.mulf %54, %53 : vector<1x16x16xf32>
    %56 = arith.addf %50, %55 : vector<1x16x16xf32>
    %57 = vector.extract_strided_slice %40 {offsets = [0, 1, 0], sizes = [1, 16, 16], strides = [1, 1, 1]} : vector<1x22x16xf32> to vector<1x16x16xf32>
    %58 = vector.broadcast %52 : f32 to vector<1x16x16xf32>
    %59 = arith.mulf %58, %57 : vector<1x16x16xf32>
    %60 = arith.addf %56, %59 : vector<1x16x16xf32>
    %c14 = arith.constant 14 : index
    %61 = memref.load %arg2[%c14] : memref<98xf32, #tpu.memory_space<smem>>
    %c63 = arith.constant 63 : index
    %62 = memref.load %arg2[%c63] : memref<98xf32, #tpu.memory_space<smem>>
    %63 = vector.extract_strided_slice %39 {offsets = [0, 2, 0], sizes = [1, 16, 16], strides = [1, 1, 1]} : vector<1x22x16xf32> to vector<1x16x16xf32>
    %64 = vector.broadcast %61 : f32 to vector<1x16x16xf32>
    %65 = arith.mulf %64, %63 : vector<1x16x16xf32>
    %66 = arith.addf %60, %65 : vector<1x16x16xf32>
    %67 = vector.extract_strided_slice %40 {offsets = [0, 2, 0], sizes = [1, 16, 16], strides = [1, 1, 1]} : vector<1x22x16xf32> to vector<1x16x16xf32>
    %68 = vector.broadcast %62 : f32 to vector<1x16x16xf32>
    %69 = arith.mulf %68, %67 : vector<1x16x16xf32>
    %70 = arith.addf %66, %69 : vector<1x16x16xf32>
    %c21 = arith.constant 21 : index
    %71 = memref.load %arg2[%c21] : memref<98xf32, #tpu.memory_space<smem>>
    %c70 = arith.constant 70 : index
    %72 = memref.load %arg2[%c70] : memref<98xf32, #tpu.memory_space<smem>>
    %73 = vector.extract_strided_slice %39 {offsets = [0, 3, 0], sizes = [1, 16, 16], strides = [1, 1, 1]} : vector<1x22x16xf32> to vector<1x16x16xf32>
    %74 = vector.broadcast %71 : f32 to vector<1x16x16xf32>
    %75 = arith.mulf %74, %73 : vector<1x16x16xf32>
    %76 = arith.addf %70, %75 : vector<1x16x16xf32>
    %77 = vector.extract_strided_slice %40 {offsets = [0, 3, 0], sizes = [1, 16, 16], strides = [1, 1, 1]} : vector<1x22x16xf32> to vector<1x16x16xf32>
    %78 = vector.broadcast %72 : f32 to vector<1x16x16xf32>
    %79 = arith.mulf %78, %77 : vector<1x16x16xf32>
    %80 = arith.addf %76, %79 : vector<1x16x16xf32>
    %c28 = arith.constant 28 : index
    %81 = memref.load %arg2[%c28] : memref<98xf32, #tpu.memory_space<smem>>
    %c77 = arith.constant 77 : index
    %82 = memref.load %arg2[%c77] : memref<98xf32, #tpu.memory_space<smem>>
    %83 = vector.extract_strided_slice %39 {offsets = [0, 4, 0], sizes = [1, 16, 16], strides = [1, 1, 1]} : vector<1x22x16xf32> to vector<1x16x16xf32>
    %84 = vector.broadcast %81 : f32 to vector<1x16x16xf32>
    %85 = arith.mulf %84, %83 : vector<1x16x16xf32>
    %86 = arith.addf %80, %85 : vector<1x16x16xf32>
    %87 = vector.extract_strided_slice %40 {offsets = [0, 4, 0], sizes = [1, 16, 16], strides = [1, 1, 1]} : vector<1x22x16xf32> to vector<1x16x16xf32>
    %88 = vector.broadcast %82 : f32 to vector<1x16x16xf32>
    %89 = arith.mulf %88, %87 : vector<1x16x16xf32>
    %90 = arith.addf %86, %89 : vector<1x16x16xf32>
    %c35 = arith.constant 35 : index
    %91 = memref.load %arg2[%c35] : memref<98xf32, #tpu.memory_space<smem>>
    %c84 = arith.constant 84 : index
    %92 = memref.load %arg2[%c84] : memref<98xf32, #tpu.memory_space<smem>>
    %93 = vector.extract_strided_slice %39 {offsets = [0, 5, 0], sizes = [1, 16, 16], strides = [1, 1, 1]} : vector<1x22x16xf32> to vector<1x16x16xf32>
    %94 = vector.broadcast %91 : f32 to vector<1x16x16xf32>
    %95 = arith.mulf %94, %93 : vector<1x16x16xf32>
    %96 = arith.addf %90, %95 : vector<1x16x16xf32>
    %97 = vector.extract_strided_slice %40 {offsets = [0, 5, 0], sizes = [1, 16, 16], strides = [1, 1, 1]} : vector<1x22x16xf32> to vector<1x16x16xf32>
    %98 = vector.broadcast %92 : f32 to vector<1x16x16xf32>
    %99 = arith.mulf %98, %97 : vector<1x16x16xf32>
    %100 = arith.addf %96, %99 : vector<1x16x16xf32>
    %c42 = arith.constant 42 : index
    %101 = memref.load %arg2[%c42] : memref<98xf32, #tpu.memory_space<smem>>
    %c91 = arith.constant 91 : index
    %102 = memref.load %arg2[%c91] : memref<98xf32, #tpu.memory_space<smem>>
    %103 = vector.extract_strided_slice %39 {offsets = [0, 6, 0], sizes = [1, 16, 16], strides = [1, 1, 1]} : vector<1x22x16xf32> to vector<1x16x16xf32>
    %104 = vector.broadcast %101 : f32 to vector<1x16x16xf32>
    %105 = arith.mulf %104, %103 : vector<1x16x16xf32>
    %106 = arith.addf %100, %105 : vector<1x16x16xf32>
    %107 = vector.extract_strided_slice %40 {offsets = [0, 6, 0], sizes = [1, 16, 16], strides = [1, 1, 1]} : vector<1x22x16xf32> to vector<1x16x16xf32>
    %108 = vector.broadcast %102 : f32 to vector<1x16x16xf32>
    %109 = arith.mulf %108, %107 : vector<1x16x16xf32>
    %110 = arith.addf %106, %109 : vector<1x16x16xf32>
    %111 = vector.extract_strided_slice %36 {offsets = [0, 0, 1], sizes = [1, 22, 16], strides = [1, 1, 1]} : vector<1x22x22xf32> to vector<1x22x16xf32>
    %112 = vector.extract_strided_slice %37 {offsets = [0, 0, 1], sizes = [1, 22, 16], strides = [1, 1, 1]} : vector<1x22x22xf32> to vector<1x22x16xf32>
    %c1 = arith.constant 1 : index
    %113 = memref.load %arg2[%c1] : memref<98xf32, #tpu.memory_space<smem>>
    %c50 = arith.constant 50 : index
    %114 = memref.load %arg2[%c50] : memref<98xf32, #tpu.memory_space<smem>>
    %115 = vector.extract_strided_slice %111 {offsets = [0, 0, 0], sizes = [1, 16, 16], strides = [1, 1, 1]} : vector<1x22x16xf32> to vector<1x16x16xf32>
    %116 = vector.broadcast %113 : f32 to vector<1x16x16xf32>
    %117 = arith.mulf %116, %115 : vector<1x16x16xf32>
    %118 = arith.addf %110, %117 : vector<1x16x16xf32>
    %119 = vector.extract_strided_slice %112 {offsets = [0, 0, 0], sizes = [1, 16, 16], strides = [1, 1, 1]} : vector<1x22x16xf32> to vector<1x16x16xf32>
    %120 = vector.broadcast %114 : f32 to vector<1x16x16xf32>
    %121 = arith.mulf %120, %119 : vector<1x16x16xf32>
    %122 = arith.addf %118, %121 : vector<1x16x16xf32>
    %c8_62 = arith.constant 8 : index
    %123 = memref.load %arg2[%c8_62] : memref<98xf32, #tpu.memory_space<smem>>
    %c57 = arith.constant 57 : index
    %124 = memref.load %arg2[%c57] : memref<98xf32, #tpu.memory_space<smem>>
    %125 = vector.extract_strided_slice %111 {offsets = [0, 1, 0], sizes = [1, 16, 16], strides = [1, 1, 1]} : vector<1x22x16xf32> to vector<1x16x16xf32>
    %126 = vector.broadcast %123 : f32 to vector<1x16x16xf32>
    %127 = arith.mulf %126, %125 : vector<1x16x16xf32>
    %128 = arith.addf %122, %127 : vector<1x16x16xf32>
    %129 = vector.extract_strided_slice %112 {offsets = [0, 1, 0], sizes = [1, 16, 16], strides = [1, 1, 1]} : vector<1x22x16xf32> to vector<1x16x16xf32>
    %130 = vector.broadcast %124 : f32 to vector<1x16x16xf32>
    %131 = arith.mulf %130, %129 : vector<1x16x16xf32>
    %132 = arith.addf %128, %131 : vector<1x16x16xf32>
    %c15 = arith.constant 15 : index
    %133 = memref.load %arg2[%c15] : memref<98xf32, #tpu.memory_space<smem>>
    %c64 = arith.constant 64 : index
    %134 = memref.load %arg2[%c64] : memref<98xf32, #tpu.memory_space<smem>>
    %135 = vector.extract_strided_slice %111 {offsets = [0, 2, 0], sizes = [1, 16, 16], strides = [1, 1, 1]} : vector<1x22x16xf32> to vector<1x16x16xf32>
    %136 = vector.broadcast %133 : f32 to vector<1x16x16xf32>
    %137 = arith.mulf %136, %135 : vector<1x16x16xf32>
    %138 = arith.addf %132, %137 : vector<1x16x16xf32>
    %139 = vector.extract_strided_slice %112 {offsets = [0, 2, 0], sizes = [1, 16, 16], strides = [1, 1, 1]} : vector<1x22x16xf32> to vector<1x16x16xf32>
    %140 = vector.broadcast %134 : f32 to vector<1x16x16xf32>
    %141 = arith.mulf %140, %139 : vector<1x16x16xf32>
    %142 = arith.addf %138, %141 : vector<1x16x16xf32>
    %c22 = arith.constant 22 : index
    %143 = memref.load %arg2[%c22] : memref<98xf32, #tpu.memory_space<smem>>
    %c71 = arith.constant 71 : index
    %144 = memref.load %arg2[%c71] : memref<98xf32, #tpu.memory_space<smem>>
    %145 = vector.extract_strided_slice %111 {offsets = [0, 3, 0], sizes = [1, 16, 16], strides = [1, 1, 1]} : vector<1x22x16xf32> to vector<1x16x16xf32>
    %146 = vector.broadcast %143 : f32 to vector<1x16x16xf32>
    %147 = arith.mulf %146, %145 : vector<1x16x16xf32>
    %148 = arith.addf %142, %147 : vector<1x16x16xf32>
    %149 = vector.extract_strided_slice %112 {offsets = [0, 3, 0], sizes = [1, 16, 16], strides = [1, 1, 1]} : vector<1x22x16xf32> to vector<1x16x16xf32>
    %150 = vector.broadcast %144 : f32 to vector<1x16x16xf32>
    %151 = arith.mulf %150, %149 : vector<1x16x16xf32>
    %152 = arith.addf %148, %151 : vector<1x16x16xf32>
    %c29 = arith.constant 29 : index
    %153 = memref.load %arg2[%c29] : memref<98xf32, #tpu.memory_space<smem>>
    %c78 = arith.constant 78 : index
    %154 = memref.load %arg2[%c78] : memref<98xf32, #tpu.memory_space<smem>>
    %155 = vector.extract_strided_slice %111 {offsets = [0, 4, 0], sizes = [1, 16, 16], strides = [1, 1, 1]} : vector<1x22x16xf32> to vector<1x16x16xf32>
    %156 = vector.broadcast %153 : f32 to vector<1x16x16xf32>
    %157 = arith.mulf %156, %155 : vector<1x16x16xf32>
    %158 = arith.addf %152, %157 : vector<1x16x16xf32>
    %159 = vector.extract_strided_slice %112 {offsets = [0, 4, 0], sizes = [1, 16, 16], strides = [1, 1, 1]} : vector<1x22x16xf32> to vector<1x16x16xf32>
    %160 = vector.broadcast %154 : f32 to vector<1x16x16xf32>
    %161 = arith.mulf %160, %159 : vector<1x16x16xf32>
    %162 = arith.addf %158, %161 : vector<1x16x16xf32>
    %c36 = arith.constant 36 : index
    %163 = memref.load %arg2[%c36] : memref<98xf32, #tpu.memory_space<smem>>
    %c85 = arith.constant 85 : index
    %164 = memref.load %arg2[%c85] : memref<98xf32, #tpu.memory_space<smem>>
    %165 = vector.extract_strided_slice %111 {offsets = [0, 5, 0], sizes = [1, 16, 16], strides = [1, 1, 1]} : vector<1x22x16xf32> to vector<1x16x16xf32>
    %166 = vector.broadcast %163 : f32 to vector<1x16x16xf32>
    %167 = arith.mulf %166, %165 : vector<1x16x16xf32>
    %168 = arith.addf %162, %167 : vector<1x16x16xf32>
    %169 = vector.extract_strided_slice %112 {offsets = [0, 5, 0], sizes = [1, 16, 16], strides = [1, 1, 1]} : vector<1x22x16xf32> to vector<1x16x16xf32>
    %170 = vector.broadcast %164 : f32 to vector<1x16x16xf32>
    %171 = arith.mulf %170, %169 : vector<1x16x16xf32>
    %172 = arith.addf %168, %171 : vector<1x16x16xf32>
    %c43 = arith.constant 43 : index
    %173 = memref.load %arg2[%c43] : memref<98xf32, #tpu.memory_space<smem>>
    %c92 = arith.constant 92 : index
    %174 = memref.load %arg2[%c92] : memref<98xf32, #tpu.memory_space<smem>>
    %175 = vector.extract_strided_slice %111 {offsets = [0, 6, 0], sizes = [1, 16, 16], strides = [1, 1, 1]} : vector<1x22x16xf32> to vector<1x16x16xf32>
    %176 = vector.broadcast %173 : f32 to vector<1x16x16xf32>
    %177 = arith.mulf %176, %175 : vector<1x16x16xf32>
    %178 = arith.addf %172, %177 : vector<1x16x16xf32>
    %179 = vector.extract_strided_slice %112 {offsets = [0, 6, 0], sizes = [1, 16, 16], strides = [1, 1, 1]} : vector<1x22x16xf32> to vector<1x16x16xf32>
    %180 = vector.broadcast %174 : f32 to vector<1x16x16xf32>
    %181 = arith.mulf %180, %179 : vector<1x16x16xf32>
    %182 = arith.addf %178, %181 : vector<1x16x16xf32>
    %183 = vector.extract_strided_slice %36 {offsets = [0, 0, 2], sizes = [1, 22, 16], strides = [1, 1, 1]} : vector<1x22x22xf32> to vector<1x22x16xf32>
    %184 = vector.extract_strided_slice %37 {offsets = [0, 0, 2], sizes = [1, 22, 16], strides = [1, 1, 1]} : vector<1x22x22xf32> to vector<1x22x16xf32>
    %c2 = arith.constant 2 : index
    %185 = memref.load %arg2[%c2] : memref<98xf32, #tpu.memory_space<smem>>
    %c51 = arith.constant 51 : index
    %186 = memref.load %arg2[%c51] : memref<98xf32, #tpu.memory_space<smem>>
    %187 = vector.extract_strided_slice %183 {offsets = [0, 0, 0], sizes = [1, 16, 16], strides = [1, 1, 1]} : vector<1x22x16xf32> to vector<1x16x16xf32>
    %188 = vector.broadcast %185 : f32 to vector<1x16x16xf32>
    %189 = arith.mulf %188, %187 : vector<1x16x16xf32>
    %190 = arith.addf %182, %189 : vector<1x16x16xf32>
    %191 = vector.extract_strided_slice %184 {offsets = [0, 0, 0], sizes = [1, 16, 16], strides = [1, 1, 1]} : vector<1x22x16xf32> to vector<1x16x16xf32>
    %192 = vector.broadcast %186 : f32 to vector<1x16x16xf32>
    %193 = arith.mulf %192, %191 : vector<1x16x16xf32>
    %194 = arith.addf %190, %193 : vector<1x16x16xf32>
    %c9 = arith.constant 9 : index
    %195 = memref.load %arg2[%c9] : memref<98xf32, #tpu.memory_space<smem>>
    %c58 = arith.constant 58 : index
    %196 = memref.load %arg2[%c58] : memref<98xf32, #tpu.memory_space<smem>>
    %197 = vector.extract_strided_slice %183 {offsets = [0, 1, 0], sizes = [1, 16, 16], strides = [1, 1, 1]} : vector<1x22x16xf32> to vector<1x16x16xf32>
    %198 = vector.broadcast %195 : f32 to vector<1x16x16xf32>
    %199 = arith.mulf %198, %197 : vector<1x16x16xf32>
    %200 = arith.addf %194, %199 : vector<1x16x16xf32>
    %201 = vector.extract_strided_slice %184 {offsets = [0, 1, 0], sizes = [1, 16, 16], strides = [1, 1, 1]} : vector<1x22x16xf32> to vector<1x16x16xf32>
    %202 = vector.broadcast %196 : f32 to vector<1x16x16xf32>
    %203 = arith.mulf %202, %201 : vector<1x16x16xf32>
    %204 = arith.addf %200, %203 : vector<1x16x16xf32>
    %c16 = arith.constant 16 : index
    %205 = memref.load %arg2[%c16] : memref<98xf32, #tpu.memory_space<smem>>
    %c65 = arith.constant 65 : index
    %206 = memref.load %arg2[%c65] : memref<98xf32, #tpu.memory_space<smem>>
    %207 = vector.extract_strided_slice %183 {offsets = [0, 2, 0], sizes = [1, 16, 16], strides = [1, 1, 1]} : vector<1x22x16xf32> to vector<1x16x16xf32>
    %208 = vector.broadcast %205 : f32 to vector<1x16x16xf32>
    %209 = arith.mulf %208, %207 : vector<1x16x16xf32>
    %210 = arith.addf %204, %209 : vector<1x16x16xf32>
    %211 = vector.extract_strided_slice %184 {offsets = [0, 2, 0], sizes = [1, 16, 16], strides = [1, 1, 1]} : vector<1x22x16xf32> to vector<1x16x16xf32>
    %212 = vector.broadcast %206 : f32 to vector<1x16x16xf32>
    %213 = arith.mulf %212, %211 : vector<1x16x16xf32>
    %214 = arith.addf %210, %213 : vector<1x16x16xf32>
    %c23 = arith.constant 23 : index
    %215 = memref.load %arg2[%c23] : memref<98xf32, #tpu.memory_space<smem>>
    %c72 = arith.constant 72 : index
    %216 = memref.load %arg2[%c72] : memref<98xf32, #tpu.memory_space<smem>>
    %217 = vector.extract_strided_slice %183 {offsets = [0, 3, 0], sizes = [1, 16, 16], strides = [1, 1, 1]} : vector<1x22x16xf32> to vector<1x16x16xf32>
    %218 = vector.broadcast %215 : f32 to vector<1x16x16xf32>
    %219 = arith.mulf %218, %217 : vector<1x16x16xf32>
    %220 = arith.addf %214, %219 : vector<1x16x16xf32>
    %221 = vector.extract_strided_slice %184 {offsets = [0, 3, 0], sizes = [1, 16, 16], strides = [1, 1, 1]} : vector<1x22x16xf32> to vector<1x16x16xf32>
    %222 = vector.broadcast %216 : f32 to vector<1x16x16xf32>
    %223 = arith.mulf %222, %221 : vector<1x16x16xf32>
    %224 = arith.addf %220, %223 : vector<1x16x16xf32>
    %c30 = arith.constant 30 : index
    %225 = memref.load %arg2[%c30] : memref<98xf32, #tpu.memory_space<smem>>
    %c79 = arith.constant 79 : index
    %226 = memref.load %arg2[%c79] : memref<98xf32, #tpu.memory_space<smem>>
    %227 = vector.extract_strided_slice %183 {offsets = [0, 4, 0], sizes = [1, 16, 16], strides = [1, 1, 1]} : vector<1x22x16xf32> to vector<1x16x16xf32>
    %228 = vector.broadcast %225 : f32 to vector<1x16x16xf32>
    %229 = arith.mulf %228, %227 : vector<1x16x16xf32>
    %230 = arith.addf %224, %229 : vector<1x16x16xf32>
    %231 = vector.extract_strided_slice %184 {offsets = [0, 4, 0], sizes = [1, 16, 16], strides = [1, 1, 1]} : vector<1x22x16xf32> to vector<1x16x16xf32>
    %232 = vector.broadcast %226 : f32 to vector<1x16x16xf32>
    %233 = arith.mulf %232, %231 : vector<1x16x16xf32>
    %234 = arith.addf %230, %233 : vector<1x16x16xf32>
    %c37 = arith.constant 37 : index
    %235 = memref.load %arg2[%c37] : memref<98xf32, #tpu.memory_space<smem>>
    %c86 = arith.constant 86 : index
    %236 = memref.load %arg2[%c86] : memref<98xf32, #tpu.memory_space<smem>>
    %237 = vector.extract_strided_slice %183 {offsets = [0, 5, 0], sizes = [1, 16, 16], strides = [1, 1, 1]} : vector<1x22x16xf32> to vector<1x16x16xf32>
    %238 = vector.broadcast %235 : f32 to vector<1x16x16xf32>
    %239 = arith.mulf %238, %237 : vector<1x16x16xf32>
    %240 = arith.addf %234, %239 : vector<1x16x16xf32>
    %241 = vector.extract_strided_slice %184 {offsets = [0, 5, 0], sizes = [1, 16, 16], strides = [1, 1, 1]} : vector<1x22x16xf32> to vector<1x16x16xf32>
    %242 = vector.broadcast %236 : f32 to vector<1x16x16xf32>
    %243 = arith.mulf %242, %241 : vector<1x16x16xf32>
    %244 = arith.addf %240, %243 : vector<1x16x16xf32>
    %c44 = arith.constant 44 : index
    %245 = memref.load %arg2[%c44] : memref<98xf32, #tpu.memory_space<smem>>
    %c93 = arith.constant 93 : index
    %246 = memref.load %arg2[%c93] : memref<98xf32, #tpu.memory_space<smem>>
    %247 = vector.extract_strided_slice %183 {offsets = [0, 6, 0], sizes = [1, 16, 16], strides = [1, 1, 1]} : vector<1x22x16xf32> to vector<1x16x16xf32>
    %248 = vector.broadcast %245 : f32 to vector<1x16x16xf32>
    %249 = arith.mulf %248, %247 : vector<1x16x16xf32>
    %250 = arith.addf %244, %249 : vector<1x16x16xf32>
    %251 = vector.extract_strided_slice %184 {offsets = [0, 6, 0], sizes = [1, 16, 16], strides = [1, 1, 1]} : vector<1x22x16xf32> to vector<1x16x16xf32>
    %252 = vector.broadcast %246 : f32 to vector<1x16x16xf32>
    %253 = arith.mulf %252, %251 : vector<1x16x16xf32>
    %254 = arith.addf %250, %253 : vector<1x16x16xf32>
    %255 = vector.extract_strided_slice %36 {offsets = [0, 0, 3], sizes = [1, 22, 16], strides = [1, 1, 1]} : vector<1x22x22xf32> to vector<1x22x16xf32>
    %256 = vector.extract_strided_slice %37 {offsets = [0, 0, 3], sizes = [1, 22, 16], strides = [1, 1, 1]} : vector<1x22x22xf32> to vector<1x22x16xf32>
    %c3_63 = arith.constant 3 : index
    %257 = memref.load %arg2[%c3_63] : memref<98xf32, #tpu.memory_space<smem>>
    %c52 = arith.constant 52 : index
    %258 = memref.load %arg2[%c52] : memref<98xf32, #tpu.memory_space<smem>>
    %259 = vector.extract_strided_slice %255 {offsets = [0, 0, 0], sizes = [1, 16, 16], strides = [1, 1, 1]} : vector<1x22x16xf32> to vector<1x16x16xf32>
    %260 = vector.broadcast %257 : f32 to vector<1x16x16xf32>
    %261 = arith.mulf %260, %259 : vector<1x16x16xf32>
    %262 = arith.addf %254, %261 : vector<1x16x16xf32>
    %263 = vector.extract_strided_slice %256 {offsets = [0, 0, 0], sizes = [1, 16, 16], strides = [1, 1, 1]} : vector<1x22x16xf32> to vector<1x16x16xf32>
    %264 = vector.broadcast %258 : f32 to vector<1x16x16xf32>
    %265 = arith.mulf %264, %263 : vector<1x16x16xf32>
    %266 = arith.addf %262, %265 : vector<1x16x16xf32>
    %c10 = arith.constant 10 : index
    %267 = memref.load %arg2[%c10] : memref<98xf32, #tpu.memory_space<smem>>
    %c59 = arith.constant 59 : index
    %268 = memref.load %arg2[%c59] : memref<98xf32, #tpu.memory_space<smem>>
    %269 = vector.extract_strided_slice %255 {offsets = [0, 1, 0], sizes = [1, 16, 16], strides = [1, 1, 1]} : vector<1x22x16xf32> to vector<1x16x16xf32>
    %270 = vector.broadcast %267 : f32 to vector<1x16x16xf32>
    %271 = arith.mulf %270, %269 : vector<1x16x16xf32>
    %272 = arith.addf %266, %271 : vector<1x16x16xf32>
    %273 = vector.extract_strided_slice %256 {offsets = [0, 1, 0], sizes = [1, 16, 16], strides = [1, 1, 1]} : vector<1x22x16xf32> to vector<1x16x16xf32>
    %274 = vector.broadcast %268 : f32 to vector<1x16x16xf32>
    %275 = arith.mulf %274, %273 : vector<1x16x16xf32>
    %276 = arith.addf %272, %275 : vector<1x16x16xf32>
    %c17 = arith.constant 17 : index
    %277 = memref.load %arg2[%c17] : memref<98xf32, #tpu.memory_space<smem>>
    %c66 = arith.constant 66 : index
    %278 = memref.load %arg2[%c66] : memref<98xf32, #tpu.memory_space<smem>>
    %279 = vector.extract_strided_slice %255 {offsets = [0, 2, 0], sizes = [1, 16, 16], strides = [1, 1, 1]} : vector<1x22x16xf32> to vector<1x16x16xf32>
    %280 = vector.broadcast %277 : f32 to vector<1x16x16xf32>
    %281 = arith.mulf %280, %279 : vector<1x16x16xf32>
    %282 = arith.addf %276, %281 : vector<1x16x16xf32>
    %283 = vector.extract_strided_slice %256 {offsets = [0, 2, 0], sizes = [1, 16, 16], strides = [1, 1, 1]} : vector<1x22x16xf32> to vector<1x16x16xf32>
    %284 = vector.broadcast %278 : f32 to vector<1x16x16xf32>
    %285 = arith.mulf %284, %283 : vector<1x16x16xf32>
    %286 = arith.addf %282, %285 : vector<1x16x16xf32>
    %c24 = arith.constant 24 : index
    %287 = memref.load %arg2[%c24] : memref<98xf32, #tpu.memory_space<smem>>
    %c73 = arith.constant 73 : index
    %288 = memref.load %arg2[%c73] : memref<98xf32, #tpu.memory_space<smem>>
    %289 = vector.extract_strided_slice %255 {offsets = [0, 3, 0], sizes = [1, 16, 16], strides = [1, 1, 1]} : vector<1x22x16xf32> to vector<1x16x16xf32>
    %290 = vector.broadcast %287 : f32 to vector<1x16x16xf32>
    %291 = arith.mulf %290, %289 : vector<1x16x16xf32>
    %292 = arith.addf %286, %291 : vector<1x16x16xf32>
    %293 = vector.extract_strided_slice %256 {offsets = [0, 3, 0], sizes = [1, 16, 16], strides = [1, 1, 1]} : vector<1x22x16xf32> to vector<1x16x16xf32>
    %294 = vector.broadcast %288 : f32 to vector<1x16x16xf32>
    %295 = arith.mulf %294, %293 : vector<1x16x16xf32>
    %296 = arith.addf %292, %295 : vector<1x16x16xf32>
    %c31 = arith.constant 31 : index
    %297 = memref.load %arg2[%c31] : memref<98xf32, #tpu.memory_space<smem>>
    %c80 = arith.constant 80 : index
    %298 = memref.load %arg2[%c80] : memref<98xf32, #tpu.memory_space<smem>>
    %299 = vector.extract_strided_slice %255 {offsets = [0, 4, 0], sizes = [1, 16, 16], strides = [1, 1, 1]} : vector<1x22x16xf32> to vector<1x16x16xf32>
    %300 = vector.broadcast %297 : f32 to vector<1x16x16xf32>
    %301 = arith.mulf %300, %299 : vector<1x16x16xf32>
    %302 = arith.addf %296, %301 : vector<1x16x16xf32>
    %303 = vector.extract_strided_slice %256 {offsets = [0, 4, 0], sizes = [1, 16, 16], strides = [1, 1, 1]} : vector<1x22x16xf32> to vector<1x16x16xf32>
    %304 = vector.broadcast %298 : f32 to vector<1x16x16xf32>
    %305 = arith.mulf %304, %303 : vector<1x16x16xf32>
    %306 = arith.addf %302, %305 : vector<1x16x16xf32>
    %c38 = arith.constant 38 : index
    %307 = memref.load %arg2[%c38] : memref<98xf32, #tpu.memory_space<smem>>
    %c87 = arith.constant 87 : index
    %308 = memref.load %arg2[%c87] : memref<98xf32, #tpu.memory_space<smem>>
    %309 = vector.extract_strided_slice %255 {offsets = [0, 5, 0], sizes = [1, 16, 16], strides = [1, 1, 1]} : vector<1x22x16xf32> to vector<1x16x16xf32>
    %310 = vector.broadcast %307 : f32 to vector<1x16x16xf32>
    %311 = arith.mulf %310, %309 : vector<1x16x16xf32>
    %312 = arith.addf %306, %311 : vector<1x16x16xf32>
    %313 = vector.extract_strided_slice %256 {offsets = [0, 5, 0], sizes = [1, 16, 16], strides = [1, 1, 1]} : vector<1x22x16xf32> to vector<1x16x16xf32>
    %314 = vector.broadcast %308 : f32 to vector<1x16x16xf32>
    %315 = arith.mulf %314, %313 : vector<1x16x16xf32>
    %316 = arith.addf %312, %315 : vector<1x16x16xf32>
    %c45 = arith.constant 45 : index
    %317 = memref.load %arg2[%c45] : memref<98xf32, #tpu.memory_space<smem>>
    %c94 = arith.constant 94 : index
    %318 = memref.load %arg2[%c94] : memref<98xf32, #tpu.memory_space<smem>>
    %319 = vector.extract_strided_slice %255 {offsets = [0, 6, 0], sizes = [1, 16, 16], strides = [1, 1, 1]} : vector<1x22x16xf32> to vector<1x16x16xf32>
    %320 = vector.broadcast %317 : f32 to vector<1x16x16xf32>
    %321 = arith.mulf %320, %319 : vector<1x16x16xf32>
    %322 = arith.addf %316, %321 : vector<1x16x16xf32>
    %323 = vector.extract_strided_slice %256 {offsets = [0, 6, 0], sizes = [1, 16, 16], strides = [1, 1, 1]} : vector<1x22x16xf32> to vector<1x16x16xf32>
    %324 = vector.broadcast %318 : f32 to vector<1x16x16xf32>
    %325 = arith.mulf %324, %323 : vector<1x16x16xf32>
    %326 = arith.addf %322, %325 : vector<1x16x16xf32>
    %327 = vector.extract_strided_slice %36 {offsets = [0, 0, 4], sizes = [1, 22, 16], strides = [1, 1, 1]} : vector<1x22x22xf32> to vector<1x22x16xf32>
    %328 = vector.extract_strided_slice %37 {offsets = [0, 0, 4], sizes = [1, 22, 16], strides = [1, 1, 1]} : vector<1x22x22xf32> to vector<1x22x16xf32>
    %c4 = arith.constant 4 : index
    %329 = memref.load %arg2[%c4] : memref<98xf32, #tpu.memory_space<smem>>
    %c53 = arith.constant 53 : index
    %330 = memref.load %arg2[%c53] : memref<98xf32, #tpu.memory_space<smem>>
    %331 = vector.extract_strided_slice %327 {offsets = [0, 0, 0], sizes = [1, 16, 16], strides = [1, 1, 1]} : vector<1x22x16xf32> to vector<1x16x16xf32>
    %332 = vector.broadcast %329 : f32 to vector<1x16x16xf32>
    %333 = arith.mulf %332, %331 : vector<1x16x16xf32>
    %334 = arith.addf %326, %333 : vector<1x16x16xf32>
    %335 = vector.extract_strided_slice %328 {offsets = [0, 0, 0], sizes = [1, 16, 16], strides = [1, 1, 1]} : vector<1x22x16xf32> to vector<1x16x16xf32>
    %336 = vector.broadcast %330 : f32 to vector<1x16x16xf32>
    %337 = arith.mulf %336, %335 : vector<1x16x16xf32>
    %338 = arith.addf %334, %337 : vector<1x16x16xf32>
    %c11 = arith.constant 11 : index
    %339 = memref.load %arg2[%c11] : memref<98xf32, #tpu.memory_space<smem>>
    %c60 = arith.constant 60 : index
    %340 = memref.load %arg2[%c60] : memref<98xf32, #tpu.memory_space<smem>>
    %341 = vector.extract_strided_slice %327 {offsets = [0, 1, 0], sizes = [1, 16, 16], strides = [1, 1, 1]} : vector<1x22x16xf32> to vector<1x16x16xf32>
    %342 = vector.broadcast %339 : f32 to vector<1x16x16xf32>
    %343 = arith.mulf %342, %341 : vector<1x16x16xf32>
    %344 = arith.addf %338, %343 : vector<1x16x16xf32>
    %345 = vector.extract_strided_slice %328 {offsets = [0, 1, 0], sizes = [1, 16, 16], strides = [1, 1, 1]} : vector<1x22x16xf32> to vector<1x16x16xf32>
    %346 = vector.broadcast %340 : f32 to vector<1x16x16xf32>
    %347 = arith.mulf %346, %345 : vector<1x16x16xf32>
    %348 = arith.addf %344, %347 : vector<1x16x16xf32>
    %c18 = arith.constant 18 : index
    %349 = memref.load %arg2[%c18] : memref<98xf32, #tpu.memory_space<smem>>
    %c67 = arith.constant 67 : index
    %350 = memref.load %arg2[%c67] : memref<98xf32, #tpu.memory_space<smem>>
    %351 = vector.extract_strided_slice %327 {offsets = [0, 2, 0], sizes = [1, 16, 16], strides = [1, 1, 1]} : vector<1x22x16xf32> to vector<1x16x16xf32>
    %352 = vector.broadcast %349 : f32 to vector<1x16x16xf32>
    %353 = arith.mulf %352, %351 : vector<1x16x16xf32>
    %354 = arith.addf %348, %353 : vector<1x16x16xf32>
    %355 = vector.extract_strided_slice %328 {offsets = [0, 2, 0], sizes = [1, 16, 16], strides = [1, 1, 1]} : vector<1x22x16xf32> to vector<1x16x16xf32>
    %356 = vector.broadcast %350 : f32 to vector<1x16x16xf32>
    %357 = arith.mulf %356, %355 : vector<1x16x16xf32>
    %358 = arith.addf %354, %357 : vector<1x16x16xf32>
    %c25 = arith.constant 25 : index
    %359 = memref.load %arg2[%c25] : memref<98xf32, #tpu.memory_space<smem>>
    %c74 = arith.constant 74 : index
    %360 = memref.load %arg2[%c74] : memref<98xf32, #tpu.memory_space<smem>>
    %361 = vector.extract_strided_slice %327 {offsets = [0, 3, 0], sizes = [1, 16, 16], strides = [1, 1, 1]} : vector<1x22x16xf32> to vector<1x16x16xf32>
    %362 = vector.broadcast %359 : f32 to vector<1x16x16xf32>
    %363 = arith.mulf %362, %361 : vector<1x16x16xf32>
    %364 = arith.addf %358, %363 : vector<1x16x16xf32>
    %365 = vector.extract_strided_slice %328 {offsets = [0, 3, 0], sizes = [1, 16, 16], strides = [1, 1, 1]} : vector<1x22x16xf32> to vector<1x16x16xf32>
    %366 = vector.broadcast %360 : f32 to vector<1x16x16xf32>
    %367 = arith.mulf %366, %365 : vector<1x16x16xf32>
    %368 = arith.addf %364, %367 : vector<1x16x16xf32>
    %c32 = arith.constant 32 : index
    %369 = memref.load %arg2[%c32] : memref<98xf32, #tpu.memory_space<smem>>
    %c81 = arith.constant 81 : index
    %370 = memref.load %arg2[%c81] : memref<98xf32, #tpu.memory_space<smem>>
    %371 = vector.extract_strided_slice %327 {offsets = [0, 4, 0], sizes = [1, 16, 16], strides = [1, 1, 1]} : vector<1x22x16xf32> to vector<1x16x16xf32>
    %372 = vector.broadcast %369 : f32 to vector<1x16x16xf32>
    %373 = arith.mulf %372, %371 : vector<1x16x16xf32>
    %374 = arith.addf %368, %373 : vector<1x16x16xf32>
    %375 = vector.extract_strided_slice %328 {offsets = [0, 4, 0], sizes = [1, 16, 16], strides = [1, 1, 1]} : vector<1x22x16xf32> to vector<1x16x16xf32>
    %376 = vector.broadcast %370 : f32 to vector<1x16x16xf32>
    %377 = arith.mulf %376, %375 : vector<1x16x16xf32>
    %378 = arith.addf %374, %377 : vector<1x16x16xf32>
    %c39 = arith.constant 39 : index
    %379 = memref.load %arg2[%c39] : memref<98xf32, #tpu.memory_space<smem>>
    %c88 = arith.constant 88 : index
    %380 = memref.load %arg2[%c88] : memref<98xf32, #tpu.memory_space<smem>>
    %381 = vector.extract_strided_slice %327 {offsets = [0, 5, 0], sizes = [1, 16, 16], strides = [1, 1, 1]} : vector<1x22x16xf32> to vector<1x16x16xf32>
    %382 = vector.broadcast %379 : f32 to vector<1x16x16xf32>
    %383 = arith.mulf %382, %381 : vector<1x16x16xf32>
    %384 = arith.addf %378, %383 : vector<1x16x16xf32>
    %385 = vector.extract_strided_slice %328 {offsets = [0, 5, 0], sizes = [1, 16, 16], strides = [1, 1, 1]} : vector<1x22x16xf32> to vector<1x16x16xf32>
    %386 = vector.broadcast %380 : f32 to vector<1x16x16xf32>
    %387 = arith.mulf %386, %385 : vector<1x16x16xf32>
    %388 = arith.addf %384, %387 : vector<1x16x16xf32>
    %c46 = arith.constant 46 : index
    %389 = memref.load %arg2[%c46] : memref<98xf32, #tpu.memory_space<smem>>
    %c95 = arith.constant 95 : index
    %390 = memref.load %arg2[%c95] : memref<98xf32, #tpu.memory_space<smem>>
    %391 = vector.extract_strided_slice %327 {offsets = [0, 6, 0], sizes = [1, 16, 16], strides = [1, 1, 1]} : vector<1x22x16xf32> to vector<1x16x16xf32>
    %392 = vector.broadcast %389 : f32 to vector<1x16x16xf32>
    %393 = arith.mulf %392, %391 : vector<1x16x16xf32>
    %394 = arith.addf %388, %393 : vector<1x16x16xf32>
    %395 = vector.extract_strided_slice %328 {offsets = [0, 6, 0], sizes = [1, 16, 16], strides = [1, 1, 1]} : vector<1x22x16xf32> to vector<1x16x16xf32>
    %396 = vector.broadcast %390 : f32 to vector<1x16x16xf32>
    %397 = arith.mulf %396, %395 : vector<1x16x16xf32>
    %398 = arith.addf %394, %397 : vector<1x16x16xf32>
    %399 = vector.extract_strided_slice %36 {offsets = [0, 0, 5], sizes = [1, 22, 16], strides = [1, 1, 1]} : vector<1x22x22xf32> to vector<1x22x16xf32>
    %400 = vector.extract_strided_slice %37 {offsets = [0, 0, 5], sizes = [1, 22, 16], strides = [1, 1, 1]} : vector<1x22x22xf32> to vector<1x22x16xf32>
    %c5 = arith.constant 5 : index
    %401 = memref.load %arg2[%c5] : memref<98xf32, #tpu.memory_space<smem>>
    %c54 = arith.constant 54 : index
    %402 = memref.load %arg2[%c54] : memref<98xf32, #tpu.memory_space<smem>>
    %403 = vector.extract_strided_slice %399 {offsets = [0, 0, 0], sizes = [1, 16, 16], strides = [1, 1, 1]} : vector<1x22x16xf32> to vector<1x16x16xf32>
    %404 = vector.broadcast %401 : f32 to vector<1x16x16xf32>
    %405 = arith.mulf %404, %403 : vector<1x16x16xf32>
    %406 = arith.addf %398, %405 : vector<1x16x16xf32>
    %407 = vector.extract_strided_slice %400 {offsets = [0, 0, 0], sizes = [1, 16, 16], strides = [1, 1, 1]} : vector<1x22x16xf32> to vector<1x16x16xf32>
    %408 = vector.broadcast %402 : f32 to vector<1x16x16xf32>
    %409 = arith.mulf %408, %407 : vector<1x16x16xf32>
    %410 = arith.addf %406, %409 : vector<1x16x16xf32>
    %c12 = arith.constant 12 : index
    %411 = memref.load %arg2[%c12] : memref<98xf32, #tpu.memory_space<smem>>
    %c61 = arith.constant 61 : index
    %412 = memref.load %arg2[%c61] : memref<98xf32, #tpu.memory_space<smem>>
    %413 = vector.extract_strided_slice %399 {offsets = [0, 1, 0], sizes = [1, 16, 16], strides = [1, 1, 1]} : vector<1x22x16xf32> to vector<1x16x16xf32>
    %414 = vector.broadcast %411 : f32 to vector<1x16x16xf32>
    %415 = arith.mulf %414, %413 : vector<1x16x16xf32>
    %416 = arith.addf %410, %415 : vector<1x16x16xf32>
    %417 = vector.extract_strided_slice %400 {offsets = [0, 1, 0], sizes = [1, 16, 16], strides = [1, 1, 1]} : vector<1x22x16xf32> to vector<1x16x16xf32>
    %418 = vector.broadcast %412 : f32 to vector<1x16x16xf32>
    %419 = arith.mulf %418, %417 : vector<1x16x16xf32>
    %420 = arith.addf %416, %419 : vector<1x16x16xf32>
    %c19_64 = arith.constant 19 : index
    %421 = memref.load %arg2[%c19_64] : memref<98xf32, #tpu.memory_space<smem>>
    %c68 = arith.constant 68 : index
    %422 = memref.load %arg2[%c68] : memref<98xf32, #tpu.memory_space<smem>>
    %423 = vector.extract_strided_slice %399 {offsets = [0, 2, 0], sizes = [1, 16, 16], strides = [1, 1, 1]} : vector<1x22x16xf32> to vector<1x16x16xf32>
    %424 = vector.broadcast %421 : f32 to vector<1x16x16xf32>
    %425 = arith.mulf %424, %423 : vector<1x16x16xf32>
    %426 = arith.addf %420, %425 : vector<1x16x16xf32>
    %427 = vector.extract_strided_slice %400 {offsets = [0, 2, 0], sizes = [1, 16, 16], strides = [1, 1, 1]} : vector<1x22x16xf32> to vector<1x16x16xf32>
    %428 = vector.broadcast %422 : f32 to vector<1x16x16xf32>
    %429 = arith.mulf %428, %427 : vector<1x16x16xf32>
    %430 = arith.addf %426, %429 : vector<1x16x16xf32>
    %c26 = arith.constant 26 : index
    %431 = memref.load %arg2[%c26] : memref<98xf32, #tpu.memory_space<smem>>
    %c75 = arith.constant 75 : index
    %432 = memref.load %arg2[%c75] : memref<98xf32, #tpu.memory_space<smem>>
    %433 = vector.extract_strided_slice %399 {offsets = [0, 3, 0], sizes = [1, 16, 16], strides = [1, 1, 1]} : vector<1x22x16xf32> to vector<1x16x16xf32>
    %434 = vector.broadcast %431 : f32 to vector<1x16x16xf32>
    %435 = arith.mulf %434, %433 : vector<1x16x16xf32>
    %436 = arith.addf %430, %435 : vector<1x16x16xf32>
    %437 = vector.extract_strided_slice %400 {offsets = [0, 3, 0], sizes = [1, 16, 16], strides = [1, 1, 1]} : vector<1x22x16xf32> to vector<1x16x16xf32>
    %438 = vector.broadcast %432 : f32 to vector<1x16x16xf32>
    %439 = arith.mulf %438, %437 : vector<1x16x16xf32>
    %440 = arith.addf %436, %439 : vector<1x16x16xf32>
    %c33 = arith.constant 33 : index
    %441 = memref.load %arg2[%c33] : memref<98xf32, #tpu.memory_space<smem>>
    %c82 = arith.constant 82 : index
    %442 = memref.load %arg2[%c82] : memref<98xf32, #tpu.memory_space<smem>>
    %443 = vector.extract_strided_slice %399 {offsets = [0, 4, 0], sizes = [1, 16, 16], strides = [1, 1, 1]} : vector<1x22x16xf32> to vector<1x16x16xf32>
    %444 = vector.broadcast %441 : f32 to vector<1x16x16xf32>
    %445 = arith.mulf %444, %443 : vector<1x16x16xf32>
    %446 = arith.addf %440, %445 : vector<1x16x16xf32>
    %447 = vector.extract_strided_slice %400 {offsets = [0, 4, 0], sizes = [1, 16, 16], strides = [1, 1, 1]} : vector<1x22x16xf32> to vector<1x16x16xf32>
    %448 = vector.broadcast %442 : f32 to vector<1x16x16xf32>
    %449 = arith.mulf %448, %447 : vector<1x16x16xf32>
    %450 = arith.addf %446, %449 : vector<1x16x16xf32>
    %c40 = arith.constant 40 : index
    %451 = memref.load %arg2[%c40] : memref<98xf32, #tpu.memory_space<smem>>
    %c89 = arith.constant 89 : index
    %452 = memref.load %arg2[%c89] : memref<98xf32, #tpu.memory_space<smem>>
    %453 = vector.extract_strided_slice %399 {offsets = [0, 5, 0], sizes = [1, 16, 16], strides = [1, 1, 1]} : vector<1x22x16xf32> to vector<1x16x16xf32>
    %454 = vector.broadcast %451 : f32 to vector<1x16x16xf32>
    %455 = arith.mulf %454, %453 : vector<1x16x16xf32>
    %456 = arith.addf %450, %455 : vector<1x16x16xf32>
    %457 = vector.extract_strided_slice %400 {offsets = [0, 5, 0], sizes = [1, 16, 16], strides = [1, 1, 1]} : vector<1x22x16xf32> to vector<1x16x16xf32>
    %458 = vector.broadcast %452 : f32 to vector<1x16x16xf32>
    %459 = arith.mulf %458, %457 : vector<1x16x16xf32>
    %460 = arith.addf %456, %459 : vector<1x16x16xf32>
    %c47 = arith.constant 47 : index
    %461 = memref.load %arg2[%c47] : memref<98xf32, #tpu.memory_space<smem>>
    %c96 = arith.constant 96 : index
    %462 = memref.load %arg2[%c96] : memref<98xf32, #tpu.memory_space<smem>>
    %463 = vector.extract_strided_slice %399 {offsets = [0, 6, 0], sizes = [1, 16, 16], strides = [1, 1, 1]} : vector<1x22x16xf32> to vector<1x16x16xf32>
    %464 = vector.broadcast %461 : f32 to vector<1x16x16xf32>
    %465 = arith.mulf %464, %463 : vector<1x16x16xf32>
    %466 = arith.addf %460, %465 : vector<1x16x16xf32>
    %467 = vector.extract_strided_slice %400 {offsets = [0, 6, 0], sizes = [1, 16, 16], strides = [1, 1, 1]} : vector<1x22x16xf32> to vector<1x16x16xf32>
    %468 = vector.broadcast %462 : f32 to vector<1x16x16xf32>
    %469 = arith.mulf %468, %467 : vector<1x16x16xf32>
    %470 = arith.addf %466, %469 : vector<1x16x16xf32>
    %471 = vector.extract_strided_slice %36 {offsets = [0, 0, 6], sizes = [1, 22, 16], strides = [1, 1, 1]} : vector<1x22x22xf32> to vector<1x22x16xf32>
    %472 = vector.extract_strided_slice %37 {offsets = [0, 0, 6], sizes = [1, 22, 16], strides = [1, 1, 1]} : vector<1x22x22xf32> to vector<1x22x16xf32>
    %c6 = arith.constant 6 : index
    %473 = memref.load %arg2[%c6] : memref<98xf32, #tpu.memory_space<smem>>
    %c55 = arith.constant 55 : index
    %474 = memref.load %arg2[%c55] : memref<98xf32, #tpu.memory_space<smem>>
    %475 = vector.extract_strided_slice %471 {offsets = [0, 0, 0], sizes = [1, 16, 16], strides = [1, 1, 1]} : vector<1x22x16xf32> to vector<1x16x16xf32>
    %476 = vector.broadcast %473 : f32 to vector<1x16x16xf32>
    %477 = arith.mulf %476, %475 : vector<1x16x16xf32>
    %478 = arith.addf %470, %477 : vector<1x16x16xf32>
    %479 = vector.extract_strided_slice %472 {offsets = [0, 0, 0], sizes = [1, 16, 16], strides = [1, 1, 1]} : vector<1x22x16xf32> to vector<1x16x16xf32>
    %480 = vector.broadcast %474 : f32 to vector<1x16x16xf32>
    %481 = arith.mulf %480, %479 : vector<1x16x16xf32>
    %482 = arith.addf %478, %481 : vector<1x16x16xf32>
    %c13 = arith.constant 13 : index
    %483 = memref.load %arg2[%c13] : memref<98xf32, #tpu.memory_space<smem>>
    %c62 = arith.constant 62 : index
    %484 = memref.load %arg2[%c62] : memref<98xf32, #tpu.memory_space<smem>>
    %485 = vector.extract_strided_slice %471 {offsets = [0, 1, 0], sizes = [1, 16, 16], strides = [1, 1, 1]} : vector<1x22x16xf32> to vector<1x16x16xf32>
    %486 = vector.broadcast %483 : f32 to vector<1x16x16xf32>
    %487 = arith.mulf %486, %485 : vector<1x16x16xf32>
    %488 = arith.addf %482, %487 : vector<1x16x16xf32>
    %489 = vector.extract_strided_slice %472 {offsets = [0, 1, 0], sizes = [1, 16, 16], strides = [1, 1, 1]} : vector<1x22x16xf32> to vector<1x16x16xf32>
    %490 = vector.broadcast %484 : f32 to vector<1x16x16xf32>
    %491 = arith.mulf %490, %489 : vector<1x16x16xf32>
    %492 = arith.addf %488, %491 : vector<1x16x16xf32>
    %c20 = arith.constant 20 : index
    %493 = memref.load %arg2[%c20] : memref<98xf32, #tpu.memory_space<smem>>
    %c69 = arith.constant 69 : index
    %494 = memref.load %arg2[%c69] : memref<98xf32, #tpu.memory_space<smem>>
    %495 = vector.extract_strided_slice %471 {offsets = [0, 2, 0], sizes = [1, 16, 16], strides = [1, 1, 1]} : vector<1x22x16xf32> to vector<1x16x16xf32>
    %496 = vector.broadcast %493 : f32 to vector<1x16x16xf32>
    %497 = arith.mulf %496, %495 : vector<1x16x16xf32>
    %498 = arith.addf %492, %497 : vector<1x16x16xf32>
    %499 = vector.extract_strided_slice %472 {offsets = [0, 2, 0], sizes = [1, 16, 16], strides = [1, 1, 1]} : vector<1x22x16xf32> to vector<1x16x16xf32>
    %500 = vector.broadcast %494 : f32 to vector<1x16x16xf32>
    %501 = arith.mulf %500, %499 : vector<1x16x16xf32>
    %502 = arith.addf %498, %501 : vector<1x16x16xf32>
    %c27 = arith.constant 27 : index
    %503 = memref.load %arg2[%c27] : memref<98xf32, #tpu.memory_space<smem>>
    %c76 = arith.constant 76 : index
    %504 = memref.load %arg2[%c76] : memref<98xf32, #tpu.memory_space<smem>>
    %505 = vector.extract_strided_slice %471 {offsets = [0, 3, 0], sizes = [1, 16, 16], strides = [1, 1, 1]} : vector<1x22x16xf32> to vector<1x16x16xf32>
    %506 = vector.broadcast %503 : f32 to vector<1x16x16xf32>
    %507 = arith.mulf %506, %505 : vector<1x16x16xf32>
    %508 = arith.addf %502, %507 : vector<1x16x16xf32>
    %509 = vector.extract_strided_slice %472 {offsets = [0, 3, 0], sizes = [1, 16, 16], strides = [1, 1, 1]} : vector<1x22x16xf32> to vector<1x16x16xf32>
    %510 = vector.broadcast %504 : f32 to vector<1x16x16xf32>
    %511 = arith.mulf %510, %509 : vector<1x16x16xf32>
    %512 = arith.addf %508, %511 : vector<1x16x16xf32>
    %c34 = arith.constant 34 : index
    %513 = memref.load %arg2[%c34] : memref<98xf32, #tpu.memory_space<smem>>
    %c83 = arith.constant 83 : index
    %514 = memref.load %arg2[%c83] : memref<98xf32, #tpu.memory_space<smem>>
    %515 = vector.extract_strided_slice %471 {offsets = [0, 4, 0], sizes = [1, 16, 16], strides = [1, 1, 1]} : vector<1x22x16xf32> to vector<1x16x16xf32>
    %516 = vector.broadcast %513 : f32 to vector<1x16x16xf32>
    %517 = arith.mulf %516, %515 : vector<1x16x16xf32>
    %518 = arith.addf %512, %517 : vector<1x16x16xf32>
    %519 = vector.extract_strided_slice %472 {offsets = [0, 4, 0], sizes = [1, 16, 16], strides = [1, 1, 1]} : vector<1x22x16xf32> to vector<1x16x16xf32>
    %520 = vector.broadcast %514 : f32 to vector<1x16x16xf32>
    %521 = arith.mulf %520, %519 : vector<1x16x16xf32>
    %522 = arith.addf %518, %521 : vector<1x16x16xf32>
    %c41 = arith.constant 41 : index
    %523 = memref.load %arg2[%c41] : memref<98xf32, #tpu.memory_space<smem>>
    %c90 = arith.constant 90 : index
    %524 = memref.load %arg2[%c90] : memref<98xf32, #tpu.memory_space<smem>>
    %525 = vector.extract_strided_slice %471 {offsets = [0, 5, 0], sizes = [1, 16, 16], strides = [1, 1, 1]} : vector<1x22x16xf32> to vector<1x16x16xf32>
    %526 = vector.broadcast %523 : f32 to vector<1x16x16xf32>
    %527 = arith.mulf %526, %525 : vector<1x16x16xf32>
    %528 = arith.addf %522, %527 : vector<1x16x16xf32>
    %529 = vector.extract_strided_slice %472 {offsets = [0, 5, 0], sizes = [1, 16, 16], strides = [1, 1, 1]} : vector<1x22x16xf32> to vector<1x16x16xf32>
    %530 = vector.broadcast %524 : f32 to vector<1x16x16xf32>
    %531 = arith.mulf %530, %529 : vector<1x16x16xf32>
    %532 = arith.addf %528, %531 : vector<1x16x16xf32>
    %c48 = arith.constant 48 : index
    %533 = memref.load %arg2[%c48] : memref<98xf32, #tpu.memory_space<smem>>
    %c97 = arith.constant 97 : index
    %534 = memref.load %arg2[%c97] : memref<98xf32, #tpu.memory_space<smem>>
    %535 = vector.extract_strided_slice %471 {offsets = [0, 6, 0], sizes = [1, 16, 16], strides = [1, 1, 1]} : vector<1x22x16xf32> to vector<1x16x16xf32>
    %536 = vector.broadcast %533 : f32 to vector<1x16x16xf32>
    %537 = arith.mulf %536, %535 : vector<1x16x16xf32>
    %538 = arith.addf %532, %537 : vector<1x16x16xf32>
    %539 = vector.extract_strided_slice %472 {offsets = [0, 6, 0], sizes = [1, 16, 16], strides = [1, 1, 1]} : vector<1x22x16xf32> to vector<1x16x16xf32>
    %540 = vector.broadcast %534 : f32 to vector<1x16x16xf32>
    %541 = arith.mulf %540, %539 : vector<1x16x16xf32>
    %542 = arith.addf %538, %541 : vector<1x16x16xf32>
    %cst_65 = arith.constant 0.000000e+00 : f32
    %543 = vector.broadcast %cst_65 : f32 to vector<1x16x16xf32>
    %544 = arith.maximumf %542, %543 : vector<1x16x16xf32>
    %545 = arith.negf %544 : vector<1x16x16xf32>
    %546 = math.exp %545 : vector<1x16x16xf32>
    %cst_66 = arith.constant 1.000000e+00 : f32
    %547 = vector.broadcast %cst_66 : f32 to vector<1x16x16xf32>
    %548 = arith.addf %547, %546 : vector<1x16x16xf32>
    %549 = arith.divf %547, %548 : vector<1x16x16xf32>
    %cst_67 = arith.constant 0.000000e+00 : f32
    %550 = vector.broadcast %cst_67 : f32 to vector<1x3x10xf32>
    %cst_68 = arith.constant 0.000000e+00 : f32
    %551 = vector.broadcast %cst_68 : f32 to vector<1x22x3xf32>
    %c0_69 = arith.constant 0 : index
    %c0_70 = arith.constant 0 : index
    %c0_71 = arith.constant 0 : index
    %552 = vector.load %arg8[%c0_69, %c0_70, %c0_71] : memref<1x22x10xf32, #tpu.memory_space<vmem>>, vector<1x3x10xf32>
    tpu.vector_store %arg8[%c0_69, %c0_70, %c0_71], %550 {strides = array<i32>} : memref<1x22x10xf32, #tpu.memory_space<vmem>>, vector<1x3x10xf32>,
    %c0_72 = arith.constant 0 : index
    %c19_73 = arith.constant 19 : index
    %c0_74 = arith.constant 0 : index
    %553 = vector.load %arg8[%c0_72, %c19_73, %c0_74] : memref<1x22x10xf32, #tpu.memory_space<vmem>>, vector<1x3x10xf32>
    tpu.vector_store %arg8[%c0_72, %c19_73, %c0_74], %550 {strides = array<i32>} : memref<1x22x10xf32, #tpu.memory_space<vmem>>, vector<1x3x10xf32>,
    %c0_75 = arith.constant 0 : index
    %c0_76 = arith.constant 0 : index
    %c0_77 = arith.constant 0 : index
    %554 = vector.load %arg8[%c0_75, %c0_76, %c0_77] : memref<1x22x10xf32, #tpu.memory_space<vmem>>, vector<1x22x3xf32>
    tpu.vector_store %arg8[%c0_75, %c0_76, %c0_77], %551 {strides = array<i32>} : memref<1x22x10xf32, #tpu.memory_space<vmem>>, vector<1x22x3xf32>,
    %c0_78 = arith.constant 0 : index
    %c0_79 = arith.constant 0 : index
    %c7_80 = arith.constant 7 : index
    %555 = vector.load %arg8[%c0_78, %c0_79, %c7_80] : memref<1x22x10xf32, #tpu.memory_space<vmem>>, vector<1x22x3xf32>
    tpu.vector_store %arg8[%c0_78, %c0_79, %c7_80], %551 {strides = array<i32>} : memref<1x22x10xf32, #tpu.memory_space<vmem>>, vector<1x22x3xf32>,
    %c0_81 = arith.constant 0 : index
    %c3_82 = arith.constant 3 : index
    %c3_83 = arith.constant 3 : index
    %556 = vector.load %arg8[%c0_81, %c3_82, %c3_83] : memref<1x22x10xf32, #tpu.memory_space<vmem>>, vector<1x16x4xf32>
    tpu.vector_store %arg8[%c0_81, %c3_82, %c3_83], %20 {strides = array<i32>} : memref<1x22x10xf32, #tpu.memory_space<vmem>>, vector<1x16x4xf32>,
    %c0_84 = arith.constant 0 : index
    %c0_85 = arith.constant 0 : index
    %c0_86 = arith.constant 0 : index
    %557 = vector.load %arg9[%c0_84, %c0_85, %c0_86] : memref<1x22x10xf32, #tpu.memory_space<vmem>>, vector<1x3x10xf32>
    tpu.vector_store %arg9[%c0_84, %c0_85, %c0_86], %550 {strides = array<i32>} : memref<1x22x10xf32, #tpu.memory_space<vmem>>, vector<1x3x10xf32>,
    %c0_87 = arith.constant 0 : index
    %c19_88 = arith.constant 19 : index
    %c0_89 = arith.constant 0 : index
    %558 = vector.load %arg9[%c0_87, %c19_88, %c0_89] : memref<1x22x10xf32, #tpu.memory_space<vmem>>, vector<1x3x10xf32>
    tpu.vector_store %arg9[%c0_87, %c19_88, %c0_89], %550 {strides = array<i32>} : memref<1x22x10xf32, #tpu.memory_space<vmem>>, vector<1x3x10xf32>,
    %c0_90 = arith.constant 0 : index
    %c0_91 = arith.constant 0 : index
    %c0_92 = arith.constant 0 : index
    %559 = vector.load %arg9[%c0_90, %c0_91, %c0_92] : memref<1x22x10xf32, #tpu.memory_space<vmem>>, vector<1x22x3xf32>
    tpu.vector_store %arg9[%c0_90, %c0_91, %c0_92], %551 {strides = array<i32>} : memref<1x22x10xf32, #tpu.memory_space<vmem>>, vector<1x22x3xf32>,
    %c0_93 = arith.constant 0 : index
    %c0_94 = arith.constant 0 : index
    %c7_95 = arith.constant 7 : index
    %560 = vector.load %arg9[%c0_93, %c0_94, %c7_95] : memref<1x22x10xf32, #tpu.memory_space<vmem>>, vector<1x22x3xf32>
    tpu.vector_store %arg9[%c0_93, %c0_94, %c7_95], %551 {strides = array<i32>} : memref<1x22x10xf32, #tpu.memory_space<vmem>>, vector<1x22x3xf32>,
    %c0_96 = arith.constant 0 : index
    %c3_97 = arith.constant 3 : index
    %c3_98 = arith.constant 3 : index
    %561 = vector.load %arg9[%c0_96, %c3_97, %c3_98] : memref<1x22x10xf32, #tpu.memory_space<vmem>>, vector<1x16x4xf32>
    tpu.vector_store %arg9[%c0_96, %c3_97, %c3_98], %21 {strides = array<i32>} : memref<1x22x10xf32, #tpu.memory_space<vmem>>, vector<1x16x4xf32>,
    %c0_99 = arith.constant 0 : index
    %c0_100 = arith.constant 0 : index
    %c0_101 = arith.constant 0 : index
    %562 = vector.load %arg8[%c0_99, %c0_100, %c0_101] : memref<1x22x10xf32, #tpu.memory_space<vmem>>, vector<1x22x10xf32>
    %c0_102 = arith.constant 0 : index
    %c0_103 = arith.constant 0 : index
    %c0_104 = arith.constant 0 : index
    %563 = vector.load %arg9[%c0_102, %c0_103, %c0_104] : memref<1x22x10xf32, #tpu.memory_space<vmem>>, vector<1x22x10xf32>
    %cst_105 = arith.constant 0.000000e+00 : f32
    %564 = vector.broadcast %cst_105 : f32 to vector<1x16x4xf32>
    %565 = vector.extract_strided_slice %562 {offsets = [0, 0, 0], sizes = [1, 22, 4], strides = [1, 1, 1]} : vector<1x22x10xf32> to vector<1x22x4xf32>
    %566 = vector.extract_strided_slice %563 {offsets = [0, 0, 0], sizes = [1, 22, 4], strides = [1, 1, 1]} : vector<1x22x10xf32> to vector<1x22x4xf32>
    %c0_106 = arith.constant 0 : index
    %567 = memref.load %arg3[%c0_106] : memref<98xf32, #tpu.memory_space<smem>>
    %c49_107 = arith.constant 49 : index
    %568 = memref.load %arg3[%c49_107] : memref<98xf32, #tpu.memory_space<smem>>
    %569 = vector.extract_strided_slice %565 {offsets = [0, 0, 0], sizes = [1, 16, 4], strides = [1, 1, 1]} : vector<1x22x4xf32> to vector<1x16x4xf32>
    %570 = vector.broadcast %567 : f32 to vector<1x16x4xf32>
    %571 = arith.mulf %570, %569 : vector<1x16x4xf32>
    %572 = arith.addf %564, %571 : vector<1x16x4xf32>
    %573 = vector.extract_strided_slice %566 {offsets = [0, 0, 0], sizes = [1, 16, 4], strides = [1, 1, 1]} : vector<1x22x4xf32> to vector<1x16x4xf32>
    %574 = vector.broadcast %568 : f32 to vector<1x16x4xf32>
    %575 = arith.mulf %574, %573 : vector<1x16x4xf32>
    %576 = arith.addf %572, %575 : vector<1x16x4xf32>
    %c7_108 = arith.constant 7 : index
    %577 = memref.load %arg3[%c7_108] : memref<98xf32, #tpu.memory_space<smem>>
    %c56_109 = arith.constant 56 : index
    %578 = memref.load %arg3[%c56_109] : memref<98xf32, #tpu.memory_space<smem>>
    %579 = vector.extract_strided_slice %565 {offsets = [0, 1, 0], sizes = [1, 16, 4], strides = [1, 1, 1]} : vector<1x22x4xf32> to vector<1x16x4xf32>
    %580 = vector.broadcast %577 : f32 to vector<1x16x4xf32>
    %581 = arith.mulf %580, %579 : vector<1x16x4xf32>
    %582 = arith.addf %576, %581 : vector<1x16x4xf32>
    %583 = vector.extract_strided_slice %566 {offsets = [0, 1, 0], sizes = [1, 16, 4], strides = [1, 1, 1]} : vector<1x22x4xf32> to vector<1x16x4xf32>
    %584 = vector.broadcast %578 : f32 to vector<1x16x4xf32>
    %585 = arith.mulf %584, %583 : vector<1x16x4xf32>
    %586 = arith.addf %582, %585 : vector<1x16x4xf32>
    %c14_110 = arith.constant 14 : index
    %587 = memref.load %arg3[%c14_110] : memref<98xf32, #tpu.memory_space<smem>>
    %c63_111 = arith.constant 63 : index
    %588 = memref.load %arg3[%c63_111] : memref<98xf32, #tpu.memory_space<smem>>
    %589 = vector.extract_strided_slice %565 {offsets = [0, 2, 0], sizes = [1, 16, 4], strides = [1, 1, 1]} : vector<1x22x4xf32> to vector<1x16x4xf32>
    %590 = vector.broadcast %587 : f32 to vector<1x16x4xf32>
    %591 = arith.mulf %590, %589 : vector<1x16x4xf32>
    %592 = arith.addf %586, %591 : vector<1x16x4xf32>
    %593 = vector.extract_strided_slice %566 {offsets = [0, 2, 0], sizes = [1, 16, 4], strides = [1, 1, 1]} : vector<1x22x4xf32> to vector<1x16x4xf32>
    %594 = vector.broadcast %588 : f32 to vector<1x16x4xf32>
    %595 = arith.mulf %594, %593 : vector<1x16x4xf32>
    %596 = arith.addf %592, %595 : vector<1x16x4xf32>
    %c21_112 = arith.constant 21 : index
    %597 = memref.load %arg3[%c21_112] : memref<98xf32, #tpu.memory_space<smem>>
    %c70_113 = arith.constant 70 : index
    %598 = memref.load %arg3[%c70_113] : memref<98xf32, #tpu.memory_space<smem>>
    %599 = vector.extract_strided_slice %565 {offsets = [0, 3, 0], sizes = [1, 16, 4], strides = [1, 1, 1]} : vector<1x22x4xf32> to vector<1x16x4xf32>
    %600 = vector.broadcast %597 : f32 to vector<1x16x4xf32>
    %601 = arith.mulf %600, %599 : vector<1x16x4xf32>
    %602 = arith.addf %596, %601 : vector<1x16x4xf32>
    %603 = vector.extract_strided_slice %566 {offsets = [0, 3, 0], sizes = [1, 16, 4], strides = [1, 1, 1]} : vector<1x22x4xf32> to vector<1x16x4xf32>
    %604 = vector.broadcast %598 : f32 to vector<1x16x4xf32>
    %605 = arith.mulf %604, %603 : vector<1x16x4xf32>
    %606 = arith.addf %602, %605 : vector<1x16x4xf32>
    %c28_114 = arith.constant 28 : index
    %607 = memref.load %arg3[%c28_114] : memref<98xf32, #tpu.memory_space<smem>>
    %c77_115 = arith.constant 77 : index
    %608 = memref.load %arg3[%c77_115] : memref<98xf32, #tpu.memory_space<smem>>
    %609 = vector.extract_strided_slice %565 {offsets = [0, 4, 0], sizes = [1, 16, 4], strides = [1, 1, 1]} : vector<1x22x4xf32> to vector<1x16x4xf32>
    %610 = vector.broadcast %607 : f32 to vector<1x16x4xf32>
    %611 = arith.mulf %610, %609 : vector<1x16x4xf32>
    %612 = arith.addf %606, %611 : vector<1x16x4xf32>
    %613 = vector.extract_strided_slice %566 {offsets = [0, 4, 0], sizes = [1, 16, 4], strides = [1, 1, 1]} : vector<1x22x4xf32> to vector<1x16x4xf32>
    %614 = vector.broadcast %608 : f32 to vector<1x16x4xf32>
    %615 = arith.mulf %614, %613 : vector<1x16x4xf32>
    %616 = arith.addf %612, %615 : vector<1x16x4xf32>
    %c35_116 = arith.constant 35 : index
    %617 = memref.load %arg3[%c35_116] : memref<98xf32, #tpu.memory_space<smem>>
    %c84_117 = arith.constant 84 : index
    %618 = memref.load %arg3[%c84_117] : memref<98xf32, #tpu.memory_space<smem>>
    %619 = vector.extract_strided_slice %565 {offsets = [0, 5, 0], sizes = [1, 16, 4], strides = [1, 1, 1]} : vector<1x22x4xf32> to vector<1x16x4xf32>
    %620 = vector.broadcast %617 : f32 to vector<1x16x4xf32>
    %621 = arith.mulf %620, %619 : vector<1x16x4xf32>
    %622 = arith.addf %616, %621 : vector<1x16x4xf32>
    %623 = vector.extract_strided_slice %566 {offsets = [0, 5, 0], sizes = [1, 16, 4], strides = [1, 1, 1]} : vector<1x22x4xf32> to vector<1x16x4xf32>
    %624 = vector.broadcast %618 : f32 to vector<1x16x4xf32>
    %625 = arith.mulf %624, %623 : vector<1x16x4xf32>
    %626 = arith.addf %622, %625 : vector<1x16x4xf32>
    %c42_118 = arith.constant 42 : index
    %627 = memref.load %arg3[%c42_118] : memref<98xf32, #tpu.memory_space<smem>>
    %c91_119 = arith.constant 91 : index
    %628 = memref.load %arg3[%c91_119] : memref<98xf32, #tpu.memory_space<smem>>
    %629 = vector.extract_strided_slice %565 {offsets = [0, 6, 0], sizes = [1, 16, 4], strides = [1, 1, 1]} : vector<1x22x4xf32> to vector<1x16x4xf32>
    %630 = vector.broadcast %627 : f32 to vector<1x16x4xf32>
    %631 = arith.mulf %630, %629 : vector<1x16x4xf32>
    %632 = arith.addf %626, %631 : vector<1x16x4xf32>
    %633 = vector.extract_strided_slice %566 {offsets = [0, 6, 0], sizes = [1, 16, 4], strides = [1, 1, 1]} : vector<1x22x4xf32> to vector<1x16x4xf32>
    %634 = vector.broadcast %628 : f32 to vector<1x16x4xf32>
    %635 = arith.mulf %634, %633 : vector<1x16x4xf32>
    %636 = arith.addf %632, %635 : vector<1x16x4xf32>
    %637 = vector.extract_strided_slice %562 {offsets = [0, 0, 1], sizes = [1, 22, 4], strides = [1, 1, 1]} : vector<1x22x10xf32> to vector<1x22x4xf32>
    %638 = vector.extract_strided_slice %563 {offsets = [0, 0, 1], sizes = [1, 22, 4], strides = [1, 1, 1]} : vector<1x22x10xf32> to vector<1x22x4xf32>
    %c1_120 = arith.constant 1 : index
    %639 = memref.load %arg3[%c1_120] : memref<98xf32, #tpu.memory_space<smem>>
    %c50_121 = arith.constant 50 : index
    %640 = memref.load %arg3[%c50_121] : memref<98xf32, #tpu.memory_space<smem>>
    %641 = vector.extract_strided_slice %637 {offsets = [0, 0, 0], sizes = [1, 16, 4], strides = [1, 1, 1]} : vector<1x22x4xf32> to vector<1x16x4xf32>
    %642 = vector.broadcast %639 : f32 to vector<1x16x4xf32>
    %643 = arith.mulf %642, %641 : vector<1x16x4xf32>
    %644 = arith.addf %636, %643 : vector<1x16x4xf32>
    %645 = vector.extract_strided_slice %638 {offsets = [0, 0, 0], sizes = [1, 16, 4], strides = [1, 1, 1]} : vector<1x22x4xf32> to vector<1x16x4xf32>
    %646 = vector.broadcast %640 : f32 to vector<1x16x4xf32>
    %647 = arith.mulf %646, %645 : vector<1x16x4xf32>
    %648 = arith.addf %644, %647 : vector<1x16x4xf32>
    %c8_122 = arith.constant 8 : index
    %649 = memref.load %arg3[%c8_122] : memref<98xf32, #tpu.memory_space<smem>>
    %c57_123 = arith.constant 57 : index
    %650 = memref.load %arg3[%c57_123] : memref<98xf32, #tpu.memory_space<smem>>
    %651 = vector.extract_strided_slice %637 {offsets = [0, 1, 0], sizes = [1, 16, 4], strides = [1, 1, 1]} : vector<1x22x4xf32> to vector<1x16x4xf32>
    %652 = vector.broadcast %649 : f32 to vector<1x16x4xf32>
    %653 = arith.mulf %652, %651 : vector<1x16x4xf32>
    %654 = arith.addf %648, %653 : vector<1x16x4xf32>
    %655 = vector.extract_strided_slice %638 {offsets = [0, 1, 0], sizes = [1, 16, 4], strides = [1, 1, 1]} : vector<1x22x4xf32> to vector<1x16x4xf32>
    %656 = vector.broadcast %650 : f32 to vector<1x16x4xf32>
    %657 = arith.mulf %656, %655 : vector<1x16x4xf32>
    %658 = arith.addf %654, %657 : vector<1x16x4xf32>
    %c15_124 = arith.constant 15 : index
    %659 = memref.load %arg3[%c15_124] : memref<98xf32, #tpu.memory_space<smem>>
    %c64_125 = arith.constant 64 : index
    %660 = memref.load %arg3[%c64_125] : memref<98xf32, #tpu.memory_space<smem>>
    %661 = vector.extract_strided_slice %637 {offsets = [0, 2, 0], sizes = [1, 16, 4], strides = [1, 1, 1]} : vector<1x22x4xf32> to vector<1x16x4xf32>
    %662 = vector.broadcast %659 : f32 to vector<1x16x4xf32>
    %663 = arith.mulf %662, %661 : vector<1x16x4xf32>
    %664 = arith.addf %658, %663 : vector<1x16x4xf32>
    %665 = vector.extract_strided_slice %638 {offsets = [0, 2, 0], sizes = [1, 16, 4], strides = [1, 1, 1]} : vector<1x22x4xf32> to vector<1x16x4xf32>
    %666 = vector.broadcast %660 : f32 to vector<1x16x4xf32>
    %667 = arith.mulf %666, %665 : vector<1x16x4xf32>
    %668 = arith.addf %664, %667 : vector<1x16x4xf32>
    %c22_126 = arith.constant 22 : index
    %669 = memref.load %arg3[%c22_126] : memref<98xf32, #tpu.memory_space<smem>>
    %c71_127 = arith.constant 71 : index
    %670 = memref.load %arg3[%c71_127] : memref<98xf32, #tpu.memory_space<smem>>
    %671 = vector.extract_strided_slice %637 {offsets = [0, 3, 0], sizes = [1, 16, 4], strides = [1, 1, 1]} : vector<1x22x4xf32> to vector<1x16x4xf32>
    %672 = vector.broadcast %669 : f32 to vector<1x16x4xf32>
    %673 = arith.mulf %672, %671 : vector<1x16x4xf32>
    %674 = arith.addf %668, %673 : vector<1x16x4xf32>
    %675 = vector.extract_strided_slice %638 {offsets = [0, 3, 0], sizes = [1, 16, 4], strides = [1, 1, 1]} : vector<1x22x4xf32> to vector<1x16x4xf32>
    %676 = vector.broadcast %670 : f32 to vector<1x16x4xf32>
    %677 = arith.mulf %676, %675 : vector<1x16x4xf32>
    %678 = arith.addf %674, %677 : vector<1x16x4xf32>
    %c29_128 = arith.constant 29 : index
    %679 = memref.load %arg3[%c29_128] : memref<98xf32, #tpu.memory_space<smem>>
    %c78_129 = arith.constant 78 : index
    %680 = memref.load %arg3[%c78_129] : memref<98xf32, #tpu.memory_space<smem>>
    %681 = vector.extract_strided_slice %637 {offsets = [0, 4, 0], sizes = [1, 16, 4], strides = [1, 1, 1]} : vector<1x22x4xf32> to vector<1x16x4xf32>
    %682 = vector.broadcast %679 : f32 to vector<1x16x4xf32>
    %683 = arith.mulf %682, %681 : vector<1x16x4xf32>
    %684 = arith.addf %678, %683 : vector<1x16x4xf32>
    %685 = vector.extract_strided_slice %638 {offsets = [0, 4, 0], sizes = [1, 16, 4], strides = [1, 1, 1]} : vector<1x22x4xf32> to vector<1x16x4xf32>
    %686 = vector.broadcast %680 : f32 to vector<1x16x4xf32>
    %687 = arith.mulf %686, %685 : vector<1x16x4xf32>
    %688 = arith.addf %684, %687 : vector<1x16x4xf32>
    %c36_130 = arith.constant 36 : index
    %689 = memref.load %arg3[%c36_130] : memref<98xf32, #tpu.memory_space<smem>>
    %c85_131 = arith.constant 85 : index
    %690 = memref.load %arg3[%c85_131] : memref<98xf32, #tpu.memory_space<smem>>
    %691 = vector.extract_strided_slice %637 {offsets = [0, 5, 0], sizes = [1, 16, 4], strides = [1, 1, 1]} : vector<1x22x4xf32> to vector<1x16x4xf32>
    %692 = vector.broadcast %689 : f32 to vector<1x16x4xf32>
    %693 = arith.mulf %692, %691 : vector<1x16x4xf32>
    %694 = arith.addf %688, %693 : vector<1x16x4xf32>
    %695 = vector.extract_strided_slice %638 {offsets = [0, 5, 0], sizes = [1, 16, 4], strides = [1, 1, 1]} : vector<1x22x4xf32> to vector<1x16x4xf32>
    %696 = vector.broadcast %690 : f32 to vector<1x16x4xf32>
    %697 = arith.mulf %696, %695 : vector<1x16x4xf32>
    %698 = arith.addf %694, %697 : vector<1x16x4xf32>
    %c43_132 = arith.constant 43 : index
    %699 = memref.load %arg3[%c43_132] : memref<98xf32, #tpu.memory_space<smem>>
    %c92_133 = arith.constant 92 : index
    %700 = memref.load %arg3[%c92_133] : memref<98xf32, #tpu.memory_space<smem>>
    %701 = vector.extract_strided_slice %637 {offsets = [0, 6, 0], sizes = [1, 16, 4], strides = [1, 1, 1]} : vector<1x22x4xf32> to vector<1x16x4xf32>
    %702 = vector.broadcast %699 : f32 to vector<1x16x4xf32>
    %703 = arith.mulf %702, %701 : vector<1x16x4xf32>
    %704 = arith.addf %698, %703 : vector<1x16x4xf32>
    %705 = vector.extract_strided_slice %638 {offsets = [0, 6, 0], sizes = [1, 16, 4], strides = [1, 1, 1]} : vector<1x22x4xf32> to vector<1x16x4xf32>
    %706 = vector.broadcast %700 : f32 to vector<1x16x4xf32>
    %707 = arith.mulf %706, %705 : vector<1x16x4xf32>
    %708 = arith.addf %704, %707 : vector<1x16x4xf32>
    %709 = vector.extract_strided_slice %562 {offsets = [0, 0, 2], sizes = [1, 22, 4], strides = [1, 1, 1]} : vector<1x22x10xf32> to vector<1x22x4xf32>
    %710 = vector.extract_strided_slice %563 {offsets = [0, 0, 2], sizes = [1, 22, 4], strides = [1, 1, 1]} : vector<1x22x10xf32> to vector<1x22x4xf32>
    %c2_134 = arith.constant 2 : index
    %711 = memref.load %arg3[%c2_134] : memref<98xf32, #tpu.memory_space<smem>>
    %c51_135 = arith.constant 51 : index
    %712 = memref.load %arg3[%c51_135] : memref<98xf32, #tpu.memory_space<smem>>
    %713 = vector.extract_strided_slice %709 {offsets = [0, 0, 0], sizes = [1, 16, 4], strides = [1, 1, 1]} : vector<1x22x4xf32> to vector<1x16x4xf32>
    %714 = vector.broadcast %711 : f32 to vector<1x16x4xf32>
    %715 = arith.mulf %714, %713 : vector<1x16x4xf32>
    %716 = arith.addf %708, %715 : vector<1x16x4xf32>
    %717 = vector.extract_strided_slice %710 {offsets = [0, 0, 0], sizes = [1, 16, 4], strides = [1, 1, 1]} : vector<1x22x4xf32> to vector<1x16x4xf32>
    %718 = vector.broadcast %712 : f32 to vector<1x16x4xf32>
    %719 = arith.mulf %718, %717 : vector<1x16x4xf32>
    %720 = arith.addf %716, %719 : vector<1x16x4xf32>
    %c9_136 = arith.constant 9 : index
    %721 = memref.load %arg3[%c9_136] : memref<98xf32, #tpu.memory_space<smem>>
    %c58_137 = arith.constant 58 : index
    %722 = memref.load %arg3[%c58_137] : memref<98xf32, #tpu.memory_space<smem>>
    %723 = vector.extract_strided_slice %709 {offsets = [0, 1, 0], sizes = [1, 16, 4], strides = [1, 1, 1]} : vector<1x22x4xf32> to vector<1x16x4xf32>
    %724 = vector.broadcast %721 : f32 to vector<1x16x4xf32>
    %725 = arith.mulf %724, %723 : vector<1x16x4xf32>
    %726 = arith.addf %720, %725 : vector<1x16x4xf32>
    %727 = vector.extract_strided_slice %710 {offsets = [0, 1, 0], sizes = [1, 16, 4], strides = [1, 1, 1]} : vector<1x22x4xf32> to vector<1x16x4xf32>
    %728 = vector.broadcast %722 : f32 to vector<1x16x4xf32>
    %729 = arith.mulf %728, %727 : vector<1x16x4xf32>
    %730 = arith.addf %726, %729 : vector<1x16x4xf32>
    %c16_138 = arith.constant 16 : index
    %731 = memref.load %arg3[%c16_138] : memref<98xf32, #tpu.memory_space<smem>>
    %c65_139 = arith.constant 65 : index
    %732 = memref.load %arg3[%c65_139] : memref<98xf32, #tpu.memory_space<smem>>
    %733 = vector.extract_strided_slice %709 {offsets = [0, 2, 0], sizes = [1, 16, 4], strides = [1, 1, 1]} : vector<1x22x4xf32> to vector<1x16x4xf32>
    %734 = vector.broadcast %731 : f32 to vector<1x16x4xf32>
    %735 = arith.mulf %734, %733 : vector<1x16x4xf32>
    %736 = arith.addf %730, %735 : vector<1x16x4xf32>
    %737 = vector.extract_strided_slice %710 {offsets = [0, 2, 0], sizes = [1, 16, 4], strides = [1, 1, 1]} : vector<1x22x4xf32> to vector<1x16x4xf32>
    %738 = vector.broadcast %732 : f32 to vector<1x16x4xf32>
    %739 = arith.mulf %738, %737 : vector<1x16x4xf32>
    %740 = arith.addf %736, %739 : vector<1x16x4xf32>
    %c23_140 = arith.constant 23 : index
    %741 = memref.load %arg3[%c23_140] : memref<98xf32, #tpu.memory_space<smem>>
    %c72_141 = arith.constant 72 : index
    %742 = memref.load %arg3[%c72_141] : memref<98xf32, #tpu.memory_space<smem>>
    %743 = vector.extract_strided_slice %709 {offsets = [0, 3, 0], sizes = [1, 16, 4], strides = [1, 1, 1]} : vector<1x22x4xf32> to vector<1x16x4xf32>
    %744 = vector.broadcast %741 : f32 to vector<1x16x4xf32>
    %745 = arith.mulf %744, %743 : vector<1x16x4xf32>
    %746 = arith.addf %740, %745 : vector<1x16x4xf32>
    %747 = vector.extract_strided_slice %710 {offsets = [0, 3, 0], sizes = [1, 16, 4], strides = [1, 1, 1]} : vector<1x22x4xf32> to vector<1x16x4xf32>
    %748 = vector.broadcast %742 : f32 to vector<1x16x4xf32>
    %749 = arith.mulf %748, %747 : vector<1x16x4xf32>
    %750 = arith.addf %746, %749 : vector<1x16x4xf32>
    %c30_142 = arith.constant 30 : index
    %751 = memref.load %arg3[%c30_142] : memref<98xf32, #tpu.memory_space<smem>>
    %c79_143 = arith.constant 79 : index
    %752 = memref.load %arg3[%c79_143] : memref<98xf32, #tpu.memory_space<smem>>
    %753 = vector.extract_strided_slice %709 {offsets = [0, 4, 0], sizes = [1, 16, 4], strides = [1, 1, 1]} : vector<1x22x4xf32> to vector<1x16x4xf32>
    %754 = vector.broadcast %751 : f32 to vector<1x16x4xf32>
    %755 = arith.mulf %754, %753 : vector<1x16x4xf32>
    %756 = arith.addf %750, %755 : vector<1x16x4xf32>
    %757 = vector.extract_strided_slice %710 {offsets = [0, 4, 0], sizes = [1, 16, 4], strides = [1, 1, 1]} : vector<1x22x4xf32> to vector<1x16x4xf32>
    %758 = vector.broadcast %752 : f32 to vector<1x16x4xf32>
    %759 = arith.mulf %758, %757 : vector<1x16x4xf32>
    %760 = arith.addf %756, %759 : vector<1x16x4xf32>
    %c37_144 = arith.constant 37 : index
    %761 = memref.load %arg3[%c37_144] : memref<98xf32, #tpu.memory_space<smem>>
    %c86_145 = arith.constant 86 : index
    %762 = memref.load %arg3[%c86_145] : memref<98xf32, #tpu.memory_space<smem>>
    %763 = vector.extract_strided_slice %709 {offsets = [0, 5, 0], sizes = [1, 16, 4], strides = [1, 1, 1]} : vector<1x22x4xf32> to vector<1x16x4xf32>
    %764 = vector.broadcast %761 : f32 to vector<1x16x4xf32>
    %765 = arith.mulf %764, %763 : vector<1x16x4xf32>
    %766 = arith.addf %760, %765 : vector<1x16x4xf32>
    %767 = vector.extract_strided_slice %710 {offsets = [0, 5, 0], sizes = [1, 16, 4], strides = [1, 1, 1]} : vector<1x22x4xf32> to vector<1x16x4xf32>
    %768 = vector.broadcast %762 : f32 to vector<1x16x4xf32>
    %769 = arith.mulf %768, %767 : vector<1x16x4xf32>
    %770 = arith.addf %766, %769 : vector<1x16x4xf32>
    %c44_146 = arith.constant 44 : index
    %771 = memref.load %arg3[%c44_146] : memref<98xf32, #tpu.memory_space<smem>>
    %c93_147 = arith.constant 93 : index
    %772 = memref.load %arg3[%c93_147] : memref<98xf32, #tpu.memory_space<smem>>
    %773 = vector.extract_strided_slice %709 {offsets = [0, 6, 0], sizes = [1, 16, 4], strides = [1, 1, 1]} : vector<1x22x4xf32> to vector<1x16x4xf32>
    %774 = vector.broadcast %771 : f32 to vector<1x16x4xf32>
    %775 = arith.mulf %774, %773 : vector<1x16x4xf32>
    %776 = arith.addf %770, %775 : vector<1x16x4xf32>
    %777 = vector.extract_strided_slice %710 {offsets = [0, 6, 0], sizes = [1, 16, 4], strides = [1, 1, 1]} : vector<1x22x4xf32> to vector<1x16x4xf32>
    %778 = vector.broadcast %772 : f32 to vector<1x16x4xf32>
    %779 = arith.mulf %778, %777 : vector<1x16x4xf32>
    %780 = arith.addf %776, %779 : vector<1x16x4xf32>
    %781 = vector.extract_strided_slice %562 {offsets = [0, 0, 3], sizes = [1, 22, 4], strides = [1, 1, 1]} : vector<1x22x10xf32> to vector<1x22x4xf32>
    %782 = vector.extract_strided_slice %563 {offsets = [0, 0, 3], sizes = [1, 22, 4], strides = [1, 1, 1]} : vector<1x22x10xf32> to vector<1x22x4xf32>
    %c3_148 = arith.constant 3 : index
    %783 = memref.load %arg3[%c3_148] : memref<98xf32, #tpu.memory_space<smem>>
    %c52_149 = arith.constant 52 : index
    %784 = memref.load %arg3[%c52_149] : memref<98xf32, #tpu.memory_space<smem>>
    %785 = vector.extract_strided_slice %781 {offsets = [0, 0, 0], sizes = [1, 16, 4], strides = [1, 1, 1]} : vector<1x22x4xf32> to vector<1x16x4xf32>
    %786 = vector.broadcast %783 : f32 to vector<1x16x4xf32>
    %787 = arith.mulf %786, %785 : vector<1x16x4xf32>
    %788 = arith.addf %780, %787 : vector<1x16x4xf32>
    %789 = vector.extract_strided_slice %782 {offsets = [0, 0, 0], sizes = [1, 16, 4], strides = [1, 1, 1]} : vector<1x22x4xf32> to vector<1x16x4xf32>
    %790 = vector.broadcast %784 : f32 to vector<1x16x4xf32>
    %791 = arith.mulf %790, %789 : vector<1x16x4xf32>
    %792 = arith.addf %788, %791 : vector<1x16x4xf32>
    %c10_150 = arith.constant 10 : index
    %793 = memref.load %arg3[%c10_150] : memref<98xf32, #tpu.memory_space<smem>>
    %c59_151 = arith.constant 59 : index
    %794 = memref.load %arg3[%c59_151] : memref<98xf32, #tpu.memory_space<smem>>
    %795 = vector.extract_strided_slice %781 {offsets = [0, 1, 0], sizes = [1, 16, 4], strides = [1, 1, 1]} : vector<1x22x4xf32> to vector<1x16x4xf32>
    %796 = vector.broadcast %793 : f32 to vector<1x16x4xf32>
    %797 = arith.mulf %796, %795 : vector<1x16x4xf32>
    %798 = arith.addf %792, %797 : vector<1x16x4xf32>
    %799 = vector.extract_strided_slice %782 {offsets = [0, 1, 0], sizes = [1, 16, 4], strides = [1, 1, 1]} : vector<1x22x4xf32> to vector<1x16x4xf32>
    %800 = vector.broadcast %794 : f32 to vector<1x16x4xf32>
    %801 = arith.mulf %800, %799 : vector<1x16x4xf32>
    %802 = arith.addf %798, %801 : vector<1x16x4xf32>
    %c17_152 = arith.constant 17 : index
    %803 = memref.load %arg3[%c17_152] : memref<98xf32, #tpu.memory_space<smem>>
    %c66_153 = arith.constant 66 : index
    %804 = memref.load %arg3[%c66_153] : memref<98xf32, #tpu.memory_space<smem>>
    %805 = vector.extract_strided_slice %781 {offsets = [0, 2, 0], sizes = [1, 16, 4], strides = [1, 1, 1]} : vector<1x22x4xf32> to vector<1x16x4xf32>
    %806 = vector.broadcast %803 : f32 to vector<1x16x4xf32>
    %807 = arith.mulf %806, %805 : vector<1x16x4xf32>
    %808 = arith.addf %802, %807 : vector<1x16x4xf32>
    %809 = vector.extract_strided_slice %782 {offsets = [0, 2, 0], sizes = [1, 16, 4], strides = [1, 1, 1]} : vector<1x22x4xf32> to vector<1x16x4xf32>
    %810 = vector.broadcast %804 : f32 to vector<1x16x4xf32>
    %811 = arith.mulf %810, %809 : vector<1x16x4xf32>
    %812 = arith.addf %808, %811 : vector<1x16x4xf32>
    %c24_154 = arith.constant 24 : index
    %813 = memref.load %arg3[%c24_154] : memref<98xf32, #tpu.memory_space<smem>>
    %c73_155 = arith.constant 73 : index
    %814 = memref.load %arg3[%c73_155] : memref<98xf32, #tpu.memory_space<smem>>
    %815 = vector.extract_strided_slice %781 {offsets = [0, 3, 0], sizes = [1, 16, 4], strides = [1, 1, 1]} : vector<1x22x4xf32> to vector<1x16x4xf32>
    %816 = vector.broadcast %813 : f32 to vector<1x16x4xf32>
    %817 = arith.mulf %816, %815 : vector<1x16x4xf32>
    %818 = arith.addf %812, %817 : vector<1x16x4xf32>
    %819 = vector.extract_strided_slice %782 {offsets = [0, 3, 0], sizes = [1, 16, 4], strides = [1, 1, 1]} : vector<1x22x4xf32> to vector<1x16x4xf32>
    %820 = vector.broadcast %814 : f32 to vector<1x16x4xf32>
    %821 = arith.mulf %820, %819 : vector<1x16x4xf32>
    %822 = arith.addf %818, %821 : vector<1x16x4xf32>
    %c31_156 = arith.constant 31 : index
    %823 = memref.load %arg3[%c31_156] : memref<98xf32, #tpu.memory_space<smem>>
    %c80_157 = arith.constant 80 : index
    %824 = memref.load %arg3[%c80_157] : memref<98xf32, #tpu.memory_space<smem>>
    %825 = vector.extract_strided_slice %781 {offsets = [0, 4, 0], sizes = [1, 16, 4], strides = [1, 1, 1]} : vector<1x22x4xf32> to vector<1x16x4xf32>
    %826 = vector.broadcast %823 : f32 to vector<1x16x4xf32>
    %827 = arith.mulf %826, %825 : vector<1x16x4xf32>
    %828 = arith.addf %822, %827 : vector<1x16x4xf32>
    %829 = vector.extract_strided_slice %782 {offsets = [0, 4, 0], sizes = [1, 16, 4], strides = [1, 1, 1]} : vector<1x22x4xf32> to vector<1x16x4xf32>
    %830 = vector.broadcast %824 : f32 to vector<1x16x4xf32>
    %831 = arith.mulf %830, %829 : vector<1x16x4xf32>
    %832 = arith.addf %828, %831 : vector<1x16x4xf32>
    %c38_158 = arith.constant 38 : index
    %833 = memref.load %arg3[%c38_158] : memref<98xf32, #tpu.memory_space<smem>>
    %c87_159 = arith.constant 87 : index
    %834 = memref.load %arg3[%c87_159] : memref<98xf32, #tpu.memory_space<smem>>
    %835 = vector.extract_strided_slice %781 {offsets = [0, 5, 0], sizes = [1, 16, 4], strides = [1, 1, 1]} : vector<1x22x4xf32> to vector<1x16x4xf32>
    %836 = vector.broadcast %833 : f32 to vector<1x16x4xf32>
    %837 = arith.mulf %836, %835 : vector<1x16x4xf32>
    %838 = arith.addf %832, %837 : vector<1x16x4xf32>
    %839 = vector.extract_strided_slice %782 {offsets = [0, 5, 0], sizes = [1, 16, 4], strides = [1, 1, 1]} : vector<1x22x4xf32> to vector<1x16x4xf32>
    %840 = vector.broadcast %834 : f32 to vector<1x16x4xf32>
    %841 = arith.mulf %840, %839 : vector<1x16x4xf32>
    %842 = arith.addf %838, %841 : vector<1x16x4xf32>
    %c45_160 = arith.constant 45 : index
    %843 = memref.load %arg3[%c45_160] : memref<98xf32, #tpu.memory_space<smem>>
    %c94_161 = arith.constant 94 : index
    %844 = memref.load %arg3[%c94_161] : memref<98xf32, #tpu.memory_space<smem>>
    %845 = vector.extract_strided_slice %781 {offsets = [0, 6, 0], sizes = [1, 16, 4], strides = [1, 1, 1]} : vector<1x22x4xf32> to vector<1x16x4xf32>
    %846 = vector.broadcast %843 : f32 to vector<1x16x4xf32>
    %847 = arith.mulf %846, %845 : vector<1x16x4xf32>
    %848 = arith.addf %842, %847 : vector<1x16x4xf32>
    %849 = vector.extract_strided_slice %782 {offsets = [0, 6, 0], sizes = [1, 16, 4], strides = [1, 1, 1]} : vector<1x22x4xf32> to vector<1x16x4xf32>
    %850 = vector.broadcast %844 : f32 to vector<1x16x4xf32>
    %851 = arith.mulf %850, %849 : vector<1x16x4xf32>
    %852 = arith.addf %848, %851 : vector<1x16x4xf32>
    %853 = vector.extract_strided_slice %562 {offsets = [0, 0, 4], sizes = [1, 22, 4], strides = [1, 1, 1]} : vector<1x22x10xf32> to vector<1x22x4xf32>
    %854 = vector.extract_strided_slice %563 {offsets = [0, 0, 4], sizes = [1, 22, 4], strides = [1, 1, 1]} : vector<1x22x10xf32> to vector<1x22x4xf32>
    %c4_162 = arith.constant 4 : index
    %855 = memref.load %arg3[%c4_162] : memref<98xf32, #tpu.memory_space<smem>>
    %c53_163 = arith.constant 53 : index
    %856 = memref.load %arg3[%c53_163] : memref<98xf32, #tpu.memory_space<smem>>
    %857 = vector.extract_strided_slice %853 {offsets = [0, 0, 0], sizes = [1, 16, 4], strides = [1, 1, 1]} : vector<1x22x4xf32> to vector<1x16x4xf32>
    %858 = vector.broadcast %855 : f32 to vector<1x16x4xf32>
    %859 = arith.mulf %858, %857 : vector<1x16x4xf32>
    %860 = arith.addf %852, %859 : vector<1x16x4xf32>
    %861 = vector.extract_strided_slice %854 {offsets = [0, 0, 0], sizes = [1, 16, 4], strides = [1, 1, 1]} : vector<1x22x4xf32> to vector<1x16x4xf32>
    %862 = vector.broadcast %856 : f32 to vector<1x16x4xf32>
    %863 = arith.mulf %862, %861 : vector<1x16x4xf32>
    %864 = arith.addf %860, %863 : vector<1x16x4xf32>
    %c11_164 = arith.constant 11 : index
    %865 = memref.load %arg3[%c11_164] : memref<98xf32, #tpu.memory_space<smem>>
    %c60_165 = arith.constant 60 : index
    %866 = memref.load %arg3[%c60_165] : memref<98xf32, #tpu.memory_space<smem>>
    %867 = vector.extract_strided_slice %853 {offsets = [0, 1, 0], sizes = [1, 16, 4], strides = [1, 1, 1]} : vector<1x22x4xf32> to vector<1x16x4xf32>
    %868 = vector.broadcast %865 : f32 to vector<1x16x4xf32>
    %869 = arith.mulf %868, %867 : vector<1x16x4xf32>
    %870 = arith.addf %864, %869 : vector<1x16x4xf32>
    %871 = vector.extract_strided_slice %854 {offsets = [0, 1, 0], sizes = [1, 16, 4], strides = [1, 1, 1]} : vector<1x22x4xf32> to vector<1x16x4xf32>
    %872 = vector.broadcast %866 : f32 to vector<1x16x4xf32>
    %873 = arith.mulf %872, %871 : vector<1x16x4xf32>
    %874 = arith.addf %870, %873 : vector<1x16x4xf32>
    %c18_166 = arith.constant 18 : index
    %875 = memref.load %arg3[%c18_166] : memref<98xf32, #tpu.memory_space<smem>>
    %c67_167 = arith.constant 67 : index
    %876 = memref.load %arg3[%c67_167] : memref<98xf32, #tpu.memory_space<smem>>
    %877 = vector.extract_strided_slice %853 {offsets = [0, 2, 0], sizes = [1, 16, 4], strides = [1, 1, 1]} : vector<1x22x4xf32> to vector<1x16x4xf32>
    %878 = vector.broadcast %875 : f32 to vector<1x16x4xf32>
    %879 = arith.mulf %878, %877 : vector<1x16x4xf32>
    %880 = arith.addf %874, %879 : vector<1x16x4xf32>
    %881 = vector.extract_strided_slice %854 {offsets = [0, 2, 0], sizes = [1, 16, 4], strides = [1, 1, 1]} : vector<1x22x4xf32> to vector<1x16x4xf32>
    %882 = vector.broadcast %876 : f32 to vector<1x16x4xf32>
    %883 = arith.mulf %882, %881 : vector<1x16x4xf32>
    %884 = arith.addf %880, %883 : vector<1x16x4xf32>
    %c25_168 = arith.constant 25 : index
    %885 = memref.load %arg3[%c25_168] : memref<98xf32, #tpu.memory_space<smem>>
    %c74_169 = arith.constant 74 : index
    %886 = memref.load %arg3[%c74_169] : memref<98xf32, #tpu.memory_space<smem>>
    %887 = vector.extract_strided_slice %853 {offsets = [0, 3, 0], sizes = [1, 16, 4], strides = [1, 1, 1]} : vector<1x22x4xf32> to vector<1x16x4xf32>
    %888 = vector.broadcast %885 : f32 to vector<1x16x4xf32>
    %889 = arith.mulf %888, %887 : vector<1x16x4xf32>
    %890 = arith.addf %884, %889 : vector<1x16x4xf32>
    %891 = vector.extract_strided_slice %854 {offsets = [0, 3, 0], sizes = [1, 16, 4], strides = [1, 1, 1]} : vector<1x22x4xf32> to vector<1x16x4xf32>
    %892 = vector.broadcast %886 : f32 to vector<1x16x4xf32>
    %893 = arith.mulf %892, %891 : vector<1x16x4xf32>
    %894 = arith.addf %890, %893 : vector<1x16x4xf32>
    %c32_170 = arith.constant 32 : index
    %895 = memref.load %arg3[%c32_170] : memref<98xf32, #tpu.memory_space<smem>>
    %c81_171 = arith.constant 81 : index
    %896 = memref.load %arg3[%c81_171] : memref<98xf32, #tpu.memory_space<smem>>
    %897 = vector.extract_strided_slice %853 {offsets = [0, 4, 0], sizes = [1, 16, 4], strides = [1, 1, 1]} : vector<1x22x4xf32> to vector<1x16x4xf32>
    %898 = vector.broadcast %895 : f32 to vector<1x16x4xf32>
    %899 = arith.mulf %898, %897 : vector<1x16x4xf32>
    %900 = arith.addf %894, %899 : vector<1x16x4xf32>
    %901 = vector.extract_strided_slice %854 {offsets = [0, 4, 0], sizes = [1, 16, 4], strides = [1, 1, 1]} : vector<1x22x4xf32> to vector<1x16x4xf32>
    %902 = vector.broadcast %896 : f32 to vector<1x16x4xf32>
    %903 = arith.mulf %902, %901 : vector<1x16x4xf32>
    %904 = arith.addf %900, %903 : vector<1x16x4xf32>
    %c39_172 = arith.constant 39 : index
    %905 = memref.load %arg3[%c39_172] : memref<98xf32, #tpu.memory_space<smem>>
    %c88_173 = arith.constant 88 : index
    %906 = memref.load %arg3[%c88_173] : memref<98xf32, #tpu.memory_space<smem>>
    %907 = vector.extract_strided_slice %853 {offsets = [0, 5, 0], sizes = [1, 16, 4], strides = [1, 1, 1]} : vector<1x22x4xf32> to vector<1x16x4xf32>
    %908 = vector.broadcast %905 : f32 to vector<1x16x4xf32>
    %909 = arith.mulf %908, %907 : vector<1x16x4xf32>
    %910 = arith.addf %904, %909 : vector<1x16x4xf32>
    %911 = vector.extract_strided_slice %854 {offsets = [0, 5, 0], sizes = [1, 16, 4], strides = [1, 1, 1]} : vector<1x22x4xf32> to vector<1x16x4xf32>
    %912 = vector.broadcast %906 : f32 to vector<1x16x4xf32>
    %913 = arith.mulf %912, %911 : vector<1x16x4xf32>
    %914 = arith.addf %910, %913 : vector<1x16x4xf32>
    %c46_174 = arith.constant 46 : index
    %915 = memref.load %arg3[%c46_174] : memref<98xf32, #tpu.memory_space<smem>>
    %c95_175 = arith.constant 95 : index
    %916 = memref.load %arg3[%c95_175] : memref<98xf32, #tpu.memory_space<smem>>
    %917 = vector.extract_strided_slice %853 {offsets = [0, 6, 0], sizes = [1, 16, 4], strides = [1, 1, 1]} : vector<1x22x4xf32> to vector<1x16x4xf32>
    %918 = vector.broadcast %915 : f32 to vector<1x16x4xf32>
    %919 = arith.mulf %918, %917 : vector<1x16x4xf32>
    %920 = arith.addf %914, %919 : vector<1x16x4xf32>
    %921 = vector.extract_strided_slice %854 {offsets = [0, 6, 0], sizes = [1, 16, 4], strides = [1, 1, 1]} : vector<1x22x4xf32> to vector<1x16x4xf32>
    %922 = vector.broadcast %916 : f32 to vector<1x16x4xf32>
    %923 = arith.mulf %922, %921 : vector<1x16x4xf32>
    %924 = arith.addf %920, %923 : vector<1x16x4xf32>
    %925 = vector.extract_strided_slice %562 {offsets = [0, 0, 5], sizes = [1, 22, 4], strides = [1, 1, 1]} : vector<1x22x10xf32> to vector<1x22x4xf32>
    %926 = vector.extract_strided_slice %563 {offsets = [0, 0, 5], sizes = [1, 22, 4], strides = [1, 1, 1]} : vector<1x22x10xf32> to vector<1x22x4xf32>
    %c5_176 = arith.constant 5 : index
    %927 = memref.load %arg3[%c5_176] : memref<98xf32, #tpu.memory_space<smem>>
    %c54_177 = arith.constant 54 : index
    %928 = memref.load %arg3[%c54_177] : memref<98xf32, #tpu.memory_space<smem>>
    %929 = vector.extract_strided_slice %925 {offsets = [0, 0, 0], sizes = [1, 16, 4], strides = [1, 1, 1]} : vector<1x22x4xf32> to vector<1x16x4xf32>
    %930 = vector.broadcast %927 : f32 to vector<1x16x4xf32>
    %931 = arith.mulf %930, %929 : vector<1x16x4xf32>
    %932 = arith.addf %924, %931 : vector<1x16x4xf32>
    %933 = vector.extract_strided_slice %926 {offsets = [0, 0, 0], sizes = [1, 16, 4], strides = [1, 1, 1]} : vector<1x22x4xf32> to vector<1x16x4xf32>
    %934 = vector.broadcast %928 : f32 to vector<1x16x4xf32>
    %935 = arith.mulf %934, %933 : vector<1x16x4xf32>
    %936 = arith.addf %932, %935 : vector<1x16x4xf32>
    %c12_178 = arith.constant 12 : index
    %937 = memref.load %arg3[%c12_178] : memref<98xf32, #tpu.memory_space<smem>>
    %c61_179 = arith.constant 61 : index
    %938 = memref.load %arg3[%c61_179] : memref<98xf32, #tpu.memory_space<smem>>
    %939 = vector.extract_strided_slice %925 {offsets = [0, 1, 0], sizes = [1, 16, 4], strides = [1, 1, 1]} : vector<1x22x4xf32> to vector<1x16x4xf32>
    %940 = vector.broadcast %937 : f32 to vector<1x16x4xf32>
    %941 = arith.mulf %940, %939 : vector<1x16x4xf32>
    %942 = arith.addf %936, %941 : vector<1x16x4xf32>
    %943 = vector.extract_strided_slice %926 {offsets = [0, 1, 0], sizes = [1, 16, 4], strides = [1, 1, 1]} : vector<1x22x4xf32> to vector<1x16x4xf32>
    %944 = vector.broadcast %938 : f32 to vector<1x16x4xf32>
    %945 = arith.mulf %944, %943 : vector<1x16x4xf32>
    %946 = arith.addf %942, %945 : vector<1x16x4xf32>
    %c19_180 = arith.constant 19 : index
    %947 = memref.load %arg3[%c19_180] : memref<98xf32, #tpu.memory_space<smem>>
    %c68_181 = arith.constant 68 : index
    %948 = memref.load %arg3[%c68_181] : memref<98xf32, #tpu.memory_space<smem>>
    %949 = vector.extract_strided_slice %925 {offsets = [0, 2, 0], sizes = [1, 16, 4], strides = [1, 1, 1]} : vector<1x22x4xf32> to vector<1x16x4xf32>
    %950 = vector.broadcast %947 : f32 to vector<1x16x4xf32>
    %951 = arith.mulf %950, %949 : vector<1x16x4xf32>
    %952 = arith.addf %946, %951 : vector<1x16x4xf32>
    %953 = vector.extract_strided_slice %926 {offsets = [0, 2, 0], sizes = [1, 16, 4], strides = [1, 1, 1]} : vector<1x22x4xf32> to vector<1x16x4xf32>
    %954 = vector.broadcast %948 : f32 to vector<1x16x4xf32>
    %955 = arith.mulf %954, %953 : vector<1x16x4xf32>
    %956 = arith.addf %952, %955 : vector<1x16x4xf32>
    %c26_182 = arith.constant 26 : index
    %957 = memref.load %arg3[%c26_182] : memref<98xf32, #tpu.memory_space<smem>>
    %c75_183 = arith.constant 75 : index
    %958 = memref.load %arg3[%c75_183] : memref<98xf32, #tpu.memory_space<smem>>
    %959 = vector.extract_strided_slice %925 {offsets = [0, 3, 0], sizes = [1, 16, 4], strides = [1, 1, 1]} : vector<1x22x4xf32> to vector<1x16x4xf32>
    %960 = vector.broadcast %957 : f32 to vector<1x16x4xf32>
    %961 = arith.mulf %960, %959 : vector<1x16x4xf32>
    %962 = arith.addf %956, %961 : vector<1x16x4xf32>
    %963 = vector.extract_strided_slice %926 {offsets = [0, 3, 0], sizes = [1, 16, 4], strides = [1, 1, 1]} : vector<1x22x4xf32> to vector<1x16x4xf32>
    %964 = vector.broadcast %958 : f32 to vector<1x16x4xf32>
    %965 = arith.mulf %964, %963 : vector<1x16x4xf32>
    %966 = arith.addf %962, %965 : vector<1x16x4xf32>
    %c33_184 = arith.constant 33 : index
    %967 = memref.load %arg3[%c33_184] : memref<98xf32, #tpu.memory_space<smem>>
    %c82_185 = arith.constant 82 : index
    %968 = memref.load %arg3[%c82_185] : memref<98xf32, #tpu.memory_space<smem>>
    %969 = vector.extract_strided_slice %925 {offsets = [0, 4, 0], sizes = [1, 16, 4], strides = [1, 1, 1]} : vector<1x22x4xf32> to vector<1x16x4xf32>
    %970 = vector.broadcast %967 : f32 to vector<1x16x4xf32>
    %971 = arith.mulf %970, %969 : vector<1x16x4xf32>
    %972 = arith.addf %966, %971 : vector<1x16x4xf32>
    %973 = vector.extract_strided_slice %926 {offsets = [0, 4, 0], sizes = [1, 16, 4], strides = [1, 1, 1]} : vector<1x22x4xf32> to vector<1x16x4xf32>
    %974 = vector.broadcast %968 : f32 to vector<1x16x4xf32>
    %975 = arith.mulf %974, %973 : vector<1x16x4xf32>
    %976 = arith.addf %972, %975 : vector<1x16x4xf32>
    %c40_186 = arith.constant 40 : index
    %977 = memref.load %arg3[%c40_186] : memref<98xf32, #tpu.memory_space<smem>>
    %c89_187 = arith.constant 89 : index
    %978 = memref.load %arg3[%c89_187] : memref<98xf32, #tpu.memory_space<smem>>
    %979 = vector.extract_strided_slice %925 {offsets = [0, 5, 0], sizes = [1, 16, 4], strides = [1, 1, 1]} : vector<1x22x4xf32> to vector<1x16x4xf32>
    %980 = vector.broadcast %977 : f32 to vector<1x16x4xf32>
    %981 = arith.mulf %980, %979 : vector<1x16x4xf32>
    %982 = arith.addf %976, %981 : vector<1x16x4xf32>
    %983 = vector.extract_strided_slice %926 {offsets = [0, 5, 0], sizes = [1, 16, 4], strides = [1, 1, 1]} : vector<1x22x4xf32> to vector<1x16x4xf32>
    %984 = vector.broadcast %978 : f32 to vector<1x16x4xf32>
    %985 = arith.mulf %984, %983 : vector<1x16x4xf32>
    %986 = arith.addf %982, %985 : vector<1x16x4xf32>
    %c47_188 = arith.constant 47 : index
    %987 = memref.load %arg3[%c47_188] : memref<98xf32, #tpu.memory_space<smem>>
    %c96_189 = arith.constant 96 : index
    %988 = memref.load %arg3[%c96_189] : memref<98xf32, #tpu.memory_space<smem>>
    %989 = vector.extract_strided_slice %925 {offsets = [0, 6, 0], sizes = [1, 16, 4], strides = [1, 1, 1]} : vector<1x22x4xf32> to vector<1x16x4xf32>
    %990 = vector.broadcast %987 : f32 to vector<1x16x4xf32>
    %991 = arith.mulf %990, %989 : vector<1x16x4xf32>
    %992 = arith.addf %986, %991 : vector<1x16x4xf32>
    %993 = vector.extract_strided_slice %926 {offsets = [0, 6, 0], sizes = [1, 16, 4], strides = [1, 1, 1]} : vector<1x22x4xf32> to vector<1x16x4xf32>
    %994 = vector.broadcast %988 : f32 to vector<1x16x4xf32>
    %995 = arith.mulf %994, %993 : vector<1x16x4xf32>
    %996 = arith.addf %992, %995 : vector<1x16x4xf32>
    %997 = vector.extract_strided_slice %562 {offsets = [0, 0, 6], sizes = [1, 22, 4], strides = [1, 1, 1]} : vector<1x22x10xf32> to vector<1x22x4xf32>
    %998 = vector.extract_strided_slice %563 {offsets = [0, 0, 6], sizes = [1, 22, 4], strides = [1, 1, 1]} : vector<1x22x10xf32> to vector<1x22x4xf32>
    %c6_190 = arith.constant 6 : index
    %999 = memref.load %arg3[%c6_190] : memref<98xf32, #tpu.memory_space<smem>>
    %c55_191 = arith.constant 55 : index
    %1000 = memref.load %arg3[%c55_191] : memref<98xf32, #tpu.memory_space<smem>>
    %1001 = vector.extract_strided_slice %997 {offsets = [0, 0, 0], sizes = [1, 16, 4], strides = [1, 1, 1]} : vector<1x22x4xf32> to vector<1x16x4xf32>
    %1002 = vector.broadcast %999 : f32 to vector<1x16x4xf32>
    %1003 = arith.mulf %1002, %1001 : vector<1x16x4xf32>
    %1004 = arith.addf %996, %1003 : vector<1x16x4xf32>
    %1005 = vector.extract_strided_slice %998 {offsets = [0, 0, 0], sizes = [1, 16, 4], strides = [1, 1, 1]} : vector<1x22x4xf32> to vector<1x16x4xf32>
    %1006 = vector.broadcast %1000 : f32 to vector<1x16x4xf32>
    %1007 = arith.mulf %1006, %1005 : vector<1x16x4xf32>
    %1008 = arith.addf %1004, %1007 : vector<1x16x4xf32>
    %c13_192 = arith.constant 13 : index
    %1009 = memref.load %arg3[%c13_192] : memref<98xf32, #tpu.memory_space<smem>>
    %c62_193 = arith.constant 62 : index
    %1010 = memref.load %arg3[%c62_193] : memref<98xf32, #tpu.memory_space<smem>>
    %1011 = vector.extract_strided_slice %997 {offsets = [0, 1, 0], sizes = [1, 16, 4], strides = [1, 1, 1]} : vector<1x22x4xf32> to vector<1x16x4xf32>
    %1012 = vector.broadcast %1009 : f32 to vector<1x16x4xf32>
    %1013 = arith.mulf %1012, %1011 : vector<1x16x4xf32>
    %1014 = arith.addf %1008, %1013 : vector<1x16x4xf32>
    %1015 = vector.extract_strided_slice %998 {offsets = [0, 1, 0], sizes = [1, 16, 4], strides = [1, 1, 1]} : vector<1x22x4xf32> to vector<1x16x4xf32>
    %1016 = vector.broadcast %1010 : f32 to vector<1x16x4xf32>
    %1017 = arith.mulf %1016, %1015 : vector<1x16x4xf32>
    %1018 = arith.addf %1014, %1017 : vector<1x16x4xf32>
    %c20_194 = arith.constant 20 : index
    %1019 = memref.load %arg3[%c20_194] : memref<98xf32, #tpu.memory_space<smem>>
    %c69_195 = arith.constant 69 : index
    %1020 = memref.load %arg3[%c69_195] : memref<98xf32, #tpu.memory_space<smem>>
    %1021 = vector.extract_strided_slice %997 {offsets = [0, 2, 0], sizes = [1, 16, 4], strides = [1, 1, 1]} : vector<1x22x4xf32> to vector<1x16x4xf32>
    %1022 = vector.broadcast %1019 : f32 to vector<1x16x4xf32>
    %1023 = arith.mulf %1022, %1021 : vector<1x16x4xf32>
    %1024 = arith.addf %1018, %1023 : vector<1x16x4xf32>
    %1025 = vector.extract_strided_slice %998 {offsets = [0, 2, 0], sizes = [1, 16, 4], strides = [1, 1, 1]} : vector<1x22x4xf32> to vector<1x16x4xf32>
    %1026 = vector.broadcast %1020 : f32 to vector<1x16x4xf32>
    %1027 = arith.mulf %1026, %1025 : vector<1x16x4xf32>
    %1028 = arith.addf %1024, %1027 : vector<1x16x4xf32>
    %c27_196 = arith.constant 27 : index
    %1029 = memref.load %arg3[%c27_196] : memref<98xf32, #tpu.memory_space<smem>>
    %c76_197 = arith.constant 76 : index
    %1030 = memref.load %arg3[%c76_197] : memref<98xf32, #tpu.memory_space<smem>>
    %1031 = vector.extract_strided_slice %997 {offsets = [0, 3, 0], sizes = [1, 16, 4], strides = [1, 1, 1]} : vector<1x22x4xf32> to vector<1x16x4xf32>
    %1032 = vector.broadcast %1029 : f32 to vector<1x16x4xf32>
    %1033 = arith.mulf %1032, %1031 : vector<1x16x4xf32>
    %1034 = arith.addf %1028, %1033 : vector<1x16x4xf32>
    %1035 = vector.extract_strided_slice %998 {offsets = [0, 3, 0], sizes = [1, 16, 4], strides = [1, 1, 1]} : vector<1x22x4xf32> to vector<1x16x4xf32>
    %1036 = vector.broadcast %1030 : f32 to vector<1x16x4xf32>
    %1037 = arith.mulf %1036, %1035 : vector<1x16x4xf32>
    %1038 = arith.addf %1034, %1037 : vector<1x16x4xf32>
    %c34_198 = arith.constant 34 : index
    %1039 = memref.load %arg3[%c34_198] : memref<98xf32, #tpu.memory_space<smem>>
    %c83_199 = arith.constant 83 : index
    %1040 = memref.load %arg3[%c83_199] : memref<98xf32, #tpu.memory_space<smem>>
    %1041 = vector.extract_strided_slice %997 {offsets = [0, 4, 0], sizes = [1, 16, 4], strides = [1, 1, 1]} : vector<1x22x4xf32> to vector<1x16x4xf32>
    %1042 = vector.broadcast %1039 : f32 to vector<1x16x4xf32>
    %1043 = arith.mulf %1042, %1041 : vector<1x16x4xf32>
    %1044 = arith.addf %1038, %1043 : vector<1x16x4xf32>
    %1045 = vector.extract_strided_slice %998 {offsets = [0, 4, 0], sizes = [1, 16, 4], strides = [1, 1, 1]} : vector<1x22x4xf32> to vector<1x16x4xf32>
    %1046 = vector.broadcast %1040 : f32 to vector<1x16x4xf32>
    %1047 = arith.mulf %1046, %1045 : vector<1x16x4xf32>
    %1048 = arith.addf %1044, %1047 : vector<1x16x4xf32>
    %c41_200 = arith.constant 41 : index
    %1049 = memref.load %arg3[%c41_200] : memref<98xf32, #tpu.memory_space<smem>>
    %c90_201 = arith.constant 90 : index
    %1050 = memref.load %arg3[%c90_201] : memref<98xf32, #tpu.memory_space<smem>>
    %1051 = vector.extract_strided_slice %997 {offsets = [0, 5, 0], sizes = [1, 16, 4], strides = [1, 1, 1]} : vector<1x22x4xf32> to vector<1x16x4xf32>
    %1052 = vector.broadcast %1049 : f32 to vector<1x16x4xf32>
    %1053 = arith.mulf %1052, %1051 : vector<1x16x4xf32>
    %1054 = arith.addf %1048, %1053 : vector<1x16x4xf32>
    %1055 = vector.extract_strided_slice %998 {offsets = [0, 5, 0], sizes = [1, 16, 4], strides = [1, 1, 1]} : vector<1x22x4xf32> to vector<1x16x4xf32>
    %1056 = vector.broadcast %1050 : f32 to vector<1x16x4xf32>
    %1057 = arith.mulf %1056, %1055 : vector<1x16x4xf32>
    %1058 = arith.addf %1054, %1057 : vector<1x16x4xf32>
    %c48_202 = arith.constant 48 : index
    %1059 = memref.load %arg3[%c48_202] : memref<98xf32, #tpu.memory_space<smem>>
    %c97_203 = arith.constant 97 : index
    %1060 = memref.load %arg3[%c97_203] : memref<98xf32, #tpu.memory_space<smem>>
    %1061 = vector.extract_strided_slice %997 {offsets = [0, 6, 0], sizes = [1, 16, 4], strides = [1, 1, 1]} : vector<1x22x4xf32> to vector<1x16x4xf32>
    %1062 = vector.broadcast %1059 : f32 to vector<1x16x4xf32>
    %1063 = arith.mulf %1062, %1061 : vector<1x16x4xf32>
    %1064 = arith.addf %1058, %1063 : vector<1x16x4xf32>
    %1065 = vector.extract_strided_slice %998 {offsets = [0, 6, 0], sizes = [1, 16, 4], strides = [1, 1, 1]} : vector<1x22x4xf32> to vector<1x16x4xf32>
    %1066 = vector.broadcast %1060 : f32 to vector<1x16x4xf32>
    %1067 = arith.mulf %1066, %1065 : vector<1x16x4xf32>
    %1068 = arith.addf %1064, %1067 : vector<1x16x4xf32>
    %cst_204 = arith.constant 0.000000e+00 : f32
    %1069 = vector.broadcast %cst_204 : f32 to vector<1x16x4xf32>
    %1070 = arith.maximumf %1068, %1069 : vector<1x16x4xf32>
    %1071 = arith.negf %1070 : vector<1x16x4xf32>
    %1072 = math.exp %1071 : vector<1x16x4xf32>
    %cst_205 = arith.constant 1.000000e+00 : f32
    %1073 = vector.broadcast %cst_205 : f32 to vector<1x16x4xf32>
    %1074 = arith.addf %1073, %1072 : vector<1x16x4xf32>
    %1075 = arith.divf %1073, %1074 : vector<1x16x4xf32>
    %cst_206 = arith.constant 0.000000e+00 : f32
    %1076 = vector.broadcast %cst_206 : f32 to vector<1x3x10xf32>
    %cst_207 = arith.constant 0.000000e+00 : f32
    %1077 = vector.broadcast %cst_207 : f32 to vector<1x22x3xf32>
    %c0_208 = arith.constant 0 : index
    %c0_209 = arith.constant 0 : index
    %c0_210 = arith.constant 0 : index
    %1078 = vector.load %arg10[%c0_208, %c0_209, %c0_210] : memref<1x22x10xf32, #tpu.memory_space<vmem>>, vector<1x3x10xf32>
    tpu.vector_store %arg10[%c0_208, %c0_209, %c0_210], %1076 {strides = array<i32>} : memref<1x22x10xf32, #tpu.memory_space<vmem>>, vector<1x3x10xf32>,
    %c0_211 = arith.constant 0 : index
    %c19_212 = arith.constant 19 : index
    %c0_213 = arith.constant 0 : index
    %1079 = vector.load %arg10[%c0_211, %c19_212, %c0_213] : memref<1x22x10xf32, #tpu.memory_space<vmem>>, vector<1x3x10xf32>
    tpu.vector_store %arg10[%c0_211, %c19_212, %c0_213], %1076 {strides = array<i32>} : memref<1x22x10xf32, #tpu.memory_space<vmem>>, vector<1x3x10xf32>,
    %c0_214 = arith.constant 0 : index
    %c0_215 = arith.constant 0 : index
    %c0_216 = arith.constant 0 : index
    %1080 = vector.load %arg10[%c0_214, %c0_215, %c0_216] : memref<1x22x10xf32, #tpu.memory_space<vmem>>, vector<1x22x3xf32>
    tpu.vector_store %arg10[%c0_214, %c0_215, %c0_216], %1077 {strides = array<i32>} : memref<1x22x10xf32, #tpu.memory_space<vmem>>, vector<1x22x3xf32>,
    %c0_217 = arith.constant 0 : index
    %c0_218 = arith.constant 0 : index
    %c7_219 = arith.constant 7 : index
    %1081 = vector.load %arg10[%c0_217, %c0_218, %c7_219] : memref<1x22x10xf32, #tpu.memory_space<vmem>>, vector<1x22x3xf32>
    tpu.vector_store %arg10[%c0_217, %c0_218, %c7_219], %1077 {strides = array<i32>} : memref<1x22x10xf32, #tpu.memory_space<vmem>>, vector<1x22x3xf32>,
    %c0_220 = arith.constant 0 : index
    %c3_221 = arith.constant 3 : index
    %c3_222 = arith.constant 3 : index
    %1082 = vector.load %arg10[%c0_220, %c3_221, %c3_222] : memref<1x22x10xf32, #tpu.memory_space<vmem>>, vector<1x16x4xf32>
    tpu.vector_store %arg10[%c0_220, %c3_221, %c3_222], %22 {strides = array<i32>} : memref<1x22x10xf32, #tpu.memory_space<vmem>>, vector<1x16x4xf32>,
    %c0_223 = arith.constant 0 : index
    %c0_224 = arith.constant 0 : index
    %c0_225 = arith.constant 0 : index
    %1083 = vector.load %arg11[%c0_223, %c0_224, %c0_225] : memref<1x22x10xf32, #tpu.memory_space<vmem>>, vector<1x3x10xf32>
    tpu.vector_store %arg11[%c0_223, %c0_224, %c0_225], %1076 {strides = array<i32>} : memref<1x22x10xf32, #tpu.memory_space<vmem>>, vector<1x3x10xf32>,
    %c0_226 = arith.constant 0 : index
    %c19_227 = arith.constant 19 : index
    %c0_228 = arith.constant 0 : index
    %1084 = vector.load %arg11[%c0_226, %c19_227, %c0_228] : memref<1x22x10xf32, #tpu.memory_space<vmem>>, vector<1x3x10xf32>
    tpu.vector_store %arg11[%c0_226, %c19_227, %c0_228], %1076 {strides = array<i32>} : memref<1x22x10xf32, #tpu.memory_space<vmem>>, vector<1x3x10xf32>,
    %c0_229 = arith.constant 0 : index
    %c0_230 = arith.constant 0 : index
    %c0_231 = arith.constant 0 : index
    %1085 = vector.load %arg11[%c0_229, %c0_230, %c0_231] : memref<1x22x10xf32, #tpu.memory_space<vmem>>, vector<1x22x3xf32>
    tpu.vector_store %arg11[%c0_229, %c0_230, %c0_231], %1077 {strides = array<i32>} : memref<1x22x10xf32, #tpu.memory_space<vmem>>, vector<1x22x3xf32>,
    %c0_232 = arith.constant 0 : index
    %c0_233 = arith.constant 0 : index
    %c7_234 = arith.constant 7 : index
    %1086 = vector.load %arg11[%c0_232, %c0_233, %c7_234] : memref<1x22x10xf32, #tpu.memory_space<vmem>>, vector<1x22x3xf32>
    tpu.vector_store %arg11[%c0_232, %c0_233, %c7_234], %1077 {strides = array<i32>} : memref<1x22x10xf32, #tpu.memory_space<vmem>>, vector<1x22x3xf32>,
    %c0_235 = arith.constant 0 : index
    %c3_236 = arith.constant 3 : index
    %c3_237 = arith.constant 3 : index
    %1087 = vector.load %arg11[%c0_235, %c3_236, %c3_237] : memref<1x22x10xf32, #tpu.memory_space<vmem>>, vector<1x16x4xf32>
    tpu.vector_store %arg11[%c0_235, %c3_236, %c3_237], %23 {strides = array<i32>} : memref<1x22x10xf32, #tpu.memory_space<vmem>>, vector<1x16x4xf32>,
    %c0_238 = arith.constant 0 : index
    %c0_239 = arith.constant 0 : index
    %c0_240 = arith.constant 0 : index
    %1088 = vector.load %arg10[%c0_238, %c0_239, %c0_240] : memref<1x22x10xf32, #tpu.memory_space<vmem>>, vector<1x22x10xf32>
    %c0_241 = arith.constant 0 : index
    %c0_242 = arith.constant 0 : index
    %c0_243 = arith.constant 0 : index
    %1089 = vector.load %arg11[%c0_241, %c0_242, %c0_243] : memref<1x22x10xf32, #tpu.memory_space<vmem>>, vector<1x22x10xf32>
    %cst_244 = arith.constant 0.000000e+00 : f32
    %1090 = vector.broadcast %cst_244 : f32 to vector<1x16x4xf32>
    %1091 = vector.extract_strided_slice %1088 {offsets = [0, 0, 0], sizes = [1, 22, 4], strides = [1, 1, 1]} : vector<1x22x10xf32> to vector<1x22x4xf32>
    %1092 = vector.extract_strided_slice %1089 {offsets = [0, 0, 0], sizes = [1, 22, 4], strides = [1, 1, 1]} : vector<1x22x10xf32> to vector<1x22x4xf32>
    %c0_245 = arith.constant 0 : index
    %1093 = memref.load %arg4[%c0_245] : memref<98xf32, #tpu.memory_space<smem>>
    %c49_246 = arith.constant 49 : index
    %1094 = memref.load %arg4[%c49_246] : memref<98xf32, #tpu.memory_space<smem>>
    %1095 = vector.extract_strided_slice %1091 {offsets = [0, 0, 0], sizes = [1, 16, 4], strides = [1, 1, 1]} : vector<1x22x4xf32> to vector<1x16x4xf32>
    %1096 = vector.broadcast %1093 : f32 to vector<1x16x4xf32>
    %1097 = arith.mulf %1096, %1095 : vector<1x16x4xf32>
    %1098 = arith.addf %1090, %1097 : vector<1x16x4xf32>
    %1099 = vector.extract_strided_slice %1092 {offsets = [0, 0, 0], sizes = [1, 16, 4], strides = [1, 1, 1]} : vector<1x22x4xf32> to vector<1x16x4xf32>
    %1100 = vector.broadcast %1094 : f32 to vector<1x16x4xf32>
    %1101 = arith.mulf %1100, %1099 : vector<1x16x4xf32>
    %1102 = arith.addf %1098, %1101 : vector<1x16x4xf32>
    %c7_247 = arith.constant 7 : index
    %1103 = memref.load %arg4[%c7_247] : memref<98xf32, #tpu.memory_space<smem>>
    %c56_248 = arith.constant 56 : index
    %1104 = memref.load %arg4[%c56_248] : memref<98xf32, #tpu.memory_space<smem>>
    %1105 = vector.extract_strided_slice %1091 {offsets = [0, 1, 0], sizes = [1, 16, 4], strides = [1, 1, 1]} : vector<1x22x4xf32> to vector<1x16x4xf32>
    %1106 = vector.broadcast %1103 : f32 to vector<1x16x4xf32>
    %1107 = arith.mulf %1106, %1105 : vector<1x16x4xf32>
    %1108 = arith.addf %1102, %1107 : vector<1x16x4xf32>
    %1109 = vector.extract_strided_slice %1092 {offsets = [0, 1, 0], sizes = [1, 16, 4], strides = [1, 1, 1]} : vector<1x22x4xf32> to vector<1x16x4xf32>
    %1110 = vector.broadcast %1104 : f32 to vector<1x16x4xf32>
    %1111 = arith.mulf %1110, %1109 : vector<1x16x4xf32>
    %1112 = arith.addf %1108, %1111 : vector<1x16x4xf32>
    %c14_249 = arith.constant 14 : index
    %1113 = memref.load %arg4[%c14_249] : memref<98xf32, #tpu.memory_space<smem>>
    %c63_250 = arith.constant 63 : index
    %1114 = memref.load %arg4[%c63_250] : memref<98xf32, #tpu.memory_space<smem>>
    %1115 = vector.extract_strided_slice %1091 {offsets = [0, 2, 0], sizes = [1, 16, 4], strides = [1, 1, 1]} : vector<1x22x4xf32> to vector<1x16x4xf32>
    %1116 = vector.broadcast %1113 : f32 to vector<1x16x4xf32>
    %1117 = arith.mulf %1116, %1115 : vector<1x16x4xf32>
    %1118 = arith.addf %1112, %1117 : vector<1x16x4xf32>
    %1119 = vector.extract_strided_slice %1092 {offsets = [0, 2, 0], sizes = [1, 16, 4], strides = [1, 1, 1]} : vector<1x22x4xf32> to vector<1x16x4xf32>
    %1120 = vector.broadcast %1114 : f32 to vector<1x16x4xf32>
    %1121 = arith.mulf %1120, %1119 : vector<1x16x4xf32>
    %1122 = arith.addf %1118, %1121 : vector<1x16x4xf32>
    %c21_251 = arith.constant 21 : index
    %1123 = memref.load %arg4[%c21_251] : memref<98xf32, #tpu.memory_space<smem>>
    %c70_252 = arith.constant 70 : index
    %1124 = memref.load %arg4[%c70_252] : memref<98xf32, #tpu.memory_space<smem>>
    %1125 = vector.extract_strided_slice %1091 {offsets = [0, 3, 0], sizes = [1, 16, 4], strides = [1, 1, 1]} : vector<1x22x4xf32> to vector<1x16x4xf32>
    %1126 = vector.broadcast %1123 : f32 to vector<1x16x4xf32>
    %1127 = arith.mulf %1126, %1125 : vector<1x16x4xf32>
    %1128 = arith.addf %1122, %1127 : vector<1x16x4xf32>
    %1129 = vector.extract_strided_slice %1092 {offsets = [0, 3, 0], sizes = [1, 16, 4], strides = [1, 1, 1]} : vector<1x22x4xf32> to vector<1x16x4xf32>
    %1130 = vector.broadcast %1124 : f32 to vector<1x16x4xf32>
    %1131 = arith.mulf %1130, %1129 : vector<1x16x4xf32>
    %1132 = arith.addf %1128, %1131 : vector<1x16x4xf32>
    %c28_253 = arith.constant 28 : index
    %1133 = memref.load %arg4[%c28_253] : memref<98xf32, #tpu.memory_space<smem>>
    %c77_254 = arith.constant 77 : index
    %1134 = memref.load %arg4[%c77_254] : memref<98xf32, #tpu.memory_space<smem>>
    %1135 = vector.extract_strided_slice %1091 {offsets = [0, 4, 0], sizes = [1, 16, 4], strides = [1, 1, 1]} : vector<1x22x4xf32> to vector<1x16x4xf32>
    %1136 = vector.broadcast %1133 : f32 to vector<1x16x4xf32>
    %1137 = arith.mulf %1136, %1135 : vector<1x16x4xf32>
    %1138 = arith.addf %1132, %1137 : vector<1x16x4xf32>
    %1139 = vector.extract_strided_slice %1092 {offsets = [0, 4, 0], sizes = [1, 16, 4], strides = [1, 1, 1]} : vector<1x22x4xf32> to vector<1x16x4xf32>
    %1140 = vector.broadcast %1134 : f32 to vector<1x16x4xf32>
    %1141 = arith.mulf %1140, %1139 : vector<1x16x4xf32>
    %1142 = arith.addf %1138, %1141 : vector<1x16x4xf32>
    %c35_255 = arith.constant 35 : index
    %1143 = memref.load %arg4[%c35_255] : memref<98xf32, #tpu.memory_space<smem>>
    %c84_256 = arith.constant 84 : index
    %1144 = memref.load %arg4[%c84_256] : memref<98xf32, #tpu.memory_space<smem>>
    %1145 = vector.extract_strided_slice %1091 {offsets = [0, 5, 0], sizes = [1, 16, 4], strides = [1, 1, 1]} : vector<1x22x4xf32> to vector<1x16x4xf32>
    %1146 = vector.broadcast %1143 : f32 to vector<1x16x4xf32>
    %1147 = arith.mulf %1146, %1145 : vector<1x16x4xf32>
    %1148 = arith.addf %1142, %1147 : vector<1x16x4xf32>
    %1149 = vector.extract_strided_slice %1092 {offsets = [0, 5, 0], sizes = [1, 16, 4], strides = [1, 1, 1]} : vector<1x22x4xf32> to vector<1x16x4xf32>
    %1150 = vector.broadcast %1144 : f32 to vector<1x16x4xf32>
    %1151 = arith.mulf %1150, %1149 : vector<1x16x4xf32>
    %1152 = arith.addf %1148, %1151 : vector<1x16x4xf32>
    %c42_257 = arith.constant 42 : index
    %1153 = memref.load %arg4[%c42_257] : memref<98xf32, #tpu.memory_space<smem>>
    %c91_258 = arith.constant 91 : index
    %1154 = memref.load %arg4[%c91_258] : memref<98xf32, #tpu.memory_space<smem>>
    %1155 = vector.extract_strided_slice %1091 {offsets = [0, 6, 0], sizes = [1, 16, 4], strides = [1, 1, 1]} : vector<1x22x4xf32> to vector<1x16x4xf32>
    %1156 = vector.broadcast %1153 : f32 to vector<1x16x4xf32>
    %1157 = arith.mulf %1156, %1155 : vector<1x16x4xf32>
    %1158 = arith.addf %1152, %1157 : vector<1x16x4xf32>
    %1159 = vector.extract_strided_slice %1092 {offsets = [0, 6, 0], sizes = [1, 16, 4], strides = [1, 1, 1]} : vector<1x22x4xf32> to vector<1x16x4xf32>
    %1160 = vector.broadcast %1154 : f32 to vector<1x16x4xf32>
    %1161 = arith.mulf %1160, %1159 : vector<1x16x4xf32>
    %1162 = arith.addf %1158, %1161 : vector<1x16x4xf32>
    %1163 = vector.extract_strided_slice %1088 {offsets = [0, 0, 1], sizes = [1, 22, 4], strides = [1, 1, 1]} : vector<1x22x10xf32> to vector<1x22x4xf32>
    %1164 = vector.extract_strided_slice %1089 {offsets = [0, 0, 1], sizes = [1, 22, 4], strides = [1, 1, 1]} : vector<1x22x10xf32> to vector<1x22x4xf32>
    %c1_259 = arith.constant 1 : index
    %1165 = memref.load %arg4[%c1_259] : memref<98xf32, #tpu.memory_space<smem>>
    %c50_260 = arith.constant 50 : index
    %1166 = memref.load %arg4[%c50_260] : memref<98xf32, #tpu.memory_space<smem>>
    %1167 = vector.extract_strided_slice %1163 {offsets = [0, 0, 0], sizes = [1, 16, 4], strides = [1, 1, 1]} : vector<1x22x4xf32> to vector<1x16x4xf32>
    %1168 = vector.broadcast %1165 : f32 to vector<1x16x4xf32>
    %1169 = arith.mulf %1168, %1167 : vector<1x16x4xf32>
    %1170 = arith.addf %1162, %1169 : vector<1x16x4xf32>
    %1171 = vector.extract_strided_slice %1164 {offsets = [0, 0, 0], sizes = [1, 16, 4], strides = [1, 1, 1]} : vector<1x22x4xf32> to vector<1x16x4xf32>
    %1172 = vector.broadcast %1166 : f32 to vector<1x16x4xf32>
    %1173 = arith.mulf %1172, %1171 : vector<1x16x4xf32>
    %1174 = arith.addf %1170, %1173 : vector<1x16x4xf32>
    %c8_261 = arith.constant 8 : index
    %1175 = memref.load %arg4[%c8_261] : memref<98xf32, #tpu.memory_space<smem>>
    %c57_262 = arith.constant 57 : index
    %1176 = memref.load %arg4[%c57_262] : memref<98xf32, #tpu.memory_space<smem>>
    %1177 = vector.extract_strided_slice %1163 {offsets = [0, 1, 0], sizes = [1, 16, 4], strides = [1, 1, 1]} : vector<1x22x4xf32> to vector<1x16x4xf32>
    %1178 = vector.broadcast %1175 : f32 to vector<1x16x4xf32>
    %1179 = arith.mulf %1178, %1177 : vector<1x16x4xf32>
    %1180 = arith.addf %1174, %1179 : vector<1x16x4xf32>
    %1181 = vector.extract_strided_slice %1164 {offsets = [0, 1, 0], sizes = [1, 16, 4], strides = [1, 1, 1]} : vector<1x22x4xf32> to vector<1x16x4xf32>
    %1182 = vector.broadcast %1176 : f32 to vector<1x16x4xf32>
    %1183 = arith.mulf %1182, %1181 : vector<1x16x4xf32>
    %1184 = arith.addf %1180, %1183 : vector<1x16x4xf32>
    %c15_263 = arith.constant 15 : index
    %1185 = memref.load %arg4[%c15_263] : memref<98xf32, #tpu.memory_space<smem>>
    %c64_264 = arith.constant 64 : index
    %1186 = memref.load %arg4[%c64_264] : memref<98xf32, #tpu.memory_space<smem>>
    %1187 = vector.extract_strided_slice %1163 {offsets = [0, 2, 0], sizes = [1, 16, 4], strides = [1, 1, 1]} : vector<1x22x4xf32> to vector<1x16x4xf32>
    %1188 = vector.broadcast %1185 : f32 to vector<1x16x4xf32>
    %1189 = arith.mulf %1188, %1187 : vector<1x16x4xf32>
    %1190 = arith.addf %1184, %1189 : vector<1x16x4xf32>
    %1191 = vector.extract_strided_slice %1164 {offsets = [0, 2, 0], sizes = [1, 16, 4], strides = [1, 1, 1]} : vector<1x22x4xf32> to vector<1x16x4xf32>
    %1192 = vector.broadcast %1186 : f32 to vector<1x16x4xf32>
    %1193 = arith.mulf %1192, %1191 : vector<1x16x4xf32>
    %1194 = arith.addf %1190, %1193 : vector<1x16x4xf32>
    %c22_265 = arith.constant 22 : index
    %1195 = memref.load %arg4[%c22_265] : memref<98xf32, #tpu.memory_space<smem>>
    %c71_266 = arith.constant 71 : index
    %1196 = memref.load %arg4[%c71_266] : memref<98xf32, #tpu.memory_space<smem>>
    %1197 = vector.extract_strided_slice %1163 {offsets = [0, 3, 0], sizes = [1, 16, 4], strides = [1, 1, 1]} : vector<1x22x4xf32> to vector<1x16x4xf32>
    %1198 = vector.broadcast %1195 : f32 to vector<1x16x4xf32>
    %1199 = arith.mulf %1198, %1197 : vector<1x16x4xf32>
    %1200 = arith.addf %1194, %1199 : vector<1x16x4xf32>
    %1201 = vector.extract_strided_slice %1164 {offsets = [0, 3, 0], sizes = [1, 16, 4], strides = [1, 1, 1]} : vector<1x22x4xf32> to vector<1x16x4xf32>
    %1202 = vector.broadcast %1196 : f32 to vector<1x16x4xf32>
    %1203 = arith.mulf %1202, %1201 : vector<1x16x4xf32>
    %1204 = arith.addf %1200, %1203 : vector<1x16x4xf32>
    %c29_267 = arith.constant 29 : index
    %1205 = memref.load %arg4[%c29_267] : memref<98xf32, #tpu.memory_space<smem>>
    %c78_268 = arith.constant 78 : index
    %1206 = memref.load %arg4[%c78_268] : memref<98xf32, #tpu.memory_space<smem>>
    %1207 = vector.extract_strided_slice %1163 {offsets = [0, 4, 0], sizes = [1, 16, 4], strides = [1, 1, 1]} : vector<1x22x4xf32> to vector<1x16x4xf32>
    %1208 = vector.broadcast %1205 : f32 to vector<1x16x4xf32>
    %1209 = arith.mulf %1208, %1207 : vector<1x16x4xf32>
    %1210 = arith.addf %1204, %1209 : vector<1x16x4xf32>
    %1211 = vector.extract_strided_slice %1164 {offsets = [0, 4, 0], sizes = [1, 16, 4], strides = [1, 1, 1]} : vector<1x22x4xf32> to vector<1x16x4xf32>
    %1212 = vector.broadcast %1206 : f32 to vector<1x16x4xf32>
    %1213 = arith.mulf %1212, %1211 : vector<1x16x4xf32>
    %1214 = arith.addf %1210, %1213 : vector<1x16x4xf32>
    %c36_269 = arith.constant 36 : index
    %1215 = memref.load %arg4[%c36_269] : memref<98xf32, #tpu.memory_space<smem>>
    %c85_270 = arith.constant 85 : index
    %1216 = memref.load %arg4[%c85_270] : memref<98xf32, #tpu.memory_space<smem>>
    %1217 = vector.extract_strided_slice %1163 {offsets = [0, 5, 0], sizes = [1, 16, 4], strides = [1, 1, 1]} : vector<1x22x4xf32> to vector<1x16x4xf32>
    %1218 = vector.broadcast %1215 : f32 to vector<1x16x4xf32>
    %1219 = arith.mulf %1218, %1217 : vector<1x16x4xf32>
    %1220 = arith.addf %1214, %1219 : vector<1x16x4xf32>
    %1221 = vector.extract_strided_slice %1164 {offsets = [0, 5, 0], sizes = [1, 16, 4], strides = [1, 1, 1]} : vector<1x22x4xf32> to vector<1x16x4xf32>
    %1222 = vector.broadcast %1216 : f32 to vector<1x16x4xf32>
    %1223 = arith.mulf %1222, %1221 : vector<1x16x4xf32>
    %1224 = arith.addf %1220, %1223 : vector<1x16x4xf32>
    %c43_271 = arith.constant 43 : index
    %1225 = memref.load %arg4[%c43_271] : memref<98xf32, #tpu.memory_space<smem>>
    %c92_272 = arith.constant 92 : index
    %1226 = memref.load %arg4[%c92_272] : memref<98xf32, #tpu.memory_space<smem>>
    %1227 = vector.extract_strided_slice %1163 {offsets = [0, 6, 0], sizes = [1, 16, 4], strides = [1, 1, 1]} : vector<1x22x4xf32> to vector<1x16x4xf32>
    %1228 = vector.broadcast %1225 : f32 to vector<1x16x4xf32>
    %1229 = arith.mulf %1228, %1227 : vector<1x16x4xf32>
    %1230 = arith.addf %1224, %1229 : vector<1x16x4xf32>
    %1231 = vector.extract_strided_slice %1164 {offsets = [0, 6, 0], sizes = [1, 16, 4], strides = [1, 1, 1]} : vector<1x22x4xf32> to vector<1x16x4xf32>
    %1232 = vector.broadcast %1226 : f32 to vector<1x16x4xf32>
    %1233 = arith.mulf %1232, %1231 : vector<1x16x4xf32>
    %1234 = arith.addf %1230, %1233 : vector<1x16x4xf32>
    %1235 = vector.extract_strided_slice %1088 {offsets = [0, 0, 2], sizes = [1, 22, 4], strides = [1, 1, 1]} : vector<1x22x10xf32> to vector<1x22x4xf32>
    %1236 = vector.extract_strided_slice %1089 {offsets = [0, 0, 2], sizes = [1, 22, 4], strides = [1, 1, 1]} : vector<1x22x10xf32> to vector<1x22x4xf32>
    %c2_273 = arith.constant 2 : index
    %1237 = memref.load %arg4[%c2_273] : memref<98xf32, #tpu.memory_space<smem>>
    %c51_274 = arith.constant 51 : index
    %1238 = memref.load %arg4[%c51_274] : memref<98xf32, #tpu.memory_space<smem>>
    %1239 = vector.extract_strided_slice %1235 {offsets = [0, 0, 0], sizes = [1, 16, 4], strides = [1, 1, 1]} : vector<1x22x4xf32> to vector<1x16x4xf32>
    %1240 = vector.broadcast %1237 : f32 to vector<1x16x4xf32>
    %1241 = arith.mulf %1240, %1239 : vector<1x16x4xf32>
    %1242 = arith.addf %1234, %1241 : vector<1x16x4xf32>
    %1243 = vector.extract_strided_slice %1236 {offsets = [0, 0, 0], sizes = [1, 16, 4], strides = [1, 1, 1]} : vector<1x22x4xf32> to vector<1x16x4xf32>
    %1244 = vector.broadcast %1238 : f32 to vector<1x16x4xf32>
    %1245 = arith.mulf %1244, %1243 : vector<1x16x4xf32>
    %1246 = arith.addf %1242, %1245 : vector<1x16x4xf32>
    %c9_275 = arith.constant 9 : index
    %1247 = memref.load %arg4[%c9_275] : memref<98xf32, #tpu.memory_space<smem>>
    %c58_276 = arith.constant 58 : index
    %1248 = memref.load %arg4[%c58_276] : memref<98xf32, #tpu.memory_space<smem>>
    %1249 = vector.extract_strided_slice %1235 {offsets = [0, 1, 0], sizes = [1, 16, 4], strides = [1, 1, 1]} : vector<1x22x4xf32> to vector<1x16x4xf32>
    %1250 = vector.broadcast %1247 : f32 to vector<1x16x4xf32>
    %1251 = arith.mulf %1250, %1249 : vector<1x16x4xf32>
    %1252 = arith.addf %1246, %1251 : vector<1x16x4xf32>
    %1253 = vector.extract_strided_slice %1236 {offsets = [0, 1, 0], sizes = [1, 16, 4], strides = [1, 1, 1]} : vector<1x22x4xf32> to vector<1x16x4xf32>
    %1254 = vector.broadcast %1248 : f32 to vector<1x16x4xf32>
    %1255 = arith.mulf %1254, %1253 : vector<1x16x4xf32>
    %1256 = arith.addf %1252, %1255 : vector<1x16x4xf32>
    %c16_277 = arith.constant 16 : index
    %1257 = memref.load %arg4[%c16_277] : memref<98xf32, #tpu.memory_space<smem>>
    %c65_278 = arith.constant 65 : index
    %1258 = memref.load %arg4[%c65_278] : memref<98xf32, #tpu.memory_space<smem>>
    %1259 = vector.extract_strided_slice %1235 {offsets = [0, 2, 0], sizes = [1, 16, 4], strides = [1, 1, 1]} : vector<1x22x4xf32> to vector<1x16x4xf32>
    %1260 = vector.broadcast %1257 : f32 to vector<1x16x4xf32>
    %1261 = arith.mulf %1260, %1259 : vector<1x16x4xf32>
    %1262 = arith.addf %1256, %1261 : vector<1x16x4xf32>
    %1263 = vector.extract_strided_slice %1236 {offsets = [0, 2, 0], sizes = [1, 16, 4], strides = [1, 1, 1]} : vector<1x22x4xf32> to vector<1x16x4xf32>
    %1264 = vector.broadcast %1258 : f32 to vector<1x16x4xf32>
    %1265 = arith.mulf %1264, %1263 : vector<1x16x4xf32>
    %1266 = arith.addf %1262, %1265 : vector<1x16x4xf32>
    %c23_279 = arith.constant 23 : index
    %1267 = memref.load %arg4[%c23_279] : memref<98xf32, #tpu.memory_space<smem>>
    %c72_280 = arith.constant 72 : index
    %1268 = memref.load %arg4[%c72_280] : memref<98xf32, #tpu.memory_space<smem>>
    %1269 = vector.extract_strided_slice %1235 {offsets = [0, 3, 0], sizes = [1, 16, 4], strides = [1, 1, 1]} : vector<1x22x4xf32> to vector<1x16x4xf32>
    %1270 = vector.broadcast %1267 : f32 to vector<1x16x4xf32>
    %1271 = arith.mulf %1270, %1269 : vector<1x16x4xf32>
    %1272 = arith.addf %1266, %1271 : vector<1x16x4xf32>
    %1273 = vector.extract_strided_slice %1236 {offsets = [0, 3, 0], sizes = [1, 16, 4], strides = [1, 1, 1]} : vector<1x22x4xf32> to vector<1x16x4xf32>
    %1274 = vector.broadcast %1268 : f32 to vector<1x16x4xf32>
    %1275 = arith.mulf %1274, %1273 : vector<1x16x4xf32>
    %1276 = arith.addf %1272, %1275 : vector<1x16x4xf32>
    %c30_281 = arith.constant 30 : index
    %1277 = memref.load %arg4[%c30_281] : memref<98xf32, #tpu.memory_space<smem>>
    %c79_282 = arith.constant 79 : index
    %1278 = memref.load %arg4[%c79_282] : memref<98xf32, #tpu.memory_space<smem>>
    %1279 = vector.extract_strided_slice %1235 {offsets = [0, 4, 0], sizes = [1, 16, 4], strides = [1, 1, 1]} : vector<1x22x4xf32> to vector<1x16x4xf32>
    %1280 = vector.broadcast %1277 : f32 to vector<1x16x4xf32>
    %1281 = arith.mulf %1280, %1279 : vector<1x16x4xf32>
    %1282 = arith.addf %1276, %1281 : vector<1x16x4xf32>
    %1283 = vector.extract_strided_slice %1236 {offsets = [0, 4, 0], sizes = [1, 16, 4], strides = [1, 1, 1]} : vector<1x22x4xf32> to vector<1x16x4xf32>
    %1284 = vector.broadcast %1278 : f32 to vector<1x16x4xf32>
    %1285 = arith.mulf %1284, %1283 : vector<1x16x4xf32>
    %1286 = arith.addf %1282, %1285 : vector<1x16x4xf32>
    %c37_283 = arith.constant 37 : index
    %1287 = memref.load %arg4[%c37_283] : memref<98xf32, #tpu.memory_space<smem>>
    %c86_284 = arith.constant 86 : index
    %1288 = memref.load %arg4[%c86_284] : memref<98xf32, #tpu.memory_space<smem>>
    %1289 = vector.extract_strided_slice %1235 {offsets = [0, 5, 0], sizes = [1, 16, 4], strides = [1, 1, 1]} : vector<1x22x4xf32> to vector<1x16x4xf32>
    %1290 = vector.broadcast %1287 : f32 to vector<1x16x4xf32>
    %1291 = arith.mulf %1290, %1289 : vector<1x16x4xf32>
    %1292 = arith.addf %1286, %1291 : vector<1x16x4xf32>
    %1293 = vector.extract_strided_slice %1236 {offsets = [0, 5, 0], sizes = [1, 16, 4], strides = [1, 1, 1]} : vector<1x22x4xf32> to vector<1x16x4xf32>
    %1294 = vector.broadcast %1288 : f32 to vector<1x16x4xf32>
    %1295 = arith.mulf %1294, %1293 : vector<1x16x4xf32>
    %1296 = arith.addf %1292, %1295 : vector<1x16x4xf32>
    %c44_285 = arith.constant 44 : index
    %1297 = memref.load %arg4[%c44_285] : memref<98xf32, #tpu.memory_space<smem>>
    %c93_286 = arith.constant 93 : index
    %1298 = memref.load %arg4[%c93_286] : memref<98xf32, #tpu.memory_space<smem>>
    %1299 = vector.extract_strided_slice %1235 {offsets = [0, 6, 0], sizes = [1, 16, 4], strides = [1, 1, 1]} : vector<1x22x4xf32> to vector<1x16x4xf32>
    %1300 = vector.broadcast %1297 : f32 to vector<1x16x4xf32>
    %1301 = arith.mulf %1300, %1299 : vector<1x16x4xf32>
    %1302 = arith.addf %1296, %1301 : vector<1x16x4xf32>
    %1303 = vector.extract_strided_slice %1236 {offsets = [0, 6, 0], sizes = [1, 16, 4], strides = [1, 1, 1]} : vector<1x22x4xf32> to vector<1x16x4xf32>
    %1304 = vector.broadcast %1298 : f32 to vector<1x16x4xf32>
    %1305 = arith.mulf %1304, %1303 : vector<1x16x4xf32>
    %1306 = arith.addf %1302, %1305 : vector<1x16x4xf32>
    %1307 = vector.extract_strided_slice %1088 {offsets = [0, 0, 3], sizes = [1, 22, 4], strides = [1, 1, 1]} : vector<1x22x10xf32> to vector<1x22x4xf32>
    %1308 = vector.extract_strided_slice %1089 {offsets = [0, 0, 3], sizes = [1, 22, 4], strides = [1, 1, 1]} : vector<1x22x10xf32> to vector<1x22x4xf32>
    %c3_287 = arith.constant 3 : index
    %1309 = memref.load %arg4[%c3_287] : memref<98xf32, #tpu.memory_space<smem>>
    %c52_288 = arith.constant 52 : index
    %1310 = memref.load %arg4[%c52_288] : memref<98xf32, #tpu.memory_space<smem>>
    %1311 = vector.extract_strided_slice %1307 {offsets = [0, 0, 0], sizes = [1, 16, 4], strides = [1, 1, 1]} : vector<1x22x4xf32> to vector<1x16x4xf32>
    %1312 = vector.broadcast %1309 : f32 to vector<1x16x4xf32>
    %1313 = arith.mulf %1312, %1311 : vector<1x16x4xf32>
    %1314 = arith.addf %1306, %1313 : vector<1x16x4xf32>
    %1315 = vector.extract_strided_slice %1308 {offsets = [0, 0, 0], sizes = [1, 16, 4], strides = [1, 1, 1]} : vector<1x22x4xf32> to vector<1x16x4xf32>
    %1316 = vector.broadcast %1310 : f32 to vector<1x16x4xf32>
    %1317 = arith.mulf %1316, %1315 : vector<1x16x4xf32>
    %1318 = arith.addf %1314, %1317 : vector<1x16x4xf32>
    %c10_289 = arith.constant 10 : index
    %1319 = memref.load %arg4[%c10_289] : memref<98xf32, #tpu.memory_space<smem>>
    %c59_290 = arith.constant 59 : index
    %1320 = memref.load %arg4[%c59_290] : memref<98xf32, #tpu.memory_space<smem>>
    %1321 = vector.extract_strided_slice %1307 {offsets = [0, 1, 0], sizes = [1, 16, 4], strides = [1, 1, 1]} : vector<1x22x4xf32> to vector<1x16x4xf32>
    %1322 = vector.broadcast %1319 : f32 to vector<1x16x4xf32>
    %1323 = arith.mulf %1322, %1321 : vector<1x16x4xf32>
    %1324 = arith.addf %1318, %1323 : vector<1x16x4xf32>
    %1325 = vector.extract_strided_slice %1308 {offsets = [0, 1, 0], sizes = [1, 16, 4], strides = [1, 1, 1]} : vector<1x22x4xf32> to vector<1x16x4xf32>
    %1326 = vector.broadcast %1320 : f32 to vector<1x16x4xf32>
    %1327 = arith.mulf %1326, %1325 : vector<1x16x4xf32>
    %1328 = arith.addf %1324, %1327 : vector<1x16x4xf32>
    %c17_291 = arith.constant 17 : index
    %1329 = memref.load %arg4[%c17_291] : memref<98xf32, #tpu.memory_space<smem>>
    %c66_292 = arith.constant 66 : index
    %1330 = memref.load %arg4[%c66_292] : memref<98xf32, #tpu.memory_space<smem>>
    %1331 = vector.extract_strided_slice %1307 {offsets = [0, 2, 0], sizes = [1, 16, 4], strides = [1, 1, 1]} : vector<1x22x4xf32> to vector<1x16x4xf32>
    %1332 = vector.broadcast %1329 : f32 to vector<1x16x4xf32>
    %1333 = arith.mulf %1332, %1331 : vector<1x16x4xf32>
    %1334 = arith.addf %1328, %1333 : vector<1x16x4xf32>
    %1335 = vector.extract_strided_slice %1308 {offsets = [0, 2, 0], sizes = [1, 16, 4], strides = [1, 1, 1]} : vector<1x22x4xf32> to vector<1x16x4xf32>
    %1336 = vector.broadcast %1330 : f32 to vector<1x16x4xf32>
    %1337 = arith.mulf %1336, %1335 : vector<1x16x4xf32>
    %1338 = arith.addf %1334, %1337 : vector<1x16x4xf32>
    %c24_293 = arith.constant 24 : index
    %1339 = memref.load %arg4[%c24_293] : memref<98xf32, #tpu.memory_space<smem>>
    %c73_294 = arith.constant 73 : index
    %1340 = memref.load %arg4[%c73_294] : memref<98xf32, #tpu.memory_space<smem>>
    %1341 = vector.extract_strided_slice %1307 {offsets = [0, 3, 0], sizes = [1, 16, 4], strides = [1, 1, 1]} : vector<1x22x4xf32> to vector<1x16x4xf32>
    %1342 = vector.broadcast %1339 : f32 to vector<1x16x4xf32>
    %1343 = arith.mulf %1342, %1341 : vector<1x16x4xf32>
    %1344 = arith.addf %1338, %1343 : vector<1x16x4xf32>
    %1345 = vector.extract_strided_slice %1308 {offsets = [0, 3, 0], sizes = [1, 16, 4], strides = [1, 1, 1]} : vector<1x22x4xf32> to vector<1x16x4xf32>
    %1346 = vector.broadcast %1340 : f32 to vector<1x16x4xf32>
    %1347 = arith.mulf %1346, %1345 : vector<1x16x4xf32>
    %1348 = arith.addf %1344, %1347 : vector<1x16x4xf32>
    %c31_295 = arith.constant 31 : index
    %1349 = memref.load %arg4[%c31_295] : memref<98xf32, #tpu.memory_space<smem>>
    %c80_296 = arith.constant 80 : index
    %1350 = memref.load %arg4[%c80_296] : memref<98xf32, #tpu.memory_space<smem>>
    %1351 = vector.extract_strided_slice %1307 {offsets = [0, 4, 0], sizes = [1, 16, 4], strides = [1, 1, 1]} : vector<1x22x4xf32> to vector<1x16x4xf32>
    %1352 = vector.broadcast %1349 : f32 to vector<1x16x4xf32>
    %1353 = arith.mulf %1352, %1351 : vector<1x16x4xf32>
    %1354 = arith.addf %1348, %1353 : vector<1x16x4xf32>
    %1355 = vector.extract_strided_slice %1308 {offsets = [0, 4, 0], sizes = [1, 16, 4], strides = [1, 1, 1]} : vector<1x22x4xf32> to vector<1x16x4xf32>
    %1356 = vector.broadcast %1350 : f32 to vector<1x16x4xf32>
    %1357 = arith.mulf %1356, %1355 : vector<1x16x4xf32>
    %1358 = arith.addf %1354, %1357 : vector<1x16x4xf32>
    %c38_297 = arith.constant 38 : index
    %1359 = memref.load %arg4[%c38_297] : memref<98xf32, #tpu.memory_space<smem>>
    %c87_298 = arith.constant 87 : index
    %1360 = memref.load %arg4[%c87_298] : memref<98xf32, #tpu.memory_space<smem>>
    %1361 = vector.extract_strided_slice %1307 {offsets = [0, 5, 0], sizes = [1, 16, 4], strides = [1, 1, 1]} : vector<1x22x4xf32> to vector<1x16x4xf32>
    %1362 = vector.broadcast %1359 : f32 to vector<1x16x4xf32>
    %1363 = arith.mulf %1362, %1361 : vector<1x16x4xf32>
    %1364 = arith.addf %1358, %1363 : vector<1x16x4xf32>
    %1365 = vector.extract_strided_slice %1308 {offsets = [0, 5, 0], sizes = [1, 16, 4], strides = [1, 1, 1]} : vector<1x22x4xf32> to vector<1x16x4xf32>
    %1366 = vector.broadcast %1360 : f32 to vector<1x16x4xf32>
    %1367 = arith.mulf %1366, %1365 : vector<1x16x4xf32>
    %1368 = arith.addf %1364, %1367 : vector<1x16x4xf32>
    %c45_299 = arith.constant 45 : index
    %1369 = memref.load %arg4[%c45_299] : memref<98xf32, #tpu.memory_space<smem>>
    %c94_300 = arith.constant 94 : index
    %1370 = memref.load %arg4[%c94_300] : memref<98xf32, #tpu.memory_space<smem>>
    %1371 = vector.extract_strided_slice %1307 {offsets = [0, 6, 0], sizes = [1, 16, 4], strides = [1, 1, 1]} : vector<1x22x4xf32> to vector<1x16x4xf32>
    %1372 = vector.broadcast %1369 : f32 to vector<1x16x4xf32>
    %1373 = arith.mulf %1372, %1371 : vector<1x16x4xf32>
    %1374 = arith.addf %1368, %1373 : vector<1x16x4xf32>
    %1375 = vector.extract_strided_slice %1308 {offsets = [0, 6, 0], sizes = [1, 16, 4], strides = [1, 1, 1]} : vector<1x22x4xf32> to vector<1x16x4xf32>
    %1376 = vector.broadcast %1370 : f32 to vector<1x16x4xf32>
    %1377 = arith.mulf %1376, %1375 : vector<1x16x4xf32>
    %1378 = arith.addf %1374, %1377 : vector<1x16x4xf32>
    %1379 = vector.extract_strided_slice %1088 {offsets = [0, 0, 4], sizes = [1, 22, 4], strides = [1, 1, 1]} : vector<1x22x10xf32> to vector<1x22x4xf32>
    %1380 = vector.extract_strided_slice %1089 {offsets = [0, 0, 4], sizes = [1, 22, 4], strides = [1, 1, 1]} : vector<1x22x10xf32> to vector<1x22x4xf32>
    %c4_301 = arith.constant 4 : index
    %1381 = memref.load %arg4[%c4_301] : memref<98xf32, #tpu.memory_space<smem>>
    %c53_302 = arith.constant 53 : index
    %1382 = memref.load %arg4[%c53_302] : memref<98xf32, #tpu.memory_space<smem>>
    %1383 = vector.extract_strided_slice %1379 {offsets = [0, 0, 0], sizes = [1, 16, 4], strides = [1, 1, 1]} : vector<1x22x4xf32> to vector<1x16x4xf32>
    %1384 = vector.broadcast %1381 : f32 to vector<1x16x4xf32>
    %1385 = arith.mulf %1384, %1383 : vector<1x16x4xf32>
    %1386 = arith.addf %1378, %1385 : vector<1x16x4xf32>
    %1387 = vector.extract_strided_slice %1380 {offsets = [0, 0, 0], sizes = [1, 16, 4], strides = [1, 1, 1]} : vector<1x22x4xf32> to vector<1x16x4xf32>
    %1388 = vector.broadcast %1382 : f32 to vector<1x16x4xf32>
    %1389 = arith.mulf %1388, %1387 : vector<1x16x4xf32>
    %1390 = arith.addf %1386, %1389 : vector<1x16x4xf32>
    %c11_303 = arith.constant 11 : index
    %1391 = memref.load %arg4[%c11_303] : memref<98xf32, #tpu.memory_space<smem>>
    %c60_304 = arith.constant 60 : index
    %1392 = memref.load %arg4[%c60_304] : memref<98xf32, #tpu.memory_space<smem>>
    %1393 = vector.extract_strided_slice %1379 {offsets = [0, 1, 0], sizes = [1, 16, 4], strides = [1, 1, 1]} : vector<1x22x4xf32> to vector<1x16x4xf32>
    %1394 = vector.broadcast %1391 : f32 to vector<1x16x4xf32>
    %1395 = arith.mulf %1394, %1393 : vector<1x16x4xf32>
    %1396 = arith.addf %1390, %1395 : vector<1x16x4xf32>
    %1397 = vector.extract_strided_slice %1380 {offsets = [0, 1, 0], sizes = [1, 16, 4], strides = [1, 1, 1]} : vector<1x22x4xf32> to vector<1x16x4xf32>
    %1398 = vector.broadcast %1392 : f32 to vector<1x16x4xf32>
    %1399 = arith.mulf %1398, %1397 : vector<1x16x4xf32>
    %1400 = arith.addf %1396, %1399 : vector<1x16x4xf32>
    %c18_305 = arith.constant 18 : index
    %1401 = memref.load %arg4[%c18_305] : memref<98xf32, #tpu.memory_space<smem>>
    %c67_306 = arith.constant 67 : index
    %1402 = memref.load %arg4[%c67_306] : memref<98xf32, #tpu.memory_space<smem>>
    %1403 = vector.extract_strided_slice %1379 {offsets = [0, 2, 0], sizes = [1, 16, 4], strides = [1, 1, 1]} : vector<1x22x4xf32> to vector<1x16x4xf32>
    %1404 = vector.broadcast %1401 : f32 to vector<1x16x4xf32>
    %1405 = arith.mulf %1404, %1403 : vector<1x16x4xf32>
    %1406 = arith.addf %1400, %1405 : vector<1x16x4xf32>
    %1407 = vector.extract_strided_slice %1380 {offsets = [0, 2, 0], sizes = [1, 16, 4], strides = [1, 1, 1]} : vector<1x22x4xf32> to vector<1x16x4xf32>
    %1408 = vector.broadcast %1402 : f32 to vector<1x16x4xf32>
    %1409 = arith.mulf %1408, %1407 : vector<1x16x4xf32>
    %1410 = arith.addf %1406, %1409 : vector<1x16x4xf32>
    %c25_307 = arith.constant 25 : index
    %1411 = memref.load %arg4[%c25_307] : memref<98xf32, #tpu.memory_space<smem>>
    %c74_308 = arith.constant 74 : index
    %1412 = memref.load %arg4[%c74_308] : memref<98xf32, #tpu.memory_space<smem>>
    %1413 = vector.extract_strided_slice %1379 {offsets = [0, 3, 0], sizes = [1, 16, 4], strides = [1, 1, 1]} : vector<1x22x4xf32> to vector<1x16x4xf32>
    %1414 = vector.broadcast %1411 : f32 to vector<1x16x4xf32>
    %1415 = arith.mulf %1414, %1413 : vector<1x16x4xf32>
    %1416 = arith.addf %1410, %1415 : vector<1x16x4xf32>
    %1417 = vector.extract_strided_slice %1380 {offsets = [0, 3, 0], sizes = [1, 16, 4], strides = [1, 1, 1]} : vector<1x22x4xf32> to vector<1x16x4xf32>
    %1418 = vector.broadcast %1412 : f32 to vector<1x16x4xf32>
    %1419 = arith.mulf %1418, %1417 : vector<1x16x4xf32>
    %1420 = arith.addf %1416, %1419 : vector<1x16x4xf32>
    %c32_309 = arith.constant 32 : index
    %1421 = memref.load %arg4[%c32_309] : memref<98xf32, #tpu.memory_space<smem>>
    %c81_310 = arith.constant 81 : index
    %1422 = memref.load %arg4[%c81_310] : memref<98xf32, #tpu.memory_space<smem>>
    %1423 = vector.extract_strided_slice %1379 {offsets = [0, 4, 0], sizes = [1, 16, 4], strides = [1, 1, 1]} : vector<1x22x4xf32> to vector<1x16x4xf32>
    %1424 = vector.broadcast %1421 : f32 to vector<1x16x4xf32>
    %1425 = arith.mulf %1424, %1423 : vector<1x16x4xf32>
    %1426 = arith.addf %1420, %1425 : vector<1x16x4xf32>
    %1427 = vector.extract_strided_slice %1380 {offsets = [0, 4, 0], sizes = [1, 16, 4], strides = [1, 1, 1]} : vector<1x22x4xf32> to vector<1x16x4xf32>
    %1428 = vector.broadcast %1422 : f32 to vector<1x16x4xf32>
    %1429 = arith.mulf %1428, %1427 : vector<1x16x4xf32>
    %1430 = arith.addf %1426, %1429 : vector<1x16x4xf32>
    %c39_311 = arith.constant 39 : index
    %1431 = memref.load %arg4[%c39_311] : memref<98xf32, #tpu.memory_space<smem>>
    %c88_312 = arith.constant 88 : index
    %1432 = memref.load %arg4[%c88_312] : memref<98xf32, #tpu.memory_space<smem>>
    %1433 = vector.extract_strided_slice %1379 {offsets = [0, 5, 0], sizes = [1, 16, 4], strides = [1, 1, 1]} : vector<1x22x4xf32> to vector<1x16x4xf32>
    %1434 = vector.broadcast %1431 : f32 to vector<1x16x4xf32>
    %1435 = arith.mulf %1434, %1433 : vector<1x16x4xf32>
    %1436 = arith.addf %1430, %1435 : vector<1x16x4xf32>
    %1437 = vector.extract_strided_slice %1380 {offsets = [0, 5, 0], sizes = [1, 16, 4], strides = [1, 1, 1]} : vector<1x22x4xf32> to vector<1x16x4xf32>
    %1438 = vector.broadcast %1432 : f32 to vector<1x16x4xf32>
    %1439 = arith.mulf %1438, %1437 : vector<1x16x4xf32>
    %1440 = arith.addf %1436, %1439 : vector<1x16x4xf32>
    %c46_313 = arith.constant 46 : index
    %1441 = memref.load %arg4[%c46_313] : memref<98xf32, #tpu.memory_space<smem>>
    %c95_314 = arith.constant 95 : index
    %1442 = memref.load %arg4[%c95_314] : memref<98xf32, #tpu.memory_space<smem>>
    %1443 = vector.extract_strided_slice %1379 {offsets = [0, 6, 0], sizes = [1, 16, 4], strides = [1, 1, 1]} : vector<1x22x4xf32> to vector<1x16x4xf32>
    %1444 = vector.broadcast %1441 : f32 to vector<1x16x4xf32>
    %1445 = arith.mulf %1444, %1443 : vector<1x16x4xf32>
    %1446 = arith.addf %1440, %1445 : vector<1x16x4xf32>
    %1447 = vector.extract_strided_slice %1380 {offsets = [0, 6, 0], sizes = [1, 16, 4], strides = [1, 1, 1]} : vector<1x22x4xf32> to vector<1x16x4xf32>
    %1448 = vector.broadcast %1442 : f32 to vector<1x16x4xf32>
    %1449 = arith.mulf %1448, %1447 : vector<1x16x4xf32>
    %1450 = arith.addf %1446, %1449 : vector<1x16x4xf32>
    %1451 = vector.extract_strided_slice %1088 {offsets = [0, 0, 5], sizes = [1, 22, 4], strides = [1, 1, 1]} : vector<1x22x10xf32> to vector<1x22x4xf32>
    %1452 = vector.extract_strided_slice %1089 {offsets = [0, 0, 5], sizes = [1, 22, 4], strides = [1, 1, 1]} : vector<1x22x10xf32> to vector<1x22x4xf32>
    %c5_315 = arith.constant 5 : index
    %1453 = memref.load %arg4[%c5_315] : memref<98xf32, #tpu.memory_space<smem>>
    %c54_316 = arith.constant 54 : index
    %1454 = memref.load %arg4[%c54_316] : memref<98xf32, #tpu.memory_space<smem>>
    %1455 = vector.extract_strided_slice %1451 {offsets = [0, 0, 0], sizes = [1, 16, 4], strides = [1, 1, 1]} : vector<1x22x4xf32> to vector<1x16x4xf32>
    %1456 = vector.broadcast %1453 : f32 to vector<1x16x4xf32>
    %1457 = arith.mulf %1456, %1455 : vector<1x16x4xf32>
    %1458 = arith.addf %1450, %1457 : vector<1x16x4xf32>
    %1459 = vector.extract_strided_slice %1452 {offsets = [0, 0, 0], sizes = [1, 16, 4], strides = [1, 1, 1]} : vector<1x22x4xf32> to vector<1x16x4xf32>
    %1460 = vector.broadcast %1454 : f32 to vector<1x16x4xf32>
    %1461 = arith.mulf %1460, %1459 : vector<1x16x4xf32>
    %1462 = arith.addf %1458, %1461 : vector<1x16x4xf32>
    %c12_317 = arith.constant 12 : index
    %1463 = memref.load %arg4[%c12_317] : memref<98xf32, #tpu.memory_space<smem>>
    %c61_318 = arith.constant 61 : index
    %1464 = memref.load %arg4[%c61_318] : memref<98xf32, #tpu.memory_space<smem>>
    %1465 = vector.extract_strided_slice %1451 {offsets = [0, 1, 0], sizes = [1, 16, 4], strides = [1, 1, 1]} : vector<1x22x4xf32> to vector<1x16x4xf32>
    %1466 = vector.broadcast %1463 : f32 to vector<1x16x4xf32>
    %1467 = arith.mulf %1466, %1465 : vector<1x16x4xf32>
    %1468 = arith.addf %1462, %1467 : vector<1x16x4xf32>
    %1469 = vector.extract_strided_slice %1452 {offsets = [0, 1, 0], sizes = [1, 16, 4], strides = [1, 1, 1]} : vector<1x22x4xf32> to vector<1x16x4xf32>
    %1470 = vector.broadcast %1464 : f32 to vector<1x16x4xf32>
    %1471 = arith.mulf %1470, %1469 : vector<1x16x4xf32>
    %1472 = arith.addf %1468, %1471 : vector<1x16x4xf32>
    %c19_319 = arith.constant 19 : index
    %1473 = memref.load %arg4[%c19_319] : memref<98xf32, #tpu.memory_space<smem>>
    %c68_320 = arith.constant 68 : index
    %1474 = memref.load %arg4[%c68_320] : memref<98xf32, #tpu.memory_space<smem>>
    %1475 = vector.extract_strided_slice %1451 {offsets = [0, 2, 0], sizes = [1, 16, 4], strides = [1, 1, 1]} : vector<1x22x4xf32> to vector<1x16x4xf32>
    %1476 = vector.broadcast %1473 : f32 to vector<1x16x4xf32>
    %1477 = arith.mulf %1476, %1475 : vector<1x16x4xf32>
    %1478 = arith.addf %1472, %1477 : vector<1x16x4xf32>
    %1479 = vector.extract_strided_slice %1452 {offsets = [0, 2, 0], sizes = [1, 16, 4], strides = [1, 1, 1]} : vector<1x22x4xf32> to vector<1x16x4xf32>
    %1480 = vector.broadcast %1474 : f32 to vector<1x16x4xf32>
    %1481 = arith.mulf %1480, %1479 : vector<1x16x4xf32>
    %1482 = arith.addf %1478, %1481 : vector<1x16x4xf32>
    %c26_321 = arith.constant 26 : index
    %1483 = memref.load %arg4[%c26_321] : memref<98xf32, #tpu.memory_space<smem>>
    %c75_322 = arith.constant 75 : index
    %1484 = memref.load %arg4[%c75_322] : memref<98xf32, #tpu.memory_space<smem>>
    %1485 = vector.extract_strided_slice %1451 {offsets = [0, 3, 0], sizes = [1, 16, 4], strides = [1, 1, 1]} : vector<1x22x4xf32> to vector<1x16x4xf32>
    %1486 = vector.broadcast %1483 : f32 to vector<1x16x4xf32>
    %1487 = arith.mulf %1486, %1485 : vector<1x16x4xf32>
    %1488 = arith.addf %1482, %1487 : vector<1x16x4xf32>
    %1489 = vector.extract_strided_slice %1452 {offsets = [0, 3, 0], sizes = [1, 16, 4], strides = [1, 1, 1]} : vector<1x22x4xf32> to vector<1x16x4xf32>
    %1490 = vector.broadcast %1484 : f32 to vector<1x16x4xf32>
    %1491 = arith.mulf %1490, %1489 : vector<1x16x4xf32>
    %1492 = arith.addf %1488, %1491 : vector<1x16x4xf32>
    %c33_323 = arith.constant 33 : index
    %1493 = memref.load %arg4[%c33_323] : memref<98xf32, #tpu.memory_space<smem>>
    %c82_324 = arith.constant 82 : index
    %1494 = memref.load %arg4[%c82_324] : memref<98xf32, #tpu.memory_space<smem>>
    %1495 = vector.extract_strided_slice %1451 {offsets = [0, 4, 0], sizes = [1, 16, 4], strides = [1, 1, 1]} : vector<1x22x4xf32> to vector<1x16x4xf32>
    %1496 = vector.broadcast %1493 : f32 to vector<1x16x4xf32>
    %1497 = arith.mulf %1496, %1495 : vector<1x16x4xf32>
    %1498 = arith.addf %1492, %1497 : vector<1x16x4xf32>
    %1499 = vector.extract_strided_slice %1452 {offsets = [0, 4, 0], sizes = [1, 16, 4], strides = [1, 1, 1]} : vector<1x22x4xf32> to vector<1x16x4xf32>
    %1500 = vector.broadcast %1494 : f32 to vector<1x16x4xf32>
    %1501 = arith.mulf %1500, %1499 : vector<1x16x4xf32>
    %1502 = arith.addf %1498, %1501 : vector<1x16x4xf32>
    %c40_325 = arith.constant 40 : index
    %1503 = memref.load %arg4[%c40_325] : memref<98xf32, #tpu.memory_space<smem>>
    %c89_326 = arith.constant 89 : index
    %1504 = memref.load %arg4[%c89_326] : memref<98xf32, #tpu.memory_space<smem>>
    %1505 = vector.extract_strided_slice %1451 {offsets = [0, 5, 0], sizes = [1, 16, 4], strides = [1, 1, 1]} : vector<1x22x4xf32> to vector<1x16x4xf32>
    %1506 = vector.broadcast %1503 : f32 to vector<1x16x4xf32>
    %1507 = arith.mulf %1506, %1505 : vector<1x16x4xf32>
    %1508 = arith.addf %1502, %1507 : vector<1x16x4xf32>
    %1509 = vector.extract_strided_slice %1452 {offsets = [0, 5, 0], sizes = [1, 16, 4], strides = [1, 1, 1]} : vector<1x22x4xf32> to vector<1x16x4xf32>
    %1510 = vector.broadcast %1504 : f32 to vector<1x16x4xf32>
    %1511 = arith.mulf %1510, %1509 : vector<1x16x4xf32>
    %1512 = arith.addf %1508, %1511 : vector<1x16x4xf32>
    %c47_327 = arith.constant 47 : index
    %1513 = memref.load %arg4[%c47_327] : memref<98xf32, #tpu.memory_space<smem>>
    %c96_328 = arith.constant 96 : index
    %1514 = memref.load %arg4[%c96_328] : memref<98xf32, #tpu.memory_space<smem>>
    %1515 = vector.extract_strided_slice %1451 {offsets = [0, 6, 0], sizes = [1, 16, 4], strides = [1, 1, 1]} : vector<1x22x4xf32> to vector<1x16x4xf32>
    %1516 = vector.broadcast %1513 : f32 to vector<1x16x4xf32>
    %1517 = arith.mulf %1516, %1515 : vector<1x16x4xf32>
    %1518 = arith.addf %1512, %1517 : vector<1x16x4xf32>
    %1519 = vector.extract_strided_slice %1452 {offsets = [0, 6, 0], sizes = [1, 16, 4], strides = [1, 1, 1]} : vector<1x22x4xf32> to vector<1x16x4xf32>
    %1520 = vector.broadcast %1514 : f32 to vector<1x16x4xf32>
    %1521 = arith.mulf %1520, %1519 : vector<1x16x4xf32>
    %1522 = arith.addf %1518, %1521 : vector<1x16x4xf32>
    %1523 = vector.extract_strided_slice %1088 {offsets = [0, 0, 6], sizes = [1, 22, 4], strides = [1, 1, 1]} : vector<1x22x10xf32> to vector<1x22x4xf32>
    %1524 = vector.extract_strided_slice %1089 {offsets = [0, 0, 6], sizes = [1, 22, 4], strides = [1, 1, 1]} : vector<1x22x10xf32> to vector<1x22x4xf32>
    %c6_329 = arith.constant 6 : index
    %1525 = memref.load %arg4[%c6_329] : memref<98xf32, #tpu.memory_space<smem>>
    %c55_330 = arith.constant 55 : index
    %1526 = memref.load %arg4[%c55_330] : memref<98xf32, #tpu.memory_space<smem>>
    %1527 = vector.extract_strided_slice %1523 {offsets = [0, 0, 0], sizes = [1, 16, 4], strides = [1, 1, 1]} : vector<1x22x4xf32> to vector<1x16x4xf32>
    %1528 = vector.broadcast %1525 : f32 to vector<1x16x4xf32>
    %1529 = arith.mulf %1528, %1527 : vector<1x16x4xf32>
    %1530 = arith.addf %1522, %1529 : vector<1x16x4xf32>
    %1531 = vector.extract_strided_slice %1524 {offsets = [0, 0, 0], sizes = [1, 16, 4], strides = [1, 1, 1]} : vector<1x22x4xf32> to vector<1x16x4xf32>
    %1532 = vector.broadcast %1526 : f32 to vector<1x16x4xf32>
    %1533 = arith.mulf %1532, %1531 : vector<1x16x4xf32>
    %1534 = arith.addf %1530, %1533 : vector<1x16x4xf32>
    %c13_331 = arith.constant 13 : index
    %1535 = memref.load %arg4[%c13_331] : memref<98xf32, #tpu.memory_space<smem>>
    %c62_332 = arith.constant 62 : index
    %1536 = memref.load %arg4[%c62_332] : memref<98xf32, #tpu.memory_space<smem>>
    %1537 = vector.extract_strided_slice %1523 {offsets = [0, 1, 0], sizes = [1, 16, 4], strides = [1, 1, 1]} : vector<1x22x4xf32> to vector<1x16x4xf32>
    %1538 = vector.broadcast %1535 : f32 to vector<1x16x4xf32>
    %1539 = arith.mulf %1538, %1537 : vector<1x16x4xf32>
    %1540 = arith.addf %1534, %1539 : vector<1x16x4xf32>
    %1541 = vector.extract_strided_slice %1524 {offsets = [0, 1, 0], sizes = [1, 16, 4], strides = [1, 1, 1]} : vector<1x22x4xf32> to vector<1x16x4xf32>
    %1542 = vector.broadcast %1536 : f32 to vector<1x16x4xf32>
    %1543 = arith.mulf %1542, %1541 : vector<1x16x4xf32>
    %1544 = arith.addf %1540, %1543 : vector<1x16x4xf32>
    %c20_333 = arith.constant 20 : index
    %1545 = memref.load %arg4[%c20_333] : memref<98xf32, #tpu.memory_space<smem>>
    %c69_334 = arith.constant 69 : index
    %1546 = memref.load %arg4[%c69_334] : memref<98xf32, #tpu.memory_space<smem>>
    %1547 = vector.extract_strided_slice %1523 {offsets = [0, 2, 0], sizes = [1, 16, 4], strides = [1, 1, 1]} : vector<1x22x4xf32> to vector<1x16x4xf32>
    %1548 = vector.broadcast %1545 : f32 to vector<1x16x4xf32>
    %1549 = arith.mulf %1548, %1547 : vector<1x16x4xf32>
    %1550 = arith.addf %1544, %1549 : vector<1x16x4xf32>
    %1551 = vector.extract_strided_slice %1524 {offsets = [0, 2, 0], sizes = [1, 16, 4], strides = [1, 1, 1]} : vector<1x22x4xf32> to vector<1x16x4xf32>
    %1552 = vector.broadcast %1546 : f32 to vector<1x16x4xf32>
    %1553 = arith.mulf %1552, %1551 : vector<1x16x4xf32>
    %1554 = arith.addf %1550, %1553 : vector<1x16x4xf32>
    %c27_335 = arith.constant 27 : index
    %1555 = memref.load %arg4[%c27_335] : memref<98xf32, #tpu.memory_space<smem>>
    %c76_336 = arith.constant 76 : index
    %1556 = memref.load %arg4[%c76_336] : memref<98xf32, #tpu.memory_space<smem>>
    %1557 = vector.extract_strided_slice %1523 {offsets = [0, 3, 0], sizes = [1, 16, 4], strides = [1, 1, 1]} : vector<1x22x4xf32> to vector<1x16x4xf32>
    %1558 = vector.broadcast %1555 : f32 to vector<1x16x4xf32>
    %1559 = arith.mulf %1558, %1557 : vector<1x16x4xf32>
    %1560 = arith.addf %1554, %1559 : vector<1x16x4xf32>
    %1561 = vector.extract_strided_slice %1524 {offsets = [0, 3, 0], sizes = [1, 16, 4], strides = [1, 1, 1]} : vector<1x22x4xf32> to vector<1x16x4xf32>
    %1562 = vector.broadcast %1556 : f32 to vector<1x16x4xf32>
    %1563 = arith.mulf %1562, %1561 : vector<1x16x4xf32>
    %1564 = arith.addf %1560, %1563 : vector<1x16x4xf32>
    %c34_337 = arith.constant 34 : index
    %1565 = memref.load %arg4[%c34_337] : memref<98xf32, #tpu.memory_space<smem>>
    %c83_338 = arith.constant 83 : index
    %1566 = memref.load %arg4[%c83_338] : memref<98xf32, #tpu.memory_space<smem>>
    %1567 = vector.extract_strided_slice %1523 {offsets = [0, 4, 0], sizes = [1, 16, 4], strides = [1, 1, 1]} : vector<1x22x4xf32> to vector<1x16x4xf32>
    %1568 = vector.broadcast %1565 : f32 to vector<1x16x4xf32>
    %1569 = arith.mulf %1568, %1567 : vector<1x16x4xf32>
    %1570 = arith.addf %1564, %1569 : vector<1x16x4xf32>
    %1571 = vector.extract_strided_slice %1524 {offsets = [0, 4, 0], sizes = [1, 16, 4], strides = [1, 1, 1]} : vector<1x22x4xf32> to vector<1x16x4xf32>
    %1572 = vector.broadcast %1566 : f32 to vector<1x16x4xf32>
    %1573 = arith.mulf %1572, %1571 : vector<1x16x4xf32>
    %1574 = arith.addf %1570, %1573 : vector<1x16x4xf32>
    %c41_339 = arith.constant 41 : index
    %1575 = memref.load %arg4[%c41_339] : memref<98xf32, #tpu.memory_space<smem>>
    %c90_340 = arith.constant 90 : index
    %1576 = memref.load %arg4[%c90_340] : memref<98xf32, #tpu.memory_space<smem>>
    %1577 = vector.extract_strided_slice %1523 {offsets = [0, 5, 0], sizes = [1, 16, 4], strides = [1, 1, 1]} : vector<1x22x4xf32> to vector<1x16x4xf32>
    %1578 = vector.broadcast %1575 : f32 to vector<1x16x4xf32>
    %1579 = arith.mulf %1578, %1577 : vector<1x16x4xf32>
    %1580 = arith.addf %1574, %1579 : vector<1x16x4xf32>
    %1581 = vector.extract_strided_slice %1524 {offsets = [0, 5, 0], sizes = [1, 16, 4], strides = [1, 1, 1]} : vector<1x22x4xf32> to vector<1x16x4xf32>
    %1582 = vector.broadcast %1576 : f32 to vector<1x16x4xf32>
    %1583 = arith.mulf %1582, %1581 : vector<1x16x4xf32>
    %1584 = arith.addf %1580, %1583 : vector<1x16x4xf32>
    %c48_341 = arith.constant 48 : index
    %1585 = memref.load %arg4[%c48_341] : memref<98xf32, #tpu.memory_space<smem>>
    %c97_342 = arith.constant 97 : index
    %1586 = memref.load %arg4[%c97_342] : memref<98xf32, #tpu.memory_space<smem>>
    %1587 = vector.extract_strided_slice %1523 {offsets = [0, 6, 0], sizes = [1, 16, 4], strides = [1, 1, 1]} : vector<1x22x4xf32> to vector<1x16x4xf32>
    %1588 = vector.broadcast %1585 : f32 to vector<1x16x4xf32>
    %1589 = arith.mulf %1588, %1587 : vector<1x16x4xf32>
    %1590 = arith.addf %1584, %1589 : vector<1x16x4xf32>
    %1591 = vector.extract_strided_slice %1524 {offsets = [0, 6, 0], sizes = [1, 16, 4], strides = [1, 1, 1]} : vector<1x22x4xf32> to vector<1x16x4xf32>
    %1592 = vector.broadcast %1586 : f32 to vector<1x16x4xf32>
    %1593 = arith.mulf %1592, %1591 : vector<1x16x4xf32>
    %1594 = arith.addf %1590, %1593 : vector<1x16x4xf32>
    %cst_343 = arith.constant 0.000000e+00 : f32
    %1595 = vector.broadcast %cst_343 : f32 to vector<1x16x4xf32>
    %1596 = arith.maximumf %1594, %1595 : vector<1x16x4xf32>
    %1597 = arith.negf %1596 : vector<1x16x4xf32>
    %1598 = math.exp %1597 : vector<1x16x4xf32>
    %cst_344 = arith.constant 1.000000e+00 : f32
    %1599 = vector.broadcast %cst_344 : f32 to vector<1x16x4xf32>
    %1600 = arith.addf %1599, %1598 : vector<1x16x4xf32>
    %1601 = arith.divf %1599, %1600 : vector<1x16x4xf32>
    %1602 = tpu.transpose %1075, [0, 2, 1] : vector<1x16x4xf32> -> vector<1x4x16xf32>
    %1603 = tpu.transpose %1601, [0, 2, 1] : vector<1x16x4xf32> -> vector<1x4x16xf32>
    %1604 = vector.shape_cast %1602 : vector<1x4x16xf32> to vector<1x4x1x16xf32>
    %1605 = vector.shape_cast %1603 : vector<1x4x16xf32> to vector<1x4x16x1xf32>
    %1606 = vector.broadcast %1604 : vector<1x4x1x16xf32> to vector<1x4x16x16xf32>
    %1607 = vector.broadcast %1605 : vector<1x4x16x1xf32> to vector<1x4x16x16xf32>
    %1608 = arith.addf %1606, %1607 : vector<1x4x16x16xf32>
    %1609 = vector.shape_cast %549 : vector<1x16x16xf32> to vector<1x1x16x16xf32>
    %1610 = vector.broadcast %1609 : vector<1x1x16x16xf32> to vector<1x4x16x16xf32>
    %1611 = arith.addf %1608, %1610 : vector<1x4x16x16xf32>
    %cst_345 = arith.constant 0.333333343 : f32
    %1612 = vector.broadcast %cst_345 : f32 to vector<1x4x16x16xf32>
    %1613 = arith.mulf %1611, %1612 : vector<1x4x16x16xf32>
    %c0_346 = arith.constant 0 : index
    %c0_347 = arith.constant 0 : index
    %c0_348 = arith.constant 0 : index
    %c0_349 = arith.constant 0 : index
    %1614 = vector.load %arg1[%c0_346, %c0_347, %c0_348, %c0_349] : memref<1x4x16x16xf32, #tpu.memory_space<vmem>>, vector<1x4x16x16xf32>
    %1615 = arith.mulf %1614, %1613 : vector<1x4x16x16xf32>
    %c0_350 = arith.constant 0 : index
    %c0_351 = arith.constant 0 : index
    %c0_352 = arith.constant 0 : index
    %c0_353 = arith.constant 0 : index
    %1616 = vector.load %arg5[%c0_350, %c0_351, %c0_352, %c0_353] : memref<1x4x16x16xf32, #tpu.memory_space<vmem>>, vector<1x4x16x16xf32>
    tpu.vector_store %arg5[%c0_350, %c0_351, %c0_352, %c0_353], %1615 {strides = array<i32>} : memref<1x4x16x16xf32, #tpu.memory_space<vmem>>, vector<1x4x16x16xf32>,
    return
  }
  func.func @transform_0(%arg0: i32) -> (i32, i32, i32, i32) {
    %c0_i32 = arith.constant 0 : i32
    %c0_i32_0 = arith.constant 0 : i32
    %c0_i32_1 = arith.constant 0 : i32
    %c0_i32_2 = arith.constant 0 : i32
    return %arg0, %c0_i32, %c0_i32_0, %c0_i32_1 : i32, i32, i32, i32
  }
  func.func @transform_1(%arg0: i32) -> i32 {
    %c0_i32 = arith.constant 0 : i32
    %c0_i32_0 = arith.constant 0 : i32
    return %c0_i32 : i32
  }
  func.func @transform_2(%arg0: i32) -> i32 {
    %c0_i32 = arith.constant 0 : i32
    %c0_i32_0 = arith.constant 0 : i32
    return %c0_i32 : i32
  }
  func.func @transform_3(%arg0: i32) -> i32 {
    %c0_i32 = arith.constant 0 : i32
    %c0_i32_0 = arith.constant 0 : i32
    return %c0_i32 : i32
  }
  func.func @transform_4(%arg0: i32) -> (i32, i32, i32, i32) {
    %c0_i32 = arith.constant 0 : i32
    %c0_i32_0 = arith.constant 0 : i32
    %c0_i32_1 = arith.constant 0 : i32
    %c0_i32_2 = arith.constant 0 : i32
    return %arg0, %c0_i32, %c0_i32_0, %c0_i32_1 : i32, i32, i32, i32
  }
}

</mosaic_0001>

<llo_original>
// kernel: tpu_custom_call.1
$region0: #{tpu_custom_call.1}
  #allocation0 [shape = 'u32[]', space=smem, size = 0x4, offset = 0x4, fixed_abs, tag = 'smem constant byte address 0x4 - core index']
  #allocation1 [shape = 'u32[144,128]{1,0:T(1,128)}', space=vmem, size = 0x12000, scoped, tag = 'internal scratch']
  #allocation2 [shape = 'f32[1,22,22]{2,1,0:T(8,128)}', space=vmem, size = 0x3000, scoped, tag = 'scratch operand']
  #allocation3 [shape = 'f32[1,22,22]{2,1,0:T(8,128)}', space=vmem, size = 0x3000, scoped, tag = 'scratch operand']
  #allocation4 [shape = 'f32[1,22,10]{2,1,0:T(8,128)}', space=vmem, size = 0x3000, scoped, tag = 'scratch operand']
  #allocation5 [shape = 'f32[1,22,10]{2,1,0:T(8,128)}', space=vmem, size = 0x3000, scoped, tag = 'scratch operand']
  #allocation6 [shape = 'f32[1,22,10]{2,1,0:T(8,128)}', space=vmem, size = 0x3000, scoped, tag = 'scratch operand']
  #allocation7 [shape = 'f32[1,22,10]{2,1,0:T(8,128)}', space=vmem, size = 0x3000, scoped, tag = 'scratch operand']
  %s0 = inlined_call_operand.hbm [shape: f32[2,4,16,16], index: 0, kind: input, shape index: {}]
  %s1 = inlined_call_operand.vmem [shape: f32[98], index: 1, kind: input, shape index: {}]
  %s2 = inlined_call_operand.vmem [shape: f32[98], index: 2, kind: input, shape index: {}]
  %s3 = inlined_call_operand.vmem [shape: f32[98], index: 3, kind: input, shape index: {}]
  %s4 = inlined_call_operand.hbm [shape: f32[2,4,16,16], index: 4, kind: output, shape index: {}]
  %s5 = sld [smem:[#allocation0]]
  $region65: #{tpu_custom_call.1} parent=0
    _
  %s7 = ssub.s32 1, %s5
  %s8 = scalar_select 0, %s7, %s5
  $region1: #{tpu_custom_call.1} parent=0
    #allocation8 [shape = 'u8[65536]{0}', space=vmem, size = 0x10000, scoped, tag = 'input window, operand 0']
    #allocation9 [shape = 's32[2]{0}', space=sflag, size = 0x8, scoped, tag = 'scoped memory for tpu_custom_call.1']
    #allocation10 [shape = 's32[2]{0}', space=sflag, size = 0x8, scoped, tag = 'scoped memory for tpu_custom_call.1']
    #allocation11 [shape = 's32[2]{0}', space=sflag, size = 0x8, scoped, tag = 'scoped memory for tpu_custom_call.1']
    #allocation12 [shape = 'u8[512]{0}', space=smem, size = 0x200, scoped, tag = 'input window, operand 1, single buffered']
    #allocation13 [shape = 'u8[512]{0}', space=smem, size = 0x200, scoped, tag = 'input window, operand 2, single buffered']
    #allocation14 [shape = 's32[1]{0}', space=sflag, size = 0x4, scoped, tag = 'scoped memory for tpu_custom_call.1']
    #allocation15 [shape = 'u8[512]{0}', space=smem, size = 0x200, scoped, tag = 'input window, operand 3, single buffered']
    #allocation16 [shape = 'u8[65536]{0}', space=vmem, size = 0x10000, scoped, tag = 'output window, operand 0']
    %9 = vsyncpa [#allocation9], 0
    %s10 = scalar_lea.sflag [#allocation9], 1
    %11 = vsyncpa %s10, 0
    %12 = vsyncpa [#allocation11], 0
    %13 = vsyncpa [#allocation14], 0
    %14 = vsyncpa [#allocation10], 0
    %s15 = scalar_lea.sflag [#allocation10], 1
    %16 = vsyncpa %s15, 0
    loop: start=0, step=1, limit=4
    $region2: #{tpu_custom_call.1} parent=1 // loop_pre_header
      _
    $region3: #{tpu_custom_call.1} parent=1 // loop_header
      %s18 = sphi 0, %s22
      %p19 = scmp.ge.s32.totalorder %s18, 4
      %s28 = sphi 0, %s30
      %s31 = sphi 0, %s28
      %s32 = sphi 0, %s31
      %s48 = sphi 0, %s32
      %s52 = sphi 0, %s52
      %s54 = sphi 0, %s52
      %s55 = sphi 0, %s54
      %s69 = sphi 0, %s55
      %s73 = sphi 0, %s73
      %s75 = sphi 0, %s73
      %s76 = sphi 0, %s75
      %s90 = sphi 0, %s76
      %s94 = sphi 0, %s94
      %s96 = sphi 0, %s94
      %s97 = sphi 0, %s96
      %s111 = sphi 0, %s97
      %s117 = sphi 0, %s119
      %s120 = sphi 0, %s117
      %s121 = sphi 0, %s120
      %s137 = sphi 0, %s121
    $region4: #{tpu_custom_call.1} parent=1 // loop_header_branch
      %21 = sbr.rel (%p19) target = $region8
    $region5: #{tpu_custom_call.1} parent=1 // loop_body
      %s23 = ssub.s32 %s18, 1
      %s24 = ssub.s32 %s18, 2
      %s25 = sadd.s32 %s18, 1
      %s26 = ssub.s32 %s18, %s25
      %p27 = scmp.eq.s32.totalorder %s26, 0
      %s29 = sadd.s32 %s28, 1
      %s30 = scalar_select %p27, %s28, %s29
      %p33 = pneg %p27
      %p34 = scmp.eq.s32.totalorder %s18, 1
      %p35 = por %p33, %p34
      %p36 = scmp.ne.s32.totalorder %s28, %s31
      %p37 = scmp.eq.s32.totalorder %s18, 0
      %p38 = por %p36, %p37
      %p39 = scmp.ne.s32.totalorder %s28, %s31
      %p40 = scmp.eq.s32.totalorder %s23, 1
      %p41 = por %p39, %p40
      %p42 = scmp.ne.s32.totalorder %s31, %s32
      %p43 = scmp.eq.s32.totalorder %s23, 0
      %p44 = por %p42, %p43
      %p45 = scmp.ne.s32.totalorder %s31, %s32
      %p46 = scmp.eq.s32.totalorder %s24, 1
      %p47 = por %p45, %p46
      %p49 = scmp.ne.s32.totalorder %s32, %s48
      %p50 = scmp.eq.s32.totalorder %s24, 0
      %p51 = por %p49, %p50
      %s53 = sadd.s32 %s52, 1
      %p56 = scmp.eq.s32.totalorder %s18, 1
      %p57 = scmp.ne.s32.totalorder %s52, %s54
      %p58 = scmp.eq.s32.totalorder %s18, 0
      %p59 = por %p57, %p58
      %p60 = scmp.ne.s32.totalorder %s52, %s54
      %p61 = scmp.eq.s32.totalorder %s23, 1
      %p62 = por %p60, %p61
      %p63 = scmp.ne.s32.totalorder %s54, %s55
      %p64 = scmp.eq.s32.totalorder %s23, 0
      %p65 = por %p63, %p64
      %p66 = scmp.ne.s32.totalorder %s54, %s55
      %p67 = scmp.eq.s32.totalorder %s24, 1
      %p68 = por %p66, %p67
      %p70 = scmp.ne.s32.totalorder %s55, %s69
      %p71 = scmp.eq.s32.totalorder %s24, 0
      %p72 = por %p70, %p71
      %s74 = sadd.s32 %s73, 1
      %p77 = scmp.eq.s32.totalorder %s18, 1
      %p78 = scmp.ne.s32.totalorder %s73, %s75
      %p79 = scmp.eq.s32.totalorder %s18, 0
      %p80 = por %p78, %p79
      %p81 = scmp.ne.s32.totalorder %s73, %s75
      %p82 = scmp.eq.s32.totalorder %s23, 1
      %p83 = por %p81, %p82
      %p84 = scmp.ne.s32.totalorder %s75, %s76
      %p85 = scmp.eq.s32.totalorder %s23, 0
      %p86 = por %p84, %p85
      %p87 = scmp.ne.s32.totalorder %s75, %s76
      %p88 = scmp.eq.s32.totalorder %s24, 1
      %p89 = por %p87, %p88
      %p91 = scmp.ne.s32.totalorder %s76, %s90
      %p92 = scmp.eq.s32.totalorder %s24, 0
      %p93 = por %p91, %p92
      %s95 = sadd.s32 %s94, 1
      %p98 = scmp.eq.s32.totalorder %s18, 1
      %p99 = scmp.ne.s32.totalorder %s94, %s96
      %p100 = scmp.eq.s32.totalorder %s18, 0
      %p101 = por %p99, %p100
      %p102 = scmp.ne.s32.totalorder %s94, %s96
      %p103 = scmp.eq.s32.totalorder %s23, 1
      %p104 = por %p102, %p103
      %p105 = scmp.ne.s32.totalorder %s96, %s97
      %p106 = scmp.eq.s32.totalorder %s23, 0
      %p107 = por %p105, %p106
      %p108 = scmp.ne.s32.totalorder %s96, %s97
      %p109 = scmp.eq.s32.totalorder %s24, 1
      %p110 = por %p108, %p109
      %p112 = scmp.ne.s32.totalorder %s97, %s111
      %p113 = scmp.eq.s32.totalorder %s24, 0
      %p114 = por %p112, %p113
      %s115 = ssub.s32 %s18, %s25
      %p116 = scmp.eq.s32.totalorder %s115, 0
      %s118 = sadd.s32 %s117, 1
      %s119 = scalar_select %p116, %s117, %s118
      %p122 = pneg %p116
      %p123 = scmp.eq.s32.totalorder %s18, 1
      %p124 = por %p122, %p123
      %p125 = scmp.ne.s32.totalorder %s117, %s120
      %p126 = scmp.eq.s32.totalorder %s18, 0
      %p127 = por %p125, %p126
      %p128 = scmp.ne.s32.totalorder %s117, %s120
      %p129 = scmp.eq.s32.totalorder %s23, 1
      %p130 = por %p128, %p129
      %p131 = scmp.ne.s32.totalorder %s120, %s121
      %p132 = scmp.eq.s32.totalorder %s23, 0
      %p133 = por %p131, %p132
      %p134 = scmp.ne.s32.totalorder %s120, %s121
      %p135 = scmp.eq.s32.totalorder %s24, 1
      %p136 = por %p134, %p135
      %p138 = scmp.ne.s32.totalorder %s121, %s137
      %p139 = scmp.eq.s32.totalorder %s24, 0
      %p140 = por %p138, %p139
      %p141 = scmp.le.s32.totalorder 1, %s18
      %p142 = scmp.lt.s32.totalorder %s18, 3
      %p143 = pnand %p141, %p142
      %p144 = pneg %p143
      // Predicated region
      $region9: #{tpu_custom_call.1} parent=5 // pred_check
        _
      $region10: #{tpu_custom_call.1} parent=5 // pred_check_branch
        %146 = sbr.rel (%p143) target = $region12
      $region11: #{tpu_custom_call.1} parent=5 // pred_region
        %s147 = ssub.s32 %s18, 1
        // Predicated region
        $region13: #{tpu_custom_call.1} parent=11 // pred_check
          %p148 = pneg %p65
        $region14: #{tpu_custom_call.1} parent=11 // pred_check_branch
          %150 = sbr.rel (%p148) target = $region16
        $region15: #{tpu_custom_call.1} parent=11 // pred_region
          %s152 = ssub.s32 16, 16
          %153 = vsyncadd [#allocation11], %s152
          %s155 = sshll.u32 %s1, 4
          %s156 = int_to_ptr.vmem [resolvable:$true] %s155
          %158 = dma.vmem_to_smem %s156, 16, [#allocation12], [#allocation11]
        $region16: #{tpu_custom_call.1} parent=11 // pred_fallthru
          _
        // Predicated region
        $region17: #{tpu_custom_call.1} parent=11 // pred_check
          %p159 = pneg %p86
        $region18: #{tpu_custom_call.1} parent=11 // pred_check_branch
          %161 = sbr.rel (%p159) target = $region20
        $region19: #{tpu_custom_call.1} parent=11 // pred_region
          %s163 = ssub.s32 16, 16
          %164 = vsyncadd [#allocation14], %s163
          %s166 = sshll.u32 %s2, 4
          %s167 = int_to_ptr.vmem [resolvable:$true] %s166
          %169 = dma.vmem_to_smem %s167, 16, [#allocation13], [#allocation14]
        $region20: #{tpu_custom_call.1} parent=11 // pred_fallthru
          _
        // Predicated region
        $region21: #{tpu_custom_call.1} parent=11 // pred_check
          %p170 = pneg %p107
        $region22: #{tpu_custom_call.1} parent=11 // pred_check_branch
          %172 = sbr.rel (%p170) target = $region24
        $region23: #{tpu_custom_call.1} parent=11 // pred_region
          %s174 = ssub.s32 16, 16
          %175 = vsyncadd [#allocation14], %s174
          %s177 = sshll.u32 %s3, 4
          %s178 = int_to_ptr.vmem [resolvable:$true] %s177
          %180 = dma.vmem_to_smem %s178, 16, [#allocation15], [#allocation14]
        $region24: #{tpu_custom_call.1} parent=11 // pred_fallthru
          _
      $region12: #{tpu_custom_call.1} parent=5 // pred_fallthru
        _
      %p181 = scmp.lt.s32.totalorder %s18, 2
      // Predicated region
      $region25: #{tpu_custom_call.1} parent=5 // pred_check
        %p182 = pneg %p181
      $region26: #{tpu_custom_call.1} parent=5 // pred_check_branch
        %184 = sbr.rel (%p182) target = $region28
      $region27: #{tpu_custom_call.1} parent=5 // pred_region
        // Predicated region
        $region29: #{tpu_custom_call.1} parent=27 // pred_check
          %p185 = pneg %p38
        $region30: #{tpu_custom_call.1} parent=27 // pred_check_branch
          %187 = sbr.rel (%p185) target = $region32
        $region31: #{tpu_custom_call.1} parent=27 // pred_region
          %s188 = sand.u32 %s28, 1
          %s189 = scalar_lea.sflag [#allocation9], %s188
          %s190 = sand.u32 %s28, 1
          %s191 = smul.addr %s190, 64
          %s192 = scalar_lea.vmem [#allocation8], %s191
          %s194 = ssub.s32 1024, 1024
          %195 = vsyncadd %s189, %s194
          %s196 = smul.addr %s18, 8
          %s197 = smul.addr %s196, 128
          %s198 = scalar_lea.hbm %s0, %s197
          %s199 = sshll.u32 %s192, 4
          %s200 = int_to_ptr.vmem [resolvable:$true] %s199
          %205 = dma.hbm_to_vmem [thread:$0]  %s198, 1024, %s200, %s189, 128, 128, 8
        $region32: #{tpu_custom_call.1} parent=27 // pred_fallthru
          _
      $region28: #{tpu_custom_call.1} parent=5 // pred_fallthru
        _
      %p206 = scmp.le.s32.totalorder 1, %s18
      %p207 = scmp.lt.s32.totalorder %s18, 3
      %p208 = pnand %p206, %p207
      %p209 = pneg %p208
      // Predicated region
      $region33: #{tpu_custom_call.1} parent=5 // pred_check
        _
      $region34: #{tpu_custom_call.1} parent=5 // pred_check_branch
        %211 = sbr.rel (%p208) target = $region36
      $region35: #{tpu_custom_call.1} parent=5 // pred_region
        %s212 = ssub.s32 %s18, 1
        %s213 = sand.u32 %s31, 1
        %s214 = scalar_lea.sflag [#allocation9], %s213
        %s215 = sand.u32 %s31, 1
        %s216 = smul.addr %s215, 64
        %s217 = scalar_lea.vmem [#allocation8], %s216
        // Predicated region
        $region37: #{tpu_custom_call.1} parent=35 // pred_check
          %p218 = pneg %p44
        $region38: #{tpu_custom_call.1} parent=35 // pred_check_branch
          %220 = sbr.rel (%p218) target = $region40
        $region39: #{tpu_custom_call.1} parent=35 // pred_region
          %221 = dma.done %s214, 1024
        $region40: #{tpu_custom_call.1} parent=35 // pred_fallthru
          _
        // Predicated region
        $region41: #{tpu_custom_call.1} parent=35 // pred_check
          %p222 = pneg %p65
        $region42: #{tpu_custom_call.1} parent=35 // pred_check_branch
          %224 = sbr.rel (%p222) target = $region44
        $region43: #{tpu_custom_call.1} parent=35 // pred_region
          %225 = dma.done [#allocation11], 16
        $region44: #{tpu_custom_call.1} parent=35 // pred_fallthru
          _
        // Predicated region
        $region45: #{tpu_custom_call.1} parent=35 // pred_check
          %p226 = pneg %p86
        $region46: #{tpu_custom_call.1} parent=35 // pred_check_branch
          %228 = sbr.rel (%p226) target = $region48
        $region47: #{tpu_custom_call.1} parent=35 // pred_region
          %229 = dma.done [#allocation14], 16
        $region48: #{tpu_custom_call.1} parent=35 // pred_fallthru
          _
        // Predicated region
        $region49: #{tpu_custom_call.1} parent=35 // pred_check
          %p230 = pneg %p107
        $region50: #{tpu_custom_call.1} parent=35 // pred_check_branch
          %232 = sbr.rel (%p230) target = $region52
        $region51: #{tpu_custom_call.1} parent=35 // pred_region
          %233 = dma.done [#allocation14], 16
        $region52: #{tpu_custom_call.1} parent=35 // pred_fallthru
          _
        %234 = sfence
        %s235 = sand.u32 %s31, 1
        %s236 = scalar_lea.sflag [#allocation9], %s235
        %s237 = sand.u32 %s31, 1
        %s238 = smul.addr %s237, 64
        %s239 = scalar_lea.vmem [#allocation8], %s238
        %p240 = pneg %p44
        %p241 = pneg %p41
        %p242 = pneg %p65
        %p243 = pneg %p62
        %p244 = pneg %p86
        %p245 = pneg %p83
        %p246 = pneg %p107
        %p247 = pneg %p104
        %p248 = pneg %p133
        %p249 = pneg %p130
        %s250 = sand.u32 %s120, 1
        %s251 = scalar_lea.sflag [#allocation10], %s250
        %s252 = sand.u32 %s120, 1
        %s253 = smul.addr %s252, 64
        %s254 = scalar_lea.vmem [#allocation16], %s253
        %v255 = vld [vmem:[%s217] sm:$0xff]
        %v256 = vld [vmem:[%s217 + $0x8] sm:$0xff]
        %v257 = vld [vmem:[%s217 + $0x10] sm:$0xff]
        %v258 = vld [vmem:[%s217 + $0x18] sm:$0xff]
        %v259 = vld [vmem:[%s217 + $0x20] sm:$0xff]
        %v260 = vld [vmem:[%s217 + $0x28] sm:$0xff]
        %v261 = vld [vmem:[%s217 + $0x30] sm:$0xff]
        %v262 = vld [vmem:[%s217 + $0x38] sm:$0xff]
        %vm263 = vcmask 130048
        %v264 = vsel %vm263, %v255, -inf
        %v265 = vsel %vm263, %v257, -inf
        %v266 = vsel %vm263, %v259, -inf
        %v267 = vmax.f32 %v264, %v266
        %v268 = vsel %vm263, %v261, -inf
        %v269 = vmax.f32 %v265, %v268
        %v270 = vmax.f32 %v267, %v269
        %v271 = vsel %vm263, %v256, -inf
        %v272 = vsel %vm263, %v258, -inf
        %v273 = vsel %vm263, %v260, -inf
        %v274 = vmax.f32 %v271, %v273
        %v275 = vsel %vm263, %v262, -inf
        %v276 = vmax.f32 %v272, %v275
        %v277 = vmax.f32 %v274, %v276
        %v278 = vsel %vm263, %v255, 0.0
        %v279 = vsel %vm263, %v257, 0.0
        %v280 = vadd.f32 %v278, %v279
        %v281 = vsel %vm263, %v259, 0.0
        %v282 = vadd.f32 %v280, %v281
        %v283 = vsel %vm263, %v261, 0.0
        %v284 = vadd.f32 %v282, %v283
        %v285 = vsel %vm263, %v256, 0.0
        %v286 = vsel %vm263, %v258, 0.0
        %v287 = vadd.f32 %v285, %v286
        %v288 = vsel %vm263, %v260, 0.0
        %v289 = vadd.f32 %v287, %v288
        %v290 = vsel %vm263, %v262, 0.0
        %v291 = vadd.f32 %v289, %v290
        %v292 = vmul.f32 %v284, 0.25
        %v293 = vmul.f32 %v291, 0.25
        %v294 = vrot.slane %v264, 4
        %v295 = vmax.f32 %v264, %v294
        %v296 = vrot.slane %v295, 2
        %v297 = vmax.f32 %v295, %v296
        %v298 = vrot.slane %v297, 1
        %v299 = vmax.f32 %v297, %v298
        %v300 = vrot.slane %v265, 4
        %v301 = vmax.f32 %v265, %v300
        %v302 = vrot.slane %v301, 2
        %v303 = vmax.f32 %v301, %v302
        %v304 = vrot.slane %v303, 1
        %v305 = vmax.f32 %v303, %v304
        %v306 = vrot.slane %v266, 4
        %v307 = vmax.f32 %v266, %v306
        %v308 = vrot.slane %v307, 2
        %v309 = vmax.f32 %v307, %v308
        %v310 = vrot.slane %v309, 1
        %v311 = vmax.f32 %v309, %v310
        %v312 = vrot.slane %v268, 4
        %v313 = vmax.f32 %v268, %v312
        %v314 = vrot.slane %v313, 2
        %v315 = vmax.f32 %v313, %v314
        %v316 = vrot.slane %v315, 1
        %v317 = vmax.f32 %v315, %v316
        %v318 = vrot.slane %v278, 4
        %v319 = vadd.f32 %v278, %v318
        %v320 = vrot.slane %v319, 2
        %v321 = vadd.f32 %v319, %v320
        %v322 = vrot.slane %v321, 1
        %v323 = vadd.f32 %v321, %v322
        %v324 = vrot.slane %v279, 4
        %v325 = vadd.f32 %v279, %v324
        %v326 = vrot.slane %v325, 2
        %v327 = vadd.f32 %v325, %v326
        %v328 = vrot.slane %v327, 1
        %v329 = vadd.f32 %v327, %v328
        %v330 = vrot.slane %v281, 4
        %v331 = vadd.f32 %v281, %v330
        %v332 = vrot.slane %v331, 2
        %v333 = vadd.f32 %v331, %v332
        %v334 = vrot.slane %v333, 1
        %v335 = vadd.f32 %v333, %v334
        %v336 = vrot.slane %v283, 4
        %v337 = vadd.f32 %v283, %v336
        %v338 = vrot.slane %v337, 2
        %v339 = vadd.f32 %v337, %v338
        %v340 = vrot.slane %v339, 1
        %v341 = vadd.f32 %v339, %v340
        %v342 = vrot.slane %v271, 4
        %v343 = vmax.f32 %v271, %v342
        %v344 = vrot.slane %v343, 2
        %v345 = vmax.f32 %v343, %v344
        %v346 = vrot.slane %v345, 1
        %v347 = vmax.f32 %v345, %v346
        %v348 = vrot.slane %v272, 4
        %v349 = vmax.f32 %v272, %v348
        %v350 = vrot.slane %v349, 2
        %v351 = vmax.f32 %v349, %v350
        %v352 = vrot.slane %v351, 1
        %v353 = vmax.f32 %v351, %v352
        %v354 = vrot.slane %v273, 4
        %v355 = vmax.f32 %v273, %v354
        %v356 = vrot.slane %v355, 2
        %v357 = vmax.f32 %v355, %v356
        %v358 = vrot.slane %v357, 1
        %v359 = vmax.f32 %v357, %v358
        %v360 = vrot.slane %v275, 4
        %v361 = vmax.f32 %v275, %v360
        %v362 = vrot.slane %v361, 2
        %v363 = vmax.f32 %v361, %v362
        %v364 = vrot.slane %v363, 1
        %v365 = vmax.f32 %v363, %v364
        %v366 = vrot.slane %v285, 4
        %v367 = vadd.f32 %v285, %v366
        %v368 = vrot.slane %v367, 2
        %v369 = vadd.f32 %v367, %v368
        %v370 = vrot.slane %v369, 1
        %v371 = vadd.f32 %v369, %v370
        %v372 = vrot.slane %v286, 4
        %v373 = vadd.f32 %v286, %v372
        %v374 = vrot.slane %v373, 2
        %v375 = vadd.f32 %v373, %v374
        %v376 = vrot.slane %v375, 1
        %v377 = vadd.f32 %v375, %v376
        %v378 = vrot.slane %v288, 4
        %v379 = vadd.f32 %v288, %v378
        %v380 = vrot.slane %v379, 2
        %v381 = vadd.f32 %v379, %v380
        %v382 = vrot.slane %v381, 1
        %v383 = vadd.f32 %v381, %v382
        %v384 = vrot.slane %v290, 4
        %v385 = vadd.f32 %v290, %v384
        %v386 = vrot.slane %v385, 2
        %v387 = vadd.f32 %v385, %v386
        %v388 = vrot.slane %v387, 1
        %v389 = vadd.f32 %v387, %v388
        %v390 = vmax.f32 %v299, %v347
        %v391 = vmax.f32 %v305, %v353
        %v392 = vmax.f32 %v311, %v359
        %v393 = vmax.f32 %v317, %v365
        %v394 = vadd.f32 %v323, %v371
        %v395 = vadd.f32 %v329, %v377
        %v396 = vadd.f32 %v335, %v383
        %v397 = vadd.f32 %v341, %v389
        %v398 = vmul.f32 %v394, 0.0625
        %v399 = vmul.f32 %v395, 0.0625
        %v400 = vmul.f32 %v396, 0.0625
        %v401 = vmul.f32 %v397, 0.0625
        %402 = vmax.xlane.f32.xlu0 %v264
        %v403 = vpop.xlane.xlu0 %402
        %404 = vmax.xlane.f32.xlu0 %v271
        %v405 = vpop.xlane.xlu0 %404
        %406 = vmax.xlane.f32.xlu0 %v265
        %v407 = vpop.xlane.xlu0 %406
        %408 = vmax.xlane.f32.xlu0 %v272
        %v409 = vpop.xlane.xlu0 %408
        %410 = vmax.xlane.f32.xlu0 %v266
        %v411 = vpop.xlane.xlu0 %410
        %412 = vmax.xlane.f32.xlu0 %v273
        %v413 = vpop.xlane.xlu0 %412
        %414 = vmax.xlane.f32.xlu0 %v268
        %v415 = vpop.xlane.xlu0 %414
        %416 = vmax.xlane.f32.xlu0 %v275
        %v417 = vpop.xlane.xlu0 %416
        %418 = vadd.xlane.f32.xlu0 %v278
        %v419 = vpop.xlane.xlu0 %418
        %420 = vadd.xlane.f32.xlu0 %v285
        %v421 = vpop.xlane.xlu0 %420
        %422 = vadd.xlane.f32.xlu0 %v279
        %v423 = vpop.xlane.xlu0 %422
        %424 = vadd.xlane.f32.xlu0 %v286
        %v425 = vpop.xlane.xlu0 %424
        %426 = vadd.xlane.f32.xlu0 %v281
        %v427 = vpop.xlane.xlu0 %426
        %428 = vadd.xlane.f32.xlu0 %v288
        %v429 = vpop.xlane.xlu0 %428
        %430 = vadd.xlane.f32.xlu0 %v283
        %v431 = vpop.xlane.xlu0 %430
        %432 = vadd.xlane.f32.xlu0 %v290
        %v433 = vpop.xlane.xlu0 %432
        %v434 = vmul.f32 %v419, 0.0625
        %v435 = vmul.f32 %v421, 0.0625
        %v436 = vmul.f32 %v423, 0.0625
        %v437 = vmul.f32 %v425, 0.0625
        %v438 = vmul.f32 %v427, 0.0625
        %v439 = vmul.f32 %v429, 0.0625
        %v440 = vmul.f32 %v431, 0.0625
        %v441 = vmul.f32 %v433, 0.0625
        %vm446 = vcmask 1041409
        %v447 = vsel %vm446, %v391, %v390
        %vm448 = vcmask 1042434
        %v449 = vsel %vm448, %v392, %v447
        %vm450 = vcmask 1043459
        %v451 = vsel %vm450, %v393, %v449
        %453 = vxpose.xlu0.b32.start [1/16] %v451, 128
        %454 = vxpose.xlu0.b32.cont [2/16] 0.0, 128
        %455 = vxpose.xlu0.b32.cont [3/16] 0.0, 128
        %456 = vxpose.xlu0.b32.cont [4/16] 0.0, 128
        %457 = vxpose.xlu0.b32.cont [5/16] 0.0, 128
        %458 = vxpose.xlu0.b32.cont [6/16] 0.0, 128
        %459 = vxpose.xlu0.b32.cont [7/16] 0.0, 128
        %460 = vxpose.xlu0.b32.cont [8/16] 0.0, 128
        %461 = vxpose.xlu0.b32.cont [9/16] 0.0, 128
        %462 = vxpose.xlu0.b32.cont [10/16] 0.0, 128
        %463 = vxpose.xlu0.b32.cont [11/16] 0.0, 128
        %464 = vxpose.xlu0.b32.cont [12/16] 0.0, 128
        %465 = vxpose.xlu0.b32.cont [13/16] 0.0, 128
        %466 = vxpose.xlu0.b32.cont [14/16] 0.0, 128
        %467 = vxpose.xlu0.b32.cont [15/16] 0.0, 128
        %468 = vxpose.xlu0.b32.end [16/16] 0.0, 128
        %v469 = vpop.trf.xlu0
        %v470 = vpop.trf.xlu0
        %v471 = vpop.trf.xlu0
        %v472 = vpop.trf.xlu0
        %v473 = vpop.trf.xlu0
        %v474 = vpop.trf.xlu0
        %v475 = vpop.trf.xlu0
        %v476 = vpop.trf.xlu0
        %v477 = vpop.trf.xlu0
        %v478 = vpop.trf.xlu0
        %v479 = vpop.trf.xlu0
        %v480 = vpop.trf.xlu0
        %v481 = vpop.trf.xlu0
        %v482 = vpop.trf.xlu0
        %v483 = vpop.trf.xlu0
        %v484 = vpop.trf.xlu0
        %v489 = vsel %vm446, %v399, %v398
        %v490 = vsel %vm448, %v400, %v489
        %v491 = vsel %vm450, %v401, %v490
        %493 = vxpose.xlu0.b32.start [1/16] %v491, 128
        %494 = vxpose.xlu0.b32.cont [2/16] 0.0, 128
        %495 = vxpose.xlu0.b32.cont [3/16] 0.0, 128
        %496 = vxpose.xlu0.b32.cont [4/16] 0.0, 128
        %497 = vxpose.xlu0.b32.cont [5/16] 0.0, 128
        %498 = vxpose.xlu0.b32.cont [6/16] 0.0, 128
        %499 = vxpose.xlu0.b32.cont [7/16] 0.0, 128
        %500 = vxpose.xlu0.b32.cont [8/16] 0.0, 128
        %501 = vxpose.xlu0.b32.cont [9/16] 0.0, 128
        %502 = vxpose.xlu0.b32.cont [10/16] 0.0, 128
        %503 = vxpose.xlu0.b32.cont [11/16] 0.0, 128
        %504 = vxpose.xlu0.b32.cont [12/16] 0.0, 128
        %505 = vxpose.xlu0.b32.cont [13/16] 0.0, 128
        %506 = vxpose.xlu0.b32.cont [14/16] 0.0, 128
        %507 = vxpose.xlu0.b32.cont [15/16] 0.0, 128
        %508 = vxpose.xlu0.b32.end [16/16] 0.0, 128
        %v509 = vpop.trf.xlu0
        %v510 = vpop.trf.xlu0
        %v511 = vpop.trf.xlu0
        %v512 = vpop.trf.xlu0
        %v513 = vpop.trf.xlu0
        %v514 = vpop.trf.xlu0
        %v515 = vpop.trf.xlu0
        %v516 = vpop.trf.xlu0
        %v517 = vpop.trf.xlu0
        %v518 = vpop.trf.xlu0
        %v519 = vpop.trf.xlu0
        %v520 = vpop.trf.xlu0
        %v521 = vpop.trf.xlu0
        %v522 = vpop.trf.xlu0
        %v523 = vpop.trf.xlu0
        %v524 = vpop.trf.xlu0
        %v533 = vlaneseq
        %v534 = vand.u32 %v533, 127
        %v535 = vlaneseq
        %v536 = vshrl.u32 %v535, 7
        %v537 = vsub.s32 %v534, %v536
        %v538 = vrot.slane %v403, %v537
        %v539 = vadd.s32 %v534, 4294967288
        %v540 = vlaneseq
        %v541 = vshrl.u32 %v540, 7
        %v542 = vsub.s32 %v539, %v541
        %v543 = vrot.slane %v405, %v542
        %vm544 = vcmask 130112
        %v545 = vsel %vm544, %v543, %v538
        %v546 = vlaneseq
        %v547 = vshrl.u32 %v546, 7
        %v548 = vsub.s32 %v534, %v547
        %v549 = vrot.slane %v407, %v548
        %v550 = vlaneseq
        %v551 = vshrl.u32 %v550, 7
        %v552 = vsub.s32 %v539, %v551
        %v553 = vrot.slane %v409, %v552
        %v554 = vsel %vm544, %v553, %v549
        %v555 = vlaneseq
        %v556 = vshrl.u32 %v555, 7
        %v557 = vsub.s32 %v534, %v556
        %v558 = vrot.slane %v411, %v557
        %v559 = vlaneseq
        %v560 = vshrl.u32 %v559, 7
        %v561 = vsub.s32 %v539, %v560
        %v562 = vrot.slane %v413, %v561
        %v563 = vsel %vm544, %v562, %v558
        %v564 = vlaneseq
        %v565 = vshrl.u32 %v564, 7
        %v566 = vsub.s32 %v534, %v565
        %v567 = vrot.slane %v415, %v566
        %v568 = vlaneseq
        %v569 = vshrl.u32 %v568, 7
        %v570 = vsub.s32 %v539, %v569
        %v571 = vrot.slane %v417, %v570
        %v572 = vsel %vm544, %v571, %v567
        %v573 = vsel %vm446, %v554, %v545
        %v574 = vsel %vm448, %v563, %v573
        %v575 = vsel %vm450, %v572, %v574
        %577 = vxpose.xlu0.b32.start [1/16] %v575, 128
        %578 = vxpose.xlu0.b32.cont [2/16] 0.0, 128
        %579 = vxpose.xlu0.b32.cont [3/16] 0.0, 128
        %580 = vxpose.xlu0.b32.cont [4/16] 0.0, 128
        %581 = vxpose.xlu0.b32.cont [5/16] 0.0, 128
        %582 = vxpose.xlu0.b32.cont [6/16] 0.0, 128
        %583 = vxpose.xlu0.b32.cont [7/16] 0.0, 128
        %584 = vxpose.xlu0.b32.cont [8/16] 0.0, 128
        %585 = vxpose.xlu0.b32.cont [9/16] 0.0, 128
        %586 = vxpose.xlu0.b32.cont [10/16] 0.0, 128
        %587 = vxpose.xlu0.b32.cont [11/16] 0.0, 128
        %588 = vxpose.xlu0.b32.cont [12/16] 0.0, 128
        %589 = vxpose.xlu0.b32.cont [13/16] 0.0, 128
        %590 = vxpose.xlu0.b32.cont [14/16] 0.0, 128
        %591 = vxpose.xlu0.b32.cont [15/16] 0.0, 128
        %592 = vxpose.xlu0.b32.end [16/16] 0.0, 128
        %v593 = vpop.trf.xlu0
        %v594 = vpop.trf.xlu0
        %v595 = vpop.trf.xlu0
        %v596 = vpop.trf.xlu0
        %v597 = vpop.trf.xlu0
        %v598 = vpop.trf.xlu0
        %v599 = vpop.trf.xlu0
        %v600 = vpop.trf.xlu0
        %v601 = vpop.trf.xlu0
        %v602 = vpop.trf.xlu0
        %v603 = vpop.trf.xlu0
        %v604 = vpop.trf.xlu0
        %v605 = vpop.trf.xlu0
        %v606 = vpop.trf.xlu0
        %v607 = vpop.trf.xlu0
        %v608 = vpop.trf.xlu0
        %v617 = vlaneseq
        %v618 = vshrl.u32 %v617, 7
        %v619 = vsub.s32 %v534, %v618
        %v620 = vrot.slane %v434, %v619
        %v621 = vlaneseq
        %v622 = vshrl.u32 %v621, 7
        %v623 = vsub.s32 %v539, %v622
        %v624 = vrot.slane %v435, %v623
        %v625 = vsel %vm544, %v624, %v620
        %v626 = vlaneseq
        %v627 = vshrl.u32 %v626, 7
        %v628 = vsub.s32 %v534, %v627
        %v629 = vrot.slane %v436, %v628
        %v630 = vlaneseq
        %v631 = vshrl.u32 %v630, 7
        %v632 = vsub.s32 %v539, %v631
        %v633 = vrot.slane %v437, %v632
        %v634 = vsel %vm544, %v633, %v629
        %v635 = vlaneseq
        %v636 = vshrl.u32 %v635, 7
        %v637 = vsub.s32 %v534, %v636
        %v638 = vrot.slane %v438, %v637
        %v639 = vlaneseq
        %v640 = vshrl.u32 %v639, 7
        %v641 = vsub.s32 %v539, %v640
        %v642 = vrot.slane %v439, %v641
        %v643 = vsel %vm544, %v642, %v638
        %v644 = vlaneseq
        %v645 = vshrl.u32 %v644, 7
        %v646 = vsub.s32 %v534, %v645
        %v647 = vrot.slane %v440, %v646
        %v648 = vlaneseq
        %v649 = vshrl.u32 %v648, 7
        %v650 = vsub.s32 %v539, %v649
        %v651 = vrot.slane %v441, %v650
        %v652 = vsel %vm544, %v651, %v647
        %v653 = vsel %vm446, %v634, %v625
        %v654 = vsel %vm448, %v643, %v653
        %v655 = vsel %vm450, %v652, %v654
        %657 = vxpose.xlu0.b32.start [1/16] %v655, 128
        %658 = vxpose.xlu0.b32.cont [2/16] 0.0, 128
        %659 = vxpose.xlu0.b32.cont [3/16] 0.0, 128
        %660 = vxpose.xlu0.b32.cont [4/16] 0.0, 128
        %661 = vxpose.xlu0.b32.cont [5/16] 0.0, 128
        %662 = vxpose.xlu0.b32.cont [6/16] 0.0, 128
        %663 = vxpose.xlu0.b32.cont [7/16] 0.0, 128
        %664 = vxpose.xlu0.b32.cont [8/16] 0.0, 128
        %665 = vxpose.xlu0.b32.cont [9/16] 0.0, 128
        %666 = vxpose.xlu0.b32.cont [10/16] 0.0, 128
        %667 = vxpose.xlu0.b32.cont [11/16] 0.0, 128
        %668 = vxpose.xlu0.b32.cont [12/16] 0.0, 128
        %669 = vxpose.xlu0.b32.cont [13/16] 0.0, 128
        %670 = vxpose.xlu0.b32.cont [14/16] 0.0, 128
        %671 = vxpose.xlu0.b32.cont [15/16] 0.0, 128
        %672 = vxpose.xlu0.b32.end [16/16] 0.0, 128
        %v673 = vpop.trf.xlu0
        %v674 = vpop.trf.xlu0
        %v675 = vpop.trf.xlu0
        %v676 = vpop.trf.xlu0
        %v677 = vpop.trf.xlu0
        %v678 = vpop.trf.xlu0
        %v679 = vpop.trf.xlu0
        %v680 = vpop.trf.xlu0
        %v681 = vpop.trf.xlu0
        %v682 = vpop.trf.xlu0
        %v683 = vpop.trf.xlu0
        %v684 = vpop.trf.xlu0
        %v685 = vpop.trf.xlu0
        %v686 = vpop.trf.xlu0
        %v687 = vpop.trf.xlu0
        %v688 = vpop.trf.xlu0
        %vm689 = vcmask 174080
        %690 = vst.msk [vmem:[#allocation2] sm:$0x7] %vm689, 0.0
        %691 = vst.msk [vmem:[#allocation2 + $0x13] sm:$0x7] %vm689, 0.0
        %vm692 = vcmask 23552
        %693 = vst.msk [vmem:[#allocation2] sm:$0xff] %vm692, 0.0
        %694 = vst.msk [vmem:[#allocation2 + $0x8] sm:$0xff] %vm692, 0.0
        %vm695 = vcmask 21504
        %696 = vst.msk [vmem:[#allocation2 + $0x10] sm:$0x3f] %vm695, 0.0
        %vm697 = vcmask 179352
        %698 = vst.msk [vmem:[#allocation2] sm:$0xff] %vm697, 0.0
        %699 = vst.msk [vmem:[#allocation2 + $0x8] sm:$0xff] %vm697, 0.0
        %vm700 = vcmask 177304
        %701 = vst.msk [vmem:[#allocation2 + $0x10] sm:$0x3f] %vm700, 0.0
        %704 = vrot.lane.b32.xlu0 %v270, 3
        %v705 = vpop.permute.xlu0 %704
        %706 = vrot.lane.b32.xlu0 %v277, 3
        %v707 = vpop.permute.xlu0 %706
        %vm710 = vcmask 154648
        %711 = vst.msk [vmem:[#allocation2 + $0x3] sm:$0xff] %vm710, %v705
        %712 = vst.msk [vmem:[#allocation2 + $0xb] sm:$0xff] %vm710, %v707
        %713 = vst.msk [vmem:[#allocation3] sm:$0x7] %vm689, 0.0
        %714 = vst.msk [vmem:[#allocation3 + $0x13] sm:$0x7] %vm689, 0.0
        %715 = vst.msk [vmem:[#allocation3] sm:$0xff] %vm692, 0.0
        %716 = vst.msk [vmem:[#allocation3 + $0x8] sm:$0xff] %vm692, 0.0
        %717 = vst.msk [vmem:[#allocation3 + $0x10] sm:$0x3f] %vm695, 0.0
        %718 = vst.msk [vmem:[#allocation3] sm:$0xff] %vm697, 0.0
        %719 = vst.msk [vmem:[#allocation3 + $0x8] sm:$0xff] %vm697, 0.0
        %720 = vst.msk [vmem:[#allocation3 + $0x10] sm:$0x3f] %vm700, 0.0
        %723 = vrot.lane.b32.xlu0 %v292, 3
        %v724 = vpop.permute.xlu0 %723
        %725 = vrot.lane.b32.xlu0 %v293, 3
        %v726 = vpop.permute.xlu0 %725
        %729 = vst.msk [vmem:[#allocation3 + $0x3] sm:$0xff] %vm710, %v724
        %730 = vst.msk [vmem:[#allocation3 + $0xb] sm:$0xff] %vm710, %v726
        %v731 = vld [vmem:[#allocation2] sm:$0xff]
        %v732 = vld [vmem:[#allocation2 + $0x8] sm:$0xff]
        %v733 = vld [vmem:[#allocation2 + $0x10] sm:$0x3f]
        %v734 = vld [vmem:[#allocation3] sm:$0xff]
        %v735 = vld [vmem:[#allocation3 + $0x8] sm:$0xff]
        %v736 = vld [vmem:[#allocation3 + $0x10] sm:$0x3f]
        %s737 = sld [smem:[#allocation12]]
        %s738 = sld [smem:[#allocation12 + $0x31]]
        %v739 = vstv %s737
        %v740 = vmul.f32 %v739, %v731
        %v741 = vmul.f32 %v739, %v732
        %v742 = vadd.f32 %v740, 0.0
        %v743 = vadd.f32 %v741, 0.0
        %v744 = vstv %s738
        %v745 = vmul.f32 %v744, %v734
        %v746 = vmul.f32 %v744, %v735
        %v747 = vadd.f32 %v742, %v745
        %v748 = vadd.f32 %v743, %v746
        %s749 = sld [smem:[#allocation12 + $0x7]]
        %s750 = sld [smem:[#allocation12 + $0x38]]
        %v751 = vstv %s749
        %v752 = vmul.f32 %v751, %v731
        %v753 = vmul.f32 %v751, %v732
        %v754 = vmul.f32 %v751, %v733
        %vm758 = vcmask 1046528
        %v759 = vrot.slane %v752, 1
        %v760 = vrot.slane %v753, 1
        %v761 = vsel %vm758, %v759, %v760
        %v762 = vrot.slane %v754, 1
        %v763 = vsel %vm758, %v760, %v762
        %v766 = vadd.f32 %v747, %v761
        %v767 = vadd.f32 %v748, %v763
        %v768 = vstv %s750
        %v769 = vmul.f32 %v768, %v734
        %v770 = vmul.f32 %v768, %v735
        %v771 = vmul.f32 %v768, %v736
        %v775 = vrot.slane %v769, 1
        %v776 = vrot.slane %v770, 1
        %v777 = vsel %vm758, %v775, %v776
        %v778 = vrot.slane %v771, 1
        %v779 = vsel %vm758, %v776, %v778
        %v782 = vadd.f32 %v766, %v777
        %v783 = vadd.f32 %v767, %v779
        %s784 = sld [smem:[#allocation12 + $0xe]]
        %s785 = sld [smem:[#allocation12 + $0x3f]]
        %v786 = vstv %s784
        %v787 = vmul.f32 %v786, %v731
        %v788 = vmul.f32 %v786, %v732
        %v789 = vmul.f32 %v786, %v733
        %vm793 = vcmask 1045504
        %v794 = vrot.slane %v787, 2
        %v795 = vrot.slane %v788, 2
        %v796 = vsel %vm793, %v794, %v795
        %v797 = vrot.slane %v789, 2
        %v798 = vsel %vm793, %v795, %v797
        %v801 = vadd.f32 %v782, %v796
        %v802 = vadd.f32 %v783, %v798
        %v803 = vstv %s785
        %v804 = vmul.f32 %v803, %v734
        %v805 = vmul.f32 %v803, %v735
        %v806 = vmul.f32 %v803, %v736
        %v810 = vrot.slane %v804, 2
        %v811 = vrot.slane %v805, 2
        %v812 = vsel %vm793, %v810, %v811
        %v813 = vrot.slane %v806, 2
        %v814 = vsel %vm793, %v811, %v813
        %v817 = vadd.f32 %v801, %v812
        %v818 = vadd.f32 %v802, %v814
        %s819 = sld [smem:[#allocation12 + $0x15]]
        %s820 = sld [smem:[#allocation12 + $0x46]]
        %v821 = vstv %s819
        %v822 = vmul.f32 %v821, %v731
        %v823 = vmul.f32 %v821, %v732
        %v824 = vmul.f32 %v821, %v733
        %vm828 = vcmask 1044480
        %v829 = vrot.slane %v822, 3
        %v830 = vrot.slane %v823, 3
        %v831 = vsel %vm828, %v829, %v830
        %v832 = vrot.slane %v824, 3
        %v833 = vsel %vm828, %v830, %v832
        %v836 = vadd.f32 %v817, %v831
        %v837 = vadd.f32 %v818, %v833
        %v838 = vstv %s820
        %v839 = vmul.f32 %v838, %v734
        %v840 = vmul.f32 %v838, %v735
        %v841 = vmul.f32 %v838, %v736
        %v845 = vrot.slane %v839, 3
        %v846 = vrot.slane %v840, 3
        %v847 = vsel %vm828, %v845, %v846
        %v848 = vrot.slane %v841, 3
        %v849 = vsel %vm828, %v846, %v848
        %v852 = vadd.f32 %v836, %v847
        %v853 = vadd.f32 %v837, %v849
        %s854 = sld [smem:[#allocation12 + $0x1c]]
        %s855 = sld [smem:[#allocation12 + $0x4d]]
        %v856 = vstv %s854
        %v857 = vmul.f32 %v856, %v731
        %v858 = vmul.f32 %v856, %v732
        %v859 = vmul.f32 %v856, %v733
        %vm863 = vcmask 1043456
        %v864 = vrot.slane %v857, 4
        %v865 = vrot.slane %v858, 4
        %v866 = vsel %vm863, %v864, %v865
        %v867 = vrot.slane %v859, 4
        %v868 = vsel %vm863, %v865, %v867
        %v871 = vadd.f32 %v852, %v866
        %v872 = vadd.f32 %v853, %v868
        %v873 = vstv %s855
        %v874 = vmul.f32 %v873, %v734
        %v875 = vmul.f32 %v873, %v735
        %v876 = vmul.f32 %v873, %v736
        %v880 = vrot.slane %v874, 4
        %v881 = vrot.slane %v875, 4
        %v882 = vsel %vm863, %v880, %v881
        %v883 = vrot.slane %v876, 4
        %v884 = vsel %vm863, %v881, %v883
        %v887 = vadd.f32 %v871, %v882
        %v888 = vadd.f32 %v872, %v884
        %s889 = sld [smem:[#allocation12 + $0x23]]
        %s890 = sld [smem:[#allocation12 + $0x54]]
        %v891 = vstv %s889
        %v892 = vmul.f32 %v891, %v731
        %v893 = vmul.f32 %v891, %v732
        %v894 = vmul.f32 %v891, %v733
        %vm898 = vcmask 1042432
        %v899 = vrot.slane %v892, 5
        %v900 = vrot.slane %v893, 5
        %v901 = vsel %vm898, %v899, %v900
        %v902 = vrot.slane %v894, 5
        %v903 = vsel %vm898, %v900, %v902
        %v906 = vadd.f32 %v887, %v901
        %v907 = vadd.f32 %v888, %v903
        %v908 = vstv %s890
        %v909 = vmul.f32 %v908, %v734
        %v910 = vmul.f32 %v908, %v735
        %v911 = vmul.f32 %v908, %v736
        %v915 = vrot.slane %v909, 5
        %v916 = vrot.slane %v910, 5
        %v917 = vsel %vm898, %v915, %v916
        %v918 = vrot.slane %v911, 5
        %v919 = vsel %vm898, %v916, %v918
        %v922 = vadd.f32 %v906, %v917
        %v923 = vadd.f32 %v907, %v919
        %s924 = sld [smem:[#allocation12 + $0x2a]]
        %s925 = sld [smem:[#allocation12 + $0x5b]]
        %v926 = vstv %s924
        %v927 = vmul.f32 %v926, %v731
        %v928 = vmul.f32 %v926, %v732
        %v929 = vmul.f32 %v926, %v733
        %vm933 = vcmask 1041408
        %v934 = vrot.slane %v927, 6
        %v935 = vrot.slane %v928, 6
        %v936 = vsel %vm933, %v934, %v935
        %v937 = vrot.slane %v929, 6
        %v938 = vsel %vm933, %v935, %v937
        %v941 = vadd.f32 %v922, %v936
        %v942 = vadd.f32 %v923, %v938
        %v943 = vstv %s925
        %v944 = vmul.f32 %v943, %v734
        %v945 = vmul.f32 %v943, %v735
        %v946 = vmul.f32 %v943, %v736
        %v950 = vrot.slane %v944, 6
        %v951 = vrot.slane %v945, 6
        %v952 = vsel %vm933, %v950, %v951
        %v953 = vrot.slane %v946, 6
        %v954 = vsel %vm933, %v951, %v953
        %v957 = vadd.f32 %v941, %v952
        %v958 = vadd.f32 %v942, %v954
        %s959 = sld [smem:[#allocation12 + $0x1]]
        %s960 = sld [smem:[#allocation12 + $0x32]]
        %v961 = vstv %s959
        %v962 = vmul.f32 %v961, %v731
        %v963 = vmul.f32 %v961, %v732
        %966 = vrot.lane.b32.xlu0 %v962, 127
        %v967 = vpop.permute.xlu0 %966
        %968 = vrot.lane.b32.xlu0 %v963, 127
        %v969 = vpop.permute.xlu0 %968
        %v972 = vadd.f32 %v957, %v967
        %v973 = vadd.f32 %v958, %v969
        %v974 = vstv %s960
        %v975 = vmul.f32 %v974, %v734
        %v976 = vmul.f32 %v974, %v735
        %979 = vrot.lane.b32.xlu0 %v975, 127
        %v980 = vpop.permute.xlu0 %979
        %981 = vrot.lane.b32.xlu0 %v976, 127
        %v982 = vpop.permute.xlu0 %981
        %v985 = vadd.f32 %v972, %v980
        %v986 = vadd.f32 %v973, %v982
        %s987 = sld [smem:[#allocation12 + $0x8]]
        %s988 = sld [smem:[#allocation12 + $0x39]]
        %v989 = vstv %s987
        %v990 = vmul.f32 %v989, %v731
        %v991 = vmul.f32 %v989, %v732
        %v992 = vmul.f32 %v989, %v733
        %v996 = vrot.slane %v990, 1
        %v997 = vrot.slane %v991, 1
        %v998 = vsel %vm758, %v996, %v997
        %v999 = vrot.slane %v992, 1
        %v1000 = vsel %vm758, %v997, %v999
        %1001 = vrot.lane.b32.xlu0 %v998, 127
        %v1002 = vpop.permute.xlu0 %1001
        %1003 = vrot.lane.b32.xlu0 %v1000, 127
        %v1004 = vpop.permute.xlu0 %1003
        %v1007 = vadd.f32 %v985, %v1002
        %v1008 = vadd.f32 %v986, %v1004
        %v1009 = vstv %s988
        %v1010 = vmul.f32 %v1009, %v734
        %v1011 = vmul.f32 %v1009, %v735
        %v1012 = vmul.f32 %v1009, %v736
        %v1016 = vrot.slane %v1010, 1
        %v1017 = vrot.slane %v1011, 1
        %v1018 = vsel %vm758, %v1016, %v1017
        %v1019 = vrot.slane %v1012, 1
        %v1020 = vsel %vm758, %v1017, %v1019
        %1021 = vrot.lane.b32.xlu0 %v1018, 127
        %v1022 = vpop.permute.xlu0 %1021
        %1023 = vrot.lane.b32.xlu0 %v1020, 127
        %v1024 = vpop.permute.xlu0 %1023
        %v1027 = vadd.f32 %v1007, %v1022
        %v1028 = vadd.f32 %v1008, %v1024
        %s1029 = sld [smem:[#allocation12 + $0xf]]
        %s1030 = sld [smem:[#allocation12 + $0x40]]
        %v1031 = vstv %s1029
        %v1032 = vmul.f32 %v1031, %v731
        %v1033 = vmul.f32 %v1031, %v732
        %v1034 = vmul.f32 %v1031, %v733
        %v1038 = vrot.slane %v1032, 2
        %v1039 = vrot.slane %v1033, 2
        %v1040 = vsel %vm793, %v1038, %v1039
        %v1041 = vrot.slane %v1034, 2
        %v1042 = vsel %vm793, %v1039, %v1041
        %1043 = vrot.lane.b32.xlu0 %v1040, 127
        %v1044 = vpop.permute.xlu0 %1043
        %1045 = vrot.lane.b32.xlu0 %v1042, 127
        %v1046 = vpop.permute.xlu0 %1045
        %v1049 = vadd.f32 %v1027, %v1044
        %v1050 = vadd.f32 %v1028, %v1046
        %v1051 = vstv %s1030
        %v1052 = vmul.f32 %v1051, %v734
        %v1053 = vmul.f32 %v1051, %v735
        %v1054 = vmul.f32 %v1051, %v736
        %v1058 = vrot.slane %v1052, 2
        %v1059 = vrot.slane %v1053, 2
        %v1060 = vsel %vm793, %v1058, %v1059
        %v1061 = vrot.slane %v1054, 2
        %v1062 = vsel %vm793, %v1059, %v1061
        %1063 = vrot.lane.b32.xlu0 %v1060, 127
        %v1064 = vpop.permute.xlu0 %1063
        %1065 = vrot.lane.b32.xlu0 %v1062, 127
        %v1066 = vpop.permute.xlu0 %1065
        %v1069 = vadd.f32 %v1049, %v1064
        %v1070 = vadd.f32 %v1050, %v1066
        %s1071 = sld [smem:[#allocation12 + $0x16]]
        %s1072 = sld [smem:[#allocation12 + $0x47]]
        %v1073 = vstv %s1071
        %v1074 = vmul.f32 %v1073, %v731
        %v1075 = vmul.f32 %v1073, %v732
        %v1076 = vmul.f32 %v1073, %v733
        %v1080 = vrot.slane %v1074, 3
        %v1081 = vrot.slane %v1075, 3
        %v1082 = vsel %vm828, %v1080, %v1081
        %v1083 = vrot.slane %v1076, 3
        %v1084 = vsel %vm828, %v1081, %v1083
        %1085 = vrot.lane.b32.xlu0 %v1082, 127
        %v1086 = vpop.permute.xlu0 %1085
        %1087 = vrot.lane.b32.xlu0 %v1084, 127
        %v1088 = vpop.permute.xlu0 %1087
        %v1091 = vadd.f32 %v1069, %v1086
        %v1092 = vadd.f32 %v1070, %v1088
        %v1093 = vstv %s1072
        %v1094 = vmul.f32 %v1093, %v734
        %v1095 = vmul.f32 %v1093, %v735
        %v1096 = vmul.f32 %v1093, %v736
        %v1100 = vrot.slane %v1094, 3
        %v1101 = vrot.slane %v1095, 3
        %v1102 = vsel %vm828, %v1100, %v1101
        %v1103 = vrot.slane %v1096, 3
        %v1104 = vsel %vm828, %v1101, %v1103
        %1105 = vrot.lane.b32.xlu0 %v1102, 127
        %v1106 = vpop.permute.xlu0 %1105
        %1107 = vrot.lane.b32.xlu0 %v1104, 127
        %v1108 = vpop.permute.xlu0 %1107
        %v1111 = vadd.f32 %v1091, %v1106
        %v1112 = vadd.f32 %v1092, %v1108
        %s1113 = sld [smem:[#allocation12 + $0x1d]]
        %s1114 = sld [smem:[#allocation12 + $0x4e]]
        %v1115 = vstv %s1113
        %v1116 = vmul.f32 %v1115, %v731
        %v1117 = vmul.f32 %v1115, %v732
        %v1118 = vmul.f32 %v1115, %v733
        %v1122 = vrot.slane %v1116, 4
        %v1123 = vrot.slane %v1117, 4
        %v1124 = vsel %vm863, %v1122, %v1123
        %v1125 = vrot.slane %v1118, 4
        %v1126 = vsel %vm863, %v1123, %v1125
        %1127 = vrot.lane.b32.xlu0 %v1124, 127
        %v1128 = vpop.permute.xlu0 %1127
        %1129 = vrot.lane.b32.xlu0 %v1126, 127
        %v1130 = vpop.permute.xlu0 %1129
        %v1133 = vadd.f32 %v1111, %v1128
        %v1134 = vadd.f32 %v1112, %v1130
        %v1135 = vstv %s1114
        %v1136 = vmul.f32 %v1135, %v734
        %v1137 = vmul.f32 %v1135, %v735
        %v1138 = vmul.f32 %v1135, %v736
        %v1142 = vrot.slane %v1136, 4
        %v1143 = vrot.slane %v1137, 4
        %v1144 = vsel %vm863, %v1142, %v1143
        %v1145 = vrot.slane %v1138, 4
        %v1146 = vsel %vm863, %v1143, %v1145
        %1147 = vrot.lane.b32.xlu0 %v1144, 127
        %v1148 = vpop.permute.xlu0 %1147
        %1149 = vrot.lane.b32.xlu0 %v1146, 127
        %v1150 = vpop.permute.xlu0 %1149
        %v1153 = vadd.f32 %v1133, %v1148
        %v1154 = vadd.f32 %v1134, %v1150
        %s1155 = sld [smem:[#allocation12 + $0x24]]
        %s1156 = sld [smem:[#allocation12 + $0x55]]
        %v1157 = vstv %s1155
        %v1158 = vmul.f32 %v1157, %v731
        %v1159 = vmul.f32 %v1157, %v732
        %v1160 = vmul.f32 %v1157, %v733
        %v1164 = vrot.slane %v1158, 5
        %v1165 = vrot.slane %v1159, 5
        %v1166 = vsel %vm898, %v1164, %v1165
        %v1167 = vrot.slane %v1160, 5
        %v1168 = vsel %vm898, %v1165, %v1167
        %1169 = vrot.lane.b32.xlu0 %v1166, 127
        %v1170 = vpop.permute.xlu0 %1169
        %1171 = vrot.lane.b32.xlu0 %v1168, 127
        %v1172 = vpop.permute.xlu0 %1171
        %v1175 = vadd.f32 %v1153, %v1170
        %v1176 = vadd.f32 %v1154, %v1172
        %v1177 = vstv %s1156
        %v1178 = vmul.f32 %v1177, %v734
        %v1179 = vmul.f32 %v1177, %v735
        %v1180 = vmul.f32 %v1177, %v736
        %v1184 = vrot.slane %v1178, 5
        %v1185 = vrot.slane %v1179, 5
        %v1186 = vsel %vm898, %v1184, %v1185
        %v1187 = vrot.slane %v1180, 5
        %v1188 = vsel %vm898, %v1185, %v1187
        %1189 = vrot.lane.b32.xlu0 %v1186, 127
        %v1190 = vpop.permute.xlu0 %1189
        %1191 = vrot.lane.b32.xlu0 %v1188, 127
        %v1192 = vpop.permute.xlu0 %1191
        %v1195 = vadd.f32 %v1175, %v1190
        %v1196 = vadd.f32 %v1176, %v1192
        %s1197 = sld [smem:[#allocation12 + $0x2b]]
        %s1198 = sld [smem:[#allocation12 + $0x5c]]
        %v1199 = vstv %s1197
        %v1200 = vmul.f32 %v1199, %v731
        %v1201 = vmul.f32 %v1199, %v732
        %v1202 = vmul.f32 %v1199, %v733
        %v1206 = vrot.slane %v1200, 6
        %v1207 = vrot.slane %v1201, 6
        %v1208 = vsel %vm933, %v1206, %v1207
        %v1209 = vrot.slane %v1202, 6
        %v1210 = vsel %vm933, %v1207, %v1209
        %1211 = vrot.lane.b32.xlu0 %v1208, 127
        %v1212 = vpop.permute.xlu0 %1211
        %1213 = vrot.lane.b32.xlu0 %v1210, 127
        %v1214 = vpop.permute.xlu0 %1213
        %v1217 = vadd.f32 %v1195, %v1212
        %v1218 = vadd.f32 %v1196, %v1214
        %v1219 = vstv %s1198
        %v1220 = vmul.f32 %v1219, %v734
        %v1221 = vmul.f32 %v1219, %v735
        %v1222 = vmul.f32 %v1219, %v736
        %v1226 = vrot.slane %v1220, 6
        %v1227 = vrot.slane %v1221, 6
        %v1228 = vsel %vm933, %v1226, %v1227
        %v1229 = vrot.slane %v1222, 6
        %v1230 = vsel %vm933, %v1227, %v1229
        %1231 = vrot.lane.b32.xlu0 %v1228, 127
        %v1232 = vpop.permute.xlu0 %1231
        %1233 = vrot.lane.b32.xlu0 %v1230, 127
        %v1234 = vpop.permute.xlu0 %1233
        %v1237 = vadd.f32 %v1217, %v1232
        %v1238 = vadd.f32 %v1218, %v1234
        %s1239 = sld [smem:[#allocation12 + $0x2]]
        %s1240 = sld [smem:[#allocation12 + $0x33]]
        %v1241 = vstv %s1239
        %v1242 = vmul.f32 %v1241, %v731
        %v1243 = vmul.f32 %v1241, %v732
        %1246 = vrot.lane.b32.xlu0 %v1242, 126
        %v1247 = vpop.permute.xlu0 %1246
        %1248 = vrot.lane.b32.xlu0 %v1243, 126
        %v1249 = vpop.permute.xlu0 %1248
        %v1252 = vadd.f32 %v1237, %v1247
        %v1253 = vadd.f32 %v1238, %v1249
        %v1254 = vstv %s1240
        %v1255 = vmul.f32 %v1254, %v734
        %v1256 = vmul.f32 %v1254, %v735
        %1259 = vrot.lane.b32.xlu0 %v1255, 126
        %v1260 = vpop.permute.xlu0 %1259
        %1261 = vrot.lane.b32.xlu0 %v1256, 126
        %v1262 = vpop.permute.xlu0 %1261
        %v1265 = vadd.f32 %v1252, %v1260
        %v1266 = vadd.f32 %v1253, %v1262
        %s1267 = sld [smem:[#allocation12 + $0x9]]
        %s1268 = sld [smem:[#allocation12 + $0x3a]]
        %v1269 = vstv %s1267
        %v1270 = vmul.f32 %v1269, %v731
        %v1271 = vmul.f32 %v1269, %v732
        %v1272 = vmul.f32 %v1269, %v733
        %v1276 = vrot.slane %v1270, 1
        %v1277 = vrot.slane %v1271, 1
        %v1278 = vsel %vm758, %v1276, %v1277
        %v1279 = vrot.slane %v1272, 1
        %v1280 = vsel %vm758, %v1277, %v1279
        %1281 = vrot.lane.b32.xlu0 %v1278, 126
        %v1282 = vpop.permute.xlu0 %1281
        %1283 = vrot.lane.b32.xlu0 %v1280, 126
        %v1284 = vpop.permute.xlu0 %1283
        %v1287 = vadd.f32 %v1265, %v1282
        %v1288 = vadd.f32 %v1266, %v1284
        %v1289 = vstv %s1268
        %v1290 = vmul.f32 %v1289, %v734
        %v1291 = vmul.f32 %v1289, %v735
        %v1292 = vmul.f32 %v1289, %v736
        %v1296 = vrot.slane %v1290, 1
        %v1297 = vrot.slane %v1291, 1
        %v1298 = vsel %vm758, %v1296, %v1297
        %v1299 = vrot.slane %v1292, 1
        %v1300 = vsel %vm758, %v1297, %v1299
        %1301 = vrot.lane.b32.xlu0 %v1298, 126
        %v1302 = vpop.permute.xlu0 %1301
        %1303 = vrot.lane.b32.xlu0 %v1300, 126
        %v1304 = vpop.permute.xlu0 %1303
        %v1307 = vadd.f32 %v1287, %v1302
        %v1308 = vadd.f32 %v1288, %v1304
        %s1309 = sld [smem:[#allocation12 + $0x10]]
        %s1310 = sld [smem:[#allocation12 + $0x41]]
        %v1311 = vstv %s1309
        %v1312 = vmul.f32 %v1311, %v731
        %v1313 = vmul.f32 %v1311, %v732
        %v1314 = vmul.f32 %v1311, %v733
        %v1318 = vrot.slane %v1312, 2
        %v1319 = vrot.slane %v1313, 2
        %v1320 = vsel %vm793, %v1318, %v1319
        %v1321 = vrot.slane %v1314, 2
        %v1322 = vsel %vm793, %v1319, %v1321
        %1323 = vrot.lane.b32.xlu0 %v1320, 126
        %v1324 = vpop.permute.xlu0 %1323
        %1325 = vrot.lane.b32.xlu0 %v1322, 126
        %v1326 = vpop.permute.xlu0 %1325
        %v1329 = vadd.f32 %v1307, %v1324
        %v1330 = vadd.f32 %v1308, %v1326
        %v1331 = vstv %s1310
        %v1332 = vmul.f32 %v1331, %v734
        %v1333 = vmul.f32 %v1331, %v735
        %v1334 = vmul.f32 %v1331, %v736
        %v1338 = vrot.slane %v1332, 2
        %v1339 = vrot.slane %v1333, 2
        %v1340 = vsel %vm793, %v1338, %v1339
        %v1341 = vrot.slane %v1334, 2
        %v1342 = vsel %vm793, %v1339, %v1341
        %1343 = vrot.lane.b32.xlu0 %v1340, 126
        %v1344 = vpop.permute.xlu0 %1343
        %1345 = vrot.lane.b32.xlu0 %v1342, 126
        %v1346 = vpop.permute.xlu0 %1345
        %v1349 = vadd.f32 %v1329, %v1344
        %v1350 = vadd.f32 %v1330, %v1346
        %s1351 = sld [smem:[#allocation12 + $0x17]]
        %s1352 = sld [smem:[#allocation12 + $0x48]]
        %v1353 = vstv %s1351
        %v1354 = vmul.f32 %v1353, %v731
        %v1355 = vmul.f32 %v1353, %v732
        %v1356 = vmul.f32 %v1353, %v733
        %v1360 = vrot.slane %v1354, 3
        %v1361 = vrot.slane %v1355, 3
        %v1362 = vsel %vm828, %v1360, %v1361
        %v1363 = vrot.slane %v1356, 3
        %v1364 = vsel %vm828, %v1361, %v1363
        %1365 = vrot.lane.b32.xlu0 %v1362, 126
        %v1366 = vpop.permute.xlu0 %1365
        %1367 = vrot.lane.b32.xlu0 %v1364, 126
        %v1368 = vpop.permute.xlu0 %1367
        %v1371 = vadd.f32 %v1349, %v1366
        %v1372 = vadd.f32 %v1350, %v1368
        %v1373 = vstv %s1352
        %v1374 = vmul.f32 %v1373, %v734
        %v1375 = vmul.f32 %v1373, %v735
        %v1376 = vmul.f32 %v1373, %v736
        %v1380 = vrot.slane %v1374, 3
        %v1381 = vrot.slane %v1375, 3
        %v1382 = vsel %vm828, %v1380, %v1381
        %v1383 = vrot.slane %v1376, 3
        %v1384 = vsel %vm828, %v1381, %v1383
        %1385 = vrot.lane.b32.xlu0 %v1382, 126
        %v1386 = vpop.permute.xlu0 %1385
        %1387 = vrot.lane.b32.xlu0 %v1384, 126
        %v1388 = vpop.permute.xlu0 %1387
        %v1391 = vadd.f32 %v1371, %v1386
        %v1392 = vadd.f32 %v1372, %v1388
        %s1393 = sld [smem:[#allocation12 + $0x1e]]
        %s1394 = sld [smem:[#allocation12 + $0x4f]]
        %v1395 = vstv %s1393
        %v1396 = vmul.f32 %v1395, %v731
        %v1397 = vmul.f32 %v1395, %v732
        %v1398 = vmul.f32 %v1395, %v733
        %v1402 = vrot.slane %v1396, 4
        %v1403 = vrot.slane %v1397, 4
        %v1404 = vsel %vm863, %v1402, %v1403
        %v1405 = vrot.slane %v1398, 4
        %v1406 = vsel %vm863, %v1403, %v1405
        %1407 = vrot.lane.b32.xlu0 %v1404, 126
        %v1408 = vpop.permute.xlu0 %1407
        %1409 = vrot.lane.b32.xlu0 %v1406, 126
        %v1410 = vpop.permute.xlu0 %1409
        %v1413 = vadd.f32 %v1391, %v1408
        %v1414 = vadd.f32 %v1392, %v1410
        %v1415 = vstv %s1394
        %v1416 = vmul.f32 %v1415, %v734
        %v1417 = vmul.f32 %v1415, %v735
        %v1418 = vmul.f32 %v1415, %v736
        %v1422 = vrot.slane %v1416, 4
        %v1423 = vrot.slane %v1417, 4
        %v1424 = vsel %vm863, %v1422, %v1423
        %v1425 = vrot.slane %v1418, 4
        %v1426 = vsel %vm863, %v1423, %v1425
        %1427 = vrot.lane.b32.xlu0 %v1424, 126
        %v1428 = vpop.permute.xlu0 %1427
        %1429 = vrot.lane.b32.xlu0 %v1426, 126
        %v1430 = vpop.permute.xlu0 %1429
        %v1433 = vadd.f32 %v1413, %v1428
        %v1434 = vadd.f32 %v1414, %v1430
        %s1435 = sld [smem:[#allocation12 + $0x25]]
        %s1436 = sld [smem:[#allocation12 + $0x56]]
        %v1437 = vstv %s1435
        %v1438 = vmul.f32 %v1437, %v731
        %v1439 = vmul.f32 %v1437, %v732
        %v1440 = vmul.f32 %v1437, %v733
        %v1444 = vrot.slane %v1438, 5
        %v1445 = vrot.slane %v1439, 5
        %v1446 = vsel %vm898, %v1444, %v1445
        %v1447 = vrot.slane %v1440, 5
        %v1448 = vsel %vm898, %v1445, %v1447
        %1449 = vrot.lane.b32.xlu0 %v1446, 126
        %v1450 = vpop.permute.xlu0 %1449
        %1451 = vrot.lane.b32.xlu0 %v1448, 126
        %v1452 = vpop.permute.xlu0 %1451
        %v1455 = vadd.f32 %v1433, %v1450
        %v1456 = vadd.f32 %v1434, %v1452
        %v1457 = vstv %s1436
        %v1458 = vmul.f32 %v1457, %v734
        %v1459 = vmul.f32 %v1457, %v735
        %v1460 = vmul.f32 %v1457, %v736
        %v1464 = vrot.slane %v1458, 5
        %v1465 = vrot.slane %v1459, 5
        %v1466 = vsel %vm898, %v1464, %v1465
        %v1467 = vrot.slane %v1460, 5
        %v1468 = vsel %vm898, %v1465, %v1467
        %1469 = vrot.lane.b32.xlu0 %v1466, 126
        %v1470 = vpop.permute.xlu0 %1469
        %1471 = vrot.lane.b32.xlu0 %v1468, 126
        %v1472 = vpop.permute.xlu0 %1471
        %v1475 = vadd.f32 %v1455, %v1470
        %v1476 = vadd.f32 %v1456, %v1472
        %s1477 = sld [smem:[#allocation12 + $0x2c]]
        %s1478 = sld [smem:[#allocation12 + $0x5d]]
        %v1479 = vstv %s1477
        %v1480 = vmul.f32 %v1479, %v731
        %v1481 = vmul.f32 %v1479, %v732
        %v1482 = vmul.f32 %v1479, %v733
        %v1486 = vrot.slane %v1480, 6
        %v1487 = vrot.slane %v1481, 6
        %v1488 = vsel %vm933, %v1486, %v1487
        %v1489 = vrot.slane %v1482, 6
        %v1490 = vsel %vm933, %v1487, %v1489
        %1491 = vrot.lane.b32.xlu0 %v1488, 126
        %v1492 = vpop.permute.xlu0 %1491
        %1493 = vrot.lane.b32.xlu0 %v1490, 126
        %v1494 = vpop.permute.xlu0 %1493
        %v1497 = vadd.f32 %v1475, %v1492
        %v1498 = vadd.f32 %v1476, %v1494
        %v1499 = vstv %s1478
        %v1500 = vmul.f32 %v1499, %v734
        %v1501 = vmul.f32 %v1499, %v735
        %v1502 = vmul.f32 %v1499, %v736
        %v1506 = vrot.slane %v1500, 6
        %v1507 = vrot.slane %v1501, 6
        %v1508 = vsel %vm933, %v1506, %v1507
        %v1509 = vrot.slane %v1502, 6
        %v1510 = vsel %vm933, %v1507, %v1509
        %1511 = vrot.lane.b32.xlu0 %v1508, 126
        %v1512 = vpop.permute.xlu0 %1511
        %1513 = vrot.lane.b32.xlu0 %v1510, 126
        %v1514 = vpop.permute.xlu0 %1513
        %v1517 = vadd.f32 %v1497, %v1512
        %v1518 = vadd.f32 %v1498, %v1514
        %s1519 = sld [smem:[#allocation12 + $0x3]]
        %s1520 = sld [smem:[#allocation12 + $0x34]]
        %v1521 = vstv %s1519
        %v1522 = vmul.f32 %v1521, %v731
        %v1523 = vmul.f32 %v1521, %v732
        %1526 = vrot.lane.b32.xlu0 %v1522, 125
        %v1527 = vpop.permute.xlu0 %1526
        %1528 = vrot.lane.b32.xlu0 %v1523, 125
        %v1529 = vpop.permute.xlu0 %1528
        %v1532 = vadd.f32 %v1517, %v1527
        %v1533 = vadd.f32 %v1518, %v1529
        %v1534 = vstv %s1520
        %v1535 = vmul.f32 %v1534, %v734
        %v1536 = vmul.f32 %v1534, %v735
        %1539 = vrot.lane.b32.xlu0 %v1535, 125
        %v1540 = vpop.permute.xlu0 %1539
        %1541 = vrot.lane.b32.xlu0 %v1536, 125
        %v1542 = vpop.permute.xlu0 %1541
        %v1545 = vadd.f32 %v1532, %v1540
        %v1546 = vadd.f32 %v1533, %v1542
        %s1547 = sld [smem:[#allocation12 + $0xa]]
        %s1548 = sld [smem:[#allocation12 + $0x3b]]
        %v1549 = vstv %s1547
        %v1550 = vmul.f32 %v1549, %v731
        %v1551 = vmul.f32 %v1549, %v732
        %v1552 = vmul.f32 %v1549, %v733
        %v1556 = vrot.slane %v1550, 1
        %v1557 = vrot.slane %v1551, 1
        %v1558 = vsel %vm758, %v1556, %v1557
        %v1559 = vrot.slane %v1552, 1
        %v1560 = vsel %vm758, %v1557, %v1559
        %1561 = vrot.lane.b32.xlu0 %v1558, 125
        %v1562 = vpop.permute.xlu0 %1561
        %1563 = vrot.lane.b32.xlu0 %v1560, 125
        %v1564 = vpop.permute.xlu0 %1563
        %v1567 = vadd.f32 %v1545, %v1562
        %v1568 = vadd.f32 %v1546, %v1564
        %v1569 = vstv %s1548
        %v1570 = vmul.f32 %v1569, %v734
        %v1571 = vmul.f32 %v1569, %v735
        %v1572 = vmul.f32 %v1569, %v736
        %v1576 = vrot.slane %v1570, 1
        %v1577 = vrot.slane %v1571, 1
        %v1578 = vsel %vm758, %v1576, %v1577
        %v1579 = vrot.slane %v1572, 1
        %v1580 = vsel %vm758, %v1577, %v1579
        %1581 = vrot.lane.b32.xlu0 %v1578, 125
        %v1582 = vpop.permute.xlu0 %1581
        %1583 = vrot.lane.b32.xlu0 %v1580, 125
        %v1584 = vpop.permute.xlu0 %1583
        %v1587 = vadd.f32 %v1567, %v1582
        %v1588 = vadd.f32 %v1568, %v1584
        %s1589 = sld [smem:[#allocation12 + $0x11]]
        %s1590 = sld [smem:[#allocation12 + $0x42]]
        %v1591 = vstv %s1589
        %v1592 = vmul.f32 %v1591, %v731
        %v1593 = vmul.f32 %v1591, %v732
        %v1594 = vmul.f32 %v1591, %v733
        %v1598 = vrot.slane %v1592, 2
        %v1599 = vrot.slane %v1593, 2
        %v1600 = vsel %vm793, %v1598, %v1599
        %v1601 = vrot.slane %v1594, 2
        %v1602 = vsel %vm793, %v1599, %v1601
        %1603 = vrot.lane.b32.xlu0 %v1600, 125
        %v1604 = vpop.permute.xlu0 %1603
        %1605 = vrot.lane.b32.xlu0 %v1602, 125
        %v1606 = vpop.permute.xlu0 %1605
        %v1609 = vadd.f32 %v1587, %v1604
        %v1610 = vadd.f32 %v1588, %v1606
        %v1611 = vstv %s1590
        %v1612 = vmul.f32 %v1611, %v734
        %v1613 = vmul.f32 %v1611, %v735
        %v1614 = vmul.f32 %v1611, %v736
        %v1618 = vrot.slane %v1612, 2
        %v1619 = vrot.slane %v1613, 2
        %v1620 = vsel %vm793, %v1618, %v1619
        %v1621 = vrot.slane %v1614, 2
        %v1622 = vsel %vm793, %v1619, %v1621
        %1623 = vrot.lane.b32.xlu0 %v1620, 125
        %v1624 = vpop.permute.xlu0 %1623
        %1625 = vrot.lane.b32.xlu0 %v1622, 125
        %v1626 = vpop.permute.xlu0 %1625
        %v1629 = vadd.f32 %v1609, %v1624
        %v1630 = vadd.f32 %v1610, %v1626
        %s1631 = sld [smem:[#allocation12 + $0x18]]
        %s1632 = sld [smem:[#allocation12 + $0x49]]
        %v1633 = vstv %s1631
        %v1634 = vmul.f32 %v1633, %v731
        %v1635 = vmul.f32 %v1633, %v732
        %v1636 = vmul.f32 %v1633, %v733
        %v1640 = vrot.slane %v1634, 3
        %v1641 = vrot.slane %v1635, 3
        %v1642 = vsel %vm828, %v1640, %v1641
        %v1643 = vrot.slane %v1636, 3
        %v1644 = vsel %vm828, %v1641, %v1643
        %1645 = vrot.lane.b32.xlu0 %v1642, 125
        %v1646 = vpop.permute.xlu0 %1645
        %1647 = vrot.lane.b32.xlu0 %v1644, 125
        %v1648 = vpop.permute.xlu0 %1647
        %v1651 = vadd.f32 %v1629, %v1646
        %v1652 = vadd.f32 %v1630, %v1648
        %v1653 = vstv %s1632
        %v1654 = vmul.f32 %v1653, %v734
        %v1655 = vmul.f32 %v1653, %v735
        %v1656 = vmul.f32 %v1653, %v736
        %v1660 = vrot.slane %v1654, 3
        %v1661 = vrot.slane %v1655, 3
        %v1662 = vsel %vm828, %v1660, %v1661
        %v1663 = vrot.slane %v1656, 3
        %v1664 = vsel %vm828, %v1661, %v1663
        %1665 = vrot.lane.b32.xlu0 %v1662, 125
        %v1666 = vpop.permute.xlu0 %1665
        %1667 = vrot.lane.b32.xlu0 %v1664, 125
        %v1668 = vpop.permute.xlu0 %1667
        %v1671 = vadd.f32 %v1651, %v1666
        %v1672 = vadd.f32 %v1652, %v1668
        %s1673 = sld [smem:[#allocation12 + $0x1f]]
        %s1674 = sld [smem:[#allocation12 + $0x50]]
        %v1675 = vstv %s1673
        %v1676 = vmul.f32 %v1675, %v731
        %v1677 = vmul.f32 %v1675, %v732
        %v1678 = vmul.f32 %v1675, %v733
        %v1682 = vrot.slane %v1676, 4
        %v1683 = vrot.slane %v1677, 4
        %v1684 = vsel %vm863, %v1682, %v1683
        %v1685 = vrot.slane %v1678, 4
        %v1686 = vsel %vm863, %v1683, %v1685
        %1687 = vrot.lane.b32.xlu0 %v1684, 125
        %v1688 = vpop.permute.xlu0 %1687
        %1689 = vrot.lane.b32.xlu0 %v1686, 125
        %v1690 = vpop.permute.xlu0 %1689
        %v1693 = vadd.f32 %v1671, %v1688
        %v1694 = vadd.f32 %v1672, %v1690
        %v1695 = vstv %s1674
        %v1696 = vmul.f32 %v1695, %v734
        %v1697 = vmul.f32 %v1695, %v735
        %v1698 = vmul.f32 %v1695, %v736
        %v1702 = vrot.slane %v1696, 4
        %v1703 = vrot.slane %v1697, 4
        %v1704 = vsel %vm863, %v1702, %v1703
        %v1705 = vrot.slane %v1698, 4
        %v1706 = vsel %vm863, %v1703, %v1705
        %1707 = vrot.lane.b32.xlu0 %v1704, 125
        %v1708 = vpop.permute.xlu0 %1707
        %1709 = vrot.lane.b32.xlu0 %v1706, 125
        %v1710 = vpop.permute.xlu0 %1709
        %v1713 = vadd.f32 %v1693, %v1708
        %v1714 = vadd.f32 %v1694, %v1710
        %s1715 = sld [smem:[#allocation12 + $0x26]]
        %s1716 = sld [smem:[#allocation12 + $0x57]]
        %v1717 = vstv %s1715
        %v1718 = vmul.f32 %v1717, %v731
        %v1719 = vmul.f32 %v1717, %v732
        %v1720 = vmul.f32 %v1717, %v733
        %v1724 = vrot.slane %v1718, 5
        %v1725 = vrot.slane %v1719, 5
        %v1726 = vsel %vm898, %v1724, %v1725
        %v1727 = vrot.slane %v1720, 5
        %v1728 = vsel %vm898, %v1725, %v1727
        %1729 = vrot.lane.b32.xlu0 %v1726, 125
        %v1730 = vpop.permute.xlu0 %1729
        %1731 = vrot.lane.b32.xlu0 %v1728, 125
        %v1732 = vpop.permute.xlu0 %1731
        %v1735 = vadd.f32 %v1713, %v1730
        %v1736 = vadd.f32 %v1714, %v1732
        %v1737 = vstv %s1716
        %v1738 = vmul.f32 %v1737, %v734
        %v1739 = vmul.f32 %v1737, %v735
        %v1740 = vmul.f32 %v1737, %v736
        %v1744 = vrot.slane %v1738, 5
        %v1745 = vrot.slane %v1739, 5
        %v1746 = vsel %vm898, %v1744, %v1745
        %v1747 = vrot.slane %v1740, 5
        %v1748 = vsel %vm898, %v1745, %v1747
        %1749 = vrot.lane.b32.xlu0 %v1746, 125
        %v1750 = vpop.permute.xlu0 %1749
        %1751 = vrot.lane.b32.xlu0 %v1748, 125
        %v1752 = vpop.permute.xlu0 %1751
        %v1755 = vadd.f32 %v1735, %v1750
        %v1756 = vadd.f32 %v1736, %v1752
        %s1757 = sld [smem:[#allocation12 + $0x2d]]
        %s1758 = sld [smem:[#allocation12 + $0x5e]]
        %v1759 = vstv %s1757
        %v1760 = vmul.f32 %v1759, %v731
        %v1761 = vmul.f32 %v1759, %v732
        %v1762 = vmul.f32 %v1759, %v733
        %v1766 = vrot.slane %v1760, 6
        %v1767 = vrot.slane %v1761, 6
        %v1768 = vsel %vm933, %v1766, %v1767
        %v1769 = vrot.slane %v1762, 6
        %v1770 = vsel %vm933, %v1767, %v1769
        %1771 = vrot.lane.b32.xlu0 %v1768, 125
        %v1772 = vpop.permute.xlu0 %1771
        %1773 = vrot.lane.b32.xlu0 %v1770, 125
        %v1774 = vpop.permute.xlu0 %1773
        %v1777 = vadd.f32 %v1755, %v1772
        %v1778 = vadd.f32 %v1756, %v1774
        %v1779 = vstv %s1758
        %v1780 = vmul.f32 %v1779, %v734
        %v1781 = vmul.f32 %v1779, %v735
        %v1782 = vmul.f32 %v1779, %v736
        %v1786 = vrot.slane %v1780, 6
        %v1787 = vrot.slane %v1781, 6
        %v1788 = vsel %vm933, %v1786, %v1787
        %v1789 = vrot.slane %v1782, 6
        %v1790 = vsel %vm933, %v1787, %v1789
        %1791 = vrot.lane.b32.xlu0 %v1788, 125
        %v1792 = vpop.permute.xlu0 %1791
        %1793 = vrot.lane.b32.xlu0 %v1790, 125
        %v1794 = vpop.permute.xlu0 %1793
        %v1797 = vadd.f32 %v1777, %v1792
        %v1798 = vadd.f32 %v1778, %v1794
        %s1799 = sld [smem:[#allocation12 + $0x4]]
        %s1800 = sld [smem:[#allocation12 + $0x35]]
        %v1801 = vstv %s1799
        %v1802 = vmul.f32 %v1801, %v731
        %v1803 = vmul.f32 %v1801, %v732
        %1806 = vrot.lane.b32.xlu0 %v1802, 124
        %v1807 = vpop.permute.xlu0 %1806
        %1808 = vrot.lane.b32.xlu0 %v1803, 124
        %v1809 = vpop.permute.xlu0 %1808
        %v1812 = vadd.f32 %v1797, %v1807
        %v1813 = vadd.f32 %v1798, %v1809
        %v1814 = vstv %s1800
        %v1815 = vmul.f32 %v1814, %v734
        %v1816 = vmul.f32 %v1814, %v735
        %1819 = vrot.lane.b32.xlu0 %v1815, 124
        %v1820 = vpop.permute.xlu0 %1819
        %1821 = vrot.lane.b32.xlu0 %v1816, 124
        %v1822 = vpop.permute.xlu0 %1821
        %v1825 = vadd.f32 %v1812, %v1820
        %v1826 = vadd.f32 %v1813, %v1822
        %s1827 = sld [smem:[#allocation12 + $0xb]]
        %s1828 = sld [smem:[#allocation12 + $0x3c]]
        %v1829 = vstv %s1827
        %v1830 = vmul.f32 %v1829, %v731
        %v1831 = vmul.f32 %v1829, %v732
        %v1832 = vmul.f32 %v1829, %v733
        %v1836 = vrot.slane %v1830, 1
        %v1837 = vrot.slane %v1831, 1
        %v1838 = vsel %vm758, %v1836, %v1837
        %v1839 = vrot.slane %v1832, 1
        %v1840 = vsel %vm758, %v1837, %v1839
        %1841 = vrot.lane.b32.xlu0 %v1838, 124
        %v1842 = vpop.permute.xlu0 %1841
        %1843 = vrot.lane.b32.xlu0 %v1840, 124
        %v1844 = vpop.permute.xlu0 %1843
        %v1847 = vadd.f32 %v1825, %v1842
        %v1848 = vadd.f32 %v1826, %v1844
        %v1849 = vstv %s1828
        %v1850 = vmul.f32 %v1849, %v734
        %v1851 = vmul.f32 %v1849, %v735
        %v1852 = vmul.f32 %v1849, %v736
        %v1856 = vrot.slane %v1850, 1
        %v1857 = vrot.slane %v1851, 1
        %v1858 = vsel %vm758, %v1856, %v1857
        %v1859 = vrot.slane %v1852, 1
        %v1860 = vsel %vm758, %v1857, %v1859
        %1861 = vrot.lane.b32.xlu0 %v1858, 124
        %v1862 = vpop.permute.xlu0 %1861
        %1863 = vrot.lane.b32.xlu0 %v1860, 124
        %v1864 = vpop.permute.xlu0 %1863
        %v1867 = vadd.f32 %v1847, %v1862
        %v1868 = vadd.f32 %v1848, %v1864
        %s1869 = sld [smem:[#allocation12 + $0x12]]
        %s1870 = sld [smem:[#allocation12 + $0x43]]
        %v1871 = vstv %s1869
        %v1872 = vmul.f32 %v1871, %v731
        %v1873 = vmul.f32 %v1871, %v732
        %v1874 = vmul.f32 %v1871, %v733
        %v1878 = vrot.slane %v1872, 2
        %v1879 = vrot.slane %v1873, 2
        %v1880 = vsel %vm793, %v1878, %v1879
        %v1881 = vrot.slane %v1874, 2
        %v1882 = vsel %vm793, %v1879, %v1881
        %1883 = vrot.lane.b32.xlu0 %v1880, 124
        %v1884 = vpop.permute.xlu0 %1883
        %1885 = vrot.lane.b32.xlu0 %v1882, 124
        %v1886 = vpop.permute.xlu0 %1885
        %v1889 = vadd.f32 %v1867, %v1884
        %v1890 = vadd.f32 %v1868, %v1886
        %v1891 = vstv %s1870
        %v1892 = vmul.f32 %v1891, %v734
        %v1893 = vmul.f32 %v1891, %v735
        %v1894 = vmul.f32 %v1891, %v736
        %v1898 = vrot.slane %v1892, 2
        %v1899 = vrot.slane %v1893, 2
        %v1900 = vsel %vm793, %v1898, %v1899
        %v1901 = vrot.slane %v1894, 2
        %v1902 = vsel %vm793, %v1899, %v1901
        %1903 = vrot.lane.b32.xlu0 %v1900, 124
        %v1904 = vpop.permute.xlu0 %1903
        %1905 = vrot.lane.b32.xlu0 %v1902, 124
        %v1906 = vpop.permute.xlu0 %1905
        %v1909 = vadd.f32 %v1889, %v1904
        %v1910 = vadd.f32 %v1890, %v1906
        %s1911 = sld [smem:[#allocation12 + $0x19]]
        %s1912 = sld [smem:[#allocation12 + $0x4a]]
        %v1913 = vstv %s1911
        %v1914 = vmul.f32 %v1913, %v731
        %v1915 = vmul.f32 %v1913, %v732
        %v1916 = vmul.f32 %v1913, %v733
        %v1920 = vrot.slane %v1914, 3
        %v1921 = vrot.slane %v1915, 3
        %v1922 = vsel %vm828, %v1920, %v1921
        %v1923 = vrot.slane %v1916, 3
        %v1924 = vsel %vm828, %v1921, %v1923
        %1925 = vrot.lane.b32.xlu0 %v1922, 124
        %v1926 = vpop.permute.xlu0 %1925
        %1927 = vrot.lane.b32.xlu0 %v1924, 124
        %v1928 = vpop.permute.xlu0 %1927
        %v1931 = vadd.f32 %v1909, %v1926
        %v1932 = vadd.f32 %v1910, %v1928
        %v1933 = vstv %s1912
        %v1934 = vmul.f32 %v1933, %v734
        %v1935 = vmul.f32 %v1933, %v735
        %v1936 = vmul.f32 %v1933, %v736
        %v1940 = vrot.slane %v1934, 3
        %v1941 = vrot.slane %v1935, 3
        %v1942 = vsel %vm828, %v1940, %v1941
        %v1943 = vrot.slane %v1936, 3
        %v1944 = vsel %vm828, %v1941, %v1943
        %1945 = vrot.lane.b32.xlu0 %v1942, 124
        %v1946 = vpop.permute.xlu0 %1945
        %1947 = vrot.lane.b32.xlu0 %v1944, 124
        %v1948 = vpop.permute.xlu0 %1947
        %v1951 = vadd.f32 %v1931, %v1946
        %v1952 = vadd.f32 %v1932, %v1948
        %s1953 = sld [smem:[#allocation12 + $0x20]]
        %s1954 = sld [smem:[#allocation12 + $0x51]]
        %v1955 = vstv %s1953
        %v1956 = vmul.f32 %v1955, %v731
        %v1957 = vmul.f32 %v1955, %v732
        %v1958 = vmul.f32 %v1955, %v733
        %v1962 = vrot.slane %v1956, 4
        %v1963 = vrot.slane %v1957, 4
        %v1964 = vsel %vm863, %v1962, %v1963
        %v1965 = vrot.slane %v1958, 4
        %v1966 = vsel %vm863, %v1963, %v1965
        %1967 = vrot.lane.b32.xlu0 %v1964, 124
        %v1968 = vpop.permute.xlu0 %1967
        %1969 = vrot.lane.b32.xlu0 %v1966, 124
        %v1970 = vpop.permute.xlu0 %1969
        %v1973 = vadd.f32 %v1951, %v1968
        %v1974 = vadd.f32 %v1952, %v1970
        %v1975 = vstv %s1954
        %v1976 = vmul.f32 %v1975, %v734
        %v1977 = vmul.f32 %v1975, %v735
        %v1978 = vmul.f32 %v1975, %v736
        %v1982 = vrot.slane %v1976, 4
        %v1983 = vrot.slane %v1977, 4
        %v1984 = vsel %vm863, %v1982, %v1983
        %v1985 = vrot.slane %v1978, 4
        %v1986 = vsel %vm863, %v1983, %v1985
        %1987 = vrot.lane.b32.xlu0 %v1984, 124
        %v1988 = vpop.permute.xlu0 %1987
        %1989 = vrot.lane.b32.xlu0 %v1986, 124
        %v1990 = vpop.permute.xlu0 %1989
        %v1993 = vadd.f32 %v1973, %v1988
        %v1994 = vadd.f32 %v1974, %v1990
        %s1995 = sld [smem:[#allocation12 + $0x27]]
        %s1996 = sld [smem:[#allocation12 + $0x58]]
        %v1997 = vstv %s1995
        %v1998 = vmul.f32 %v1997, %v731
        %v1999 = vmul.f32 %v1997, %v732
        %v2000 = vmul.f32 %v1997, %v733
        %v2004 = vrot.slane %v1998, 5
        %v2005 = vrot.slane %v1999, 5
        %v2006 = vsel %vm898, %v2004, %v2005
        %v2007 = vrot.slane %v2000, 5
        %v2008 = vsel %vm898, %v2005, %v2007
        %2009 = vrot.lane.b32.xlu0 %v2006, 124
        %v2010 = vpop.permute.xlu0 %2009
        %2011 = vrot.lane.b32.xlu0 %v2008, 124
        %v2012 = vpop.permute.xlu0 %2011
        %v2015 = vadd.f32 %v1993, %v2010
        %v2016 = vadd.f32 %v1994, %v2012
        %v2017 = vstv %s1996
        %v2018 = vmul.f32 %v2017, %v734
        %v2019 = vmul.f32 %v2017, %v735
        %v2020 = vmul.f32 %v2017, %v736
        %v2024 = vrot.slane %v2018, 5
        %v2025 = vrot.slane %v2019, 5
        %v2026 = vsel %vm898, %v2024, %v2025
        %v2027 = vrot.slane %v2020, 5
        %v2028 = vsel %vm898, %v2025, %v2027
        %2029 = vrot.lane.b32.xlu0 %v2026, 124
        %v2030 = vpop.permute.xlu0 %2029
        %2031 = vrot.lane.b32.xlu0 %v2028, 124
        %v2032 = vpop.permute.xlu0 %2031
        %v2035 = vadd.f32 %v2015, %v2030
        %v2036 = vadd.f32 %v2016, %v2032
        %s2037 = sld [smem:[#allocation12 + $0x2e]]
        %s2038 = sld [smem:[#allocation12 + $0x5f]]
        %v2039 = vstv %s2037
        %v2040 = vmul.f32 %v2039, %v731
        %v2041 = vmul.f32 %v2039, %v732
        %v2042 = vmul.f32 %v2039, %v733
        %v2046 = vrot.slane %v2040, 6
        %v2047 = vrot.slane %v2041, 6
        %v2048 = vsel %vm933, %v2046, %v2047
        %v2049 = vrot.slane %v2042, 6
        %v2050 = vsel %vm933, %v2047, %v2049
        %2051 = vrot.lane.b32.xlu0 %v2048, 124
        %v2052 = vpop.permute.xlu0 %2051
        %2053 = vrot.lane.b32.xlu0 %v2050, 124
        %v2054 = vpop.permute.xlu0 %2053
        %v2057 = vadd.f32 %v2035, %v2052
        %v2058 = vadd.f32 %v2036, %v2054
        %v2059 = vstv %s2038
        %v2060 = vmul.f32 %v2059, %v734
        %v2061 = vmul.f32 %v2059, %v735
        %v2062 = vmul.f32 %v2059, %v736
        %v2066 = vrot.slane %v2060, 6
        %v2067 = vrot.slane %v2061, 6
        %v2068 = vsel %vm933, %v2066, %v2067
        %v2069 = vrot.slane %v2062, 6
        %v2070 = vsel %vm933, %v2067, %v2069
        %2071 = vrot.lane.b32.xlu0 %v2068, 124
        %v2072 = vpop.permute.xlu0 %2071
        %2073 = vrot.lane.b32.xlu0 %v2070, 124
        %v2074 = vpop.permute.xlu0 %2073
        %v2077 = vadd.f32 %v2057, %v2072
        %v2078 = vadd.f32 %v2058, %v2074
        %s2079 = sld [smem:[#allocation12 + $0x5]]
        %s2080 = sld [smem:[#allocation12 + $0x36]]
        %v2081 = vstv %s2079
        %v2082 = vmul.f32 %v2081, %v731
        %v2083 = vmul.f32 %v2081, %v732
        %2086 = vrot.lane.b32.xlu0 %v2082, 123
        %v2087 = vpop.permute.xlu0 %2086
        %2088 = vrot.lane.b32.xlu0 %v2083, 123
        %v2089 = vpop.permute.xlu0 %2088
        %v2092 = vadd.f32 %v2077, %v2087
        %v2093 = vadd.f32 %v2078, %v2089
        %v2094 = vstv %s2080
        %v2095 = vmul.f32 %v2094, %v734
        %v2096 = vmul.f32 %v2094, %v735
        %2099 = vrot.lane.b32.xlu0 %v2095, 123
        %v2100 = vpop.permute.xlu0 %2099
        %2101 = vrot.lane.b32.xlu0 %v2096, 123
        %v2102 = vpop.permute.xlu0 %2101
        %v2105 = vadd.f32 %v2092, %v2100
        %v2106 = vadd.f32 %v2093, %v2102
        %s2107 = sld [smem:[#allocation12 + $0xc]]
        %s2108 = sld [smem:[#allocation12 + $0x3d]]
        %v2109 = vstv %s2107
        %v2110 = vmul.f32 %v2109, %v731
        %v2111 = vmul.f32 %v2109, %v732
        %v2112 = vmul.f32 %v2109, %v733
        %v2116 = vrot.slane %v2110, 1
        %v2117 = vrot.slane %v2111, 1
        %v2118 = vsel %vm758, %v2116, %v2117
        %v2119 = vrot.slane %v2112, 1
        %v2120 = vsel %vm758, %v2117, %v2119
        %2121 = vrot.lane.b32.xlu0 %v2118, 123
        %v2122 = vpop.permute.xlu0 %2121
        %2123 = vrot.lane.b32.xlu0 %v2120, 123
        %v2124 = vpop.permute.xlu0 %2123
        %v2127 = vadd.f32 %v2105, %v2122
        %v2128 = vadd.f32 %v2106, %v2124
        %v2129 = vstv %s2108
        %v2130 = vmul.f32 %v2129, %v734
        %v2131 = vmul.f32 %v2129, %v735
        %v2132 = vmul.f32 %v2129, %v736
        %v2136 = vrot.slane %v2130, 1
        %v2137 = vrot.slane %v2131, 1
        %v2138 = vsel %vm758, %v2136, %v2137
        %v2139 = vrot.slane %v2132, 1
        %v2140 = vsel %vm758, %v2137, %v2139
        %2141 = vrot.lane.b32.xlu0 %v2138, 123
        %v2142 = vpop.permute.xlu0 %2141
        %2143 = vrot.lane.b32.xlu0 %v2140, 123
        %v2144 = vpop.permute.xlu0 %2143
        %v2147 = vadd.f32 %v2127, %v2142
        %v2148 = vadd.f32 %v2128, %v2144
        %s2149 = sld [smem:[#allocation12 + $0x13]]
        %s2150 = sld [smem:[#allocation12 + $0x44]]
        %v2151 = vstv %s2149
        %v2152 = vmul.f32 %v2151, %v731
        %v2153 = vmul.f32 %v2151, %v732
        %v2154 = vmul.f32 %v2151, %v733
        %v2158 = vrot.slane %v2152, 2
        %v2159 = vrot.slane %v2153, 2
        %v2160 = vsel %vm793, %v2158, %v2159
        %v2161 = vrot.slane %v2154, 2
        %v2162 = vsel %vm793, %v2159, %v2161
        %2163 = vrot.lane.b32.xlu0 %v2160, 123
        %v2164 = vpop.permute.xlu0 %2163
        %2165 = vrot.lane.b32.xlu0 %v2162, 123
        %v2166 = vpop.permute.xlu0 %2165
        %v2169 = vadd.f32 %v2147, %v2164
        %v2170 = vadd.f32 %v2148, %v2166
        %v2171 = vstv %s2150
        %v2172 = vmul.f32 %v2171, %v734
        %v2173 = vmul.f32 %v2171, %v735
        %v2174 = vmul.f32 %v2171, %v736
        %v2178 = vrot.slane %v2172, 2
        %v2179 = vrot.slane %v2173, 2
        %v2180 = vsel %vm793, %v2178, %v2179
        %v2181 = vrot.slane %v2174, 2
        %v2182 = vsel %vm793, %v2179, %v2181
        %2183 = vrot.lane.b32.xlu0 %v2180, 123
        %v2184 = vpop.permute.xlu0 %2183
        %2185 = vrot.lane.b32.xlu0 %v2182, 123
        %v2186 = vpop.permute.xlu0 %2185
        %v2189 = vadd.f32 %v2169, %v2184
        %v2190 = vadd.f32 %v2170, %v2186
        %s2191 = sld [smem:[#allocation12 + $0x1a]]
        %s2192 = sld [smem:[#allocation12 + $0x4b]]
        %v2193 = vstv %s2191
        %v2194 = vmul.f32 %v2193, %v731
        %v2195 = vmul.f32 %v2193, %v732
        %v2196 = vmul.f32 %v2193, %v733
        %v2200 = vrot.slane %v2194, 3
        %v2201 = vrot.slane %v2195, 3
        %v2202 = vsel %vm828, %v2200, %v2201
        %v2203 = vrot.slane %v2196, 3
        %v2204 = vsel %vm828, %v2201, %v2203
        %2205 = vrot.lane.b32.xlu0 %v2202, 123
        %v2206 = vpop.permute.xlu0 %2205
        %2207 = vrot.lane.b32.xlu0 %v2204, 123
        %v2208 = vpop.permute.xlu0 %2207
        %v2211 = vadd.f32 %v2189, %v2206
        %v2212 = vadd.f32 %v2190, %v2208
        %v2213 = vstv %s2192
        %v2214 = vmul.f32 %v2213, %v734
        %v2215 = vmul.f32 %v2213, %v735
        %v2216 = vmul.f32 %v2213, %v736
        %v2220 = vrot.slane %v2214, 3
        %v2221 = vrot.slane %v2215, 3
        %v2222 = vsel %vm828, %v2220, %v2221
        %v2223 = vrot.slane %v2216, 3
        %v2224 = vsel %vm828, %v2221, %v2223
        %2225 = vrot.lane.b32.xlu0 %v2222, 123
        %v2226 = vpop.permute.xlu0 %2225
        %2227 = vrot.lane.b32.xlu0 %v2224, 123
        %v2228 = vpop.permute.xlu0 %2227
        %v2231 = vadd.f32 %v2211, %v2226
        %v2232 = vadd.f32 %v2212, %v2228
        %s2233 = sld [smem:[#allocation12 + $0x21]]
        %s2234 = sld [smem:[#allocation12 + $0x52]]
        %v2235 = vstv %s2233
        %v2236 = vmul.f32 %v2235, %v731
        %v2237 = vmul.f32 %v2235, %v732
        %v2238 = vmul.f32 %v2235, %v733
        %v2242 = vrot.slane %v2236, 4
        %v2243 = vrot.slane %v2237, 4
        %v2244 = vsel %vm863, %v2242, %v2243
        %v2245 = vrot.slane %v2238, 4
        %v2246 = vsel %vm863, %v2243, %v2245
        %2247 = vrot.lane.b32.xlu0 %v2244, 123
        %v2248 = vpop.permute.xlu0 %2247
        %2249 = vrot.lane.b32.xlu0 %v2246, 123
        %v2250 = vpop.permute.xlu0 %2249
        %v2253 = vadd.f32 %v2231, %v2248
        %v2254 = vadd.f32 %v2232, %v2250
        %v2255 = vstv %s2234
        %v2256 = vmul.f32 %v2255, %v734
        %v2257 = vmul.f32 %v2255, %v735
        %v2258 = vmul.f32 %v2255, %v736
        %v2262 = vrot.slane %v2256, 4
        %v2263 = vrot.slane %v2257, 4
        %v2264 = vsel %vm863, %v2262, %v2263
        %v2265 = vrot.slane %v2258, 4
        %v2266 = vsel %vm863, %v2263, %v2265
        %2267 = vrot.lane.b32.xlu0 %v2264, 123
        %v2268 = vpop.permute.xlu0 %2267
        %2269 = vrot.lane.b32.xlu0 %v2266, 123
        %v2270 = vpop.permute.xlu0 %2269
        %v2273 = vadd.f32 %v2253, %v2268
        %v2274 = vadd.f32 %v2254, %v2270
        %s2275 = sld [smem:[#allocation12 + $0x28]]
        %s2276 = sld [smem:[#allocation12 + $0x59]]
        %v2277 = vstv %s2275
        %v2278 = vmul.f32 %v2277, %v731
        %v2279 = vmul.f32 %v2277, %v732
        %v2280 = vmul.f32 %v2277, %v733
        %v2284 = vrot.slane %v2278, 5
        %v2285 = vrot.slane %v2279, 5
        %v2286 = vsel %vm898, %v2284, %v2285
        %v2287 = vrot.slane %v2280, 5
        %v2288 = vsel %vm898, %v2285, %v2287
        %2289 = vrot.lane.b32.xlu0 %v2286, 123
        %v2290 = vpop.permute.xlu0 %2289
        %2291 = vrot.lane.b32.xlu0 %v2288, 123
        %v2292 = vpop.permute.xlu0 %2291
        %v2295 = vadd.f32 %v2273, %v2290
        %v2296 = vadd.f32 %v2274, %v2292
        %v2297 = vstv %s2276
        %v2298 = vmul.f32 %v2297, %v734
        %v2299 = vmul.f32 %v2297, %v735
        %v2300 = vmul.f32 %v2297, %v736
        %v2304 = vrot.slane %v2298, 5
        %v2305 = vrot.slane %v2299, 5
        %v2306 = vsel %vm898, %v2304, %v2305
        %v2307 = vrot.slane %v2300, 5
        %v2308 = vsel %vm898, %v2305, %v2307
        %2309 = vrot.lane.b32.xlu0 %v2306, 123
        %v2310 = vpop.permute.xlu0 %2309
        %2311 = vrot.lane.b32.xlu0 %v2308, 123
        %v2312 = vpop.permute.xlu0 %2311
        %v2315 = vadd.f32 %v2295, %v2310
        %v2316 = vadd.f32 %v2296, %v2312
        %s2317 = sld [smem:[#allocation12 + $0x2f]]
        %s2318 = sld [smem:[#allocation12 + $0x60]]
        %v2319 = vstv %s2317
        %v2320 = vmul.f32 %v2319, %v731
        %v2321 = vmul.f32 %v2319, %v732
        %v2322 = vmul.f32 %v2319, %v733
        %v2326 = vrot.slane %v2320, 6
        %v2327 = vrot.slane %v2321, 6
        %v2328 = vsel %vm933, %v2326, %v2327
        %v2329 = vrot.slane %v2322, 6
        %v2330 = vsel %vm933, %v2327, %v2329
        %2331 = vrot.lane.b32.xlu0 %v2328, 123
        %v2332 = vpop.permute.xlu0 %2331
        %2333 = vrot.lane.b32.xlu0 %v2330, 123
        %v2334 = vpop.permute.xlu0 %2333
        %v2337 = vadd.f32 %v2315, %v2332
        %v2338 = vadd.f32 %v2316, %v2334
        %v2339 = vstv %s2318
        %v2340 = vmul.f32 %v2339, %v734
        %v2341 = vmul.f32 %v2339, %v735
        %v2342 = vmul.f32 %v2339, %v736
        %v2346 = vrot.slane %v2340, 6
        %v2347 = vrot.slane %v2341, 6
        %v2348 = vsel %vm933, %v2346, %v2347
        %v2349 = vrot.slane %v2342, 6
        %v2350 = vsel %vm933, %v2347, %v2349
        %2351 = vrot.lane.b32.xlu0 %v2348, 123
        %v2352 = vpop.permute.xlu0 %2351
        %2353 = vrot.lane.b32.xlu0 %v2350, 123
        %v2354 = vpop.permute.xlu0 %2353
        %v2357 = vadd.f32 %v2337, %v2352
        %v2358 = vadd.f32 %v2338, %v2354
        %s2359 = sld [smem:[#allocation12 + $0x6]]
        %s2360 = sld [smem:[#allocation12 + $0x37]]
        %v2361 = vstv %s2359
        %v2362 = vmul.f32 %v2361, %v731
        %v2363 = vmul.f32 %v2361, %v732
        %2366 = vrot.lane.b32.xlu0 %v2362, 122
        %v2367 = vpop.permute.xlu0 %2366
        %2368 = vrot.lane.b32.xlu0 %v2363, 122
        %v2369 = vpop.permute.xlu0 %2368
        %v2372 = vadd.f32 %v2357, %v2367
        %v2373 = vadd.f32 %v2358, %v2369
        %v2374 = vstv %s2360
        %v2375 = vmul.f32 %v2374, %v734
        %v2376 = vmul.f32 %v2374, %v735
        %2379 = vrot.lane.b32.xlu0 %v2375, 122
        %v2380 = vpop.permute.xlu0 %2379
        %2381 = vrot.lane.b32.xlu0 %v2376, 122
        %v2382 = vpop.permute.xlu0 %2381
        %v2385 = vadd.f32 %v2372, %v2380
        %v2386 = vadd.f32 %v2373, %v2382
        %s2387 = sld [smem:[#allocation12 + $0xd]]
        %s2388 = sld [smem:[#allocation12 + $0x3e]]
        %v2389 = vstv %s2387
        %v2390 = vmul.f32 %v2389, %v731
        %v2391 = vmul.f32 %v2389, %v732
        %v2392 = vmul.f32 %v2389, %v733
        %v2396 = vrot.slane %v2390, 1
        %v2397 = vrot.slane %v2391, 1
        %v2398 = vsel %vm758, %v2396, %v2397
        %v2399 = vrot.slane %v2392, 1
        %v2400 = vsel %vm758, %v2397, %v2399
        %2401 = vrot.lane.b32.xlu0 %v2398, 122
        %v2402 = vpop.permute.xlu0 %2401
        %2403 = vrot.lane.b32.xlu0 %v2400, 122
        %v2404 = vpop.permute.xlu0 %2403
        %v2407 = vadd.f32 %v2385, %v2402
        %v2408 = vadd.f32 %v2386, %v2404
        %v2409 = vstv %s2388
        %v2410 = vmul.f32 %v2409, %v734
        %v2411 = vmul.f32 %v2409, %v735
        %v2412 = vmul.f32 %v2409, %v736
        %v2416 = vrot.slane %v2410, 1
        %v2417 = vrot.slane %v2411, 1
        %v2418 = vsel %vm758, %v2416, %v2417
        %v2419 = vrot.slane %v2412, 1
        %v2420 = vsel %vm758, %v2417, %v2419
        %2421 = vrot.lane.b32.xlu0 %v2418, 122
        %v2422 = vpop.permute.xlu0 %2421
        %2423 = vrot.lane.b32.xlu0 %v2420, 122
        %v2424 = vpop.permute.xlu0 %2423
        %v2427 = vadd.f32 %v2407, %v2422
        %v2428 = vadd.f32 %v2408, %v2424
        %s2429 = sld [smem:[#allocation12 + $0x14]]
        %s2430 = sld [smem:[#allocation12 + $0x45]]
        %v2431 = vstv %s2429
        %v2432 = vmul.f32 %v2431, %v731
        %v2433 = vmul.f32 %v2431, %v732
        %v2434 = vmul.f32 %v2431, %v733
        %v2438 = vrot.slane %v2432, 2
        %v2439 = vrot.slane %v2433, 2
        %v2440 = vsel %vm793, %v2438, %v2439
        %v2441 = vrot.slane %v2434, 2
        %v2442 = vsel %vm793, %v2439, %v2441
        %2443 = vrot.lane.b32.xlu0 %v2440, 122
        %v2444 = vpop.permute.xlu0 %2443
        %2445 = vrot.lane.b32.xlu0 %v2442, 122
        %v2446 = vpop.permute.xlu0 %2445
        %v2449 = vadd.f32 %v2427, %v2444
        %v2450 = vadd.f32 %v2428, %v2446
        %v2451 = vstv %s2430
        %v2452 = vmul.f32 %v2451, %v734
        %v2453 = vmul.f32 %v2451, %v735
        %v2454 = vmul.f32 %v2451, %v736
        %v2458 = vrot.slane %v2452, 2
        %v2459 = vrot.slane %v2453, 2
        %v2460 = vsel %vm793, %v2458, %v2459
        %v2461 = vrot.slane %v2454, 2
        %v2462 = vsel %vm793, %v2459, %v2461
        %2463 = vrot.lane.b32.xlu0 %v2460, 122
        %v2464 = vpop.permute.xlu0 %2463
        %2465 = vrot.lane.b32.xlu0 %v2462, 122
        %v2466 = vpop.permute.xlu0 %2465
        %v2469 = vadd.f32 %v2449, %v2464
        %v2470 = vadd.f32 %v2450, %v2466
        %s2471 = sld [smem:[#allocation12 + $0x1b]]
        %s2472 = sld [smem:[#allocation12 + $0x4c]]
        %v2473 = vstv %s2471
        %v2474 = vmul.f32 %v2473, %v731
        %v2475 = vmul.f32 %v2473, %v732
        %v2476 = vmul.f32 %v2473, %v733
        %v2480 = vrot.slane %v2474, 3
        %v2481 = vrot.slane %v2475, 3
        %v2482 = vsel %vm828, %v2480, %v2481
        %v2483 = vrot.slane %v2476, 3
        %v2484 = vsel %vm828, %v2481, %v2483
        %2485 = vrot.lane.b32.xlu0 %v2482, 122
        %v2486 = vpop.permute.xlu0 %2485
        %2487 = vrot.lane.b32.xlu0 %v2484, 122
        %v2488 = vpop.permute.xlu0 %2487
        %v2491 = vadd.f32 %v2469, %v2486
        %v2492 = vadd.f32 %v2470, %v2488
        %v2493 = vstv %s2472
        %v2494 = vmul.f32 %v2493, %v734
        %v2495 = vmul.f32 %v2493, %v735
        %v2496 = vmul.f32 %v2493, %v736
        %v2500 = vrot.slane %v2494, 3
        %v2501 = vrot.slane %v2495, 3
        %v2502 = vsel %vm828, %v2500, %v2501
        %v2503 = vrot.slane %v2496, 3
        %v2504 = vsel %vm828, %v2501, %v2503
        %2505 = vrot.lane.b32.xlu0 %v2502, 122
        %v2506 = vpop.permute.xlu0 %2505
        %2507 = vrot.lane.b32.xlu0 %v2504, 122
        %v2508 = vpop.permute.xlu0 %2507
        %v2511 = vadd.f32 %v2491, %v2506
        %v2512 = vadd.f32 %v2492, %v2508
        %s2513 = sld [smem:[#allocation12 + $0x22]]
        %s2514 = sld [smem:[#allocation12 + $0x53]]
        %v2515 = vstv %s2513
        %v2516 = vmul.f32 %v2515, %v731
        %v2517 = vmul.f32 %v2515, %v732
        %v2518 = vmul.f32 %v2515, %v733
        %v2522 = vrot.slane %v2516, 4
        %v2523 = vrot.slane %v2517, 4
        %v2524 = vsel %vm863, %v2522, %v2523
        %v2525 = vrot.slane %v2518, 4
        %v2526 = vsel %vm863, %v2523, %v2525
        %2527 = vrot.lane.b32.xlu0 %v2524, 122
        %v2528 = vpop.permute.xlu0 %2527
        %2529 = vrot.lane.b32.xlu0 %v2526, 122
        %v2530 = vpop.permute.xlu0 %2529
        %v2533 = vadd.f32 %v2511, %v2528
        %v2534 = vadd.f32 %v2512, %v2530
        %v2535 = vstv %s2514
        %v2536 = vmul.f32 %v2535, %v734
        %v2537 = vmul.f32 %v2535, %v735
        %v2538 = vmul.f32 %v2535, %v736
        %v2542 = vrot.slane %v2536, 4
        %v2543 = vrot.slane %v2537, 4
        %v2544 = vsel %vm863, %v2542, %v2543
        %v2545 = vrot.slane %v2538, 4
        %v2546 = vsel %vm863, %v2543, %v2545
        %2547 = vrot.lane.b32.xlu0 %v2544, 122
        %v2548 = vpop.permute.xlu0 %2547
        %2549 = vrot.lane.b32.xlu0 %v2546, 122
        %v2550 = vpop.permute.xlu0 %2549
        %v2553 = vadd.f32 %v2533, %v2548
        %v2554 = vadd.f32 %v2534, %v2550
        %s2555 = sld [smem:[#allocation12 + $0x29]]
        %s2556 = sld [smem:[#allocation12 + $0x5a]]
        %v2557 = vstv %s2555
        %v2558 = vmul.f32 %v2557, %v731
        %v2559 = vmul.f32 %v2557, %v732
        %v2560 = vmul.f32 %v2557, %v733
        %v2564 = vrot.slane %v2558, 5
        %v2565 = vrot.slane %v2559, 5
        %v2566 = vsel %vm898, %v2564, %v2565
        %v2567 = vrot.slane %v2560, 5
        %v2568 = vsel %vm898, %v2565, %v2567
        %2569 = vrot.lane.b32.xlu0 %v2566, 122
        %v2570 = vpop.permute.xlu0 %2569
        %2571 = vrot.lane.b32.xlu0 %v2568, 122
        %v2572 = vpop.permute.xlu0 %2571
        %v2575 = vadd.f32 %v2553, %v2570
        %v2576 = vadd.f32 %v2554, %v2572
        %v2577 = vstv %s2556
        %v2578 = vmul.f32 %v2577, %v734
        %v2579 = vmul.f32 %v2577, %v735
        %v2580 = vmul.f32 %v2577, %v736
        %v2584 = vrot.slane %v2578, 5
        %v2585 = vrot.slane %v2579, 5
        %v2586 = vsel %vm898, %v2584, %v2585
        %v2587 = vrot.slane %v2580, 5
        %v2588 = vsel %vm898, %v2585, %v2587
        %2589 = vrot.lane.b32.xlu0 %v2586, 122
        %v2590 = vpop.permute.xlu0 %2589
        %2591 = vrot.lane.b32.xlu0 %v2588, 122
        %v2592 = vpop.permute.xlu0 %2591
        %v2595 = vadd.f32 %v2575, %v2590
        %v2596 = vadd.f32 %v2576, %v2592
        %s2597 = sld [smem:[#allocation12 + $0x30]]
        %s2598 = sld [smem:[#allocation12 + $0x61]]
        %v2599 = vstv %s2597
        %v2600 = vmul.f32 %v2599, %v731
        %v2601 = vmul.f32 %v2599, %v732
        %v2602 = vmul.f32 %v2599, %v733
        %v2606 = vrot.slane %v2600, 6
        %v2607 = vrot.slane %v2601, 6
        %v2608 = vsel %vm933, %v2606, %v2607
        %v2609 = vrot.slane %v2602, 6
        %v2610 = vsel %vm933, %v2607, %v2609
        %2611 = vrot.lane.b32.xlu0 %v2608, 122
        %v2612 = vpop.permute.xlu0 %2611
        %2613 = vrot.lane.b32.xlu0 %v2610, 122
        %v2614 = vpop.permute.xlu0 %2613
        %v2617 = vadd.f32 %v2595, %v2612
        %v2618 = vadd.f32 %v2596, %v2614
        %v2619 = vstv %s2598
        %v2620 = vmul.f32 %v2619, %v734
        %v2621 = vmul.f32 %v2619, %v735
        %v2622 = vmul.f32 %v2619, %v736
        %v2626 = vrot.slane %v2620, 6
        %v2627 = vrot.slane %v2621, 6
        %v2628 = vsel %vm933, %v2626, %v2627
        %v2629 = vrot.slane %v2622, 6
        %v2630 = vsel %vm933, %v2627, %v2629
        %2631 = vrot.lane.b32.xlu0 %v2628, 122
        %v2632 = vpop.permute.xlu0 %2631
        %2633 = vrot.lane.b32.xlu0 %v2630, 122
        %v2634 = vpop.permute.xlu0 %2633
        %v2637 = vadd.f32 %v2617, %v2632
        %v2638 = vadd.f32 %v2618, %v2634
        %v2639 = vmax.f32 %v2637, 0.0
        %v2640 = vmax.f32 %v2638, 0.0
        %v2641 = vxor.u32 %v2639, 2147483648
        %v2642 = vxor.u32 %v2640, 2147483648
        %v2643 = vmul.f32 %v2641, 1.442695
        %v2644 = vpow.pop %v2643
        %v2645 = vmul.f32 %v2642, 1.442695
        %v2646 = vpow.pop %v2645
        %v2647 = vadd.f32 %v2644, 1.0
        %v2648 = vadd.f32 %v2646, 1.0
        %v2649 = vrcp.pop %v2647
        %v2650 = vmul.f32 1.0, %v2649
        %v2651 = vrcp.pop %v2648
        %v2652 = vmul.f32 1.0, %v2651
        %vm2653 = vcmask 75776
        %2654 = vst.msk [vmem:[#allocation4] sm:$0x7] %vm2653, 0.0
        %2655 = vst.msk [vmem:[#allocation4 + $0x13] sm:$0x7] %vm2653, 0.0
        %2656 = vst.msk [vmem:[#allocation4] sm:$0xff] %vm692, 0.0
        %2657 = vst.msk [vmem:[#allocation4 + $0x8] sm:$0xff] %vm692, 0.0
        %2658 = vst.msk [vmem:[#allocation4 + $0x10] sm:$0x3f] %vm695, 0.0
        %vm2659 = vcmask 80952
        %2660 = vst.msk [vmem:[#allocation4] sm:$0xff] %vm2659, 0.0
        %2661 = vst.msk [vmem:[#allocation4 + $0x8] sm:$0xff] %vm2659, 0.0
        %vm2662 = vcmask 78904
        %2663 = vst.msk [vmem:[#allocation4 + $0x10] sm:$0x3f] %vm2662, 0.0
        %2666 = vrot.lane.b32.xlu0 %v469, 3
        %v2667 = vpop.permute.xlu0 %2666
        %2668 = vrot.lane.b32.xlu0 %v470, 3
        %v2669 = vpop.permute.xlu0 %2668
        %vm2672 = vcmask 56344
        %2673 = vst.msk [vmem:[#allocation4 + $0x3] sm:$0xff] %vm2672, %v2667
        %2674 = vst.msk [vmem:[#allocation4 + $0xb] sm:$0xff] %vm2672, %v2669
        %2675 = vst.msk [vmem:[#allocation5] sm:$0x7] %vm2653, 0.0
        %2676 = vst.msk [vmem:[#allocation5 + $0x13] sm:$0x7] %vm2653, 0.0
        %2677 = vst.msk [vmem:[#allocation5] sm:$0xff] %vm692, 0.0
        %2678 = vst.msk [vmem:[#allocation5 + $0x8] sm:$0xff] %vm692, 0.0
        %2679 = vst.msk [vmem:[#allocation5 + $0x10] sm:$0x3f] %vm695, 0.0
        %2680 = vst.msk [vmem:[#allocation5] sm:$0xff] %vm2659, 0.0
        %2681 = vst.msk [vmem:[#allocation5 + $0x8] sm:$0xff] %vm2659, 0.0
        %2682 = vst.msk [vmem:[#allocation5 + $0x10] sm:$0x3f] %vm2662, 0.0
        %2685 = vrot.lane.b32.xlu0 %v509, 3
        %v2686 = vpop.permute.xlu0 %2685
        %2687 = vrot.lane.b32.xlu0 %v510, 3
        %v2688 = vpop.permute.xlu0 %2687
        %2691 = vst.msk [vmem:[#allocation5 + $0x3] sm:$0xff] %vm2672, %v2686
        %2692 = vst.msk [vmem:[#allocation5 + $0xb] sm:$0xff] %vm2672, %v2688
        %v2693 = vld [vmem:[#allocation4] sm:$0xff]
        %v2694 = vld [vmem:[#allocation4 + $0x8] sm:$0xff]
        %v2695 = vld [vmem:[#allocation4 + $0x10] sm:$0x3f]
        %v2696 = vld [vmem:[#allocation5] sm:$0xff]
        %v2697 = vld [vmem:[#allocation5 + $0x8] sm:$0xff]
        %v2698 = vld [vmem:[#allocation5 + $0x10] sm:$0x3f]
        %s2699 = sld [smem:[#allocation13]]
        %s2700 = sld [smem:[#allocation13 + $0x31]]
        %v2701 = vstv %s2699
        %v2702 = vmul.f32 %v2701, %v2693
        %v2703 = vmul.f32 %v2701, %v2694
        %v2704 = vadd.f32 %v2702, 0.0
        %v2705 = vadd.f32 %v2703, 0.0
        %v2706 = vstv %s2700
        %v2707 = vmul.f32 %v2706, %v2696
        %v2708 = vmul.f32 %v2706, %v2697
        %v2709 = vadd.f32 %v2704, %v2707
        %v2710 = vadd.f32 %v2705, %v2708
        %s2711 = sld [smem:[#allocation13 + $0x7]]
        %s2712 = sld [smem:[#allocation13 + $0x38]]
        %v2713 = vstv %s2711
        %v2714 = vmul.f32 %v2713, %v2693
        %v2715 = vmul.f32 %v2713, %v2694
        %v2716 = vmul.f32 %v2713, %v2695
        %v2720 = vrot.slane %v2714, 1
        %v2721 = vrot.slane %v2715, 1
        %v2722 = vsel %vm758, %v2720, %v2721
        %v2723 = vrot.slane %v2716, 1
        %v2724 = vsel %vm758, %v2721, %v2723
        %v2727 = vadd.f32 %v2709, %v2722
        %v2728 = vadd.f32 %v2710, %v2724
        %v2729 = vstv %s2712
        %v2730 = vmul.f32 %v2729, %v2696
        %v2731 = vmul.f32 %v2729, %v2697
        %v2732 = vmul.f32 %v2729, %v2698
        %v2736 = vrot.slane %v2730, 1
        %v2737 = vrot.slane %v2731, 1
        %v2738 = vsel %vm758, %v2736, %v2737
        %v2739 = vrot.slane %v2732, 1
        %v2740 = vsel %vm758, %v2737, %v2739
        %v2743 = vadd.f32 %v2727, %v2738
        %v2744 = vadd.f32 %v2728, %v2740
        %s2745 = sld [smem:[#allocation13 + $0xe]]
        %s2746 = sld [smem:[#allocation13 + $0x3f]]
        %v2747 = vstv %s2745
        %v2748 = vmul.f32 %v2747, %v2693
        %v2749 = vmul.f32 %v2747, %v2694
        %v2750 = vmul.f32 %v2747, %v2695
        %v2754 = vrot.slane %v2748, 2
        %v2755 = vrot.slane %v2749, 2
        %v2756 = vsel %vm793, %v2754, %v2755
        %v2757 = vrot.slane %v2750, 2
        %v2758 = vsel %vm793, %v2755, %v2757
        %v2761 = vadd.f32 %v2743, %v2756
        %v2762 = vadd.f32 %v2744, %v2758
        %v2763 = vstv %s2746
        %v2764 = vmul.f32 %v2763, %v2696
        %v2765 = vmul.f32 %v2763, %v2697
        %v2766 = vmul.f32 %v2763, %v2698
        %v2770 = vrot.slane %v2764, 2
        %v2771 = vrot.slane %v2765, 2
        %v2772 = vsel %vm793, %v2770, %v2771
        %v2773 = vrot.slane %v2766, 2
        %v2774 = vsel %vm793, %v2771, %v2773
        %v2777 = vadd.f32 %v2761, %v2772
        %v2778 = vadd.f32 %v2762, %v2774
        %s2779 = sld [smem:[#allocation13 + $0x15]]
        %s2780 = sld [smem:[#allocation13 + $0x46]]
        %v2781 = vstv %s2779
        %v2782 = vmul.f32 %v2781, %v2693
        %v2783 = vmul.f32 %v2781, %v2694
        %v2784 = vmul.f32 %v2781, %v2695
        %v2788 = vrot.slane %v2782, 3
        %v2789 = vrot.slane %v2783, 3
        %v2790 = vsel %vm828, %v2788, %v2789
        %v2791 = vrot.slane %v2784, 3
        %v2792 = vsel %vm828, %v2789, %v2791
        %v2795 = vadd.f32 %v2777, %v2790
        %v2796 = vadd.f32 %v2778, %v2792
        %v2797 = vstv %s2780
        %v2798 = vmul.f32 %v2797, %v2696
        %v2799 = vmul.f32 %v2797, %v2697
        %v2800 = vmul.f32 %v2797, %v2698
        %v2804 = vrot.slane %v2798, 3
        %v2805 = vrot.slane %v2799, 3
        %v2806 = vsel %vm828, %v2804, %v2805
        %v2807 = vrot.slane %v2800, 3
        %v2808 = vsel %vm828, %v2805, %v2807
        %v2811 = vadd.f32 %v2795, %v2806
        %v2812 = vadd.f32 %v2796, %v2808
        %s2813 = sld [smem:[#allocation13 + $0x1c]]
        %s2814 = sld [smem:[#allocation13 + $0x4d]]
        %v2815 = vstv %s2813
        %v2816 = vmul.f32 %v2815, %v2693
        %v2817 = vmul.f32 %v2815, %v2694
        %v2818 = vmul.f32 %v2815, %v2695
        %v2822 = vrot.slane %v2816, 4
        %v2823 = vrot.slane %v2817, 4
        %v2824 = vsel %vm863, %v2822, %v2823
        %v2825 = vrot.slane %v2818, 4
        %v2826 = vsel %vm863, %v2823, %v2825
        %v2829 = vadd.f32 %v2811, %v2824
        %v2830 = vadd.f32 %v2812, %v2826
        %v2831 = vstv %s2814
        %v2832 = vmul.f32 %v2831, %v2696
        %v2833 = vmul.f32 %v2831, %v2697
        %v2834 = vmul.f32 %v2831, %v2698
        %v2838 = vrot.slane %v2832, 4
        %v2839 = vrot.slane %v2833, 4
        %v2840 = vsel %vm863, %v2838, %v2839
        %v2841 = vrot.slane %v2834, 4
        %v2842 = vsel %vm863, %v2839, %v2841
        %v2845 = vadd.f32 %v2829, %v2840
        %v2846 = vadd.f32 %v2830, %v2842
        %s2847 = sld [smem:[#allocation13 + $0x23]]
        %s2848 = sld [smem:[#allocation13 + $0x54]]
        %v2849 = vstv %s2847
        %v2850 = vmul.f32 %v2849, %v2693
        %v2851 = vmul.f32 %v2849, %v2694
        %v2852 = vmul.f32 %v2849, %v2695
        %v2856 = vrot.slane %v2850, 5
        %v2857 = vrot.slane %v2851, 5
        %v2858 = vsel %vm898, %v2856, %v2857
        %v2859 = vrot.slane %v2852, 5
        %v2860 = vsel %vm898, %v2857, %v2859
        %v2863 = vadd.f32 %v2845, %v2858
        %v2864 = vadd.f32 %v2846, %v2860
        %v2865 = vstv %s2848
        %v2866 = vmul.f32 %v2865, %v2696
        %v2867 = vmul.f32 %v2865, %v2697
        %v2868 = vmul.f32 %v2865, %v2698
        %v2872 = vrot.slane %v2866, 5
        %v2873 = vrot.slane %v2867, 5
        %v2874 = vsel %vm898, %v2872, %v2873
        %v2875 = vrot.slane %v2868, 5
        %v2876 = vsel %vm898, %v2873, %v2875
        %v2879 = vadd.f32 %v2863, %v2874
        %v2880 = vadd.f32 %v2864, %v2876
        %s2881 = sld [smem:[#allocation13 + $0x2a]]
        %s2882 = sld [smem:[#allocation13 + $0x5b]]
        %v2883 = vstv %s2881
        %v2884 = vmul.f32 %v2883, %v2693
        %v2885 = vmul.f32 %v2883, %v2694
        %v2886 = vmul.f32 %v2883, %v2695
        %v2890 = vrot.slane %v2884, 6
        %v2891 = vrot.slane %v2885, 6
        %v2892 = vsel %vm933, %v2890, %v2891
        %v2893 = vrot.slane %v2886, 6
        %v2894 = vsel %vm933, %v2891, %v2893
        %v2897 = vadd.f32 %v2879, %v2892
        %v2898 = vadd.f32 %v2880, %v2894
        %v2899 = vstv %s2882
        %v2900 = vmul.f32 %v2899, %v2696
        %v2901 = vmul.f32 %v2899, %v2697
        %v2902 = vmul.f32 %v2899, %v2698
        %v2906 = vrot.slane %v2900, 6
        %v2907 = vrot.slane %v2901, 6
        %v2908 = vsel %vm933, %v2906, %v2907
        %v2909 = vrot.slane %v2902, 6
        %v2910 = vsel %vm933, %v2907, %v2909
        %v2913 = vadd.f32 %v2897, %v2908
        %v2914 = vadd.f32 %v2898, %v2910
        %s2915 = sld [smem:[#allocation13 + $0x1]]
        %s2916 = sld [smem:[#allocation13 + $0x32]]
        %v2917 = vstv %s2915
        %v2918 = vmul.f32 %v2917, %v2693
        %v2919 = vmul.f32 %v2917, %v2694
        %2922 = vrot.lane.b32.xlu0 %v2918, 127
        %v2923 = vpop.permute.xlu0 %2922
        %2924 = vrot.lane.b32.xlu0 %v2919, 127
        %v2925 = vpop.permute.xlu0 %2924
        %v2928 = vadd.f32 %v2913, %v2923
        %v2929 = vadd.f32 %v2914, %v2925
        %v2930 = vstv %s2916
        %v2931 = vmul.f32 %v2930, %v2696
        %v2932 = vmul.f32 %v2930, %v2697
        %2935 = vrot.lane.b32.xlu0 %v2931, 127
        %v2936 = vpop.permute.xlu0 %2935
        %2937 = vrot.lane.b32.xlu0 %v2932, 127
        %v2938 = vpop.permute.xlu0 %2937
        %v2941 = vadd.f32 %v2928, %v2936
        %v2942 = vadd.f32 %v2929, %v2938
        %s2943 = sld [smem:[#allocation13 + $0x8]]
        %s2944 = sld [smem:[#allocation13 + $0x39]]
        %v2945 = vstv %s2943
        %v2946 = vmul.f32 %v2945, %v2693
        %v2947 = vmul.f32 %v2945, %v2694
        %v2948 = vmul.f32 %v2945, %v2695
        %v2952 = vrot.slane %v2946, 1
        %v2953 = vrot.slane %v2947, 1
        %v2954 = vsel %vm758, %v2952, %v2953
        %v2955 = vrot.slane %v2948, 1
        %v2956 = vsel %vm758, %v2953, %v2955
        %2957 = vrot.lane.b32.xlu0 %v2954, 127
        %v2958 = vpop.permute.xlu0 %2957
        %2959 = vrot.lane.b32.xlu0 %v2956, 127
        %v2960 = vpop.permute.xlu0 %2959
        %v2963 = vadd.f32 %v2941, %v2958
        %v2964 = vadd.f32 %v2942, %v2960
        %v2965 = vstv %s2944
        %v2966 = vmul.f32 %v2965, %v2696
        %v2967 = vmul.f32 %v2965, %v2697
        %v2968 = vmul.f32 %v2965, %v2698
        %v2972 = vrot.slane %v2966, 1
        %v2973 = vrot.slane %v2967, 1
        %v2974 = vsel %vm758, %v2972, %v2973
        %v2975 = vrot.slane %v2968, 1
        %v2976 = vsel %vm758, %v2973, %v2975
        %2977 = vrot.lane.b32.xlu0 %v2974, 127
        %v2978 = vpop.permute.xlu0 %2977
        %2979 = vrot.lane.b32.xlu0 %v2976, 127
        %v2980 = vpop.permute.xlu0 %2979
        %v2983 = vadd.f32 %v2963, %v2978
        %v2984 = vadd.f32 %v2964, %v2980
        %s2985 = sld [smem:[#allocation13 + $0xf]]
        %s2986 = sld [smem:[#allocation13 + $0x40]]
        %v2987 = vstv %s2985
        %v2988 = vmul.f32 %v2987, %v2693
        %v2989 = vmul.f32 %v2987, %v2694
        %v2990 = vmul.f32 %v2987, %v2695
        %v2994 = vrot.slane %v2988, 2
        %v2995 = vrot.slane %v2989, 2
        %v2996 = vsel %vm793, %v2994, %v2995
        %v2997 = vrot.slane %v2990, 2
        %v2998 = vsel %vm793, %v2995, %v2997
        %2999 = vrot.lane.b32.xlu0 %v2996, 127
        %v3000 = vpop.permute.xlu0 %2999
        %3001 = vrot.lane.b32.xlu0 %v2998, 127
        %v3002 = vpop.permute.xlu0 %3001
        %v3005 = vadd.f32 %v2983, %v3000
        %v3006 = vadd.f32 %v2984, %v3002
        %v3007 = vstv %s2986
        %v3008 = vmul.f32 %v3007, %v2696
        %v3009 = vmul.f32 %v3007, %v2697
        %v3010 = vmul.f32 %v3007, %v2698
        %v3014 = vrot.slane %v3008, 2
        %v3015 = vrot.slane %v3009, 2
        %v3016 = vsel %vm793, %v3014, %v3015
        %v3017 = vrot.slane %v3010, 2
        %v3018 = vsel %vm793, %v3015, %v3017
        %3019 = vrot.lane.b32.xlu0 %v3016, 127
        %v3020 = vpop.permute.xlu0 %3019
        %3021 = vrot.lane.b32.xlu0 %v3018, 127
        %v3022 = vpop.permute.xlu0 %3021
        %v3025 = vadd.f32 %v3005, %v3020
        %v3026 = vadd.f32 %v3006, %v3022
        %s3027 = sld [smem:[#allocation13 + $0x16]]
        %s3028 = sld [smem:[#allocation13 + $0x47]]
        %v3029 = vstv %s3027
        %v3030 = vmul.f32 %v3029, %v2693
        %v3031 = vmul.f32 %v3029, %v2694
        %v3032 = vmul.f32 %v3029, %v2695
        %v3036 = vrot.slane %v3030, 3
        %v3037 = vrot.slane %v3031, 3
        %v3038 = vsel %vm828, %v3036, %v3037
        %v3039 = vrot.slane %v3032, 3
        %v3040 = vsel %vm828, %v3037, %v3039
        %3041 = vrot.lane.b32.xlu0 %v3038, 127
        %v3042 = vpop.permute.xlu0 %3041
        %3043 = vrot.lane.b32.xlu0 %v3040, 127
        %v3044 = vpop.permute.xlu0 %3043
        %v3047 = vadd.f32 %v3025, %v3042
        %v3048 = vadd.f32 %v3026, %v3044
        %v3049 = vstv %s3028
        %v3050 = vmul.f32 %v3049, %v2696
        %v3051 = vmul.f32 %v3049, %v2697
        %v3052 = vmul.f32 %v3049, %v2698
        %v3056 = vrot.slane %v3050, 3
        %v3057 = vrot.slane %v3051, 3
        %v3058 = vsel %vm828, %v3056, %v3057
        %v3059 = vrot.slane %v3052, 3
        %v3060 = vsel %vm828, %v3057, %v3059
        %3061 = vrot.lane.b32.xlu0 %v3058, 127
        %v3062 = vpop.permute.xlu0 %3061
        %3063 = vrot.lane.b32.xlu0 %v3060, 127
        %v3064 = vpop.permute.xlu0 %3063
        %v3067 = vadd.f32 %v3047, %v3062
        %v3068 = vadd.f32 %v3048, %v3064
        %s3069 = sld [smem:[#allocation13 + $0x1d]]
        %s3070 = sld [smem:[#allocation13 + $0x4e]]
        %v3071 = vstv %s3069
        %v3072 = vmul.f32 %v3071, %v2693
        %v3073 = vmul.f32 %v3071, %v2694
        %v3074 = vmul.f32 %v3071, %v2695
        %v3078 = vrot.slane %v3072, 4
        %v3079 = vrot.slane %v3073, 4
        %v3080 = vsel %vm863, %v3078, %v3079
        %v3081 = vrot.slane %v3074, 4
        %v3082 = vsel %vm863, %v3079, %v3081
        %3083 = vrot.lane.b32.xlu0 %v3080, 127
        %v3084 = vpop.permute.xlu0 %3083
        %3085 = vrot.lane.b32.xlu0 %v3082, 127
        %v3086 = vpop.permute.xlu0 %3085
        %v3089 = vadd.f32 %v3067, %v3084
        %v3090 = vadd.f32 %v3068, %v3086
        %v3091 = vstv %s3070
        %v3092 = vmul.f32 %v3091, %v2696
        %v3093 = vmul.f32 %v3091, %v2697
        %v3094 = vmul.f32 %v3091, %v2698
        %v3098 = vrot.slane %v3092, 4
        %v3099 = vrot.slane %v3093, 4
        %v3100 = vsel %vm863, %v3098, %v3099
        %v3101 = vrot.slane %v3094, 4
        %v3102 = vsel %vm863, %v3099, %v3101
        %3103 = vrot.lane.b32.xlu0 %v3100, 127
        %v3104 = vpop.permute.xlu0 %3103
        %3105 = vrot.lane.b32.xlu0 %v3102, 127
        %v3106 = vpop.permute.xlu0 %3105
        %v3109 = vadd.f32 %v3089, %v3104
        %v3110 = vadd.f32 %v3090, %v3106
        %s3111 = sld [smem:[#allocation13 + $0x24]]
        %s3112 = sld [smem:[#allocation13 + $0x55]]
        %v3113 = vstv %s3111
        %v3114 = vmul.f32 %v3113, %v2693
        %v3115 = vmul.f32 %v3113, %v2694
        %v3116 = vmul.f32 %v3113, %v2695
        %v3120 = vrot.slane %v3114, 5
        %v3121 = vrot.slane %v3115, 5
        %v3122 = vsel %vm898, %v3120, %v3121
        %v3123 = vrot.slane %v3116, 5
        %v3124 = vsel %vm898, %v3121, %v3123
        %3125 = vrot.lane.b32.xlu0 %v3122, 127
        %v3126 = vpop.permute.xlu0 %3125
        %3127 = vrot.lane.b32.xlu0 %v3124, 127
        %v3128 = vpop.permute.xlu0 %3127
        %v3131 = vadd.f32 %v3109, %v3126
        %v3132 = vadd.f32 %v3110, %v3128
        %v3133 = vstv %s3112
        %v3134 = vmul.f32 %v3133, %v2696
        %v3135 = vmul.f32 %v3133, %v2697
        %v3136 = vmul.f32 %v3133, %v2698
        %v3140 = vrot.slane %v3134, 5
        %v3141 = vrot.slane %v3135, 5
        %v3142 = vsel %vm898, %v3140, %v3141
        %v3143 = vrot.slane %v3136, 5
        %v3144 = vsel %vm898, %v3141, %v3143
        %3145 = vrot.lane.b32.xlu0 %v3142, 127
        %v3146 = vpop.permute.xlu0 %3145
        %3147 = vrot.lane.b32.xlu0 %v3144, 127
        %v3148 = vpop.permute.xlu0 %3147
        %v3151 = vadd.f32 %v3131, %v3146
        %v3152 = vadd.f32 %v3132, %v3148
        %s3153 = sld [smem:[#allocation13 + $0x2b]]
        %s3154 = sld [smem:[#allocation13 + $0x5c]]
        %v3155 = vstv %s3153
        %v3156 = vmul.f32 %v3155, %v2693
        %v3157 = vmul.f32 %v3155, %v2694
        %v3158 = vmul.f32 %v3155, %v2695
        %v3162 = vrot.slane %v3156, 6
        %v3163 = vrot.slane %v3157, 6
        %v3164 = vsel %vm933, %v3162, %v3163
        %v3165 = vrot.slane %v3158, 6
        %v3166 = vsel %vm933, %v3163, %v3165
        %3167 = vrot.lane.b32.xlu0 %v3164, 127
        %v3168 = vpop.permute.xlu0 %3167
        %3169 = vrot.lane.b32.xlu0 %v3166, 127
        %v3170 = vpop.permute.xlu0 %3169
        %v3173 = vadd.f32 %v3151, %v3168
        %v3174 = vadd.f32 %v3152, %v3170
        %v3175 = vstv %s3154
        %v3176 = vmul.f32 %v3175, %v2696
        %v3177 = vmul.f32 %v3175, %v2697
        %v3178 = vmul.f32 %v3175, %v2698
        %v3182 = vrot.slane %v3176, 6
        %v3183 = vrot.slane %v3177, 6
        %v3184 = vsel %vm933, %v3182, %v3183
        %v3185 = vrot.slane %v3178, 6
        %v3186 = vsel %vm933, %v3183, %v3185
        %3187 = vrot.lane.b32.xlu0 %v3184, 127
        %v3188 = vpop.permute.xlu0 %3187
        %3189 = vrot.lane.b32.xlu0 %v3186, 127
        %v3190 = vpop.permute.xlu0 %3189
        %v3193 = vadd.f32 %v3173, %v3188
        %v3194 = vadd.f32 %v3174, %v3190
        %s3195 = sld [smem:[#allocation13 + $0x2]]
        %s3196 = sld [smem:[#allocation13 + $0x33]]
        %v3197 = vstv %s3195
        %v3198 = vmul.f32 %v3197, %v2693
        %v3199 = vmul.f32 %v3197, %v2694
        %3202 = vrot.lane.b32.xlu0 %v3198, 126
        %v3203 = vpop.permute.xlu0 %3202
        %3204 = vrot.lane.b32.xlu0 %v3199, 126
        %v3205 = vpop.permute.xlu0 %3204
        %v3208 = vadd.f32 %v3193, %v3203
        %v3209 = vadd.f32 %v3194, %v3205
        %v3210 = vstv %s3196
        %v3211 = vmul.f32 %v3210, %v2696
        %v3212 = vmul.f32 %v3210, %v2697
        %3215 = vrot.lane.b32.xlu0 %v3211, 126
        %v3216 = vpop.permute.xlu0 %3215
        %3217 = vrot.lane.b32.xlu0 %v3212, 126
        %v3218 = vpop.permute.xlu0 %3217
        %v3221 = vadd.f32 %v3208, %v3216
        %v3222 = vadd.f32 %v3209, %v3218
        %s3223 = sld [smem:[#allocation13 + $0x9]]
        %s3224 = sld [smem:[#allocation13 + $0x3a]]
        %v3225 = vstv %s3223
        %v3226 = vmul.f32 %v3225, %v2693
        %v3227 = vmul.f32 %v3225, %v2694
        %v3228 = vmul.f32 %v3225, %v2695
        %v3232 = vrot.slane %v3226, 1
        %v3233 = vrot.slane %v3227, 1
        %v3234 = vsel %vm758, %v3232, %v3233
        %v3235 = vrot.slane %v3228, 1
        %v3236 = vsel %vm758, %v3233, %v3235
        %3237 = vrot.lane.b32.xlu0 %v3234, 126
        %v3238 = vpop.permute.xlu0 %3237
        %3239 = vrot.lane.b32.xlu0 %v3236, 126
        %v3240 = vpop.permute.xlu0 %3239
        %v3243 = vadd.f32 %v3221, %v3238
        %v3244 = vadd.f32 %v3222, %v3240
        %v3245 = vstv %s3224
        %v3246 = vmul.f32 %v3245, %v2696
        %v3247 = vmul.f32 %v3245, %v2697
        %v3248 = vmul.f32 %v3245, %v2698
        %v3252 = vrot.slane %v3246, 1
        %v3253 = vrot.slane %v3247, 1
        %v3254 = vsel %vm758, %v3252, %v3253
        %v3255 = vrot.slane %v3248, 1
        %v3256 = vsel %vm758, %v3253, %v3255
        %3257 = vrot.lane.b32.xlu0 %v3254, 126
        %v3258 = vpop.permute.xlu0 %3257
        %3259 = vrot.lane.b32.xlu0 %v3256, 126
        %v3260 = vpop.permute.xlu0 %3259
        %v3263 = vadd.f32 %v3243, %v3258
        %v3264 = vadd.f32 %v3244, %v3260
        %s3265 = sld [smem:[#allocation13 + $0x10]]
        %s3266 = sld [smem:[#allocation13 + $0x41]]
        %v3267 = vstv %s3265
        %v3268 = vmul.f32 %v3267, %v2693
        %v3269 = vmul.f32 %v3267, %v2694
        %v3270 = vmul.f32 %v3267, %v2695
        %v3274 = vrot.slane %v3268, 2
        %v3275 = vrot.slane %v3269, 2
        %v3276 = vsel %vm793, %v3274, %v3275
        %v3277 = vrot.slane %v3270, 2
        %v3278 = vsel %vm793, %v3275, %v3277
        %3279 = vrot.lane.b32.xlu0 %v3276, 126
        %v3280 = vpop.permute.xlu0 %3279
        %3281 = vrot.lane.b32.xlu0 %v3278, 126
        %v3282 = vpop.permute.xlu0 %3281
        %v3285 = vadd.f32 %v3263, %v3280
        %v3286 = vadd.f32 %v3264, %v3282
        %v3287 = vstv %s3266
        %v3288 = vmul.f32 %v3287, %v2696
        %v3289 = vmul.f32 %v3287, %v2697
        %v3290 = vmul.f32 %v3287, %v2698
        %v3294 = vrot.slane %v3288, 2
        %v3295 = vrot.slane %v3289, 2
        %v3296 = vsel %vm793, %v3294, %v3295
        %v3297 = vrot.slane %v3290, 2
        %v3298 = vsel %vm793, %v3295, %v3297
        %3299 = vrot.lane.b32.xlu0 %v3296, 126
        %v3300 = vpop.permute.xlu0 %3299
        %3301 = vrot.lane.b32.xlu0 %v3298, 126
        %v3302 = vpop.permute.xlu0 %3301
        %v3305 = vadd.f32 %v3285, %v3300
        %v3306 = vadd.f32 %v3286, %v3302
        %s3307 = sld [smem:[#allocation13 + $0x17]]
        %s3308 = sld [smem:[#allocation13 + $0x48]]
        %v3309 = vstv %s3307
        %v3310 = vmul.f32 %v3309, %v2693
        %v3311 = vmul.f32 %v3309, %v2694
        %v3312 = vmul.f32 %v3309, %v2695
        %v3316 = vrot.slane %v3310, 3
        %v3317 = vrot.slane %v3311, 3
        %v3318 = vsel %vm828, %v3316, %v3317
        %v3319 = vrot.slane %v3312, 3
        %v3320 = vsel %vm828, %v3317, %v3319
        %3321 = vrot.lane.b32.xlu0 %v3318, 126
        %v3322 = vpop.permute.xlu0 %3321
        %3323 = vrot.lane.b32.xlu0 %v3320, 126
        %v3324 = vpop.permute.xlu0 %3323
        %v3327 = vadd.f32 %v3305, %v3322
        %v3328 = vadd.f32 %v3306, %v3324
        %v3329 = vstv %s3308
        %v3330 = vmul.f32 %v3329, %v2696
        %v3331 = vmul.f32 %v3329, %v2697
        %v3332 = vmul.f32 %v3329, %v2698
        %v3336 = vrot.slane %v3330, 3
        %v3337 = vrot.slane %v3331, 3
        %v3338 = vsel %vm828, %v3336, %v3337
        %v3339 = vrot.slane %v3332, 3
        %v3340 = vsel %vm828, %v3337, %v3339
        %3341 = vrot.lane.b32.xlu0 %v3338, 126
        %v3342 = vpop.permute.xlu0 %3341
        %3343 = vrot.lane.b32.xlu0 %v3340, 126
        %v3344 = vpop.permute.xlu0 %3343
        %v3347 = vadd.f32 %v3327, %v3342
        %v3348 = vadd.f32 %v3328, %v3344
        %s3349 = sld [smem:[#allocation13 + $0x1e]]
        %s3350 = sld [smem:[#allocation13 + $0x4f]]
        %v3351 = vstv %s3349
        %v3352 = vmul.f32 %v3351, %v2693
        %v3353 = vmul.f32 %v3351, %v2694
        %v3354 = vmul.f32 %v3351, %v2695
        %v3358 = vrot.slane %v3352, 4
        %v3359 = vrot.slane %v3353, 4
        %v3360 = vsel %vm863, %v3358, %v3359
        %v3361 = vrot.slane %v3354, 4
        %v3362 = vsel %vm863, %v3359, %v3361
        %3363 = vrot.lane.b32.xlu0 %v3360, 126
        %v3364 = vpop.permute.xlu0 %3363
        %3365 = vrot.lane.b32.xlu0 %v3362, 126
        %v3366 = vpop.permute.xlu0 %3365
        %v3369 = vadd.f32 %v3347, %v3364
        %v3370 = vadd.f32 %v3348, %v3366
        %v3371 = vstv %s3350
        %v3372 = vmul.f32 %v3371, %v2696
        %v3373 = vmul.f32 %v3371, %v2697
        %v3374 = vmul.f32 %v3371, %v2698
        %v3378 = vrot.slane %v3372, 4
        %v3379 = vrot.slane %v3373, 4
        %v3380 = vsel %vm863, %v3378, %v3379
        %v3381 = vrot.slane %v3374, 4
        %v3382 = vsel %vm863, %v3379, %v3381
        %3383 = vrot.lane.b32.xlu0 %v3380, 126
        %v3384 = vpop.permute.xlu0 %3383
        %3385 = vrot.lane.b32.xlu0 %v3382, 126
        %v3386 = vpop.permute.xlu0 %3385
        %v3389 = vadd.f32 %v3369, %v3384
        %v3390 = vadd.f32 %v3370, %v3386
        %s3391 = sld [smem:[#allocation13 + $0x25]]
        %s3392 = sld [smem:[#allocation13 + $0x56]]
        %v3393 = vstv %s3391
        %v3394 = vmul.f32 %v3393, %v2693
        %v3395 = vmul.f32 %v3393, %v2694
        %v3396 = vmul.f32 %v3393, %v2695
        %v3400 = vrot.slane %v3394, 5
        %v3401 = vrot.slane %v3395, 5
        %v3402 = vsel %vm898, %v3400, %v3401
        %v3403 = vrot.slane %v3396, 5
        %v3404 = vsel %vm898, %v3401, %v3403
        %3405 = vrot.lane.b32.xlu0 %v3402, 126
        %v3406 = vpop.permute.xlu0 %3405
        %3407 = vrot.lane.b32.xlu0 %v3404, 126
        %v3408 = vpop.permute.xlu0 %3407
        %v3411 = vadd.f32 %v3389, %v3406
        %v3412 = vadd.f32 %v3390, %v3408
        %v3413 = vstv %s3392
        %v3414 = vmul.f32 %v3413, %v2696
        %v3415 = vmul.f32 %v3413, %v2697
        %v3416 = vmul.f32 %v3413, %v2698
        %v3420 = vrot.slane %v3414, 5
        %v3421 = vrot.slane %v3415, 5
        %v3422 = vsel %vm898, %v3420, %v3421
        %v3423 = vrot.slane %v3416, 5
        %v3424 = vsel %vm898, %v3421, %v3423
        %3425 = vrot.lane.b32.xlu0 %v3422, 126
        %v3426 = vpop.permute.xlu0 %3425
        %3427 = vrot.lane.b32.xlu0 %v3424, 126
        %v3428 = vpop.permute.xlu0 %3427
        %v3431 = vadd.f32 %v3411, %v3426
        %v3432 = vadd.f32 %v3412, %v3428
        %s3433 = sld [smem:[#allocation13 + $0x2c]]
        %s3434 = sld [smem:[#allocation13 + $0x5d]]
        %v3435 = vstv %s3433
        %v3436 = vmul.f32 %v3435, %v2693
        %v3437 = vmul.f32 %v3435, %v2694
        %v3438 = vmul.f32 %v3435, %v2695
        %v3442 = vrot.slane %v3436, 6
        %v3443 = vrot.slane %v3437, 6
        %v3444 = vsel %vm933, %v3442, %v3443
        %v3445 = vrot.slane %v3438, 6
        %v3446 = vsel %vm933, %v3443, %v3445
        %3447 = vrot.lane.b32.xlu0 %v3444, 126
        %v3448 = vpop.permute.xlu0 %3447
        %3449 = vrot.lane.b32.xlu0 %v3446, 126
        %v3450 = vpop.permute.xlu0 %3449
        %v3453 = vadd.f32 %v3431, %v3448
        %v3454 = vadd.f32 %v3432, %v3450
        %v3455 = vstv %s3434
        %v3456 = vmul.f32 %v3455, %v2696
        %v3457 = vmul.f32 %v3455, %v2697
        %v3458 = vmul.f32 %v3455, %v2698
        %v3462 = vrot.slane %v3456, 6
        %v3463 = vrot.slane %v3457, 6
        %v3464 = vsel %vm933, %v3462, %v3463
        %v3465 = vrot.slane %v3458, 6
        %v3466 = vsel %vm933, %v3463, %v3465
        %3467 = vrot.lane.b32.xlu0 %v3464, 126
        %v3468 = vpop.permute.xlu0 %3467
        %3469 = vrot.lane.b32.xlu0 %v3466, 126
        %v3470 = vpop.permute.xlu0 %3469
        %v3473 = vadd.f32 %v3453, %v3468
        %v3474 = vadd.f32 %v3454, %v3470
        %s3475 = sld [smem:[#allocation13 + $0x3]]
        %s3476 = sld [smem:[#allocation13 + $0x34]]
        %v3477 = vstv %s3475
        %v3478 = vmul.f32 %v3477, %v2693
        %v3479 = vmul.f32 %v3477, %v2694
        %3482 = vrot.lane.b32.xlu0 %v3478, 125
        %v3483 = vpop.permute.xlu0 %3482
        %3484 = vrot.lane.b32.xlu0 %v3479, 125
        %v3485 = vpop.permute.xlu0 %3484
        %v3488 = vadd.f32 %v3473, %v3483
        %v3489 = vadd.f32 %v3474, %v3485
        %v3490 = vstv %s3476
        %v3491 = vmul.f32 %v3490, %v2696
        %v3492 = vmul.f32 %v3490, %v2697
        %3495 = vrot.lane.b32.xlu0 %v3491, 125
        %v3496 = vpop.permute.xlu0 %3495
        %3497 = vrot.lane.b32.xlu0 %v3492, 125
        %v3498 = vpop.permute.xlu0 %3497
        %v3501 = vadd.f32 %v3488, %v3496
        %v3502 = vadd.f32 %v3489, %v3498
        %s3503 = sld [smem:[#allocation13 + $0xa]]
        %s3504 = sld [smem:[#allocation13 + $0x3b]]
        %v3505 = vstv %s3503
        %v3506 = vmul.f32 %v3505, %v2693
        %v3507 = vmul.f32 %v3505, %v2694
        %v3508 = vmul.f32 %v3505, %v2695
        %v3512 = vrot.slane %v3506, 1
        %v3513 = vrot.slane %v3507, 1
        %v3514 = vsel %vm758, %v3512, %v3513
        %v3515 = vrot.slane %v3508, 1
        %v3516 = vsel %vm758, %v3513, %v3515
        %3517 = vrot.lane.b32.xlu0 %v3514, 125
        %v3518 = vpop.permute.xlu0 %3517
        %3519 = vrot.lane.b32.xlu0 %v3516, 125
        %v3520 = vpop.permute.xlu0 %3519
        %v3523 = vadd.f32 %v3501, %v3518
        %v3524 = vadd.f32 %v3502, %v3520
        %v3525 = vstv %s3504
        %v3526 = vmul.f32 %v3525, %v2696
        %v3527 = vmul.f32 %v3525, %v2697
        %v3528 = vmul.f32 %v3525, %v2698
        %v3532 = vrot.slane %v3526, 1
        %v3533 = vrot.slane %v3527, 1
        %v3534 = vsel %vm758, %v3532, %v3533
        %v3535 = vrot.slane %v3528, 1
        %v3536 = vsel %vm758, %v3533, %v3535
        %3537 = vrot.lane.b32.xlu0 %v3534, 125
        %v3538 = vpop.permute.xlu0 %3537
        %3539 = vrot.lane.b32.xlu0 %v3536, 125
        %v3540 = vpop.permute.xlu0 %3539
        %v3543 = vadd.f32 %v3523, %v3538
        %v3544 = vadd.f32 %v3524, %v3540
        %s3545 = sld [smem:[#allocation13 + $0x11]]
        %s3546 = sld [smem:[#allocation13 + $0x42]]
        %v3547 = vstv %s3545
        %v3548 = vmul.f32 %v3547, %v2693
        %v3549 = vmul.f32 %v3547, %v2694
        %v3550 = vmul.f32 %v3547, %v2695
        %v3554 = vrot.slane %v3548, 2
        %v3555 = vrot.slane %v3549, 2
        %v3556 = vsel %vm793, %v3554, %v3555
        %v3557 = vrot.slane %v3550, 2
        %v3558 = vsel %vm793, %v3555, %v3557
        %3559 = vrot.lane.b32.xlu0 %v3556, 125
        %v3560 = vpop.permute.xlu0 %3559
        %3561 = vrot.lane.b32.xlu0 %v3558, 125
        %v3562 = vpop.permute.xlu0 %3561
        %v3565 = vadd.f32 %v3543, %v3560
        %v3566 = vadd.f32 %v3544, %v3562
        %v3567 = vstv %s3546
        %v3568 = vmul.f32 %v3567, %v2696
        %v3569 = vmul.f32 %v3567, %v2697
        %v3570 = vmul.f32 %v3567, %v2698
        %v3574 = vrot.slane %v3568, 2
        %v3575 = vrot.slane %v3569, 2
        %v3576 = vsel %vm793, %v3574, %v3575
        %v3577 = vrot.slane %v3570, 2
        %v3578 = vsel %vm793, %v3575, %v3577
        %3579 = vrot.lane.b32.xlu0 %v3576, 125
        %v3580 = vpop.permute.xlu0 %3579
        %3581 = vrot.lane.b32.xlu0 %v3578, 125
        %v3582 = vpop.permute.xlu0 %3581
        %v3585 = vadd.f32 %v3565, %v3580
        %v3586 = vadd.f32 %v3566, %v3582
        %s3587 = sld [smem:[#allocation13 + $0x18]]
        %s3588 = sld [smem:[#allocation13 + $0x49]]
        %v3589 = vstv %s3587
        %v3590 = vmul.f32 %v3589, %v2693
        %v3591 = vmul.f32 %v3589, %v2694
        %v3592 = vmul.f32 %v3589, %v2695
        %v3596 = vrot.slane %v3590, 3
        %v3597 = vrot.slane %v3591, 3
        %v3598 = vsel %vm828, %v3596, %v3597
        %v3599 = vrot.slane %v3592, 3
        %v3600 = vsel %vm828, %v3597, %v3599
        %3601 = vrot.lane.b32.xlu0 %v3598, 125
        %v3602 = vpop.permute.xlu0 %3601
        %3603 = vrot.lane.b32.xlu0 %v3600, 125
        %v3604 = vpop.permute.xlu0 %3603
        %v3607 = vadd.f32 %v3585, %v3602
        %v3608 = vadd.f32 %v3586, %v3604
        %v3609 = vstv %s3588
        %v3610 = vmul.f32 %v3609, %v2696
        %v3611 = vmul.f32 %v3609, %v2697
        %v3612 = vmul.f32 %v3609, %v2698
        %v3616 = vrot.slane %v3610, 3
        %v3617 = vrot.slane %v3611, 3
        %v3618 = vsel %vm828, %v3616, %v3617
        %v3619 = vrot.slane %v3612, 3
        %v3620 = vsel %vm828, %v3617, %v3619
        %3621 = vrot.lane.b32.xlu0 %v3618, 125
        %v3622 = vpop.permute.xlu0 %3621
        %3623 = vrot.lane.b32.xlu0 %v3620, 125
        %v3624 = vpop.permute.xlu0 %3623
        %v3627 = vadd.f32 %v3607, %v3622
        %v3628 = vadd.f32 %v3608, %v3624
        %s3629 = sld [smem:[#allocation13 + $0x1f]]
        %s3630 = sld [smem:[#allocation13 + $0x50]]
        %v3631 = vstv %s3629
        %v3632 = vmul.f32 %v3631, %v2693
        %v3633 = vmul.f32 %v3631, %v2694
        %v3634 = vmul.f32 %v3631, %v2695
        %v3638 = vrot.slane %v3632, 4
        %v3639 = vrot.slane %v3633, 4
        %v3640 = vsel %vm863, %v3638, %v3639
        %v3641 = vrot.slane %v3634, 4
        %v3642 = vsel %vm863, %v3639, %v3641
        %3643 = vrot.lane.b32.xlu0 %v3640, 125
        %v3644 = vpop.permute.xlu0 %3643
        %3645 = vrot.lane.b32.xlu0 %v3642, 125
        %v3646 = vpop.permute.xlu0 %3645
        %v3649 = vadd.f32 %v3627, %v3644
        %v3650 = vadd.f32 %v3628, %v3646
        %v3651 = vstv %s3630
        %v3652 = vmul.f32 %v3651, %v2696
        %v3653 = vmul.f32 %v3651, %v2697
        %v3654 = vmul.f32 %v3651, %v2698
        %v3658 = vrot.slane %v3652, 4
        %v3659 = vrot.slane %v3653, 4
        %v3660 = vsel %vm863, %v3658, %v3659
        %v3661 = vrot.slane %v3654, 4
        %v3662 = vsel %vm863, %v3659, %v3661
        %3663 = vrot.lane.b32.xlu0 %v3660, 125
        %v3664 = vpop.permute.xlu0 %3663
        %3665 = vrot.lane.b32.xlu0 %v3662, 125
        %v3666 = vpop.permute.xlu0 %3665
        %v3669 = vadd.f32 %v3649, %v3664
        %v3670 = vadd.f32 %v3650, %v3666
        %s3671 = sld [smem:[#allocation13 + $0x26]]
        %s3672 = sld [smem:[#allocation13 + $0x57]]
        %v3673 = vstv %s3671
        %v3674 = vmul.f32 %v3673, %v2693
        %v3675 = vmul.f32 %v3673, %v2694
        %v3676 = vmul.f32 %v3673, %v2695
        %v3680 = vrot.slane %v3674, 5
        %v3681 = vrot.slane %v3675, 5
        %v3682 = vsel %vm898, %v3680, %v3681
        %v3683 = vrot.slane %v3676, 5
        %v3684 = vsel %vm898, %v3681, %v3683
        %3685 = vrot.lane.b32.xlu0 %v3682, 125
        %v3686 = vpop.permute.xlu0 %3685
        %3687 = vrot.lane.b32.xlu0 %v3684, 125
        %v3688 = vpop.permute.xlu0 %3687
        %v3691 = vadd.f32 %v3669, %v3686
        %v3692 = vadd.f32 %v3670, %v3688
        %v3693 = vstv %s3672
        %v3694 = vmul.f32 %v3693, %v2696
        %v3695 = vmul.f32 %v3693, %v2697
        %v3696 = vmul.f32 %v3693, %v2698
        %v3700 = vrot.slane %v3694, 5
        %v3701 = vrot.slane %v3695, 5
        %v3702 = vsel %vm898, %v3700, %v3701
        %v3703 = vrot.slane %v3696, 5
        %v3704 = vsel %vm898, %v3701, %v3703
        %3705 = vrot.lane.b32.xlu0 %v3702, 125
        %v3706 = vpop.permute.xlu0 %3705
        %3707 = vrot.lane.b32.xlu0 %v3704, 125
        %v3708 = vpop.permute.xlu0 %3707
        %v3711 = vadd.f32 %v3691, %v3706
        %v3712 = vadd.f32 %v3692, %v3708
        %s3713 = sld [smem:[#allocation13 + $0x2d]]
        %s3714 = sld [smem:[#allocation13 + $0x5e]]
        %v3715 = vstv %s3713
        %v3716 = vmul.f32 %v3715, %v2693
        %v3717 = vmul.f32 %v3715, %v2694
        %v3718 = vmul.f32 %v3715, %v2695
        %v3722 = vrot.slane %v3716, 6
        %v3723 = vrot.slane %v3717, 6
        %v3724 = vsel %vm933, %v3722, %v3723
        %v3725 = vrot.slane %v3718, 6
        %v3726 = vsel %vm933, %v3723, %v3725
        %3727 = vrot.lane.b32.xlu0 %v3724, 125
        %v3728 = vpop.permute.xlu0 %3727
        %3729 = vrot.lane.b32.xlu0 %v3726, 125
        %v3730 = vpop.permute.xlu0 %3729
        %v3733 = vadd.f32 %v3711, %v3728
        %v3734 = vadd.f32 %v3712, %v3730
        %v3735 = vstv %s3714
        %v3736 = vmul.f32 %v3735, %v2696
        %v3737 = vmul.f32 %v3735, %v2697
        %v3738 = vmul.f32 %v3735, %v2698
        %v3742 = vrot.slane %v3736, 6
        %v3743 = vrot.slane %v3737, 6
        %v3744 = vsel %vm933, %v3742, %v3743
        %v3745 = vrot.slane %v3738, 6
        %v3746 = vsel %vm933, %v3743, %v3745
        %3747 = vrot.lane.b32.xlu0 %v3744, 125
        %v3748 = vpop.permute.xlu0 %3747
        %3749 = vrot.lane.b32.xlu0 %v3746, 125
        %v3750 = vpop.permute.xlu0 %3749
        %v3753 = vadd.f32 %v3733, %v3748
        %v3754 = vadd.f32 %v3734, %v3750
        %s3755 = sld [smem:[#allocation13 + $0x4]]
        %s3756 = sld [smem:[#allocation13 + $0x35]]
        %v3757 = vstv %s3755
        %v3758 = vmul.f32 %v3757, %v2693
        %v3759 = vmul.f32 %v3757, %v2694
        %3762 = vrot.lane.b32.xlu0 %v3758, 124
        %v3763 = vpop.permute.xlu0 %3762
        %3764 = vrot.lane.b32.xlu0 %v3759, 124
        %v3765 = vpop.permute.xlu0 %3764
        %v3768 = vadd.f32 %v3753, %v3763
        %v3769 = vadd.f32 %v3754, %v3765
        %v3770 = vstv %s3756
        %v3771 = vmul.f32 %v3770, %v2696
        %v3772 = vmul.f32 %v3770, %v2697
        %3775 = vrot.lane.b32.xlu0 %v3771, 124
        %v3776 = vpop.permute.xlu0 %3775
        %3777 = vrot.lane.b32.xlu0 %v3772, 124
        %v3778 = vpop.permute.xlu0 %3777
        %v3781 = vadd.f32 %v3768, %v3776
        %v3782 = vadd.f32 %v3769, %v3778
        %s3783 = sld [smem:[#allocation13 + $0xb]]
        %s3784 = sld [smem:[#allocation13 + $0x3c]]
        %v3785 = vstv %s3783
        %v3786 = vmul.f32 %v3785, %v2693
        %v3787 = vmul.f32 %v3785, %v2694
        %v3788 = vmul.f32 %v3785, %v2695
        %v3792 = vrot.slane %v3786, 1
        %v3793 = vrot.slane %v3787, 1
        %v3794 = vsel %vm758, %v3792, %v3793
        %v3795 = vrot.slane %v3788, 1
        %v3796 = vsel %vm758, %v3793, %v3795
        %3797 = vrot.lane.b32.xlu0 %v3794, 124
        %v3798 = vpop.permute.xlu0 %3797
        %3799 = vrot.lane.b32.xlu0 %v3796, 124
        %v3800 = vpop.permute.xlu0 %3799
        %v3803 = vadd.f32 %v3781, %v3798
        %v3804 = vadd.f32 %v3782, %v3800
        %v3805 = vstv %s3784
        %v3806 = vmul.f32 %v3805, %v2696
        %v3807 = vmul.f32 %v3805, %v2697
        %v3808 = vmul.f32 %v3805, %v2698
        %v3812 = vrot.slane %v3806, 1
        %v3813 = vrot.slane %v3807, 1
        %v3814 = vsel %vm758, %v3812, %v3813
        %v3815 = vrot.slane %v3808, 1
        %v3816 = vsel %vm758, %v3813, %v3815
        %3817 = vrot.lane.b32.xlu0 %v3814, 124
        %v3818 = vpop.permute.xlu0 %3817
        %3819 = vrot.lane.b32.xlu0 %v3816, 124
        %v3820 = vpop.permute.xlu0 %3819
        %v3823 = vadd.f32 %v3803, %v3818
        %v3824 = vadd.f32 %v3804, %v3820
        %s3825 = sld [smem:[#allocation13 + $0x12]]
        %s3826 = sld [smem:[#allocation13 + $0x43]]
        %v3827 = vstv %s3825
        %v3828 = vmul.f32 %v3827, %v2693
        %v3829 = vmul.f32 %v3827, %v2694
        %v3830 = vmul.f32 %v3827, %v2695
        %v3834 = vrot.slane %v3828, 2
        %v3835 = vrot.slane %v3829, 2
        %v3836 = vsel %vm793, %v3834, %v3835
        %v3837 = vrot.slane %v3830, 2
        %v3838 = vsel %vm793, %v3835, %v3837
        %3839 = vrot.lane.b32.xlu0 %v3836, 124
        %v3840 = vpop.permute.xlu0 %3839
        %3841 = vrot.lane.b32.xlu0 %v3838, 124
        %v3842 = vpop.permute.xlu0 %3841
        %v3845 = vadd.f32 %v3823, %v3840
        %v3846 = vadd.f32 %v3824, %v3842
        %v3847 = vstv %s3826
        %v3848 = vmul.f32 %v3847, %v2696
        %v3849 = vmul.f32 %v3847, %v2697
        %v3850 = vmul.f32 %v3847, %v2698
        %v3854 = vrot.slane %v3848, 2
        %v3855 = vrot.slane %v3849, 2
        %v3856 = vsel %vm793, %v3854, %v3855
        %v3857 = vrot.slane %v3850, 2
        %v3858 = vsel %vm793, %v3855, %v3857
        %3859 = vrot.lane.b32.xlu0 %v3856, 124
        %v3860 = vpop.permute.xlu0 %3859
        %3861 = vrot.lane.b32.xlu0 %v3858, 124
        %v3862 = vpop.permute.xlu0 %3861
        %v3865 = vadd.f32 %v3845, %v3860
        %v3866 = vadd.f32 %v3846, %v3862
        %s3867 = sld [smem:[#allocation13 + $0x19]]
        %s3868 = sld [smem:[#allocation13 + $0x4a]]
        %v3869 = vstv %s3867
        %v3870 = vmul.f32 %v3869, %v2693
        %v3871 = vmul.f32 %v3869, %v2694
        %v3872 = vmul.f32 %v3869, %v2695
        %v3876 = vrot.slane %v3870, 3
        %v3877 = vrot.slane %v3871, 3
        %v3878 = vsel %vm828, %v3876, %v3877
        %v3879 = vrot.slane %v3872, 3
        %v3880 = vsel %vm828, %v3877, %v3879
        %3881 = vrot.lane.b32.xlu0 %v3878, 124
        %v3882 = vpop.permute.xlu0 %3881
        %3883 = vrot.lane.b32.xlu0 %v3880, 124
        %v3884 = vpop.permute.xlu0 %3883
        %v3887 = vadd.f32 %v3865, %v3882
        %v3888 = vadd.f32 %v3866, %v3884
        %v3889 = vstv %s3868
        %v3890 = vmul.f32 %v3889, %v2696
        %v3891 = vmul.f32 %v3889, %v2697
        %v3892 = vmul.f32 %v3889, %v2698
        %v3896 = vrot.slane %v3890, 3
        %v3897 = vrot.slane %v3891, 3
        %v3898 = vsel %vm828, %v3896, %v3897
        %v3899 = vrot.slane %v3892, 3
        %v3900 = vsel %vm828, %v3897, %v3899
        %3901 = vrot.lane.b32.xlu0 %v3898, 124
        %v3902 = vpop.permute.xlu0 %3901
        %3903 = vrot.lane.b32.xlu0 %v3900, 124
        %v3904 = vpop.permute.xlu0 %3903
        %v3907 = vadd.f32 %v3887, %v3902
        %v3908 = vadd.f32 %v3888, %v3904
        %s3909 = sld [smem:[#allocation13 + $0x20]]
        %s3910 = sld [smem:[#allocation13 + $0x51]]
        %v3911 = vstv %s3909
        %v3912 = vmul.f32 %v3911, %v2693
        %v3913 = vmul.f32 %v3911, %v2694
        %v3914 = vmul.f32 %v3911, %v2695
        %v3918 = vrot.slane %v3912, 4
        %v3919 = vrot.slane %v3913, 4
        %v3920 = vsel %vm863, %v3918, %v3919
        %v3921 = vrot.slane %v3914, 4
        %v3922 = vsel %vm863, %v3919, %v3921
        %3923 = vrot.lane.b32.xlu0 %v3920, 124
        %v3924 = vpop.permute.xlu0 %3923
        %3925 = vrot.lane.b32.xlu0 %v3922, 124
        %v3926 = vpop.permute.xlu0 %3925
        %v3929 = vadd.f32 %v3907, %v3924
        %v3930 = vadd.f32 %v3908, %v3926
        %v3931 = vstv %s3910
        %v3932 = vmul.f32 %v3931, %v2696
        %v3933 = vmul.f32 %v3931, %v2697
        %v3934 = vmul.f32 %v3931, %v2698
        %v3938 = vrot.slane %v3932, 4
        %v3939 = vrot.slane %v3933, 4
        %v3940 = vsel %vm863, %v3938, %v3939
        %v3941 = vrot.slane %v3934, 4
        %v3942 = vsel %vm863, %v3939, %v3941
        %3943 = vrot.lane.b32.xlu0 %v3940, 124
        %v3944 = vpop.permute.xlu0 %3943
        %3945 = vrot.lane.b32.xlu0 %v3942, 124
        %v3946 = vpop.permute.xlu0 %3945
        %v3949 = vadd.f32 %v3929, %v3944
        %v3950 = vadd.f32 %v3930, %v3946
        %s3951 = sld [smem:[#allocation13 + $0x27]]
        %s3952 = sld [smem:[#allocation13 + $0x58]]
        %v3953 = vstv %s3951
        %v3954 = vmul.f32 %v3953, %v2693
        %v3955 = vmul.f32 %v3953, %v2694
        %v3956 = vmul.f32 %v3953, %v2695
        %v3960 = vrot.slane %v3954, 5
        %v3961 = vrot.slane %v3955, 5
        %v3962 = vsel %vm898, %v3960, %v3961
        %v3963 = vrot.slane %v3956, 5
        %v3964 = vsel %vm898, %v3961, %v3963
        %3965 = vrot.lane.b32.xlu0 %v3962, 124
        %v3966 = vpop.permute.xlu0 %3965
        %3967 = vrot.lane.b32.xlu0 %v3964, 124
        %v3968 = vpop.permute.xlu0 %3967
        %v3971 = vadd.f32 %v3949, %v3966
        %v3972 = vadd.f32 %v3950, %v3968
        %v3973 = vstv %s3952
        %v3974 = vmul.f32 %v3973, %v2696
        %v3975 = vmul.f32 %v3973, %v2697
        %v3976 = vmul.f32 %v3973, %v2698
        %v3980 = vrot.slane %v3974, 5
        %v3981 = vrot.slane %v3975, 5
        %v3982 = vsel %vm898, %v3980, %v3981
        %v3983 = vrot.slane %v3976, 5
        %v3984 = vsel %vm898, %v3981, %v3983
        %3985 = vrot.lane.b32.xlu0 %v3982, 124
        %v3986 = vpop.permute.xlu0 %3985
        %3987 = vrot.lane.b32.xlu0 %v3984, 124
        %v3988 = vpop.permute.xlu0 %3987
        %v3991 = vadd.f32 %v3971, %v3986
        %v3992 = vadd.f32 %v3972, %v3988
        %s3993 = sld [smem:[#allocation13 + $0x2e]]
        %s3994 = sld [smem:[#allocation13 + $0x5f]]
        %v3995 = vstv %s3993
        %v3996 = vmul.f32 %v3995, %v2693
        %v3997 = vmul.f32 %v3995, %v2694
        %v3998 = vmul.f32 %v3995, %v2695
        %v4002 = vrot.slane %v3996, 6
        %v4003 = vrot.slane %v3997, 6
        %v4004 = vsel %vm933, %v4002, %v4003
        %v4005 = vrot.slane %v3998, 6
        %v4006 = vsel %vm933, %v4003, %v4005
        %4007 = vrot.lane.b32.xlu0 %v4004, 124
        %v4008 = vpop.permute.xlu0 %4007
        %4009 = vrot.lane.b32.xlu0 %v4006, 124
        %v4010 = vpop.permute.xlu0 %4009
        %v4013 = vadd.f32 %v3991, %v4008
        %v4014 = vadd.f32 %v3992, %v4010
        %v4015 = vstv %s3994
        %v4016 = vmul.f32 %v4015, %v2696
        %v4017 = vmul.f32 %v4015, %v2697
        %v4018 = vmul.f32 %v4015, %v2698
        %v4022 = vrot.slane %v4016, 6
        %v4023 = vrot.slane %v4017, 6
        %v4024 = vsel %vm933, %v4022, %v4023
        %v4025 = vrot.slane %v4018, 6
        %v4026 = vsel %vm933, %v4023, %v4025
        %4027 = vrot.lane.b32.xlu0 %v4024, 124
        %v4028 = vpop.permute.xlu0 %4027
        %4029 = vrot.lane.b32.xlu0 %v4026, 124
        %v4030 = vpop.permute.xlu0 %4029
        %v4033 = vadd.f32 %v4013, %v4028
        %v4034 = vadd.f32 %v4014, %v4030
        %s4035 = sld [smem:[#allocation13 + $0x5]]
        %s4036 = sld [smem:[#allocation13 + $0x36]]
        %v4037 = vstv %s4035
        %v4038 = vmul.f32 %v4037, %v2693
        %v4039 = vmul.f32 %v4037, %v2694
        %4042 = vrot.lane.b32.xlu0 %v4038, 123
        %v4043 = vpop.permute.xlu0 %4042
        %4044 = vrot.lane.b32.xlu0 %v4039, 123
        %v4045 = vpop.permute.xlu0 %4044
        %v4048 = vadd.f32 %v4033, %v4043
        %v4049 = vadd.f32 %v4034, %v4045
        %v4050 = vstv %s4036
        %v4051 = vmul.f32 %v4050, %v2696
        %v4052 = vmul.f32 %v4050, %v2697
        %4055 = vrot.lane.b32.xlu0 %v4051, 123
        %v4056 = vpop.permute.xlu0 %4055
        %4057 = vrot.lane.b32.xlu0 %v4052, 123
        %v4058 = vpop.permute.xlu0 %4057
        %v4061 = vadd.f32 %v4048, %v4056
        %v4062 = vadd.f32 %v4049, %v4058
        %s4063 = sld [smem:[#allocation13 + $0xc]]
        %s4064 = sld [smem:[#allocation13 + $0x3d]]
        %v4065 = vstv %s4063
        %v4066 = vmul.f32 %v4065, %v2693
        %v4067 = vmul.f32 %v4065, %v2694
        %v4068 = vmul.f32 %v4065, %v2695
        %v4072 = vrot.slane %v4066, 1
        %v4073 = vrot.slane %v4067, 1
        %v4074 = vsel %vm758, %v4072, %v4073
        %v4075 = vrot.slane %v4068, 1
        %v4076 = vsel %vm758, %v4073, %v4075
        %4077 = vrot.lane.b32.xlu0 %v4074, 123
        %v4078 = vpop.permute.xlu0 %4077
        %4079 = vrot.lane.b32.xlu0 %v4076, 123
        %v4080 = vpop.permute.xlu0 %4079
        %v4083 = vadd.f32 %v4061, %v4078
        %v4084 = vadd.f32 %v4062, %v4080
        %v4085 = vstv %s4064
        %v4086 = vmul.f32 %v4085, %v2696
        %v4087 = vmul.f32 %v4085, %v2697
        %v4088 = vmul.f32 %v4085, %v2698
        %v4092 = vrot.slane %v4086, 1
        %v4093 = vrot.slane %v4087, 1
        %v4094 = vsel %vm758, %v4092, %v4093
        %v4095 = vrot.slane %v4088, 1
        %v4096 = vsel %vm758, %v4093, %v4095
        %4097 = vrot.lane.b32.xlu0 %v4094, 123
        %v4098 = vpop.permute.xlu0 %4097
        %4099 = vrot.lane.b32.xlu0 %v4096, 123
        %v4100 = vpop.permute.xlu0 %4099
        %v4103 = vadd.f32 %v4083, %v4098
        %v4104 = vadd.f32 %v4084, %v4100
        %s4105 = sld [smem:[#allocation13 + $0x13]]
        %s4106 = sld [smem:[#allocation13 + $0x44]]
        %v4107 = vstv %s4105
        %v4108 = vmul.f32 %v4107, %v2693
        %v4109 = vmul.f32 %v4107, %v2694
        %v4110 = vmul.f32 %v4107, %v2695
        %v4114 = vrot.slane %v4108, 2
        %v4115 = vrot.slane %v4109, 2
        %v4116 = vsel %vm793, %v4114, %v4115
        %v4117 = vrot.slane %v4110, 2
        %v4118 = vsel %vm793, %v4115, %v4117
        %4119 = vrot.lane.b32.xlu0 %v4116, 123
        %v4120 = vpop.permute.xlu0 %4119
        %4121 = vrot.lane.b32.xlu0 %v4118, 123
        %v4122 = vpop.permute.xlu0 %4121
        %v4125 = vadd.f32 %v4103, %v4120
        %v4126 = vadd.f32 %v4104, %v4122
        %v4127 = vstv %s4106
        %v4128 = vmul.f32 %v4127, %v2696
        %v4129 = vmul.f32 %v4127, %v2697
        %v4130 = vmul.f32 %v4127, %v2698
        %v4134 = vrot.slane %v4128, 2
        %v4135 = vrot.slane %v4129, 2
        %v4136 = vsel %vm793, %v4134, %v4135
        %v4137 = vrot.slane %v4130, 2
        %v4138 = vsel %vm793, %v4135, %v4137
        %4139 = vrot.lane.b32.xlu0 %v4136, 123
        %v4140 = vpop.permute.xlu0 %4139
        %4141 = vrot.lane.b32.xlu0 %v4138, 123
        %v4142 = vpop.permute.xlu0 %4141
        %v4145 = vadd.f32 %v4125, %v4140
        %v4146 = vadd.f32 %v4126, %v4142
        %s4147 = sld [smem:[#allocation13 + $0x1a]]
        %s4148 = sld [smem:[#allocation13 + $0x4b]]
        %v4149 = vstv %s4147
        %v4150 = vmul.f32 %v4149, %v2693
        %v4151 = vmul.f32 %v4149, %v2694
        %v4152 = vmul.f32 %v4149, %v2695
        %v4156 = vrot.slane %v4150, 3
        %v4157 = vrot.slane %v4151, 3
        %v4158 = vsel %vm828, %v4156, %v4157
        %v4159 = vrot.slane %v4152, 3
        %v4160 = vsel %vm828, %v4157, %v4159
        %4161 = vrot.lane.b32.xlu0 %v4158, 123
        %v4162 = vpop.permute.xlu0 %4161
        %4163 = vrot.lane.b32.xlu0 %v4160, 123
        %v4164 = vpop.permute.xlu0 %4163
        %v4167 = vadd.f32 %v4145, %v4162
        %v4168 = vadd.f32 %v4146, %v4164
        %v4169 = vstv %s4148
        %v4170 = vmul.f32 %v4169, %v2696
        %v4171 = vmul.f32 %v4169, %v2697
        %v4172 = vmul.f32 %v4169, %v2698
        %v4176 = vrot.slane %v4170, 3
        %v4177 = vrot.slane %v4171, 3
        %v4178 = vsel %vm828, %v4176, %v4177
        %v4179 = vrot.slane %v4172, 3
        %v4180 = vsel %vm828, %v4177, %v4179
        %4181 = vrot.lane.b32.xlu0 %v4178, 123
        %v4182 = vpop.permute.xlu0 %4181
        %4183 = vrot.lane.b32.xlu0 %v4180, 123
        %v4184 = vpop.permute.xlu0 %4183
        %v4187 = vadd.f32 %v4167, %v4182
        %v4188 = vadd.f32 %v4168, %v4184
        %s4189 = sld [smem:[#allocation13 + $0x21]]
        %s4190 = sld [smem:[#allocation13 + $0x52]]
        %v4191 = vstv %s4189
        %v4192 = vmul.f32 %v4191, %v2693
        %v4193 = vmul.f32 %v4191, %v2694
        %v4194 = vmul.f32 %v4191, %v2695
        %v4198 = vrot.slane %v4192, 4
        %v4199 = vrot.slane %v4193, 4
        %v4200 = vsel %vm863, %v4198, %v4199
        %v4201 = vrot.slane %v4194, 4
        %v4202 = vsel %vm863, %v4199, %v4201
        %4203 = vrot.lane.b32.xlu0 %v4200, 123
        %v4204 = vpop.permute.xlu0 %4203
        %4205 = vrot.lane.b32.xlu0 %v4202, 123
        %v4206 = vpop.permute.xlu0 %4205
        %v4209 = vadd.f32 %v4187, %v4204
        %v4210 = vadd.f32 %v4188, %v4206
        %v4211 = vstv %s4190
        %v4212 = vmul.f32 %v4211, %v2696
        %v4213 = vmul.f32 %v4211, %v2697
        %v4214 = vmul.f32 %v4211, %v2698
        %v4218 = vrot.slane %v4212, 4
        %v4219 = vrot.slane %v4213, 4
        %v4220 = vsel %vm863, %v4218, %v4219
        %v4221 = vrot.slane %v4214, 4
        %v4222 = vsel %vm863, %v4219, %v4221
        %4223 = vrot.lane.b32.xlu0 %v4220, 123
        %v4224 = vpop.permute.xlu0 %4223
        %4225 = vrot.lane.b32.xlu0 %v4222, 123
        %v4226 = vpop.permute.xlu0 %4225
        %v4229 = vadd.f32 %v4209, %v4224
        %v4230 = vadd.f32 %v4210, %v4226
        %s4231 = sld [smem:[#allocation13 + $0x28]]
        %s4232 = sld [smem:[#allocation13 + $0x59]]
        %v4233 = vstv %s4231
        %v4234 = vmul.f32 %v4233, %v2693
        %v4235 = vmul.f32 %v4233, %v2694
        %v4236 = vmul.f32 %v4233, %v2695
        %v4240 = vrot.slane %v4234, 5
        %v4241 = vrot.slane %v4235, 5
        %v4242 = vsel %vm898, %v4240, %v4241
        %v4243 = vrot.slane %v4236, 5
        %v4244 = vsel %vm898, %v4241, %v4243
        %4245 = vrot.lane.b32.xlu0 %v4242, 123
        %v4246 = vpop.permute.xlu0 %4245
        %4247 = vrot.lane.b32.xlu0 %v4244, 123
        %v4248 = vpop.permute.xlu0 %4247
        %v4251 = vadd.f32 %v4229, %v4246
        %v4252 = vadd.f32 %v4230, %v4248
        %v4253 = vstv %s4232
        %v4254 = vmul.f32 %v4253, %v2696
        %v4255 = vmul.f32 %v4253, %v2697
        %v4256 = vmul.f32 %v4253, %v2698
        %v4260 = vrot.slane %v4254, 5
        %v4261 = vrot.slane %v4255, 5
        %v4262 = vsel %vm898, %v4260, %v4261
        %v4263 = vrot.slane %v4256, 5
        %v4264 = vsel %vm898, %v4261, %v4263
        %4265 = vrot.lane.b32.xlu0 %v4262, 123
        %v4266 = vpop.permute.xlu0 %4265
        %4267 = vrot.lane.b32.xlu0 %v4264, 123
        %v4268 = vpop.permute.xlu0 %4267
        %v4271 = vadd.f32 %v4251, %v4266
        %v4272 = vadd.f32 %v4252, %v4268
        %s4273 = sld [smem:[#allocation13 + $0x2f]]
        %s4274 = sld [smem:[#allocation13 + $0x60]]
        %v4275 = vstv %s4273
        %v4276 = vmul.f32 %v4275, %v2693
        %v4277 = vmul.f32 %v4275, %v2694
        %v4278 = vmul.f32 %v4275, %v2695
        %v4282 = vrot.slane %v4276, 6
        %v4283 = vrot.slane %v4277, 6
        %v4284 = vsel %vm933, %v4282, %v4283
        %v4285 = vrot.slane %v4278, 6
        %v4286 = vsel %vm933, %v4283, %v4285
        %4287 = vrot.lane.b32.xlu0 %v4284, 123
        %v4288 = vpop.permute.xlu0 %4287
        %4289 = vrot.lane.b32.xlu0 %v4286, 123
        %v4290 = vpop.permute.xlu0 %4289
        %v4293 = vadd.f32 %v4271, %v4288
        %v4294 = vadd.f32 %v4272, %v4290
        %v4295 = vstv %s4274
        %v4296 = vmul.f32 %v4295, %v2696
        %v4297 = vmul.f32 %v4295, %v2697
        %v4298 = vmul.f32 %v4295, %v2698
        %v4302 = vrot.slane %v4296, 6
        %v4303 = vrot.slane %v4297, 6
        %v4304 = vsel %vm933, %v4302, %v4303
        %v4305 = vrot.slane %v4298, 6
        %v4306 = vsel %vm933, %v4303, %v4305
        %4307 = vrot.lane.b32.xlu0 %v4304, 123
        %v4308 = vpop.permute.xlu0 %4307
        %4309 = vrot.lane.b32.xlu0 %v4306, 123
        %v4310 = vpop.permute.xlu0 %4309
        %v4313 = vadd.f32 %v4293, %v4308
        %v4314 = vadd.f32 %v4294, %v4310
        %s4315 = sld [smem:[#allocation13 + $0x6]]
        %s4316 = sld [smem:[#allocation13 + $0x37]]
        %v4317 = vstv %s4315
        %v4318 = vmul.f32 %v4317, %v2693
        %v4319 = vmul.f32 %v4317, %v2694
        %4322 = vrot.lane.b32.xlu0 %v4318, 122
        %v4323 = vpop.permute.xlu0 %4322
        %4324 = vrot.lane.b32.xlu0 %v4319, 122
        %v4325 = vpop.permute.xlu0 %4324
        %v4328 = vadd.f32 %v4313, %v4323
        %v4329 = vadd.f32 %v4314, %v4325
        %v4330 = vstv %s4316
        %v4331 = vmul.f32 %v4330, %v2696
        %v4332 = vmul.f32 %v4330, %v2697
        %4335 = vrot.lane.b32.xlu0 %v4331, 122
        %v4336 = vpop.permute.xlu0 %4335
        %4337 = vrot.lane.b32.xlu0 %v4332, 122
        %v4338 = vpop.permute.xlu0 %4337
        %v4341 = vadd.f32 %v4328, %v4336
        %v4342 = vadd.f32 %v4329, %v4338
        %s4343 = sld [smem:[#allocation13 + $0xd]]
        %s4344 = sld [smem:[#allocation13 + $0x3e]]
        %v4345 = vstv %s4343
        %v4346 = vmul.f32 %v4345, %v2693
        %v4347 = vmul.f32 %v4345, %v2694
        %v4348 = vmul.f32 %v4345, %v2695
        %v4352 = vrot.slane %v4346, 1
        %v4353 = vrot.slane %v4347, 1
        %v4354 = vsel %vm758, %v4352, %v4353
        %v4355 = vrot.slane %v4348, 1
        %v4356 = vsel %vm758, %v4353, %v4355
        %4357 = vrot.lane.b32.xlu0 %v4354, 122
        %v4358 = vpop.permute.xlu0 %4357
        %4359 = vrot.lane.b32.xlu0 %v4356, 122
        %v4360 = vpop.permute.xlu0 %4359
        %v4363 = vadd.f32 %v4341, %v4358
        %v4364 = vadd.f32 %v4342, %v4360
        %v4365 = vstv %s4344
        %v4366 = vmul.f32 %v4365, %v2696
        %v4367 = vmul.f32 %v4365, %v2697
        %v4368 = vmul.f32 %v4365, %v2698
        %v4372 = vrot.slane %v4366, 1
        %v4373 = vrot.slane %v4367, 1
        %v4374 = vsel %vm758, %v4372, %v4373
        %v4375 = vrot.slane %v4368, 1
        %v4376 = vsel %vm758, %v4373, %v4375
        %4377 = vrot.lane.b32.xlu0 %v4374, 122
        %v4378 = vpop.permute.xlu0 %4377
        %4379 = vrot.lane.b32.xlu0 %v4376, 122
        %v4380 = vpop.permute.xlu0 %4379
        %v4383 = vadd.f32 %v4363, %v4378
        %v4384 = vadd.f32 %v4364, %v4380
        %s4385 = sld [smem:[#allocation13 + $0x14]]
        %s4386 = sld [smem:[#allocation13 + $0x45]]
        %v4387 = vstv %s4385
        %v4388 = vmul.f32 %v4387, %v2693
        %v4389 = vmul.f32 %v4387, %v2694
        %v4390 = vmul.f32 %v4387, %v2695
        %v4394 = vrot.slane %v4388, 2
        %v4395 = vrot.slane %v4389, 2
        %v4396 = vsel %vm793, %v4394, %v4395
        %v4397 = vrot.slane %v4390, 2
        %v4398 = vsel %vm793, %v4395, %v4397
        %4399 = vrot.lane.b32.xlu0 %v4396, 122
        %v4400 = vpop.permute.xlu0 %4399
        %4401 = vrot.lane.b32.xlu0 %v4398, 122
        %v4402 = vpop.permute.xlu0 %4401
        %v4405 = vadd.f32 %v4383, %v4400
        %v4406 = vadd.f32 %v4384, %v4402
        %v4407 = vstv %s4386
        %v4408 = vmul.f32 %v4407, %v2696
        %v4409 = vmul.f32 %v4407, %v2697
        %v4410 = vmul.f32 %v4407, %v2698
        %v4414 = vrot.slane %v4408, 2
        %v4415 = vrot.slane %v4409, 2
        %v4416 = vsel %vm793, %v4414, %v4415
        %v4417 = vrot.slane %v4410, 2
        %v4418 = vsel %vm793, %v4415, %v4417
        %4419 = vrot.lane.b32.xlu0 %v4416, 122
        %v4420 = vpop.permute.xlu0 %4419
        %4421 = vrot.lane.b32.xlu0 %v4418, 122
        %v4422 = vpop.permute.xlu0 %4421
        %v4425 = vadd.f32 %v4405, %v4420
        %v4426 = vadd.f32 %v4406, %v4422
        %s4427 = sld [smem:[#allocation13 + $0x1b]]
        %s4428 = sld [smem:[#allocation13 + $0x4c]]
        %v4429 = vstv %s4427
        %v4430 = vmul.f32 %v4429, %v2693
        %v4431 = vmul.f32 %v4429, %v2694
        %v4432 = vmul.f32 %v4429, %v2695
        %v4436 = vrot.slane %v4430, 3
        %v4437 = vrot.slane %v4431, 3
        %v4438 = vsel %vm828, %v4436, %v4437
        %v4439 = vrot.slane %v4432, 3
        %v4440 = vsel %vm828, %v4437, %v4439
        %4441 = vrot.lane.b32.xlu0 %v4438, 122
        %v4442 = vpop.permute.xlu0 %4441
        %4443 = vrot.lane.b32.xlu0 %v4440, 122
        %v4444 = vpop.permute.xlu0 %4443
        %v4447 = vadd.f32 %v4425, %v4442
        %v4448 = vadd.f32 %v4426, %v4444
        %v4449 = vstv %s4428
        %v4450 = vmul.f32 %v4449, %v2696
        %v4451 = vmul.f32 %v4449, %v2697
        %v4452 = vmul.f32 %v4449, %v2698
        %v4456 = vrot.slane %v4450, 3
        %v4457 = vrot.slane %v4451, 3
        %v4458 = vsel %vm828, %v4456, %v4457
        %v4459 = vrot.slane %v4452, 3
        %v4460 = vsel %vm828, %v4457, %v4459
        %4461 = vrot.lane.b32.xlu0 %v4458, 122
        %v4462 = vpop.permute.xlu0 %4461
        %4463 = vrot.lane.b32.xlu0 %v4460, 122
        %v4464 = vpop.permute.xlu0 %4463
        %v4467 = vadd.f32 %v4447, %v4462
        %v4468 = vadd.f32 %v4448, %v4464
        %s4469 = sld [smem:[#allocation13 + $0x22]]
        %s4470 = sld [smem:[#allocation13 + $0x53]]
        %v4471 = vstv %s4469
        %v4472 = vmul.f32 %v4471, %v2693
        %v4473 = vmul.f32 %v4471, %v2694
        %v4474 = vmul.f32 %v4471, %v2695
        %v4478 = vrot.slane %v4472, 4
        %v4479 = vrot.slane %v4473, 4
        %v4480 = vsel %vm863, %v4478, %v4479
        %v4481 = vrot.slane %v4474, 4
        %v4482 = vsel %vm863, %v4479, %v4481
        %4483 = vrot.lane.b32.xlu0 %v4480, 122
        %v4484 = vpop.permute.xlu0 %4483
        %4485 = vrot.lane.b32.xlu0 %v4482, 122
        %v4486 = vpop.permute.xlu0 %4485
        %v4489 = vadd.f32 %v4467, %v4484
        %v4490 = vadd.f32 %v4468, %v4486
        %v4491 = vstv %s4470
        %v4492 = vmul.f32 %v4491, %v2696
        %v4493 = vmul.f32 %v4491, %v2697
        %v4494 = vmul.f32 %v4491, %v2698
        %v4498 = vrot.slane %v4492, 4
        %v4499 = vrot.slane %v4493, 4
        %v4500 = vsel %vm863, %v4498, %v4499
        %v4501 = vrot.slane %v4494, 4
        %v4502 = vsel %vm863, %v4499, %v4501
        %4503 = vrot.lane.b32.xlu0 %v4500, 122
        %v4504 = vpop.permute.xlu0 %4503
        %4505 = vrot.lane.b32.xlu0 %v4502, 122
        %v4506 = vpop.permute.xlu0 %4505
        %v4509 = vadd.f32 %v4489, %v4504
        %v4510 = vadd.f32 %v4490, %v4506
        %s4511 = sld [smem:[#allocation13 + $0x29]]
        %s4512 = sld [smem:[#allocation13 + $0x5a]]
        %v4513 = vstv %s4511
        %v4514 = vmul.f32 %v4513, %v2693
        %v4515 = vmul.f32 %v4513, %v2694
        %v4516 = vmul.f32 %v4513, %v2695
        %v4520 = vrot.slane %v4514, 5
        %v4521 = vrot.slane %v4515, 5
        %v4522 = vsel %vm898, %v4520, %v4521
        %v4523 = vrot.slane %v4516, 5
        %v4524 = vsel %vm898, %v4521, %v4523
        %4525 = vrot.lane.b32.xlu0 %v4522, 122
        %v4526 = vpop.permute.xlu0 %4525
        %4527 = vrot.lane.b32.xlu0 %v4524, 122
        %v4528 = vpop.permute.xlu0 %4527
        %v4531 = vadd.f32 %v4509, %v4526
        %v4532 = vadd.f32 %v4510, %v4528
        %v4533 = vstv %s4512
        %v4534 = vmul.f32 %v4533, %v2696
        %v4535 = vmul.f32 %v4533, %v2697
        %v4536 = vmul.f32 %v4533, %v2698
        %v4540 = vrot.slane %v4534, 5
        %v4541 = vrot.slane %v4535, 5
        %v4542 = vsel %vm898, %v4540, %v4541
        %v4543 = vrot.slane %v4536, 5
        %v4544 = vsel %vm898, %v4541, %v4543
        %4545 = vrot.lane.b32.xlu0 %v4542, 122
        %v4546 = vpop.permute.xlu0 %4545
        %4547 = vrot.lane.b32.xlu0 %v4544, 122
        %v4548 = vpop.permute.xlu0 %4547
        %v4551 = vadd.f32 %v4531, %v4546
        %v4552 = vadd.f32 %v4532, %v4548
        %s4553 = sld [smem:[#allocation13 + $0x30]]
        %s4554 = sld [smem:[#allocation13 + $0x61]]
        %v4555 = vstv %s4553
        %v4556 = vmul.f32 %v4555, %v2693
        %v4557 = vmul.f32 %v4555, %v2694
        %v4558 = vmul.f32 %v4555, %v2695
        %v4562 = vrot.slane %v4556, 6
        %v4563 = vrot.slane %v4557, 6
        %v4564 = vsel %vm933, %v4562, %v4563
        %v4565 = vrot.slane %v4558, 6
        %v4566 = vsel %vm933, %v4563, %v4565
        %4567 = vrot.lane.b32.xlu0 %v4564, 122
        %v4568 = vpop.permute.xlu0 %4567
        %4569 = vrot.lane.b32.xlu0 %v4566, 122
        %v4570 = vpop.permute.xlu0 %4569
        %v4573 = vadd.f32 %v4551, %v4568
        %v4574 = vadd.f32 %v4552, %v4570
        %v4575 = vstv %s4554
        %v4576 = vmul.f32 %v4575, %v2696
        %v4577 = vmul.f32 %v4575, %v2697
        %v4578 = vmul.f32 %v4575, %v2698
        %v4582 = vrot.slane %v4576, 6
        %v4583 = vrot.slane %v4577, 6
        %v4584 = vsel %vm933, %v4582, %v4583
        %v4585 = vrot.slane %v4578, 6
        %v4586 = vsel %vm933, %v4583, %v4585
        %4587 = vrot.lane.b32.xlu0 %v4584, 122
        %v4588 = vpop.permute.xlu0 %4587
        %4589 = vrot.lane.b32.xlu0 %v4586, 122
        %v4590 = vpop.permute.xlu0 %4589
        %v4593 = vadd.f32 %v4573, %v4588
        %v4594 = vadd.f32 %v4574, %v4590
        %v4595 = vmax.f32 %v4593, 0.0
        %v4596 = vmax.f32 %v4594, 0.0
        %v4597 = vxor.u32 %v4595, 2147483648
        %v4598 = vxor.u32 %v4596, 2147483648
        %v4599 = vmul.f32 %v4597, 1.442695
        %v4600 = vpow.pop %v4599
        %v4601 = vmul.f32 %v4598, 1.442695
        %v4602 = vpow.pop %v4601
        %v4603 = vadd.f32 %v4600, 1.0
        %v4604 = vadd.f32 %v4602, 1.0
        %v4605 = vrcp.pop %v4603
        %v4606 = vmul.f32 1.0, %v4605
        %v4607 = vrcp.pop %v4604
        %v4608 = vmul.f32 1.0, %v4607
        %4609 = vst.msk [vmem:[#allocation6] sm:$0x7] %vm2653, 0.0
        %4610 = vst.msk [vmem:[#allocation6 + $0x13] sm:$0x7] %vm2653, 0.0
        %4611 = vst.msk [vmem:[#allocation6] sm:$0xff] %vm692, 0.0
        %4612 = vst.msk [vmem:[#allocation6 + $0x8] sm:$0xff] %vm692, 0.0
        %4613 = vst.msk [vmem:[#allocation6 + $0x10] sm:$0x3f] %vm695, 0.0
        %4614 = vst.msk [vmem:[#allocation6] sm:$0xff] %vm2659, 0.0
        %4615 = vst.msk [vmem:[#allocation6 + $0x8] sm:$0xff] %vm2659, 0.0
        %4616 = vst.msk [vmem:[#allocation6 + $0x10] sm:$0x3f] %vm2662, 0.0
        %4619 = vrot.lane.b32.xlu0 %v593, 3
        %v4620 = vpop.permute.xlu0 %4619
        %4621 = vrot.lane.b32.xlu0 %v594, 3
        %v4622 = vpop.permute.xlu0 %4621
        %4625 = vst.msk [vmem:[#allocation6 + $0x3] sm:$0xff] %vm2672, %v4620
        %4626 = vst.msk [vmem:[#allocation6 + $0xb] sm:$0xff] %vm2672, %v4622
        %4627 = vst.msk [vmem:[#allocation7] sm:$0x7] %vm2653, 0.0
        %4628 = vst.msk [vmem:[#allocation7 + $0x13] sm:$0x7] %vm2653, 0.0
        %4629 = vst.msk [vmem:[#allocation7] sm:$0xff] %vm692, 0.0
        %4630 = vst.msk [vmem:[#allocation7 + $0x8] sm:$0xff] %vm692, 0.0
        %4631 = vst.msk [vmem:[#allocation7 + $0x10] sm:$0x3f] %vm695, 0.0
        %4632 = vst.msk [vmem:[#allocation7] sm:$0xff] %vm2659, 0.0
        %4633 = vst.msk [vmem:[#allocation7 + $0x8] sm:$0xff] %vm2659, 0.0
        %4634 = vst.msk [vmem:[#allocation7 + $0x10] sm:$0x3f] %vm2662, 0.0
        %4637 = vrot.lane.b32.xlu0 %v673, 3
        %v4638 = vpop.permute.xlu0 %4637
        %4639 = vrot.lane.b32.xlu0 %v674, 3
        %v4640 = vpop.permute.xlu0 %4639
        %4643 = vst.msk [vmem:[#allocation7 + $0x3] sm:$0xff] %vm2672, %v4638
        %4644 = vst.msk [vmem:[#allocation7 + $0xb] sm:$0xff] %vm2672, %v4640
        %v4645 = vld [vmem:[#allocation6] sm:$0xff]
        %v4646 = vld [vmem:[#allocation6 + $0x8] sm:$0xff]
        %v4647 = vld [vmem:[#allocation6 + $0x10] sm:$0x3f]
        %v4648 = vld [vmem:[#allocation7] sm:$0xff]
        %v4649 = vld [vmem:[#allocation7 + $0x8] sm:$0xff]
        %v4650 = vld [vmem:[#allocation7 + $0x10] sm:$0x3f]
        %s4651 = sld [smem:[#allocation15]]
        %s4652 = sld [smem:[#allocation15 + $0x31]]
        %v4653 = vstv %s4651
        %v4654 = vmul.f32 %v4653, %v4645
        %v4655 = vmul.f32 %v4653, %v4646
        %v4656 = vadd.f32 %v4654, 0.0
        %v4657 = vadd.f32 %v4655, 0.0
        %v4658 = vstv %s4652
        %v4659 = vmul.f32 %v4658, %v4648
        %v4660 = vmul.f32 %v4658, %v4649
        %v4661 = vadd.f32 %v4656, %v4659
        %v4662 = vadd.f32 %v4657, %v4660
        %s4663 = sld [smem:[#allocation15 + $0x7]]
        %s4664 = sld [smem:[#allocation15 + $0x38]]
        %v4665 = vstv %s4663
        %v4666 = vmul.f32 %v4665, %v4645
        %v4667 = vmul.f32 %v4665, %v4646
        %v4668 = vmul.f32 %v4665, %v4647
        %v4672 = vrot.slane %v4666, 1
        %v4673 = vrot.slane %v4667, 1
        %v4674 = vsel %vm758, %v4672, %v4673
        %v4675 = vrot.slane %v4668, 1
        %v4676 = vsel %vm758, %v4673, %v4675
        %v4679 = vadd.f32 %v4661, %v4674
        %v4680 = vadd.f32 %v4662, %v4676
        %v4681 = vstv %s4664
        %v4682 = vmul.f32 %v4681, %v4648
        %v4683 = vmul.f32 %v4681, %v4649
        %v4684 = vmul.f32 %v4681, %v4650
        %v4688 = vrot.slane %v4682, 1
        %v4689 = vrot.slane %v4683, 1
        %v4690 = vsel %vm758, %v4688, %v4689
        %v4691 = vrot.slane %v4684, 1
        %v4692 = vsel %vm758, %v4689, %v4691
        %v4695 = vadd.f32 %v4679, %v4690
        %v4696 = vadd.f32 %v4680, %v4692
        %s4697 = sld [smem:[#allocation15 + $0xe]]
        %s4698 = sld [smem:[#allocation15 + $0x3f]]
        %v4699 = vstv %s4697
        %v4700 = vmul.f32 %v4699, %v4645
        %v4701 = vmul.f32 %v4699, %v4646
        %v4702 = vmul.f32 %v4699, %v4647
        %v4706 = vrot.slane %v4700, 2
        %v4707 = vrot.slane %v4701, 2
        %v4708 = vsel %vm793, %v4706, %v4707
        %v4709 = vrot.slane %v4702, 2
        %v4710 = vsel %vm793, %v4707, %v4709
        %v4713 = vadd.f32 %v4695, %v4708
        %v4714 = vadd.f32 %v4696, %v4710
        %v4715 = vstv %s4698
        %v4716 = vmul.f32 %v4715, %v4648
        %v4717 = vmul.f32 %v4715, %v4649
        %v4718 = vmul.f32 %v4715, %v4650
        %v4722 = vrot.slane %v4716, 2
        %v4723 = vrot.slane %v4717, 2
        %v4724 = vsel %vm793, %v4722, %v4723
        %v4725 = vrot.slane %v4718, 2
        %v4726 = vsel %vm793, %v4723, %v4725
        %v4729 = vadd.f32 %v4713, %v4724
        %v4730 = vadd.f32 %v4714, %v4726
        %s4731 = sld [smem:[#allocation15 + $0x15]]
        %s4732 = sld [smem:[#allocation15 + $0x46]]
        %v4733 = vstv %s4731
        %v4734 = vmul.f32 %v4733, %v4645
        %v4735 = vmul.f32 %v4733, %v4646
        %v4736 = vmul.f32 %v4733, %v4647
        %v4740 = vrot.slane %v4734, 3
        %v4741 = vrot.slane %v4735, 3
        %v4742 = vsel %vm828, %v4740, %v4741
        %v4743 = vrot.slane %v4736, 3
        %v4744 = vsel %vm828, %v4741, %v4743
        %v4747 = vadd.f32 %v4729, %v4742
        %v4748 = vadd.f32 %v4730, %v4744
        %v4749 = vstv %s4732
        %v4750 = vmul.f32 %v4749, %v4648
        %v4751 = vmul.f32 %v4749, %v4649
        %v4752 = vmul.f32 %v4749, %v4650
        %v4756 = vrot.slane %v4750, 3
        %v4757 = vrot.slane %v4751, 3
        %v4758 = vsel %vm828, %v4756, %v4757
        %v4759 = vrot.slane %v4752, 3
        %v4760 = vsel %vm828, %v4757, %v4759
        %v4763 = vadd.f32 %v4747, %v4758
        %v4764 = vadd.f32 %v4748, %v4760
        %s4765 = sld [smem:[#allocation15 + $0x1c]]
        %s4766 = sld [smem:[#allocation15 + $0x4d]]
        %v4767 = vstv %s4765
        %v4768 = vmul.f32 %v4767, %v4645
        %v4769 = vmul.f32 %v4767, %v4646
        %v4770 = vmul.f32 %v4767, %v4647
        %v4774 = vrot.slane %v4768, 4
        %v4775 = vrot.slane %v4769, 4
        %v4776 = vsel %vm863, %v4774, %v4775
        %v4777 = vrot.slane %v4770, 4
        %v4778 = vsel %vm863, %v4775, %v4777
        %v4781 = vadd.f32 %v4763, %v4776
        %v4782 = vadd.f32 %v4764, %v4778
        %v4783 = vstv %s4766
        %v4784 = vmul.f32 %v4783, %v4648
        %v4785 = vmul.f32 %v4783, %v4649
        %v4786 = vmul.f32 %v4783, %v4650
        %v4790 = vrot.slane %v4784, 4
        %v4791 = vrot.slane %v4785, 4
        %v4792 = vsel %vm863, %v4790, %v4791
        %v4793 = vrot.slane %v4786, 4
        %v4794 = vsel %vm863, %v4791, %v4793
        %v4797 = vadd.f32 %v4781, %v4792
        %v4798 = vadd.f32 %v4782, %v4794
        %s4799 = sld [smem:[#allocation15 + $0x23]]
        %s4800 = sld [smem:[#allocation15 + $0x54]]
        %v4801 = vstv %s4799
        %v4802 = vmul.f32 %v4801, %v4645
        %v4803 = vmul.f32 %v4801, %v4646
        %v4804 = vmul.f32 %v4801, %v4647
        %v4808 = vrot.slane %v4802, 5
        %v4809 = vrot.slane %v4803, 5
        %v4810 = vsel %vm898, %v4808, %v4809
        %v4811 = vrot.slane %v4804, 5
        %v4812 = vsel %vm898, %v4809, %v4811
        %v4815 = vadd.f32 %v4797, %v4810
        %v4816 = vadd.f32 %v4798, %v4812
        %v4817 = vstv %s4800
        %v4818 = vmul.f32 %v4817, %v4648
        %v4819 = vmul.f32 %v4817, %v4649
        %v4820 = vmul.f32 %v4817, %v4650
        %v4824 = vrot.slane %v4818, 5
        %v4825 = vrot.slane %v4819, 5
        %v4826 = vsel %vm898, %v4824, %v4825
        %v4827 = vrot.slane %v4820, 5
        %v4828 = vsel %vm898, %v4825, %v4827
        %v4831 = vadd.f32 %v4815, %v4826
        %v4832 = vadd.f32 %v4816, %v4828
        %s4833 = sld [smem:[#allocation15 + $0x2a]]
        %s4834 = sld [smem:[#allocation15 + $0x5b]]
        %v4835 = vstv %s4833
        %v4836 = vmul.f32 %v4835, %v4645
        %v4837 = vmul.f32 %v4835, %v4646
        %v4838 = vmul.f32 %v4835, %v4647
        %v4842 = vrot.slane %v4836, 6
        %v4843 = vrot.slane %v4837, 6
        %v4844 = vsel %vm933, %v4842, %v4843
        %v4845 = vrot.slane %v4838, 6
        %v4846 = vsel %vm933, %v4843, %v4845
        %v4849 = vadd.f32 %v4831, %v4844
        %v4850 = vadd.f32 %v4832, %v4846
        %v4851 = vstv %s4834
        %v4852 = vmul.f32 %v4851, %v4648
        %v4853 = vmul.f32 %v4851, %v4649
        %v4854 = vmul.f32 %v4851, %v4650
        %v4858 = vrot.slane %v4852, 6
        %v4859 = vrot.slane %v4853, 6
        %v4860 = vsel %vm933, %v4858, %v4859
        %v4861 = vrot.slane %v4854, 6
        %v4862 = vsel %vm933, %v4859, %v4861
        %v4865 = vadd.f32 %v4849, %v4860
        %v4866 = vadd.f32 %v4850, %v4862
        %s4867 = sld [smem:[#allocation15 + $0x1]]
        %s4868 = sld [smem:[#allocation15 + $0x32]]
        %v4869 = vstv %s4867
        %v4870 = vmul.f32 %v4869, %v4645
        %v4871 = vmul.f32 %v4869, %v4646
        %4874 = vrot.lane.b32.xlu0 %v4870, 127
        %v4875 = vpop.permute.xlu0 %4874
        %4876 = vrot.lane.b32.xlu0 %v4871, 127
        %v4877 = vpop.permute.xlu0 %4876
        %v4880 = vadd.f32 %v4865, %v4875
        %v4881 = vadd.f32 %v4866, %v4877
        %v4882 = vstv %s4868
        %v4883 = vmul.f32 %v4882, %v4648
        %v4884 = vmul.f32 %v4882, %v4649
        %4887 = vrot.lane.b32.xlu0 %v4883, 127
        %v4888 = vpop.permute.xlu0 %4887
        %4889 = vrot.lane.b32.xlu0 %v4884, 127
        %v4890 = vpop.permute.xlu0 %4889
        %v4893 = vadd.f32 %v4880, %v4888
        %v4894 = vadd.f32 %v4881, %v4890
        %s4895 = sld [smem:[#allocation15 + $0x8]]
        %s4896 = sld [smem:[#allocation15 + $0x39]]
        %v4897 = vstv %s4895
        %v4898 = vmul.f32 %v4897, %v4645
        %v4899 = vmul.f32 %v4897, %v4646
        %v4900 = vmul.f32 %v4897, %v4647
        %v4904 = vrot.slane %v4898, 1
        %v4905 = vrot.slane %v4899, 1
        %v4906 = vsel %vm758, %v4904, %v4905
        %v4907 = vrot.slane %v4900, 1
        %v4908 = vsel %vm758, %v4905, %v4907
        %4909 = vrot.lane.b32.xlu0 %v4906, 127
        %v4910 = vpop.permute.xlu0 %4909
        %4911 = vrot.lane.b32.xlu0 %v4908, 127
        %v4912 = vpop.permute.xlu0 %4911
        %v4915 = vadd.f32 %v4893, %v4910
        %v4916 = vadd.f32 %v4894, %v4912
        %v4917 = vstv %s4896
        %v4918 = vmul.f32 %v4917, %v4648
        %v4919 = vmul.f32 %v4917, %v4649
        %v4920 = vmul.f32 %v4917, %v4650
        %v4924 = vrot.slane %v4918, 1
        %v4925 = vrot.slane %v4919, 1
        %v4926 = vsel %vm758, %v4924, %v4925
        %v4927 = vrot.slane %v4920, 1
        %v4928 = vsel %vm758, %v4925, %v4927
        %4929 = vrot.lane.b32.xlu0 %v4926, 127
        %v4930 = vpop.permute.xlu0 %4929
        %4931 = vrot.lane.b32.xlu0 %v4928, 127
        %v4932 = vpop.permute.xlu0 %4931
        %v4935 = vadd.f32 %v4915, %v4930
        %v4936 = vadd.f32 %v4916, %v4932
        %s4937 = sld [smem:[#allocation15 + $0xf]]
        %s4938 = sld [smem:[#allocation15 + $0x40]]
        %v4939 = vstv %s4937
        %v4940 = vmul.f32 %v4939, %v4645
        %v4941 = vmul.f32 %v4939, %v4646
        %v4942 = vmul.f32 %v4939, %v4647
        %v4946 = vrot.slane %v4940, 2
        %v4947 = vrot.slane %v4941, 2
        %v4948 = vsel %vm793, %v4946, %v4947
        %v4949 = vrot.slane %v4942, 2
        %v4950 = vsel %vm793, %v4947, %v4949
        %4951 = vrot.lane.b32.xlu0 %v4948, 127
        %v4952 = vpop.permute.xlu0 %4951
        %4953 = vrot.lane.b32.xlu0 %v4950, 127
        %v4954 = vpop.permute.xlu0 %4953
        %v4957 = vadd.f32 %v4935, %v4952
        %v4958 = vadd.f32 %v4936, %v4954
        %v4959 = vstv %s4938
        %v4960 = vmul.f32 %v4959, %v4648
        %v4961 = vmul.f32 %v4959, %v4649
        %v4962 = vmul.f32 %v4959, %v4650
        %v4966 = vrot.slane %v4960, 2
        %v4967 = vrot.slane %v4961, 2
        %v4968 = vsel %vm793, %v4966, %v4967
        %v4969 = vrot.slane %v4962, 2
        %v4970 = vsel %vm793, %v4967, %v4969
        %4971 = vrot.lane.b32.xlu0 %v4968, 127
        %v4972 = vpop.permute.xlu0 %4971
        %4973 = vrot.lane.b32.xlu0 %v4970, 127
        %v4974 = vpop.permute.xlu0 %4973
        %v4977 = vadd.f32 %v4957, %v4972
        %v4978 = vadd.f32 %v4958, %v4974
        %s4979 = sld [smem:[#allocation15 + $0x16]]
        %s4980 = sld [smem:[#allocation15 + $0x47]]
        %v4981 = vstv %s4979
        %v4982 = vmul.f32 %v4981, %v4645
        %v4983 = vmul.f32 %v4981, %v4646
        %v4984 = vmul.f32 %v4981, %v4647
        %v4988 = vrot.slane %v4982, 3
        %v4989 = vrot.slane %v4983, 3
        %v4990 = vsel %vm828, %v4988, %v4989
        %v4991 = vrot.slane %v4984, 3
        %v4992 = vsel %vm828, %v4989, %v4991
        %4993 = vrot.lane.b32.xlu0 %v4990, 127
        %v4994 = vpop.permute.xlu0 %4993
        %4995 = vrot.lane.b32.xlu0 %v4992, 127
        %v4996 = vpop.permute.xlu0 %4995
        %v4999 = vadd.f32 %v4977, %v4994
        %v5000 = vadd.f32 %v4978, %v4996
        %v5001 = vstv %s4980
        %v5002 = vmul.f32 %v5001, %v4648
        %v5003 = vmul.f32 %v5001, %v4649
        %v5004 = vmul.f32 %v5001, %v4650
        %v5008 = vrot.slane %v5002, 3
        %v5009 = vrot.slane %v5003, 3
        %v5010 = vsel %vm828, %v5008, %v5009
        %v5011 = vrot.slane %v5004, 3
        %v5012 = vsel %vm828, %v5009, %v5011
        %5013 = vrot.lane.b32.xlu0 %v5010, 127
        %v5014 = vpop.permute.xlu0 %5013
        %5015 = vrot.lane.b32.xlu0 %v5012, 127
        %v5016 = vpop.permute.xlu0 %5015
        %v5019 = vadd.f32 %v4999, %v5014
        %v5020 = vadd.f32 %v5000, %v5016
        %s5021 = sld [smem:[#allocation15 + $0x1d]]
        %s5022 = sld [smem:[#allocation15 + $0x4e]]
        %v5023 = vstv %s5021
        %v5024 = vmul.f32 %v5023, %v4645
        %v5025 = vmul.f32 %v5023, %v4646
        %v5026 = vmul.f32 %v5023, %v4647
        %v5030 = vrot.slane %v5024, 4
        %v5031 = vrot.slane %v5025, 4
        %v5032 = vsel %vm863, %v5030, %v5031
        %v5033 = vrot.slane %v5026, 4
        %v5034 = vsel %vm863, %v5031, %v5033
        %5035 = vrot.lane.b32.xlu0 %v5032, 127
        %v5036 = vpop.permute.xlu0 %5035
        %5037 = vrot.lane.b32.xlu0 %v5034, 127
        %v5038 = vpop.permute.xlu0 %5037
        %v5041 = vadd.f32 %v5019, %v5036
        %v5042 = vadd.f32 %v5020, %v5038
        %v5043 = vstv %s5022
        %v5044 = vmul.f32 %v5043, %v4648
        %v5045 = vmul.f32 %v5043, %v4649
        %v5046 = vmul.f32 %v5043, %v4650
        %v5050 = vrot.slane %v5044, 4
        %v5051 = vrot.slane %v5045, 4
        %v5052 = vsel %vm863, %v5050, %v5051
        %v5053 = vrot.slane %v5046, 4
        %v5054 = vsel %vm863, %v5051, %v5053
        %5055 = vrot.lane.b32.xlu0 %v5052, 127
        %v5056 = vpop.permute.xlu0 %5055
        %5057 = vrot.lane.b32.xlu0 %v5054, 127
        %v5058 = vpop.permute.xlu0 %5057
        %v5061 = vadd.f32 %v5041, %v5056
        %v5062 = vadd.f32 %v5042, %v5058
        %s5063 = sld [smem:[#allocation15 + $0x24]]
        %s5064 = sld [smem:[#allocation15 + $0x55]]
        %v5065 = vstv %s5063
        %v5066 = vmul.f32 %v5065, %v4645
        %v5067 = vmul.f32 %v5065, %v4646
        %v5068 = vmul.f32 %v5065, %v4647
        %v5072 = vrot.slane %v5066, 5
        %v5073 = vrot.slane %v5067, 5
        %v5074 = vsel %vm898, %v5072, %v5073
        %v5075 = vrot.slane %v5068, 5
        %v5076 = vsel %vm898, %v5073, %v5075
        %5077 = vrot.lane.b32.xlu0 %v5074, 127
        %v5078 = vpop.permute.xlu0 %5077
        %5079 = vrot.lane.b32.xlu0 %v5076, 127
        %v5080 = vpop.permute.xlu0 %5079
        %v5083 = vadd.f32 %v5061, %v5078
        %v5084 = vadd.f32 %v5062, %v5080
        %v5085 = vstv %s5064
        %v5086 = vmul.f32 %v5085, %v4648
        %v5087 = vmul.f32 %v5085, %v4649
        %v5088 = vmul.f32 %v5085, %v4650
        %v5092 = vrot.slane %v5086, 5
        %v5093 = vrot.slane %v5087, 5
        %v5094 = vsel %vm898, %v5092, %v5093
        %v5095 = vrot.slane %v5088, 5
        %v5096 = vsel %vm898, %v5093, %v5095
        %5097 = vrot.lane.b32.xlu0 %v5094, 127
        %v5098 = vpop.permute.xlu0 %5097
        %5099 = vrot.lane.b32.xlu0 %v5096, 127
        %v5100 = vpop.permute.xlu0 %5099
        %v5103 = vadd.f32 %v5083, %v5098
        %v5104 = vadd.f32 %v5084, %v5100
        %s5105 = sld [smem:[#allocation15 + $0x2b]]
        %s5106 = sld [smem:[#allocation15 + $0x5c]]
        %v5107 = vstv %s5105
        %v5108 = vmul.f32 %v5107, %v4645
        %v5109 = vmul.f32 %v5107, %v4646
        %v5110 = vmul.f32 %v5107, %v4647
        %v5114 = vrot.slane %v5108, 6
        %v5115 = vrot.slane %v5109, 6
        %v5116 = vsel %vm933, %v5114, %v5115
        %v5117 = vrot.slane %v5110, 6
        %v5118 = vsel %vm933, %v5115, %v5117
        %5119 = vrot.lane.b32.xlu0 %v5116, 127
        %v5120 = vpop.permute.xlu0 %5119
        %5121 = vrot.lane.b32.xlu0 %v5118, 127
        %v5122 = vpop.permute.xlu0 %5121
        %v5125 = vadd.f32 %v5103, %v5120
        %v5126 = vadd.f32 %v5104, %v5122
        %v5127 = vstv %s5106
        %v5128 = vmul.f32 %v5127, %v4648
        %v5129 = vmul.f32 %v5127, %v4649
        %v5130 = vmul.f32 %v5127, %v4650
        %v5134 = vrot.slane %v5128, 6
        %v5135 = vrot.slane %v5129, 6
        %v5136 = vsel %vm933, %v5134, %v5135
        %v5137 = vrot.slane %v5130, 6
        %v5138 = vsel %vm933, %v5135, %v5137
        %5139 = vrot.lane.b32.xlu0 %v5136, 127
        %v5140 = vpop.permute.xlu0 %5139
        %5141 = vrot.lane.b32.xlu0 %v5138, 127
        %v5142 = vpop.permute.xlu0 %5141
        %v5145 = vadd.f32 %v5125, %v5140
        %v5146 = vadd.f32 %v5126, %v5142
        %s5147 = sld [smem:[#allocation15 + $0x2]]
        %s5148 = sld [smem:[#allocation15 + $0x33]]
        %v5149 = vstv %s5147
        %v5150 = vmul.f32 %v5149, %v4645
        %v5151 = vmul.f32 %v5149, %v4646
        %5154 = vrot.lane.b32.xlu0 %v5150, 126
        %v5155 = vpop.permute.xlu0 %5154
        %5156 = vrot.lane.b32.xlu0 %v5151, 126
        %v5157 = vpop.permute.xlu0 %5156
        %v5160 = vadd.f32 %v5145, %v5155
        %v5161 = vadd.f32 %v5146, %v5157
        %v5162 = vstv %s5148
        %v5163 = vmul.f32 %v5162, %v4648
        %v5164 = vmul.f32 %v5162, %v4649
        %5167 = vrot.lane.b32.xlu0 %v5163, 126
        %v5168 = vpop.permute.xlu0 %5167
        %5169 = vrot.lane.b32.xlu0 %v5164, 126
        %v5170 = vpop.permute.xlu0 %5169
        %v5173 = vadd.f32 %v5160, %v5168
        %v5174 = vadd.f32 %v5161, %v5170
        %s5175 = sld [smem:[#allocation15 + $0x9]]
        %s5176 = sld [smem:[#allocation15 + $0x3a]]
        %v5177 = vstv %s5175
        %v5178 = vmul.f32 %v5177, %v4645
        %v5179 = vmul.f32 %v5177, %v4646
        %v5180 = vmul.f32 %v5177, %v4647
        %v5184 = vrot.slane %v5178, 1
        %v5185 = vrot.slane %v5179, 1
        %v5186 = vsel %vm758, %v5184, %v5185
        %v5187 = vrot.slane %v5180, 1
        %v5188 = vsel %vm758, %v5185, %v5187
        %5189 = vrot.lane.b32.xlu0 %v5186, 126
        %v5190 = vpop.permute.xlu0 %5189
        %5191 = vrot.lane.b32.xlu0 %v5188, 126
        %v5192 = vpop.permute.xlu0 %5191
        %v5195 = vadd.f32 %v5173, %v5190
        %v5196 = vadd.f32 %v5174, %v5192
        %v5197 = vstv %s5176
        %v5198 = vmul.f32 %v5197, %v4648
        %v5199 = vmul.f32 %v5197, %v4649
        %v5200 = vmul.f32 %v5197, %v4650
        %v5204 = vrot.slane %v5198, 1
        %v5205 = vrot.slane %v5199, 1
        %v5206 = vsel %vm758, %v5204, %v5205
        %v5207 = vrot.slane %v5200, 1
        %v5208 = vsel %vm758, %v5205, %v5207
        %5209 = vrot.lane.b32.xlu0 %v5206, 126
        %v5210 = vpop.permute.xlu0 %5209
        %5211 = vrot.lane.b32.xlu0 %v5208, 126
        %v5212 = vpop.permute.xlu0 %5211
        %v5215 = vadd.f32 %v5195, %v5210
        %v5216 = vadd.f32 %v5196, %v5212
        %s5217 = sld [smem:[#allocation15 + $0x10]]
        %s5218 = sld [smem:[#allocation15 + $0x41]]
        %v5219 = vstv %s5217
        %v5220 = vmul.f32 %v5219, %v4645
        %v5221 = vmul.f32 %v5219, %v4646
        %v5222 = vmul.f32 %v5219, %v4647
        %v5226 = vrot.slane %v5220, 2
        %v5227 = vrot.slane %v5221, 2
        %v5228 = vsel %vm793, %v5226, %v5227
        %v5229 = vrot.slane %v5222, 2
        %v5230 = vsel %vm793, %v5227, %v5229
        %5231 = vrot.lane.b32.xlu0 %v5228, 126
        %v5232 = vpop.permute.xlu0 %5231
        %5233 = vrot.lane.b32.xlu0 %v5230, 126
        %v5234 = vpop.permute.xlu0 %5233
        %v5237 = vadd.f32 %v5215, %v5232
        %v5238 = vadd.f32 %v5216, %v5234
        %v5239 = vstv %s5218
        %v5240 = vmul.f32 %v5239, %v4648
        %v5241 = vmul.f32 %v5239, %v4649
        %v5242 = vmul.f32 %v5239, %v4650
        %v5246 = vrot.slane %v5240, 2
        %v5247 = vrot.slane %v5241, 2
        %v5248 = vsel %vm793, %v5246, %v5247
        %v5249 = vrot.slane %v5242, 2
        %v5250 = vsel %vm793, %v5247, %v5249
        %5251 = vrot.lane.b32.xlu0 %v5248, 126
        %v5252 = vpop.permute.xlu0 %5251
        %5253 = vrot.lane.b32.xlu0 %v5250, 126
        %v5254 = vpop.permute.xlu0 %5253
        %v5257 = vadd.f32 %v5237, %v5252
        %v5258 = vadd.f32 %v5238, %v5254
        %s5259 = sld [smem:[#allocation15 + $0x17]]
        %s5260 = sld [smem:[#allocation15 + $0x48]]
        %v5261 = vstv %s5259
        %v5262 = vmul.f32 %v5261, %v4645
        %v5263 = vmul.f32 %v5261, %v4646
        %v5264 = vmul.f32 %v5261, %v4647
        %v5268 = vrot.slane %v5262, 3
        %v5269 = vrot.slane %v5263, 3
        %v5270 = vsel %vm828, %v5268, %v5269
        %v5271 = vrot.slane %v5264, 3
        %v5272 = vsel %vm828, %v5269, %v5271
        %5273 = vrot.lane.b32.xlu0 %v5270, 126
        %v5274 = vpop.permute.xlu0 %5273
        %5275 = vrot.lane.b32.xlu0 %v5272, 126
        %v5276 = vpop.permute.xlu0 %5275
        %v5279 = vadd.f32 %v5257, %v5274
        %v5280 = vadd.f32 %v5258, %v5276
        %v5281 = vstv %s5260
        %v5282 = vmul.f32 %v5281, %v4648
        %v5283 = vmul.f32 %v5281, %v4649
        %v5284 = vmul.f32 %v5281, %v4650
        %v5288 = vrot.slane %v5282, 3
        %v5289 = vrot.slane %v5283, 3
        %v5290 = vsel %vm828, %v5288, %v5289
        %v5291 = vrot.slane %v5284, 3
        %v5292 = vsel %vm828, %v5289, %v5291
        %5293 = vrot.lane.b32.xlu0 %v5290, 126
        %v5294 = vpop.permute.xlu0 %5293
        %5295 = vrot.lane.b32.xlu0 %v5292, 126
        %v5296 = vpop.permute.xlu0 %5295
        %v5299 = vadd.f32 %v5279, %v5294
        %v5300 = vadd.f32 %v5280, %v5296
        %s5301 = sld [smem:[#allocation15 + $0x1e]]
        %s5302 = sld [smem:[#allocation15 + $0x4f]]
        %v5303 = vstv %s5301
        %v5304 = vmul.f32 %v5303, %v4645
        %v5305 = vmul.f32 %v5303, %v4646
        %v5306 = vmul.f32 %v5303, %v4647
        %v5310 = vrot.slane %v5304, 4
        %v5311 = vrot.slane %v5305, 4
        %v5312 = vsel %vm863, %v5310, %v5311
        %v5313 = vrot.slane %v5306, 4
        %v5314 = vsel %vm863, %v5311, %v5313
        %5315 = vrot.lane.b32.xlu0 %v5312, 126
        %v5316 = vpop.permute.xlu0 %5315
        %5317 = vrot.lane.b32.xlu0 %v5314, 126
        %v5318 = vpop.permute.xlu0 %5317
        %v5321 = vadd.f32 %v5299, %v5316
        %v5322 = vadd.f32 %v5300, %v5318
        %v5323 = vstv %s5302
        %v5324 = vmul.f32 %v5323, %v4648
        %v5325 = vmul.f32 %v5323, %v4649
        %v5326 = vmul.f32 %v5323, %v4650
        %v5330 = vrot.slane %v5324, 4
        %v5331 = vrot.slane %v5325, 4
        %v5332 = vsel %vm863, %v5330, %v5331
        %v5333 = vrot.slane %v5326, 4
        %v5334 = vsel %vm863, %v5331, %v5333
        %5335 = vrot.lane.b32.xlu0 %v5332, 126
        %v5336 = vpop.permute.xlu0 %5335
        %5337 = vrot.lane.b32.xlu0 %v5334, 126
        %v5338 = vpop.permute.xlu0 %5337
        %v5341 = vadd.f32 %v5321, %v5336
        %v5342 = vadd.f32 %v5322, %v5338
        %s5343 = sld [smem:[#allocation15 + $0x25]]
        %s5344 = sld [smem:[#allocation15 + $0x56]]
        %v5345 = vstv %s5343
        %v5346 = vmul.f32 %v5345, %v4645
        %v5347 = vmul.f32 %v5345, %v4646
        %v5348 = vmul.f32 %v5345, %v4647
        %v5352 = vrot.slane %v5346, 5
        %v5353 = vrot.slane %v5347, 5
        %v5354 = vsel %vm898, %v5352, %v5353
        %v5355 = vrot.slane %v5348, 5
        %v5356 = vsel %vm898, %v5353, %v5355
        %5357 = vrot.lane.b32.xlu0 %v5354, 126
        %v5358 = vpop.permute.xlu0 %5357
        %5359 = vrot.lane.b32.xlu0 %v5356, 126
        %v5360 = vpop.permute.xlu0 %5359
        %v5363 = vadd.f32 %v5341, %v5358
        %v5364 = vadd.f32 %v5342, %v5360
        %v5365 = vstv %s5344
        %v5366 = vmul.f32 %v5365, %v4648
        %v5367 = vmul.f32 %v5365, %v4649
        %v5368 = vmul.f32 %v5365, %v4650
        %v5372 = vrot.slane %v5366, 5
        %v5373 = vrot.slane %v5367, 5
        %v5374 = vsel %vm898, %v5372, %v5373
        %v5375 = vrot.slane %v5368, 5
        %v5376 = vsel %vm898, %v5373, %v5375
        %5377 = vrot.lane.b32.xlu0 %v5374, 126
        %v5378 = vpop.permute.xlu0 %5377
        %5379 = vrot.lane.b32.xlu0 %v5376, 126
        %v5380 = vpop.permute.xlu0 %5379
        %v5383 = vadd.f32 %v5363, %v5378
        %v5384 = vadd.f32 %v5364, %v5380
        %s5385 = sld [smem:[#allocation15 + $0x2c]]
        %s5386 = sld [smem:[#allocation15 + $0x5d]]
        %v5387 = vstv %s5385
        %v5388 = vmul.f32 %v5387, %v4645
        %v5389 = vmul.f32 %v5387, %v4646
        %v5390 = vmul.f32 %v5387, %v4647
        %v5394 = vrot.slane %v5388, 6
        %v5395 = vrot.slane %v5389, 6
        %v5396 = vsel %vm933, %v5394, %v5395
        %v5397 = vrot.slane %v5390, 6
        %v5398 = vsel %vm933, %v5395, %v5397
        %5399 = vrot.lane.b32.xlu0 %v5396, 126
        %v5400 = vpop.permute.xlu0 %5399
        %5401 = vrot.lane.b32.xlu0 %v5398, 126
        %v5402 = vpop.permute.xlu0 %5401
        %v5405 = vadd.f32 %v5383, %v5400
        %v5406 = vadd.f32 %v5384, %v5402
        %v5407 = vstv %s5386
        %v5408 = vmul.f32 %v5407, %v4648
        %v5409 = vmul.f32 %v5407, %v4649
        %v5410 = vmul.f32 %v5407, %v4650
        %v5414 = vrot.slane %v5408, 6
        %v5415 = vrot.slane %v5409, 6
        %v5416 = vsel %vm933, %v5414, %v5415
        %v5417 = vrot.slane %v5410, 6
        %v5418 = vsel %vm933, %v5415, %v5417
        %5419 = vrot.lane.b32.xlu0 %v5416, 126
        %v5420 = vpop.permute.xlu0 %5419
        %5421 = vrot.lane.b32.xlu0 %v5418, 126
        %v5422 = vpop.permute.xlu0 %5421
        %v5425 = vadd.f32 %v5405, %v5420
        %v5426 = vadd.f32 %v5406, %v5422
        %s5427 = sld [smem:[#allocation15 + $0x3]]
        %s5428 = sld [smem:[#allocation15 + $0x34]]
        %v5429 = vstv %s5427
        %v5430 = vmul.f32 %v5429, %v4645
        %v5431 = vmul.f32 %v5429, %v4646
        %5434 = vrot.lane.b32.xlu0 %v5430, 125
        %v5435 = vpop.permute.xlu0 %5434
        %5436 = vrot.lane.b32.xlu0 %v5431, 125
        %v5437 = vpop.permute.xlu0 %5436
        %v5440 = vadd.f32 %v5425, %v5435
        %v5441 = vadd.f32 %v5426, %v5437
        %v5442 = vstv %s5428
        %v5443 = vmul.f32 %v5442, %v4648
        %v5444 = vmul.f32 %v5442, %v4649
        %5447 = vrot.lane.b32.xlu0 %v5443, 125
        %v5448 = vpop.permute.xlu0 %5447
        %5449 = vrot.lane.b32.xlu0 %v5444, 125
        %v5450 = vpop.permute.xlu0 %5449
        %v5453 = vadd.f32 %v5440, %v5448
        %v5454 = vadd.f32 %v5441, %v5450
        %s5455 = sld [smem:[#allocation15 + $0xa]]
        %s5456 = sld [smem:[#allocation15 + $0x3b]]
        %v5457 = vstv %s5455
        %v5458 = vmul.f32 %v5457, %v4645
        %v5459 = vmul.f32 %v5457, %v4646
        %v5460 = vmul.f32 %v5457, %v4647
        %v5464 = vrot.slane %v5458, 1
        %v5465 = vrot.slane %v5459, 1
        %v5466 = vsel %vm758, %v5464, %v5465
        %v5467 = vrot.slane %v5460, 1
        %v5468 = vsel %vm758, %v5465, %v5467
        %5469 = vrot.lane.b32.xlu0 %v5466, 125
        %v5470 = vpop.permute.xlu0 %5469
        %5471 = vrot.lane.b32.xlu0 %v5468, 125
        %v5472 = vpop.permute.xlu0 %5471
        %v5475 = vadd.f32 %v5453, %v5470
        %v5476 = vadd.f32 %v5454, %v5472
        %v5477 = vstv %s5456
        %v5478 = vmul.f32 %v5477, %v4648
        %v5479 = vmul.f32 %v5477, %v4649
        %v5480 = vmul.f32 %v5477, %v4650
        %v5484 = vrot.slane %v5478, 1
        %v5485 = vrot.slane %v5479, 1
        %v5486 = vsel %vm758, %v5484, %v5485
        %v5487 = vrot.slane %v5480, 1
        %v5488 = vsel %vm758, %v5485, %v5487
        %5489 = vrot.lane.b32.xlu0 %v5486, 125
        %v5490 = vpop.permute.xlu0 %5489
        %5491 = vrot.lane.b32.xlu0 %v5488, 125
        %v5492 = vpop.permute.xlu0 %5491
        %v5495 = vadd.f32 %v5475, %v5490
        %v5496 = vadd.f32 %v5476, %v5492
        %s5497 = sld [smem:[#allocation15 + $0x11]]
        %s5498 = sld [smem:[#allocation15 + $0x42]]
        %v5499 = vstv %s5497
        %v5500 = vmul.f32 %v5499, %v4645
        %v5501 = vmul.f32 %v5499, %v4646
        %v5502 = vmul.f32 %v5499, %v4647
        %v5506 = vrot.slane %v5500, 2
        %v5507 = vrot.slane %v5501, 2
        %v5508 = vsel %vm793, %v5506, %v5507
        %v5509 = vrot.slane %v5502, 2
        %v5510 = vsel %vm793, %v5507, %v5509
        %5511 = vrot.lane.b32.xlu0 %v5508, 125
        %v5512 = vpop.permute.xlu0 %5511
        %5513 = vrot.lane.b32.xlu0 %v5510, 125
        %v5514 = vpop.permute.xlu0 %5513
        %v5517 = vadd.f32 %v5495, %v5512
        %v5518 = vadd.f32 %v5496, %v5514
        %v5519 = vstv %s5498
        %v5520 = vmul.f32 %v5519, %v4648
        %v5521 = vmul.f32 %v5519, %v4649
        %v5522 = vmul.f32 %v5519, %v4650
        %v5526 = vrot.slane %v5520, 2
        %v5527 = vrot.slane %v5521, 2
        %v5528 = vsel %vm793, %v5526, %v5527
        %v5529 = vrot.slane %v5522, 2
        %v5530 = vsel %vm793, %v5527, %v5529
        %5531 = vrot.lane.b32.xlu0 %v5528, 125
        %v5532 = vpop.permute.xlu0 %5531
        %5533 = vrot.lane.b32.xlu0 %v5530, 125
        %v5534 = vpop.permute.xlu0 %5533
        %v5537 = vadd.f32 %v5517, %v5532
        %v5538 = vadd.f32 %v5518, %v5534
        %s5539 = sld [smem:[#allocation15 + $0x18]]
        %s5540 = sld [smem:[#allocation15 + $0x49]]
        %v5541 = vstv %s5539
        %v5542 = vmul.f32 %v5541, %v4645
        %v5543 = vmul.f32 %v5541, %v4646
        %v5544 = vmul.f32 %v5541, %v4647
        %v5548 = vrot.slane %v5542, 3
        %v5549 = vrot.slane %v5543, 3
        %v5550 = vsel %vm828, %v5548, %v5549
        %v5551 = vrot.slane %v5544, 3
        %v5552 = vsel %vm828, %v5549, %v5551
        %5553 = vrot.lane.b32.xlu0 %v5550, 125
        %v5554 = vpop.permute.xlu0 %5553
        %5555 = vrot.lane.b32.xlu0 %v5552, 125
        %v5556 = vpop.permute.xlu0 %5555
        %v5559 = vadd.f32 %v5537, %v5554
        %v5560 = vadd.f32 %v5538, %v5556
        %v5561 = vstv %s5540
        %v5562 = vmul.f32 %v5561, %v4648
        %v5563 = vmul.f32 %v5561, %v4649
        %v5564 = vmul.f32 %v5561, %v4650
        %v5568 = vrot.slane %v5562, 3
        %v5569 = vrot.slane %v5563, 3
        %v5570 = vsel %vm828, %v5568, %v5569
        %v5571 = vrot.slane %v5564, 3
        %v5572 = vsel %vm828, %v5569, %v5571
        %5573 = vrot.lane.b32.xlu0 %v5570, 125
        %v5574 = vpop.permute.xlu0 %5573
        %5575 = vrot.lane.b32.xlu0 %v5572, 125
        %v5576 = vpop.permute.xlu0 %5575
        %v5579 = vadd.f32 %v5559, %v5574
        %v5580 = vadd.f32 %v5560, %v5576
        %s5581 = sld [smem:[#allocation15 + $0x1f]]
        %s5582 = sld [smem:[#allocation15 + $0x50]]
        %v5583 = vstv %s5581
        %v5584 = vmul.f32 %v5583, %v4645
        %v5585 = vmul.f32 %v5583, %v4646
        %v5586 = vmul.f32 %v5583, %v4647
        %v5590 = vrot.slane %v5584, 4
        %v5591 = vrot.slane %v5585, 4
        %v5592 = vsel %vm863, %v5590, %v5591
        %v5593 = vrot.slane %v5586, 4
        %v5594 = vsel %vm863, %v5591, %v5593
        %5595 = vrot.lane.b32.xlu0 %v5592, 125
        %v5596 = vpop.permute.xlu0 %5595
        %5597 = vrot.lane.b32.xlu0 %v5594, 125
        %v5598 = vpop.permute.xlu0 %5597
        %v5601 = vadd.f32 %v5579, %v5596
        %v5602 = vadd.f32 %v5580, %v5598
        %v5603 = vstv %s5582
        %v5604 = vmul.f32 %v5603, %v4648
        %v5605 = vmul.f32 %v5603, %v4649
        %v5606 = vmul.f32 %v5603, %v4650
        %v5610 = vrot.slane %v5604, 4
        %v5611 = vrot.slane %v5605, 4
        %v5612 = vsel %vm863, %v5610, %v5611
        %v5613 = vrot.slane %v5606, 4
        %v5614 = vsel %vm863, %v5611, %v5613
        %5615 = vrot.lane.b32.xlu0 %v5612, 125
        %v5616 = vpop.permute.xlu0 %5615
        %5617 = vrot.lane.b32.xlu0 %v5614, 125
        %v5618 = vpop.permute.xlu0 %5617
        %v5621 = vadd.f32 %v5601, %v5616
        %v5622 = vadd.f32 %v5602, %v5618
        %s5623 = sld [smem:[#allocation15 + $0x26]]
        %s5624 = sld [smem:[#allocation15 + $0x57]]
        %v5625 = vstv %s5623
        %v5626 = vmul.f32 %v5625, %v4645
        %v5627 = vmul.f32 %v5625, %v4646
        %v5628 = vmul.f32 %v5625, %v4647
        %v5632 = vrot.slane %v5626, 5
        %v5633 = vrot.slane %v5627, 5
        %v5634 = vsel %vm898, %v5632, %v5633
        %v5635 = vrot.slane %v5628, 5
        %v5636 = vsel %vm898, %v5633, %v5635
        %5637 = vrot.lane.b32.xlu0 %v5634, 125
        %v5638 = vpop.permute.xlu0 %5637
        %5639 = vrot.lane.b32.xlu0 %v5636, 125
        %v5640 = vpop.permute.xlu0 %5639
        %v5643 = vadd.f32 %v5621, %v5638
        %v5644 = vadd.f32 %v5622, %v5640
        %v5645 = vstv %s5624
        %v5646 = vmul.f32 %v5645, %v4648
        %v5647 = vmul.f32 %v5645, %v4649
        %v5648 = vmul.f32 %v5645, %v4650
        %v5652 = vrot.slane %v5646, 5
        %v5653 = vrot.slane %v5647, 5
        %v5654 = vsel %vm898, %v5652, %v5653
        %v5655 = vrot.slane %v5648, 5
        %v5656 = vsel %vm898, %v5653, %v5655
        %5657 = vrot.lane.b32.xlu0 %v5654, 125
        %v5658 = vpop.permute.xlu0 %5657
        %5659 = vrot.lane.b32.xlu0 %v5656, 125
        %v5660 = vpop.permute.xlu0 %5659
        %v5663 = vadd.f32 %v5643, %v5658
        %v5664 = vadd.f32 %v5644, %v5660
        %s5665 = sld [smem:[#allocation15 + $0x2d]]
        %s5666 = sld [smem:[#allocation15 + $0x5e]]
        %v5667 = vstv %s5665
        %v5668 = vmul.f32 %v5667, %v4645
        %v5669 = vmul.f32 %v5667, %v4646
        %v5670 = vmul.f32 %v5667, %v4647
        %v5674 = vrot.slane %v5668, 6
        %v5675 = vrot.slane %v5669, 6
        %v5676 = vsel %vm933, %v5674, %v5675
        %v5677 = vrot.slane %v5670, 6
        %v5678 = vsel %vm933, %v5675, %v5677
        %5679 = vrot.lane.b32.xlu0 %v5676, 125
        %v5680 = vpop.permute.xlu0 %5679
        %5681 = vrot.lane.b32.xlu0 %v5678, 125
        %v5682 = vpop.permute.xlu0 %5681
        %v5685 = vadd.f32 %v5663, %v5680
        %v5686 = vadd.f32 %v5664, %v5682
        %v5687 = vstv %s5666
        %v5688 = vmul.f32 %v5687, %v4648
        %v5689 = vmul.f32 %v5687, %v4649
        %v5690 = vmul.f32 %v5687, %v4650
        %v5694 = vrot.slane %v5688, 6
        %v5695 = vrot.slane %v5689, 6
        %v5696 = vsel %vm933, %v5694, %v5695
        %v5697 = vrot.slane %v5690, 6
        %v5698 = vsel %vm933, %v5695, %v5697
        %5699 = vrot.lane.b32.xlu0 %v5696, 125
        %v5700 = vpop.permute.xlu0 %5699
        %5701 = vrot.lane.b32.xlu0 %v5698, 125
        %v5702 = vpop.permute.xlu0 %5701
        %v5705 = vadd.f32 %v5685, %v5700
        %v5706 = vadd.f32 %v5686, %v5702
        %s5707 = sld [smem:[#allocation15 + $0x4]]
        %s5708 = sld [smem:[#allocation15 + $0x35]]
        %v5709 = vstv %s5707
        %v5710 = vmul.f32 %v5709, %v4645
        %v5711 = vmul.f32 %v5709, %v4646
        %5714 = vrot.lane.b32.xlu0 %v5710, 124
        %v5715 = vpop.permute.xlu0 %5714
        %5716 = vrot.lane.b32.xlu0 %v5711, 124
        %v5717 = vpop.permute.xlu0 %5716
        %v5720 = vadd.f32 %v5705, %v5715
        %v5721 = vadd.f32 %v5706, %v5717
        %v5722 = vstv %s5708
        %v5723 = vmul.f32 %v5722, %v4648
        %v5724 = vmul.f32 %v5722, %v4649
        %5727 = vrot.lane.b32.xlu0 %v5723, 124
        %v5728 = vpop.permute.xlu0 %5727
        %5729 = vrot.lane.b32.xlu0 %v5724, 124
        %v5730 = vpop.permute.xlu0 %5729
        %v5733 = vadd.f32 %v5720, %v5728
        %v5734 = vadd.f32 %v5721, %v5730
        %s5735 = sld [smem:[#allocation15 + $0xb]]
        %s5736 = sld [smem:[#allocation15 + $0x3c]]
        %v5737 = vstv %s5735
        %v5738 = vmul.f32 %v5737, %v4645
        %v5739 = vmul.f32 %v5737, %v4646
        %v5740 = vmul.f32 %v5737, %v4647
        %v5744 = vrot.slane %v5738, 1
        %v5745 = vrot.slane %v5739, 1
        %v5746 = vsel %vm758, %v5744, %v5745
        %v5747 = vrot.slane %v5740, 1
        %v5748 = vsel %vm758, %v5745, %v5747
        %5749 = vrot.lane.b32.xlu0 %v5746, 124
        %v5750 = vpop.permute.xlu0 %5749
        %5751 = vrot.lane.b32.xlu0 %v5748, 124
        %v5752 = vpop.permute.xlu0 %5751
        %v5755 = vadd.f32 %v5733, %v5750
        %v5756 = vadd.f32 %v5734, %v5752
        %v5757 = vstv %s5736
        %v5758 = vmul.f32 %v5757, %v4648
        %v5759 = vmul.f32 %v5757, %v4649
        %v5760 = vmul.f32 %v5757, %v4650
        %v5764 = vrot.slane %v5758, 1
        %v5765 = vrot.slane %v5759, 1
        %v5766 = vsel %vm758, %v5764, %v5765
        %v5767 = vrot.slane %v5760, 1
        %v5768 = vsel %vm758, %v5765, %v5767
        %5769 = vrot.lane.b32.xlu0 %v5766, 124
        %v5770 = vpop.permute.xlu0 %5769
        %5771 = vrot.lane.b32.xlu0 %v5768, 124
        %v5772 = vpop.permute.xlu0 %5771
        %v5775 = vadd.f32 %v5755, %v5770
        %v5776 = vadd.f32 %v5756, %v5772
        %s5777 = sld [smem:[#allocation15 + $0x12]]
        %s5778 = sld [smem:[#allocation15 + $0x43]]
        %v5779 = vstv %s5777
        %v5780 = vmul.f32 %v5779, %v4645
        %v5781 = vmul.f32 %v5779, %v4646
        %v5782 = vmul.f32 %v5779, %v4647
        %v5786 = vrot.slane %v5780, 2
        %v5787 = vrot.slane %v5781, 2
        %v5788 = vsel %vm793, %v5786, %v5787
        %v5789 = vrot.slane %v5782, 2
        %v5790 = vsel %vm793, %v5787, %v5789
        %5791 = vrot.lane.b32.xlu0 %v5788, 124
        %v5792 = vpop.permute.xlu0 %5791
        %5793 = vrot.lane.b32.xlu0 %v5790, 124
        %v5794 = vpop.permute.xlu0 %5793
        %v5797 = vadd.f32 %v5775, %v5792
        %v5798 = vadd.f32 %v5776, %v5794
        %v5799 = vstv %s5778
        %v5800 = vmul.f32 %v5799, %v4648
        %v5801 = vmul.f32 %v5799, %v4649
        %v5802 = vmul.f32 %v5799, %v4650
        %v5806 = vrot.slane %v5800, 2
        %v5807 = vrot.slane %v5801, 2
        %v5808 = vsel %vm793, %v5806, %v5807
        %v5809 = vrot.slane %v5802, 2
        %v5810 = vsel %vm793, %v5807, %v5809
        %5811 = vrot.lane.b32.xlu0 %v5808, 124
        %v5812 = vpop.permute.xlu0 %5811
        %5813 = vrot.lane.b32.xlu0 %v5810, 124
        %v5814 = vpop.permute.xlu0 %5813
        %v5817 = vadd.f32 %v5797, %v5812
        %v5818 = vadd.f32 %v5798, %v5814
        %s5819 = sld [smem:[#allocation15 + $0x19]]
        %s5820 = sld [smem:[#allocation15 + $0x4a]]
        %v5821 = vstv %s5819
        %v5822 = vmul.f32 %v5821, %v4645
        %v5823 = vmul.f32 %v5821, %v4646
        %v5824 = vmul.f32 %v5821, %v4647
        %v5828 = vrot.slane %v5822, 3
        %v5829 = vrot.slane %v5823, 3
        %v5830 = vsel %vm828, %v5828, %v5829
        %v5831 = vrot.slane %v5824, 3
        %v5832 = vsel %vm828, %v5829, %v5831
        %5833 = vrot.lane.b32.xlu0 %v5830, 124
        %v5834 = vpop.permute.xlu0 %5833
        %5835 = vrot.lane.b32.xlu0 %v5832, 124
        %v5836 = vpop.permute.xlu0 %5835
        %v5839 = vadd.f32 %v5817, %v5834
        %v5840 = vadd.f32 %v5818, %v5836
        %v5841 = vstv %s5820
        %v5842 = vmul.f32 %v5841, %v4648
        %v5843 = vmul.f32 %v5841, %v4649
        %v5844 = vmul.f32 %v5841, %v4650
        %v5848 = vrot.slane %v5842, 3
        %v5849 = vrot.slane %v5843, 3
        %v5850 = vsel %vm828, %v5848, %v5849
        %v5851 = vrot.slane %v5844, 3
        %v5852 = vsel %vm828, %v5849, %v5851
        %5853 = vrot.lane.b32.xlu0 %v5850, 124
        %v5854 = vpop.permute.xlu0 %5853
        %5855 = vrot.lane.b32.xlu0 %v5852, 124
        %v5856 = vpop.permute.xlu0 %5855
        %v5859 = vadd.f32 %v5839, %v5854
        %v5860 = vadd.f32 %v5840, %v5856
        %s5861 = sld [smem:[#allocation15 + $0x20]]
        %s5862 = sld [smem:[#allocation15 + $0x51]]
        %v5863 = vstv %s5861
        %v5864 = vmul.f32 %v5863, %v4645
        %v5865 = vmul.f32 %v5863, %v4646
        %v5866 = vmul.f32 %v5863, %v4647
        %v5870 = vrot.slane %v5864, 4
        %v5871 = vrot.slane %v5865, 4
        %v5872 = vsel %vm863, %v5870, %v5871
        %v5873 = vrot.slane %v5866, 4
        %v5874 = vsel %vm863, %v5871, %v5873
        %5875 = vrot.lane.b32.xlu0 %v5872, 124
        %v5876 = vpop.permute.xlu0 %5875
        %5877 = vrot.lane.b32.xlu0 %v5874, 124
        %v5878 = vpop.permute.xlu0 %5877
        %v5881 = vadd.f32 %v5859, %v5876
        %v5882 = vadd.f32 %v5860, %v5878
        %v5883 = vstv %s5862
        %v5884 = vmul.f32 %v5883, %v4648
        %v5885 = vmul.f32 %v5883, %v4649
        %v5886 = vmul.f32 %v5883, %v4650
        %v5890 = vrot.slane %v5884, 4
        %v5891 = vrot.slane %v5885, 4
        %v5892 = vsel %vm863, %v5890, %v5891
        %v5893 = vrot.slane %v5886, 4
        %v5894 = vsel %vm863, %v5891, %v5893
        %5895 = vrot.lane.b32.xlu0 %v5892, 124
        %v5896 = vpop.permute.xlu0 %5895
        %5897 = vrot.lane.b32.xlu0 %v5894, 124
        %v5898 = vpop.permute.xlu0 %5897
        %v5901 = vadd.f32 %v5881, %v5896
        %v5902 = vadd.f32 %v5882, %v5898
        %s5903 = sld [smem:[#allocation15 + $0x27]]
        %s5904 = sld [smem:[#allocation15 + $0x58]]
        %v5905 = vstv %s5903
        %v5906 = vmul.f32 %v5905, %v4645
        %v5907 = vmul.f32 %v5905, %v4646
        %v5908 = vmul.f32 %v5905, %v4647
        %v5912 = vrot.slane %v5906, 5
        %v5913 = vrot.slane %v5907, 5
        %v5914 = vsel %vm898, %v5912, %v5913
        %v5915 = vrot.slane %v5908, 5
        %v5916 = vsel %vm898, %v5913, %v5915
        %5917 = vrot.lane.b32.xlu0 %v5914, 124
        %v5918 = vpop.permute.xlu0 %5917
        %5919 = vrot.lane.b32.xlu0 %v5916, 124
        %v5920 = vpop.permute.xlu0 %5919
        %v5923 = vadd.f32 %v5901, %v5918
        %v5924 = vadd.f32 %v5902, %v5920
        %v5925 = vstv %s5904
        %v5926 = vmul.f32 %v5925, %v4648
        %v5927 = vmul.f32 %v5925, %v4649
        %v5928 = vmul.f32 %v5925, %v4650
        %v5932 = vrot.slane %v5926, 5
        %v5933 = vrot.slane %v5927, 5
        %v5934 = vsel %vm898, %v5932, %v5933
        %v5935 = vrot.slane %v5928, 5
        %v5936 = vsel %vm898, %v5933, %v5935
        %5937 = vrot.lane.b32.xlu0 %v5934, 124
        %v5938 = vpop.permute.xlu0 %5937
        %5939 = vrot.lane.b32.xlu0 %v5936, 124
        %v5940 = vpop.permute.xlu0 %5939
        %v5943 = vadd.f32 %v5923, %v5938
        %v5944 = vadd.f32 %v5924, %v5940
        %s5945 = sld [smem:[#allocation15 + $0x2e]]
        %s5946 = sld [smem:[#allocation15 + $0x5f]]
        %v5947 = vstv %s5945
        %v5948 = vmul.f32 %v5947, %v4645
        %v5949 = vmul.f32 %v5947, %v4646
        %v5950 = vmul.f32 %v5947, %v4647
        %v5954 = vrot.slane %v5948, 6
        %v5955 = vrot.slane %v5949, 6
        %v5956 = vsel %vm933, %v5954, %v5955
        %v5957 = vrot.slane %v5950, 6
        %v5958 = vsel %vm933, %v5955, %v5957
        %5959 = vrot.lane.b32.xlu0 %v5956, 124
        %v5960 = vpop.permute.xlu0 %5959
        %5961 = vrot.lane.b32.xlu0 %v5958, 124
        %v5962 = vpop.permute.xlu0 %5961
        %v5965 = vadd.f32 %v5943, %v5960
        %v5966 = vadd.f32 %v5944, %v5962
        %v5967 = vstv %s5946
        %v5968 = vmul.f32 %v5967, %v4648
        %v5969 = vmul.f32 %v5967, %v4649
        %v5970 = vmul.f32 %v5967, %v4650
        %v5974 = vrot.slane %v5968, 6
        %v5975 = vrot.slane %v5969, 6
        %v5976 = vsel %vm933, %v5974, %v5975
        %v5977 = vrot.slane %v5970, 6
        %v5978 = vsel %vm933, %v5975, %v5977
        %5979 = vrot.lane.b32.xlu0 %v5976, 124
        %v5980 = vpop.permute.xlu0 %5979
        %5981 = vrot.lane.b32.xlu0 %v5978, 124
        %v5982 = vpop.permute.xlu0 %5981
        %v5985 = vadd.f32 %v5965, %v5980
        %v5986 = vadd.f32 %v5966, %v5982
        %s5987 = sld [smem:[#allocation15 + $0x5]]
        %s5988 = sld [smem:[#allocation15 + $0x36]]
        %v5989 = vstv %s5987
        %v5990 = vmul.f32 %v5989, %v4645
        %v5991 = vmul.f32 %v5989, %v4646
        %5994 = vrot.lane.b32.xlu0 %v5990, 123
        %v5995 = vpop.permute.xlu0 %5994
        %5996 = vrot.lane.b32.xlu0 %v5991, 123
        %v5997 = vpop.permute.xlu0 %5996
        %v6000 = vadd.f32 %v5985, %v5995
        %v6001 = vadd.f32 %v5986, %v5997
        %v6002 = vstv %s5988
        %v6003 = vmul.f32 %v6002, %v4648
        %v6004 = vmul.f32 %v6002, %v4649
        %6007 = vrot.lane.b32.xlu0 %v6003, 123
        %v6008 = vpop.permute.xlu0 %6007
        %6009 = vrot.lane.b32.xlu0 %v6004, 123
        %v6010 = vpop.permute.xlu0 %6009
        %v6013 = vadd.f32 %v6000, %v6008
        %v6014 = vadd.f32 %v6001, %v6010
        %s6015 = sld [smem:[#allocation15 + $0xc]]
        %s6016 = sld [smem:[#allocation15 + $0x3d]]
        %v6017 = vstv %s6015
        %v6018 = vmul.f32 %v6017, %v4645
        %v6019 = vmul.f32 %v6017, %v4646
        %v6020 = vmul.f32 %v6017, %v4647
        %v6024 = vrot.slane %v6018, 1
        %v6025 = vrot.slane %v6019, 1
        %v6026 = vsel %vm758, %v6024, %v6025
        %v6027 = vrot.slane %v6020, 1
        %v6028 = vsel %vm758, %v6025, %v6027
        %6029 = vrot.lane.b32.xlu0 %v6026, 123
        %v6030 = vpop.permute.xlu0 %6029
        %6031 = vrot.lane.b32.xlu0 %v6028, 123
        %v6032 = vpop.permute.xlu0 %6031
        %v6035 = vadd.f32 %v6013, %v6030
        %v6036 = vadd.f32 %v6014, %v6032
        %v6037 = vstv %s6016
        %v6038 = vmul.f32 %v6037, %v4648
        %v6039 = vmul.f32 %v6037, %v4649
        %v6040 = vmul.f32 %v6037, %v4650
        %v6044 = vrot.slane %v6038, 1
        %v6045 = vrot.slane %v6039, 1
        %v6046 = vsel %vm758, %v6044, %v6045
        %v6047 = vrot.slane %v6040, 1
        %v6048 = vsel %vm758, %v6045, %v6047
        %6049 = vrot.lane.b32.xlu0 %v6046, 123
        %v6050 = vpop.permute.xlu0 %6049
        %6051 = vrot.lane.b32.xlu0 %v6048, 123
        %v6052 = vpop.permute.xlu0 %6051
        %v6055 = vadd.f32 %v6035, %v6050
        %v6056 = vadd.f32 %v6036, %v6052
        %s6057 = sld [smem:[#allocation15 + $0x13]]
        %s6058 = sld [smem:[#allocation15 + $0x44]]
        %v6059 = vstv %s6057
        %v6060 = vmul.f32 %v6059, %v4645
        %v6061 = vmul.f32 %v6059, %v4646
        %v6062 = vmul.f32 %v6059, %v4647
        %v6066 = vrot.slane %v6060, 2
        %v6067 = vrot.slane %v6061, 2
        %v6068 = vsel %vm793, %v6066, %v6067
        %v6069 = vrot.slane %v6062, 2
        %v6070 = vsel %vm793, %v6067, %v6069
        %6071 = vrot.lane.b32.xlu0 %v6068, 123
        %v6072 = vpop.permute.xlu0 %6071
        %6073 = vrot.lane.b32.xlu0 %v6070, 123
        %v6074 = vpop.permute.xlu0 %6073
        %v6077 = vadd.f32 %v6055, %v6072
        %v6078 = vadd.f32 %v6056, %v6074
        %v6079 = vstv %s6058
        %v6080 = vmul.f32 %v6079, %v4648
        %v6081 = vmul.f32 %v6079, %v4649
        %v6082 = vmul.f32 %v6079, %v4650
        %v6086 = vrot.slane %v6080, 2
        %v6087 = vrot.slane %v6081, 2
        %v6088 = vsel %vm793, %v6086, %v6087
        %v6089 = vrot.slane %v6082, 2
        %v6090 = vsel %vm793, %v6087, %v6089
        %6091 = vrot.lane.b32.xlu0 %v6088, 123
        %v6092 = vpop.permute.xlu0 %6091
        %6093 = vrot.lane.b32.xlu0 %v6090, 123
        %v6094 = vpop.permute.xlu0 %6093
        %v6097 = vadd.f32 %v6077, %v6092
        %v6098 = vadd.f32 %v6078, %v6094
        %s6099 = sld [smem:[#allocation15 + $0x1a]]
        %s6100 = sld [smem:[#allocation15 + $0x4b]]
        %v6101 = vstv %s6099
        %v6102 = vmul.f32 %v6101, %v4645
        %v6103 = vmul.f32 %v6101, %v4646
        %v6104 = vmul.f32 %v6101, %v4647
        %v6108 = vrot.slane %v6102, 3
        %v6109 = vrot.slane %v6103, 3
        %v6110 = vsel %vm828, %v6108, %v6109
        %v6111 = vrot.slane %v6104, 3
        %v6112 = vsel %vm828, %v6109, %v6111
        %6113 = vrot.lane.b32.xlu0 %v6110, 123
        %v6114 = vpop.permute.xlu0 %6113
        %6115 = vrot.lane.b32.xlu0 %v6112, 123
        %v6116 = vpop.permute.xlu0 %6115
        %v6119 = vadd.f32 %v6097, %v6114
        %v6120 = vadd.f32 %v6098, %v6116
        %v6121 = vstv %s6100
        %v6122 = vmul.f32 %v6121, %v4648
        %v6123 = vmul.f32 %v6121, %v4649
        %v6124 = vmul.f32 %v6121, %v4650
        %v6128 = vrot.slane %v6122, 3
        %v6129 = vrot.slane %v6123, 3
        %v6130 = vsel %vm828, %v6128, %v6129
        %v6131 = vrot.slane %v6124, 3
        %v6132 = vsel %vm828, %v6129, %v6131
        %6133 = vrot.lane.b32.xlu0 %v6130, 123
        %v6134 = vpop.permute.xlu0 %6133
        %6135 = vrot.lane.b32.xlu0 %v6132, 123
        %v6136 = vpop.permute.xlu0 %6135
        %v6139 = vadd.f32 %v6119, %v6134
        %v6140 = vadd.f32 %v6120, %v6136
        %s6141 = sld [smem:[#allocation15 + $0x21]]
        %s6142 = sld [smem:[#allocation15 + $0x52]]
        %v6143 = vstv %s6141
        %v6144 = vmul.f32 %v6143, %v4645
        %v6145 = vmul.f32 %v6143, %v4646
        %v6146 = vmul.f32 %v6143, %v4647
        %v6150 = vrot.slane %v6144, 4
        %v6151 = vrot.slane %v6145, 4
        %v6152 = vsel %vm863, %v6150, %v6151
        %v6153 = vrot.slane %v6146, 4
        %v6154 = vsel %vm863, %v6151, %v6153
        %6155 = vrot.lane.b32.xlu0 %v6152, 123
        %v6156 = vpop.permute.xlu0 %6155
        %6157 = vrot.lane.b32.xlu0 %v6154, 123
        %v6158 = vpop.permute.xlu0 %6157
        %v6161 = vadd.f32 %v6139, %v6156
        %v6162 = vadd.f32 %v6140, %v6158
        %v6163 = vstv %s6142
        %v6164 = vmul.f32 %v6163, %v4648
        %v6165 = vmul.f32 %v6163, %v4649
        %v6166 = vmul.f32 %v6163, %v4650
        %v6170 = vrot.slane %v6164, 4
        %v6171 = vrot.slane %v6165, 4
        %v6172 = vsel %vm863, %v6170, %v6171
        %v6173 = vrot.slane %v6166, 4
        %v6174 = vsel %vm863, %v6171, %v6173
        %6175 = vrot.lane.b32.xlu0 %v6172, 123
        %v6176 = vpop.permute.xlu0 %6175
        %6177 = vrot.lane.b32.xlu0 %v6174, 123
        %v6178 = vpop.permute.xlu0 %6177
        %v6181 = vadd.f32 %v6161, %v6176
        %v6182 = vadd.f32 %v6162, %v6178
        %s6183 = sld [smem:[#allocation15 + $0x28]]
        %s6184 = sld [smem:[#allocation15 + $0x59]]
        %v6185 = vstv %s6183
        %v6186 = vmul.f32 %v6185, %v4645
        %v6187 = vmul.f32 %v6185, %v4646
        %v6188 = vmul.f32 %v6185, %v4647
        %v6192 = vrot.slane %v6186, 5
        %v6193 = vrot.slane %v6187, 5
        %v6194 = vsel %vm898, %v6192, %v6193
        %v6195 = vrot.slane %v6188, 5
        %v6196 = vsel %vm898, %v6193, %v6195
        %6197 = vrot.lane.b32.xlu0 %v6194, 123
        %v6198 = vpop.permute.xlu0 %6197
        %6199 = vrot.lane.b32.xlu0 %v6196, 123
        %v6200 = vpop.permute.xlu0 %6199
        %v6203 = vadd.f32 %v6181, %v6198
        %v6204 = vadd.f32 %v6182, %v6200
        %v6205 = vstv %s6184
        %v6206 = vmul.f32 %v6205, %v4648
        %v6207 = vmul.f32 %v6205, %v4649
        %v6208 = vmul.f32 %v6205, %v4650
        %v6212 = vrot.slane %v6206, 5
        %v6213 = vrot.slane %v6207, 5
        %v6214 = vsel %vm898, %v6212, %v6213
        %v6215 = vrot.slane %v6208, 5
        %v6216 = vsel %vm898, %v6213, %v6215
        %6217 = vrot.lane.b32.xlu0 %v6214, 123
        %v6218 = vpop.permute.xlu0 %6217
        %6219 = vrot.lane.b32.xlu0 %v6216, 123
        %v6220 = vpop.permute.xlu0 %6219
        %v6223 = vadd.f32 %v6203, %v6218
        %v6224 = vadd.f32 %v6204, %v6220
        %s6225 = sld [smem:[#allocation15 + $0x2f]]
        %s6226 = sld [smem:[#allocation15 + $0x60]]
        %v6227 = vstv %s6225
        %v6228 = vmul.f32 %v6227, %v4645
        %v6229 = vmul.f32 %v6227, %v4646
        %v6230 = vmul.f32 %v6227, %v4647
        %v6234 = vrot.slane %v6228, 6
        %v6235 = vrot.slane %v6229, 6
        %v6236 = vsel %vm933, %v6234, %v6235
        %v6237 = vrot.slane %v6230, 6
        %v6238 = vsel %vm933, %v6235, %v6237
        %6239 = vrot.lane.b32.xlu0 %v6236, 123
        %v6240 = vpop.permute.xlu0 %6239
        %6241 = vrot.lane.b32.xlu0 %v6238, 123
        %v6242 = vpop.permute.xlu0 %6241
        %v6245 = vadd.f32 %v6223, %v6240
        %v6246 = vadd.f32 %v6224, %v6242
        %v6247 = vstv %s6226
        %v6248 = vmul.f32 %v6247, %v4648
        %v6249 = vmul.f32 %v6247, %v4649
        %v6250 = vmul.f32 %v6247, %v4650
        %v6254 = vrot.slane %v6248, 6
        %v6255 = vrot.slane %v6249, 6
        %v6256 = vsel %vm933, %v6254, %v6255
        %v6257 = vrot.slane %v6250, 6
        %v6258 = vsel %vm933, %v6255, %v6257
        %6259 = vrot.lane.b32.xlu0 %v6256, 123
        %v6260 = vpop.permute.xlu0 %6259
        %6261 = vrot.lane.b32.xlu0 %v6258, 123
        %v6262 = vpop.permute.xlu0 %6261
        %v6265 = vadd.f32 %v6245, %v6260
        %v6266 = vadd.f32 %v6246, %v6262
        %s6267 = sld [smem:[#allocation15 + $0x6]]
        %s6268 = sld [smem:[#allocation15 + $0x37]]
        %v6269 = vstv %s6267
        %v6270 = vmul.f32 %v6269, %v4645
        %v6271 = vmul.f32 %v6269, %v4646
        %6274 = vrot.lane.b32.xlu0 %v6270, 122
        %v6275 = vpop.permute.xlu0 %6274
        %6276 = vrot.lane.b32.xlu0 %v6271, 122
        %v6277 = vpop.permute.xlu0 %6276
        %v6280 = vadd.f32 %v6265, %v6275
        %v6281 = vadd.f32 %v6266, %v6277
        %v6282 = vstv %s6268
        %v6283 = vmul.f32 %v6282, %v4648
        %v6284 = vmul.f32 %v6282, %v4649
        %6287 = vrot.lane.b32.xlu0 %v6283, 122
        %v6288 = vpop.permute.xlu0 %6287
        %6289 = vrot.lane.b32.xlu0 %v6284, 122
        %v6290 = vpop.permute.xlu0 %6289
        %v6293 = vadd.f32 %v6280, %v6288
        %v6294 = vadd.f32 %v6281, %v6290
        %s6295 = sld [smem:[#allocation15 + $0xd]]
        %s6296 = sld [smem:[#allocation15 + $0x3e]]
        %v6297 = vstv %s6295
        %v6298 = vmul.f32 %v6297, %v4645
        %v6299 = vmul.f32 %v6297, %v4646
        %v6300 = vmul.f32 %v6297, %v4647
        %v6304 = vrot.slane %v6298, 1
        %v6305 = vrot.slane %v6299, 1
        %v6306 = vsel %vm758, %v6304, %v6305
        %v6307 = vrot.slane %v6300, 1
        %v6308 = vsel %vm758, %v6305, %v6307
        %6309 = vrot.lane.b32.xlu0 %v6306, 122
        %v6310 = vpop.permute.xlu0 %6309
        %6311 = vrot.lane.b32.xlu0 %v6308, 122
        %v6312 = vpop.permute.xlu0 %6311
        %v6315 = vadd.f32 %v6293, %v6310
        %v6316 = vadd.f32 %v6294, %v6312
        %v6317 = vstv %s6296
        %v6318 = vmul.f32 %v6317, %v4648
        %v6319 = vmul.f32 %v6317, %v4649
        %v6320 = vmul.f32 %v6317, %v4650
        %v6324 = vrot.slane %v6318, 1
        %v6325 = vrot.slane %v6319, 1
        %v6326 = vsel %vm758, %v6324, %v6325
        %v6327 = vrot.slane %v6320, 1
        %v6328 = vsel %vm758, %v6325, %v6327
        %6329 = vrot.lane.b32.xlu0 %v6326, 122
        %v6330 = vpop.permute.xlu0 %6329
        %6331 = vrot.lane.b32.xlu0 %v6328, 122
        %v6332 = vpop.permute.xlu0 %6331
        %v6335 = vadd.f32 %v6315, %v6330
        %v6336 = vadd.f32 %v6316, %v6332
        %s6337 = sld [smem:[#allocation15 + $0x14]]
        %s6338 = sld [smem:[#allocation15 + $0x45]]
        %v6339 = vstv %s6337
        %v6340 = vmul.f32 %v6339, %v4645
        %v6341 = vmul.f32 %v6339, %v4646
        %v6342 = vmul.f32 %v6339, %v4647
        %v6346 = vrot.slane %v6340, 2
        %v6347 = vrot.slane %v6341, 2
        %v6348 = vsel %vm793, %v6346, %v6347
        %v6349 = vrot.slane %v6342, 2
        %v6350 = vsel %vm793, %v6347, %v6349
        %6351 = vrot.lane.b32.xlu0 %v6348, 122
        %v6352 = vpop.permute.xlu0 %6351
        %6353 = vrot.lane.b32.xlu0 %v6350, 122
        %v6354 = vpop.permute.xlu0 %6353
        %v6357 = vadd.f32 %v6335, %v6352
        %v6358 = vadd.f32 %v6336, %v6354
        %v6359 = vstv %s6338
        %v6360 = vmul.f32 %v6359, %v4648
        %v6361 = vmul.f32 %v6359, %v4649
        %v6362 = vmul.f32 %v6359, %v4650
        %v6366 = vrot.slane %v6360, 2
        %v6367 = vrot.slane %v6361, 2
        %v6368 = vsel %vm793, %v6366, %v6367
        %v6369 = vrot.slane %v6362, 2
        %v6370 = vsel %vm793, %v6367, %v6369
        %6371 = vrot.lane.b32.xlu0 %v6368, 122
        %v6372 = vpop.permute.xlu0 %6371
        %6373 = vrot.lane.b32.xlu0 %v6370, 122
        %v6374 = vpop.permute.xlu0 %6373
        %v6377 = vadd.f32 %v6357, %v6372
        %v6378 = vadd.f32 %v6358, %v6374
        %s6379 = sld [smem:[#allocation15 + $0x1b]]
        %s6380 = sld [smem:[#allocation15 + $0x4c]]
        %v6381 = vstv %s6379
        %v6382 = vmul.f32 %v6381, %v4645
        %v6383 = vmul.f32 %v6381, %v4646
        %v6384 = vmul.f32 %v6381, %v4647
        %v6388 = vrot.slane %v6382, 3
        %v6389 = vrot.slane %v6383, 3
        %v6390 = vsel %vm828, %v6388, %v6389
        %v6391 = vrot.slane %v6384, 3
        %v6392 = vsel %vm828, %v6389, %v6391
        %6393 = vrot.lane.b32.xlu0 %v6390, 122
        %v6394 = vpop.permute.xlu0 %6393
        %6395 = vrot.lane.b32.xlu0 %v6392, 122
        %v6396 = vpop.permute.xlu0 %6395
        %v6399 = vadd.f32 %v6377, %v6394
        %v6400 = vadd.f32 %v6378, %v6396
        %v6401 = vstv %s6380
        %v6402 = vmul.f32 %v6401, %v4648
        %v6403 = vmul.f32 %v6401, %v4649
        %v6404 = vmul.f32 %v6401, %v4650
        %v6408 = vrot.slane %v6402, 3
        %v6409 = vrot.slane %v6403, 3
        %v6410 = vsel %vm828, %v6408, %v6409
        %v6411 = vrot.slane %v6404, 3
        %v6412 = vsel %vm828, %v6409, %v6411
        %6413 = vrot.lane.b32.xlu0 %v6410, 122
        %v6414 = vpop.permute.xlu0 %6413
        %6415 = vrot.lane.b32.xlu0 %v6412, 122
        %v6416 = vpop.permute.xlu0 %6415
        %v6419 = vadd.f32 %v6399, %v6414
        %v6420 = vadd.f32 %v6400, %v6416
        %s6421 = sld [smem:[#allocation15 + $0x22]]
        %s6422 = sld [smem:[#allocation15 + $0x53]]
        %v6423 = vstv %s6421
        %v6424 = vmul.f32 %v6423, %v4645
        %v6425 = vmul.f32 %v6423, %v4646
        %v6426 = vmul.f32 %v6423, %v4647
        %v6430 = vrot.slane %v6424, 4
        %v6431 = vrot.slane %v6425, 4
        %v6432 = vsel %vm863, %v6430, %v6431
        %v6433 = vrot.slane %v6426, 4
        %v6434 = vsel %vm863, %v6431, %v6433
        %6435 = vrot.lane.b32.xlu0 %v6432, 122
        %v6436 = vpop.permute.xlu0 %6435
        %6437 = vrot.lane.b32.xlu0 %v6434, 122
        %v6438 = vpop.permute.xlu0 %6437
        %v6441 = vadd.f32 %v6419, %v6436
        %v6442 = vadd.f32 %v6420, %v6438
        %v6443 = vstv %s6422
        %v6444 = vmul.f32 %v6443, %v4648
        %v6445 = vmul.f32 %v6443, %v4649
        %v6446 = vmul.f32 %v6443, %v4650
        %v6450 = vrot.slane %v6444, 4
        %v6451 = vrot.slane %v6445, 4
        %v6452 = vsel %vm863, %v6450, %v6451
        %v6453 = vrot.slane %v6446, 4
        %v6454 = vsel %vm863, %v6451, %v6453
        %6455 = vrot.lane.b32.xlu0 %v6452, 122
        %v6456 = vpop.permute.xlu0 %6455
        %6457 = vrot.lane.b32.xlu0 %v6454, 122
        %v6458 = vpop.permute.xlu0 %6457
        %v6461 = vadd.f32 %v6441, %v6456
        %v6462 = vadd.f32 %v6442, %v6458
        %s6463 = sld [smem:[#allocation15 + $0x29]]
        %s6464 = sld [smem:[#allocation15 + $0x5a]]
        %v6465 = vstv %s6463
        %v6466 = vmul.f32 %v6465, %v4645
        %v6467 = vmul.f32 %v6465, %v4646
        %v6468 = vmul.f32 %v6465, %v4647
        %v6472 = vrot.slane %v6466, 5
        %v6473 = vrot.slane %v6467, 5
        %v6474 = vsel %vm898, %v6472, %v6473
        %v6475 = vrot.slane %v6468, 5
        %v6476 = vsel %vm898, %v6473, %v6475
        %6477 = vrot.lane.b32.xlu0 %v6474, 122
        %v6478 = vpop.permute.xlu0 %6477
        %6479 = vrot.lane.b32.xlu0 %v6476, 122
        %v6480 = vpop.permute.xlu0 %6479
        %v6483 = vadd.f32 %v6461, %v6478
        %v6484 = vadd.f32 %v6462, %v6480
        %v6485 = vstv %s6464
        %v6486 = vmul.f32 %v6485, %v4648
        %v6487 = vmul.f32 %v6485, %v4649
        %v6488 = vmul.f32 %v6485, %v4650
        %v6492 = vrot.slane %v6486, 5
        %v6493 = vrot.slane %v6487, 5
        %v6494 = vsel %vm898, %v6492, %v6493
        %v6495 = vrot.slane %v6488, 5
        %v6496 = vsel %vm898, %v6493, %v6495
        %6497 = vrot.lane.b32.xlu0 %v6494, 122
        %v6498 = vpop.permute.xlu0 %6497
        %6499 = vrot.lane.b32.xlu0 %v6496, 122
        %v6500 = vpop.permute.xlu0 %6499
        %v6503 = vadd.f32 %v6483, %v6498
        %v6504 = vadd.f32 %v6484, %v6500
        %s6505 = sld [smem:[#allocation15 + $0x30]]
        %s6506 = sld [smem:[#allocation15 + $0x61]]
        %v6507 = vstv %s6505
        %v6508 = vmul.f32 %v6507, %v4645
        %v6509 = vmul.f32 %v6507, %v4646
        %v6510 = vmul.f32 %v6507, %v4647
        %v6514 = vrot.slane %v6508, 6
        %v6515 = vrot.slane %v6509, 6
        %v6516 = vsel %vm933, %v6514, %v6515
        %v6517 = vrot.slane %v6510, 6
        %v6518 = vsel %vm933, %v6515, %v6517
        %6519 = vrot.lane.b32.xlu0 %v6516, 122
        %v6520 = vpop.permute.xlu0 %6519
        %6521 = vrot.lane.b32.xlu0 %v6518, 122
        %v6522 = vpop.permute.xlu0 %6521
        %v6525 = vadd.f32 %v6503, %v6520
        %v6526 = vadd.f32 %v6504, %v6522
        %v6527 = vstv %s6506
        %v6528 = vmul.f32 %v6527, %v4648
        %v6529 = vmul.f32 %v6527, %v4649
        %v6530 = vmul.f32 %v6527, %v4650
        %v6534 = vrot.slane %v6528, 6
        %v6535 = vrot.slane %v6529, 6
        %v6536 = vsel %vm933, %v6534, %v6535
        %v6537 = vrot.slane %v6530, 6
        %v6538 = vsel %vm933, %v6535, %v6537
        %6539 = vrot.lane.b32.xlu0 %v6536, 122
        %v6540 = vpop.permute.xlu0 %6539
        %6541 = vrot.lane.b32.xlu0 %v6538, 122
        %v6542 = vpop.permute.xlu0 %6541
        %v6545 = vadd.f32 %v6525, %v6540
        %v6546 = vadd.f32 %v6526, %v6542
        %v6547 = vmax.f32 %v6545, 0.0
        %v6548 = vmax.f32 %v6546, 0.0
        %v6549 = vxor.u32 %v6547, 2147483648
        %v6550 = vxor.u32 %v6548, 2147483648
        %v6551 = vmul.f32 %v6549, 1.442695
        %v6552 = vpow.pop %v6551
        %v6553 = vmul.f32 %v6550, 1.442695
        %v6554 = vpow.pop %v6553
        %v6555 = vadd.f32 %v6552, 1.0
        %v6556 = vadd.f32 %v6554, 1.0
        %v6557 = vrcp.pop %v6555
        %v6558 = vmul.f32 1.0, %v6557
        %v6559 = vrcp.pop %v6556
        %v6560 = vmul.f32 1.0, %v6559
        %6561 = vxpose.xlu0.b32.start [1/16] %v4606, 128
        %6562 = vxpose.xlu0.b32.cont [2/16] %v4608, 128
        %6563 = vxpose.xlu0.b32.cont [3/16] 0.0, 128
        %6564 = vxpose.xlu0.b32.cont [4/16] 0.0, 128
        %6565 = vxpose.xlu0.b32.cont [5/16] 0.0, 128
        %6566 = vxpose.xlu0.b32.cont [6/16] 0.0, 128
        %6567 = vxpose.xlu0.b32.cont [7/16] 0.0, 128
        %6568 = vxpose.xlu0.b32.cont [8/16] 0.0, 128
        %6569 = vxpose.xlu0.b32.cont [9/16] 0.0, 128
        %6570 = vxpose.xlu0.b32.cont [10/16] 0.0, 128
        %6571 = vxpose.xlu0.b32.cont [11/16] 0.0, 128
        %6572 = vxpose.xlu0.b32.cont [12/16] 0.0, 128
        %6573 = vxpose.xlu0.b32.cont [13/16] 0.0, 128
        %6574 = vxpose.xlu0.b32.cont [14/16] 0.0, 128
        %6575 = vxpose.xlu0.b32.cont [15/16] 0.0, 128
        %6576 = vxpose.xlu0.b32.end [16/16] 0.0, 128
        %v6577 = vpop.trf.xlu0
        %v6578 = vpop.trf.xlu0
        %v6579 = vpop.trf.xlu0
        %v6580 = vpop.trf.xlu0
        %v6581 = vpop.trf.xlu0
        %v6582 = vpop.trf.xlu0
        %v6583 = vpop.trf.xlu0
        %v6584 = vpop.trf.xlu0
        %v6585 = vpop.trf.xlu0
        %v6586 = vpop.trf.xlu0
        %v6587 = vpop.trf.xlu0
        %v6588 = vpop.trf.xlu0
        %v6589 = vpop.trf.xlu0
        %v6590 = vpop.trf.xlu0
        %v6591 = vpop.trf.xlu0
        %v6592 = vpop.trf.xlu0
        %6593 = vxpose.xlu0.b32.start [1/16] %v6558, 128
        %6594 = vxpose.xlu0.b32.cont [2/16] %v6560, 128
        %6595 = vxpose.xlu0.b32.cont [3/16] 0.0, 128
        %6596 = vxpose.xlu0.b32.cont [4/16] 0.0, 128
        %6597 = vxpose.xlu0.b32.cont [5/16] 0.0, 128
        %6598 = vxpose.xlu0.b32.cont [6/16] 0.0, 128
        %6599 = vxpose.xlu0.b32.cont [7/16] 0.0, 128
        %6600 = vxpose.xlu0.b32.cont [8/16] 0.0, 128
        %6601 = vxpose.xlu0.b32.cont [9/16] 0.0, 128
        %6602 = vxpose.xlu0.b32.cont [10/16] 0.0, 128
        %6603 = vxpose.xlu0.b32.cont [11/16] 0.0, 128
        %6604 = vxpose.xlu0.b32.cont [12/16] 0.0, 128
        %6605 = vxpose.xlu0.b32.cont [13/16] 0.0, 128
        %6606 = vxpose.xlu0.b32.cont [14/16] 0.0, 128
        %6607 = vxpose.xlu0.b32.cont [15/16] 0.0, 128
        %6608 = vxpose.xlu0.b32.end [16/16] 0.0, 128
        %v6609 = vpop.trf.xlu0
        %v6610 = vpop.trf.xlu0
        %v6611 = vpop.trf.xlu0
        %v6612 = vpop.trf.xlu0
        %v6613 = vpop.trf.xlu0
        %v6614 = vpop.trf.xlu0
        %v6615 = vpop.trf.xlu0
        %v6616 = vpop.trf.xlu0
        %v6617 = vpop.trf.xlu0
        %v6618 = vpop.trf.xlu0
        %v6619 = vpop.trf.xlu0
        %v6620 = vpop.trf.xlu0
        %v6621 = vpop.trf.xlu0
        %v6622 = vpop.trf.xlu0
        %v6623 = vpop.trf.xlu0
        %v6624 = vpop.trf.xlu0
        %v6627 = vunpack.c.l.s4 1966171168
        %v6628 = vunpack.c.0.s8 %v6627
        %v6629 = vlaneseq
        %v6630 = vshrl.u32 %v6629, 7
        %v6631 = vsub.s32 %v6628, %v6630
        %v6632 = vrot.slane %v6577, %v6631
        %v6633 = vcombine.high %v6632, %v6632
        %v6635 = vunpack.c.l.s4 1966171168
        %v6636 = vunpack.c.0.s8 %v6635
        %v6637 = vlaneseq
        %v6638 = vshrl.u32 %v6637, 7
        %v6639 = vsub.s32 %v6636, %v6638
        %v6640 = vrot.slane %v6632, %v6639
        %v6642 = vunpack.c.l.s4 1966171168
        %v6643 = vunpack.c.0.s8 %v6642
        %v6644 = vlaneseq
        %v6645 = vshrl.u32 %v6644, 7
        %v6646 = vsub.s32 %v6643, %v6645
        %v6647 = vrot.slane %v6633, %v6646
        %v6648 = vcombine.high %v6640, %v6640
        %v6649 = vcombine.high %v6647, %v6647
        %v6650 = vlaneseq
        %v6651 = vshrl.u32 %v6650, 7
        %v6652 = vsub.s32 0, %v6651
        %v6653 = vrot.slane %v6609, %v6652
        %6655 = vbcast.lane.b32.xlu0 %v6653, 256
        %v6656 = vpop.permute.xlu0 %6655
        %s6658 = sor.u32 256, 8
        %6659 = vbcast.lane.b32.xlu0 %v6653, %s6658
        %v6660 = vpop.permute.xlu0 %6659
        %v6661 = vlaneseq
        %v6662 = vshrl.u32 %v6661, 7
        %v6663 = vsub.s32 1, %v6662
        %v6664 = vrot.slane %v6609, %v6663
        %6666 = vbcast.lane.b32.xlu0 %v6664, 256
        %v6667 = vpop.permute.xlu0 %6666
        %s6669 = sor.u32 256, 8
        %6670 = vbcast.lane.b32.xlu0 %v6664, %s6669
        %v6671 = vpop.permute.xlu0 %6670
        %v6672 = vlaneseq
        %v6673 = vshrl.u32 %v6672, 7
        %v6674 = vsub.s32 2, %v6673
        %v6675 = vrot.slane %v6609, %v6674
        %6677 = vbcast.lane.b32.xlu0 %v6675, 256
        %v6678 = vpop.permute.xlu0 %6677
        %s6680 = sor.u32 256, 8
        %6681 = vbcast.lane.b32.xlu0 %v6675, %s6680
        %v6682 = vpop.permute.xlu0 %6681
        %v6683 = vlaneseq
        %v6684 = vshrl.u32 %v6683, 7
        %v6685 = vsub.s32 3, %v6684
        %v6686 = vrot.slane %v6609, %v6685
        %6688 = vbcast.lane.b32.xlu0 %v6686, 256
        %v6689 = vpop.permute.xlu0 %6688
        %s6691 = sor.u32 256, 8
        %6692 = vbcast.lane.b32.xlu0 %v6686, %s6691
        %v6693 = vpop.permute.xlu0 %6692
        %v6694 = vlaneseq
        %v6695 = vshrl.u32 %v6694, 7
        %v6696 = vsub.s32 0, %v6695
        %v6697 = vrot.slane %v6640, %v6696
        %v6698 = vlaneseq
        %v6699 = vshrl.u32 %v6698, 7
        %v6700 = vsub.s32 0, %v6699
        %v6701 = vrot.slane %v6647, %v6700
        %v6702 = vlaneseq
        %v6703 = vshrl.u32 %v6702, 7
        %v6704 = vsub.s32 0, %v6703
        %v6705 = vrot.slane %v6648, %v6704
        %v6706 = vlaneseq
        %v6707 = vshrl.u32 %v6706, 7
        %v6708 = vsub.s32 0, %v6707
        %v6709 = vrot.slane %v6649, %v6708
        %v6714 = vadd.f32 %v6697, %v6656
        %v6715 = vadd.f32 %v6697, %v6660
        %v6716 = vadd.f32 %v6701, %v6667
        %v6717 = vadd.f32 %v6701, %v6671
        %v6718 = vadd.f32 %v6705, %v6678
        %v6719 = vadd.f32 %v6705, %v6682
        %v6720 = vadd.f32 %v6709, %v6689
        %v6721 = vadd.f32 %v6709, %v6693
        %v6722 = vadd.f32 %v6714, %v2650
        %v6723 = vadd.f32 %v6715, %v2652
        %v6724 = vadd.f32 %v6716, %v2650
        %v6725 = vadd.f32 %v6717, %v2652
        %v6726 = vadd.f32 %v6718, %v2650
        %v6727 = vadd.f32 %v6719, %v2652
        %v6728 = vadd.f32 %v6720, %v2650
        %v6729 = vadd.f32 %v6721, %v2652
        %v6730 = vmul.f32 %v6722, 0.33333334
        %v6731 = vmul.f32 %v6723, 0.33333334
        %v6732 = vmul.f32 %v6724, 0.33333334
        %v6733 = vmul.f32 %v6725, 0.33333334
        %v6734 = vmul.f32 %v6726, 0.33333334
        %v6735 = vmul.f32 %v6727, 0.33333334
        %v6736 = vmul.f32 %v6728, 0.33333334
        %v6737 = vmul.f32 %v6729, 0.33333334
        %v6738 = vld [vmem:[%s217] sm:$0xff]
        %v6739 = vld [vmem:[%s217 + $0x8] sm:$0xff]
        %v6740 = vld [vmem:[%s217 + $0x10] sm:$0xff]
        %v6741 = vld [vmem:[%s217 + $0x18] sm:$0xff]
        %v6742 = vld [vmem:[%s217 + $0x20] sm:$0xff]
        %v6743 = vld [vmem:[%s217 + $0x28] sm:$0xff]
        %v6744 = vld [vmem:[%s217 + $0x30] sm:$0xff]
        %v6745 = vld [vmem:[%s217 + $0x38] sm:$0xff]
        %v6746 = vmul.f32 %v6738, %v6730
        %v6747 = vmul.f32 %v6739, %v6731
        %v6748 = vmul.f32 %v6740, %v6732
        %v6749 = vmul.f32 %v6741, %v6733
        %v6750 = vmul.f32 %v6742, %v6734
        %v6751 = vmul.f32 %v6743, %v6735
        %v6752 = vmul.f32 %v6744, %v6736
        %v6753 = vmul.f32 %v6745, %v6737
        %6754 = vst.msk [vmem:[%s254] sm:$0xff] %vm263, %v6746
        %6755 = vst.msk [vmem:[%s254 + $0x8] sm:$0xff] %vm263, %v6747
        %6756 = vst.msk [vmem:[%s254 + $0x10] sm:$0xff] %vm263, %v6748
        %6757 = vst.msk [vmem:[%s254 + $0x18] sm:$0xff] %vm263, %v6749
        %6758 = vst.msk [vmem:[%s254 + $0x20] sm:$0xff] %vm263, %v6750
        %6759 = vst.msk [vmem:[%s254 + $0x28] sm:$0xff] %vm263, %v6751
        %6760 = vst.msk [vmem:[%s254 + $0x30] sm:$0xff] %vm263, %v6752
        %6761 = vst.msk [vmem:[%s254 + $0x38] sm:$0xff] %vm263, %v6753
        %s6762 = sand.u32 %s120, 1
        %s6763 = scalar_lea.sflag [#allocation10], %s6762
        %s6764 = sand.u32 %s120, 1
        %s6765 = smul.addr %s6764, 64
        %s6766 = scalar_lea.vmem [#allocation16], %s6765
        // Predicated region
        $region53: #{tpu_custom_call.1} parent=35 // pred_check
          %p6767 = pneg %p130
        $region54: #{tpu_custom_call.1} parent=35 // pred_check_branch
          %6769 = sbr.rel (%p6767) target = $region56
        $region55: #{tpu_custom_call.1} parent=35 // pred_region
          %s6771 = ssub.s32 1024, 1024
          %6772 = vsyncadd %s6763, %s6771
          %s6773 = smul.addr %s23, 8
          %s6774 = smul.addr %s6773, 128
          %s6775 = scalar_lea.hbm %s4, %s6774
          %s6776 = sshll.u32 %s6766, 4
          %s6777 = int_to_ptr.vmem [resolvable:$true] %s6776
          %6782 = dma.vmem_to_hbm [thread:$0]  %s6777, 1024, %s6775, %s6763, 128, 128, 8
        $region56: #{tpu_custom_call.1} parent=35 // pred_fallthru
          _
      $region36: #{tpu_custom_call.1} parent=5 // pred_fallthru
        _
      %p6783 = scmp.le.s32.totalorder 2, %s18
      // Predicated region
      $region57: #{tpu_custom_call.1} parent=5 // pred_check
        %p6784 = pneg %p6783
      $region58: #{tpu_custom_call.1} parent=5 // pred_check_branch
        %6786 = sbr.rel (%p6784) target = $region60
      $region59: #{tpu_custom_call.1} parent=5 // pred_region
        %s6787 = ssub.s32 %s18, 2
        // Predicated region
        $region61: #{tpu_custom_call.1} parent=59 // pred_check
          %p6788 = pneg %p136
        $region62: #{tpu_custom_call.1} parent=59 // pred_check_branch
          %6790 = sbr.rel (%p6788) target = $region64
        $region63: #{tpu_custom_call.1} parent=59 // pred_region
          %s6791 = sand.u32 %s121, 1
          %s6792 = scalar_lea.sflag [#allocation10], %s6791
          %s6793 = sand.u32 %s121, 1
          %s6794 = smul.addr %s6793, 64
          %s6795 = scalar_lea.vmem [#allocation16], %s6794
          %6796 = dma.done %s6792, 1024
        $region64: #{tpu_custom_call.1} parent=59 // pred_fallthru
          _
      $region60: #{tpu_custom_call.1} parent=5 // pred_fallthru
        _
    $region6: #{tpu_custom_call.1} parent=1 // loop_footer
      %s22 = sadd.s32 1, %s18
    $region7: #{tpu_custom_call.1} parent=1 // loop_footer_branch
      %17 = sbr.rel target = $region3
    $region8: #{tpu_custom_call.1} parent=1 // loop_exit
      _
    %6797 = vsyncpa [#allocation9], 1
    %s6798 = scalar_lea.sflag [#allocation9], 1
    %6799 = vsyncpa %s6798, 1
    %6800 = vsyncpa [#allocation10], 1
    %s6801 = scalar_lea.sflag [#allocation10], 1
    %6802 = vsyncpa %s6801, 1
    %6803 = vsyncpa [#allocation11], 1
    %s6804 = scalar_lea.sflag [#allocation11], 1
    %6805 = vsyncpa %s6804, 1
    %6806 = vsyncpa [#allocation14], 1

</llo_original>
